<compile_context>
chip_gen: v7x
topology: tpu7x:2x2x1
jax: 0.10.0
libtpu: 0.0.40
codegen_flags: <defaults>
</compile_context>

<pallas_src>
import functools

import jax
import jax.numpy as jnp
from jax import lax
from jax.experimental import pallas as pl
from jax.experimental.pallas import tpu as pltpu


def _conv3x3_tile(src_ref, w_ref, t, TH, W, C, left_keep, right_keep):
    """3x3 conv (stride 1, pad 1) for one row-tile.

    src_ref    : VMEM ref ((H+2)*W, C) f32 -- H-padded input, flat (row, col).
    w_ref      : (3, 3, C, Cout) bf16 weights (HWIO).
    left_keep  : (SLAB, C) f32 {0,1} mask killing the w == 0 wrap rows.
    right_keep : (SLAB, C) f32 {0,1} mask killing the w == W-1 wrap rows.
    Returns (TH*W, Cout) f32 for output rows [t*TH, (t+1)*TH).
    """
    SLAB = (TH + 2) * W
    Cout = w_ref.shape[-1]
    s0 = t * TH * W                                   # static, multiple of W
    slab = src_ref[s0:s0 + SLAB, :]                   # aligned sublane slice
    acc = jnp.zeros((TH * W, Cout), jnp.float32)
    for kw in range(3):
        if kw == 1:
            shifted = slab
        else:
            # Column shift by +/-1 on the XLU; wrapped edge columns masked to 0.
            rolled = pltpu.roll(slab, (1 - kw) % SLAB, axis=0)
            shifted = rolled * (left_keep if kw == 0 else right_keep)
        lhs_bf = shifted.astype(jnp.bfloat16)          # bf16 MXU operands
        for kh in range(3):
            lhs = lhs_bf[kh * W:kh * W + TH * W, :]    # aligned slice (kh*W % 8 == 0)
            acc = acc + jnp.dot(lhs, w_ref[kh, kw],
                                preferred_element_type=jnp.float32)
    return acc


def _basic_block_kernel(H, W, C, TH, NT,
                        x_ref, w1_ref, s1_ref, b1_ref, w2_ref, s2_ref, b2_ref,
                        out_ref, xp1, xp2):
    """One batch element per grid step.

    x_ref     : (1, H*W, C)  bf16 input, NHWC flattened over (H, W)
    w*_ref    : (3, 3, C, C) bf16 conv weights (HWIO)
    s*/b*     : (1, C)       f32 folded BN scale / shift
    out_ref   : (1, H*W, C)  output
    xp1, xp2  : ((H+2)*W, C) f32 VMEM scratch (H-padded conv1 / conv2 inputs)
    """
    SLAB = (TH + 2) * W

    # {0,1} edge masks for the +/-1 column shifts (w == 0 / w == W-1 wraps).
    pos_w = lax.broadcasted_iota(jnp.int32, (SLAB, C), 0) % W
    left_keep = (pos_w != 0).astype(jnp.float32)
    right_keep = (pos_w != W - 1).astype(jnp.float32)

    zero_row = jnp.zeros((W, C), jnp.float32)

    # H-padded copy of x (conv1 input). Only the 2 halo rows are zeroed; the
    # interior is fully overwritten, so no full-buffer re-zero is needed.
    xp1[0:W, :] = zero_row
    xp1[(H + 1) * W:(H + 2) * W, :] = zero_row
    xp1[W:(H + 1) * W, :] = x_ref[0].astype(jnp.float32)

    # Halo rows of the conv2-input scratch (interior written below every step).
    xp2[0:W, :] = zero_row
    xp2[(H + 1) * W:(H + 2) * W, :] = zero_row

    s1 = s1_ref[...]
    b1 = b1_ref[...]
    s2 = s2_ref[...]
    b2 = b2_ref[...]

    # ---- conv1 -> bn1 -> relu, written (H-padded) into xp2 ----
    for t in range(NT):
        acc = _conv3x3_tile(xp1, w1_ref, t, TH, W, C, left_keep, right_keep)
        h1 = jnp.maximum(acc * s1 + b1, 0.0)
        row0 = (t * TH + 1) * W
        xp2[row0:row0 + TH * W, :] = h1

    # ---- conv2 -> bn2 -> + identity -> relu -> out ----
    for t in range(NT):
        acc = _conv3x3_tile(xp2, w2_ref, t, TH, W, C, left_keep, right_keep)
        h2 = acc * s2 + b2
        start = t * TH * W
        identity = xp1[W + start:W + start + TH * W, :]   # f32 copy of x rows
        out = jnp.maximum(h2 + identity, 0.0)
        out_ref[0, start:start + TH * W, :] = out.astype(out_ref.dtype)


def _pick_row_tile(H, W, C, acc_budget_bytes=32 * 1024):
    """Largest divisor of H whose f32 accumulator (TH*W*C) fits the budget."""
    th = 1
    for cand in range(1, H + 1):
        if H % cand == 0 and cand * W * C * 4 <= acc_budget_bytes:
            th = cand
    return th


def basic_block_pallas(x_nchw, w1_oihw, g1, b1, m1, v1,
                       w2_oihw, g2, b2, m2, v2, eps=1e-5):
    """ResNet BasicBlock forward (stride=1, downsample=None, eval-mode BN).

    x_nchw: (N, C, H, W) float32; conv weights in PyTorch OIHW layout.
    Returns (N, C, H, W) float32.
    """
    N, Cin, H, W = x_nchw.shape
    Cout = w1_oihw.shape[0]
    assert Cin == Cout, "identity shortcut requires inplanes == planes"
    assert w1_oihw.shape == (Cout, Cin, 3, 3)
    assert w2_oihw.shape == (Cout, Cout, 3, 3)
    C = Cout

    # ---- plain-JAX glue: layout, bf16 cast, eval-mode BN folding ----
    x = jnp.transpose(x_nchw, (0, 2, 3, 1)).reshape(N, H * W, C)
    x = x.astype(jnp.bfloat16)                                   # halve DMA
    w1 = jnp.transpose(w1_oihw, (2, 3, 1, 0)).astype(jnp.bfloat16)  # HWIO
    w2 = jnp.transpose(w2_oihw, (2, 3, 1, 0)).astype(jnp.bfloat16)
    inv1 = lax.rsqrt(v1.astype(jnp.float32) + eps)
    inv2 = lax.rsqrt(v2.astype(jnp.float32) + eps)
    s1 = (g1 * inv1).reshape(1, C).astype(jnp.float32)
    t1 = (b1 - m1 * g1 * inv1).reshape(1, C).astype(jnp.float32)
    s2 = (g2 * inv2).reshape(1, C).astype(jnp.float32)
    t2 = (b2 - m2 * g2 * inv2).reshape(1, C).astype(jnp.float32)

    TH = _pick_row_tile(H, W, C)
    NT = H // TH

    kernel = functools.partial(_basic_block_kernel, H, W, C, TH, NT)

    flops = 2 * (2 * 9 * C * C) * N * H * W            # two 3x3 convs
    bytes_accessed = (x.size * 2 + N * H * W * C * 4
                      + (w1.size + w2.size) * 2 + 4 * C * 4)

    batch_spec = pl.BlockSpec((1, H * W, C), lambda n: (n, 0, 0))
    whole = lambda n: (0, 0, 0, 0)
    vec = lambda n: (0, 0)

    out_flat = pl.pallas_call(
        kernel,
        out_shape=jax.ShapeDtypeStruct((N, H * W, C), x_nchw.dtype),
        grid_spec=pltpu.PrefetchScalarGridSpec(
            num_scalar_prefetch=0,
            grid=(N,),
            in_specs=[
                batch_spec,                              # x (bf16)
                pl.BlockSpec((3, 3, C, C), whole),       # w1
                pl.BlockSpec((1, C), vec),               # bn1 scale
                pl.BlockSpec((1, C), vec),               # bn1 shift
                pl.BlockSpec((3, 3, C, C), whole),       # w2
                pl.BlockSpec((1, C), vec),               # bn2 scale
                pl.BlockSpec((1, C), vec),               # bn2 shift
            ],
            out_specs=batch_spec,
            scratch_shapes=[
                pltpu.VMEM(((H + 2) * W, C), jnp.float32),   # padded x
                pltpu.VMEM(((H + 2) * W, C), jnp.float32),   # padded relu(bn1(conv1))
            ],
        ),
        compiler_params=pltpu.CompilerParams(
            dimension_semantics=("parallel",)),
        cost_estimate=pl.CostEstimate(
            flops=flops, transcendentals=0, bytes_accessed=bytes_accessed),
    )(x, w1, s1, t1, w2, s2, t2)

    return jnp.transpose(out_flat.reshape(N, H, W, C), (0, 3, 1, 2))


def basic_block_reference(x_nchw, w1_oihw, g1, b1, m1, v1,
                          w2_oihw, g2, b2, m2, v2, eps=1e-5):
    """Pure-JAX reference (eval-mode BN, bf16 conv operands, f32 accumulate)."""
    x = jnp.transpose(x_nchw, (0, 2, 3, 1))
    xb = x.astype(jnp.bfloat16).astype(jnp.float32)   # kernel sees bf16 input
    w1 = jnp.transpose(w1_oihw, (2, 3, 1, 0)).astype(jnp.bfloat16)
    w2 = jnp.transpose(w2_oihw, (2, 3, 1, 0)).astype(jnp.bfloat16)
    dn = lax.conv_dimension_numbers(x.shape, w1.shape, ("NHWC", "HWIO", "NHWC"))

    def conv(inp, w):
        return lax.conv_general_dilated(
            inp.astype(jnp.bfloat16), w, (1, 1), ((1, 1), (1, 1)),
            dimension_numbers=dn, preferred_element_type=jnp.float32)

    def bn(y, g, b, m, v):
        return (y - m) * lax.rsqrt(v + eps) * g + b

    out = jax.nn.relu(bn(conv(xb, w1), g1, b1, m1, v1))
    out = bn(conv(out, w2), g2, b2, m2, v2)
    out = jax.nn.relu(out + xb)
    return jnp.transpose(out, (0, 3, 1, 2)).astype(x_nchw.dtype)


if __name__ == "__main__":
    # BasicBlock(inplanes=64, planes=64, stride=1, downsample=None)
    # -- a ResNet "layer1" block at a small spatial size.
    N, C, H, W = 2, 64, 16, 16
    key = jax.random.PRNGKey(0)
    ks = jax.random.split(key, 11)

    x = jax.random.normal(ks[0], (N, C, H, W), jnp.float32)
    w1 = 0.05 * jax.random.normal(ks[1], (C, C, 3, 3), jnp.float32)
    w2 = 0.05 * jax.random.normal(ks[2], (C, C, 3, 3), jnp.float32)
    g1 = 1.0 + 0.1 * jax.random.normal(ks[3], (C,), jnp.float32)
    b1 = 0.1 * jax.random.normal(ks[4], (C,), jnp.float32)
    m1 = 0.1 * jax.random.normal(ks[5], (C,), jnp.float32)
    v1 = 1.0 + 0.1 * jnp.abs(jax.random.normal(ks[6], (C,), jnp.float32))
    g2 = 1.0 + 0.1 * jax.random.normal(ks[7], (C,), jnp.float32)
    b2 = 0.1 * jax.random.normal(ks[8], (C,), jnp.float32)
    m2 = 0.1 * jax.random.normal(ks[9], (C,), jnp.float32)
    v2 = 1.0 + 0.1 * jnp.abs(jax.random.normal(ks[10], (C,), jnp.float32))

    out = basic_block_pallas(x, w1, g1, b1, m1, v1, w2, g2, b2, m2, v2)
    out = jax.block_until_ready(out)

    ref = basic_block_reference(x, w1, g1, b1, m1, v1, w2, g2, b2, m2, v2)
    assert out.shape == (N, C, H, W)
    err = float(jnp.max(jnp.abs(out - ref)))
    assert err < 2e-2, f"mismatch vs reference: max abs err = {err}"

    print("KERNEL_OK")
</pallas_src>

<mosaic_0001>
module attributes {stable_mosaic.version = 11 : i64} {
  func.func @_basic_block_kernel(%arg0: i32, %arg1: memref<1x256x64xbf16, #tpu.memory_space<vmem>>, %arg2: memref<3x3x64x64xbf16, #tpu.memory_space<vmem>>, %arg3: memref<1x64xf32, #tpu.memory_space<vmem>>, %arg4: memref<1x64xf32, #tpu.memory_space<vmem>>, %arg5: memref<3x3x64x64xbf16, #tpu.memory_space<vmem>>, %arg6: memref<1x64xf32, #tpu.memory_space<vmem>>, %arg7: memref<1x64xf32, #tpu.memory_space<vmem>>, %arg8: memref<1x256x64xf32, #tpu.memory_space<vmem>>, %arg9: memref<288x64xf32, #tpu.memory_space<vmem>>, %arg10: memref<288x64xf32, #tpu.memory_space<vmem>>) attributes {dimension_semantics = [#tpu.dimension_semantics<parallel>], iteration_bounds = array<i64: 2>, scalar_prefetch = 0 : i64, scratch_operands = 2 : i64, tpu.core_type = #tpu.core_type<tc>, window_params = [{transform_indices = @transform_0, window_bounds = array<i64: 1, 256, 64>}, {pipeline_mode = #tpu.pipeline_mode<synchronous>, transform_indices = @transform_1, window_bounds = array<i64: 3, 3, 64, 64>}, {pipeline_mode = #tpu.pipeline_mode<synchronous>, transform_indices = @transform_2, window_bounds = array<i64: 1, 64>}, {pipeline_mode = #tpu.pipeline_mode<synchronous>, transform_indices = @transform_3, window_bounds = array<i64: 1, 64>}, {pipeline_mode = #tpu.pipeline_mode<synchronous>, transform_indices = @transform_4, window_bounds = array<i64: 3, 3, 64, 64>}, {pipeline_mode = #tpu.pipeline_mode<synchronous>, transform_indices = @transform_5, window_bounds = array<i64: 1, 64>}, {pipeline_mode = #tpu.pipeline_mode<synchronous>, transform_indices = @transform_6, window_bounds = array<i64: 1, 64>}, {transform_indices = @transform_7, window_bounds = array<i64: 1, 256, 64>}]} {
    %0 = tpu.iota {dimensions = array<i32: 0>} : vector<160x64xi32>
    %c16_i32 = arith.constant 16 : i32
    %c0_i32 = arith.constant 0 : i32
    %1 = arith.cmpi eq, %c16_i32, %c0_i32 : i32
    %c1_i32 = arith.constant 1 : i32
    %2 = arith.select %1, %c1_i32, %c16_i32 : i32
    %3 = vector.broadcast %2 : i32 to vector<160x64xi32>
    %4 = arith.remsi %0, %3 : vector<160x64xi32>
    %c0_i32_0 = arith.constant 0 : i32
    %5 = vector.broadcast %c0_i32_0 : i32 to vector<160x64xi32>
    %6 = arith.cmpi ne, %4, %5 : vector<160x64xi32>
    %c0_i32_1 = arith.constant 0 : i32
    %7 = vector.broadcast %c0_i32_1 : i32 to vector<160x64xi32>
    %8 = arith.cmpi slt, %4, %7 : vector<160x64xi32>
    %c0_i32_2 = arith.constant 0 : i32
    %9 = arith.cmpi slt, %2, %c0_i32_2 : i32
    %10 = vector.broadcast %9 : i1 to vector<160x64xi1>
    %11 = vector.broadcast %10 : vector<160x64xi1> to vector<160x64xi1>
    %12 = arith.xori %8, %11 : vector<160x64xi1>
    %13 = arith.andi %12, %6 : vector<160x64xi1>
    %14 = vector.broadcast %2 : i32 to vector<160x64xi32>
    %15 = arith.addi %4, %14 : vector<160x64xi32>
    %16 = arith.select %13, %15, %4 : vector<160x64xi1>, vector<160x64xi32>
    %c0_i32_3 = arith.constant 0 : i32
    %17 = vector.broadcast %c0_i32_3 : i32 to vector<160x64xi32>
    %18 = arith.cmpi ne, %16, %17 : vector<160x64xi32>
    %19 = arith.extui %18 : vector<160x64xi1> to vector<160x64xi32>
    %20 = arith.sitofp %19 : vector<160x64xi32> to vector<160x64xf32>
    %c15_i32 = arith.constant 15 : i32
    %21 = vector.broadcast %c15_i32 : i32 to vector<160x64xi32>
    %22 = arith.cmpi ne, %16, %21 : vector<160x64xi32>
    %23 = arith.extui %22 : vector<160x64xi1> to vector<160x64xi32>
    %24 = arith.sitofp %23 : vector<160x64xi32> to vector<160x64xf32>
    %cst = arith.constant 0.000000e+00 : f32
    %25 = vector.broadcast %cst : f32 to vector<16x64xf32>
    %c0 = arith.constant 0 : index
    %c0_4 = arith.constant 0 : index
    %26 = vector.load %arg9[%c0, %c0_4] : memref<288x64xf32, #tpu.memory_space<vmem>>, vector<16x64xf32>
    tpu.vector_store %arg9[%c0, %c0_4], %25 {strides = array<i32>} : memref<288x64xf32, #tpu.memory_space<vmem>>, vector<16x64xf32>,
    %c272 = arith.constant 272 : index
    %c0_5 = arith.constant 0 : index
    %27 = vector.load %arg9[%c272, %c0_5] : memref<288x64xf32, #tpu.memory_space<vmem>>, vector<16x64xf32>
    tpu.vector_store %arg9[%c272, %c0_5], %25 {strides = array<i32>} : memref<288x64xf32, #tpu.memory_space<vmem>>, vector<16x64xf32>,
    %c0_6 = arith.constant 0 : index
    %c0_7 = arith.constant 0 : index
    %c0_8 = arith.constant 0 : index
    %28 = vector.load %arg1[%c0_6, %c0_7, %c0_8] : memref<1x256x64xbf16, #tpu.memory_space<vmem>>, vector<1x256x64xbf16>
    %29 = vector.shape_cast %28 : vector<1x256x64xbf16> to vector<256x64xbf16>
    %30 = arith.extf %29 : vector<256x64xbf16> to vector<256x64xf32>
    %c16 = arith.constant 16 : index
    %c0_9 = arith.constant 0 : index
    %31 = vector.load %arg9[%c16, %c0_9] : memref<288x64xf32, #tpu.memory_space<vmem>>, vector<256x64xf32>
    tpu.vector_store %arg9[%c16, %c0_9], %30 {strides = array<i32>} : memref<288x64xf32, #tpu.memory_space<vmem>>, vector<256x64xf32>,
    %c0_10 = arith.constant 0 : index
    %c0_11 = arith.constant 0 : index
    %32 = vector.load %arg10[%c0_10, %c0_11] : memref<288x64xf32, #tpu.memory_space<vmem>>, vector<16x64xf32>
    tpu.vector_store %arg10[%c0_10, %c0_11], %25 {strides = array<i32>} : memref<288x64xf32, #tpu.memory_space<vmem>>, vector<16x64xf32>,
    %c272_12 = arith.constant 272 : index
    %c0_13 = arith.constant 0 : index
    %33 = vector.load %arg10[%c272_12, %c0_13] : memref<288x64xf32, #tpu.memory_space<vmem>>, vector<16x64xf32>
    tpu.vector_store %arg10[%c272_12, %c0_13], %25 {strides = array<i32>} : memref<288x64xf32, #tpu.memory_space<vmem>>, vector<16x64xf32>,
    %c0_14 = arith.constant 0 : index
    %c0_15 = arith.constant 0 : index
    %34 = vector.load %arg3[%c0_14, %c0_15] : memref<1x64xf32, #tpu.memory_space<vmem>>, vector<1x64xf32>
    %c0_16 = arith.constant 0 : index
    %c0_17 = arith.constant 0 : index
    %35 = vector.load %arg4[%c0_16, %c0_17] : memref<1x64xf32, #tpu.memory_space<vmem>>, vector<1x64xf32>
    %c0_18 = arith.constant 0 : index
    %c0_19 = arith.constant 0 : index
    %36 = vector.load %arg6[%c0_18, %c0_19] : memref<1x64xf32, #tpu.memory_space<vmem>>, vector<1x64xf32>
    %c0_20 = arith.constant 0 : index
    %c0_21 = arith.constant 0 : index
    %37 = vector.load %arg7[%c0_20, %c0_21] : memref<1x64xf32, #tpu.memory_space<vmem>>, vector<1x64xf32>
    %c0_22 = arith.constant 0 : index
    %c0_23 = arith.constant 0 : index
    %38 = vector.load %arg9[%c0_22, %c0_23] : memref<288x64xf32, #tpu.memory_space<vmem>>, vector<160x64xf32>
    %cst_24 = arith.constant 0.000000e+00 : f32
    %39 = vector.broadcast %cst_24 : f32 to vector<128x64xf32>
    %c1_i32_25 = arith.constant 1 : i32
    %40 = tpu.dynamic_rotate %38 by %c1_i32_25 dim 0 : vector<160x64xf32>, i32 -> vector<160x64xf32>
    %41 = arith.mulf %40, %20 : vector<160x64xf32>
    %42 = arith.truncf %41 : vector<160x64xf32> to vector<160x64xbf16>
    %43 = vector.extract_strided_slice %42 {offsets = [0, 0], sizes = [128, 64], strides = [1, 1]} : vector<160x64xbf16> to vector<128x64xbf16>
    %c0_26 = arith.constant 0 : index
    %c0_27 = arith.constant 0 : index
    %c0_28 = arith.constant 0 : index
    %c0_29 = arith.constant 0 : index
    %44 = vector.load %arg2[%c0_26, %c0_27, %c0_28, %c0_29] : memref<3x3x64x64xbf16, #tpu.memory_space<vmem>>, vector<1x1x64x64xbf16>
    %45 = vector.shape_cast %44 : vector<1x1x64x64xbf16> to vector<64x64xbf16>
    %cst_30 = arith.constant dense<0.000000e+00> : vector<128x64xf32>
    %46 = tpu.matmul %43, %45, %cst_30 {dimension_numbers = #tpu.dot_dimension_numbers<[1], [0], [0], [1], [0, 0, 1, 1], [], []>} : vector<128x64xbf16>, vector<64x64xbf16>, vector<128x64xf32> -> vector<128x64xf32>
    %47 = arith.addf %39, %46 : vector<128x64xf32>
    %48 = vector.extract_strided_slice %42 {offsets = [16, 0], sizes = [128, 64], strides = [1, 1]} : vector<160x64xbf16> to vector<128x64xbf16>
    %c1 = arith.constant 1 : index
    %c0_31 = arith.constant 0 : index
    %c0_32 = arith.constant 0 : index
    %c0_33 = arith.constant 0 : index
    %49 = vector.load %arg2[%c1, %c0_31, %c0_32, %c0_33] : memref<3x3x64x64xbf16, #tpu.memory_space<vmem>>, vector<1x1x64x64xbf16>
    %50 = vector.shape_cast %49 : vector<1x1x64x64xbf16> to vector<64x64xbf16>
    %cst_34 = arith.constant dense<0.000000e+00> : vector<128x64xf32>
    %51 = tpu.matmul %48, %50, %cst_34 {dimension_numbers = #tpu.dot_dimension_numbers<[1], [0], [0], [1], [0, 0, 1, 1], [], []>} : vector<128x64xbf16>, vector<64x64xbf16>, vector<128x64xf32> -> vector<128x64xf32>
    %52 = arith.addf %47, %51 : vector<128x64xf32>
    %53 = vector.extract_strided_slice %42 {offsets = [32, 0], sizes = [128, 64], strides = [1, 1]} : vector<160x64xbf16> to vector<128x64xbf16>
    %c2 = arith.constant 2 : index
    %c0_35 = arith.constant 0 : index
    %c0_36 = arith.constant 0 : index
    %c0_37 = arith.constant 0 : index
    %54 = vector.load %arg2[%c2, %c0_35, %c0_36, %c0_37] : memref<3x3x64x64xbf16, #tpu.memory_space<vmem>>, vector<1x1x64x64xbf16>
    %55 = vector.shape_cast %54 : vector<1x1x64x64xbf16> to vector<64x64xbf16>
    %cst_38 = arith.constant dense<0.000000e+00> : vector<128x64xf32>
    %56 = tpu.matmul %53, %55, %cst_38 {dimension_numbers = #tpu.dot_dimension_numbers<[1], [0], [0], [1], [0, 0, 1, 1], [], []>} : vector<128x64xbf16>, vector<64x64xbf16>, vector<128x64xf32> -> vector<128x64xf32>
    %57 = arith.addf %52, %56 : vector<128x64xf32>
    %58 = arith.truncf %38 : vector<160x64xf32> to vector<160x64xbf16>
    %59 = vector.extract_strided_slice %58 {offsets = [0, 0], sizes = [128, 64], strides = [1, 1]} : vector<160x64xbf16> to vector<128x64xbf16>
    %c0_39 = arith.constant 0 : index
    %c1_40 = arith.constant 1 : index
    %c0_41 = arith.constant 0 : index
    %c0_42 = arith.constant 0 : index
    %60 = vector.load %arg2[%c0_39, %c1_40, %c0_41, %c0_42] : memref<3x3x64x64xbf16, #tpu.memory_space<vmem>>, vector<1x1x64x64xbf16>
    %61 = vector.shape_cast %60 : vector<1x1x64x64xbf16> to vector<64x64xbf16>
    %cst_43 = arith.constant dense<0.000000e+00> : vector<128x64xf32>
    %62 = tpu.matmul %59, %61, %cst_43 {dimension_numbers = #tpu.dot_dimension_numbers<[1], [0], [0], [1], [0, 0, 1, 1], [], []>} : vector<128x64xbf16>, vector<64x64xbf16>, vector<128x64xf32> -> vector<128x64xf32>
    %63 = arith.addf %57, %62 : vector<128x64xf32>
    %64 = vector.extract_strided_slice %58 {offsets = [16, 0], sizes = [128, 64], strides = [1, 1]} : vector<160x64xbf16> to vector<128x64xbf16>
    %c1_44 = arith.constant 1 : index
    %c1_45 = arith.constant 1 : index
    %c0_46 = arith.constant 0 : index
    %c0_47 = arith.constant 0 : index
    %65 = vector.load %arg2[%c1_44, %c1_45, %c0_46, %c0_47] : memref<3x3x64x64xbf16, #tpu.memory_space<vmem>>, vector<1x1x64x64xbf16>
    %66 = vector.shape_cast %65 : vector<1x1x64x64xbf16> to vector<64x64xbf16>
    %cst_48 = arith.constant dense<0.000000e+00> : vector<128x64xf32>
    %67 = tpu.matmul %64, %66, %cst_48 {dimension_numbers = #tpu.dot_dimension_numbers<[1], [0], [0], [1], [0, 0, 1, 1], [], []>} : vector<128x64xbf16>, vector<64x64xbf16>, vector<128x64xf32> -> vector<128x64xf32>
    %68 = arith.addf %63, %67 : vector<128x64xf32>
    %69 = vector.extract_strided_slice %58 {offsets = [32, 0], sizes = [128, 64], strides = [1, 1]} : vector<160x64xbf16> to vector<128x64xbf16>
    %c2_49 = arith.constant 2 : index
    %c1_50 = arith.constant 1 : index
    %c0_51 = arith.constant 0 : index
    %c0_52 = arith.constant 0 : index
    %70 = vector.load %arg2[%c2_49, %c1_50, %c0_51, %c0_52] : memref<3x3x64x64xbf16, #tpu.memory_space<vmem>>, vector<1x1x64x64xbf16>
    %71 = vector.shape_cast %70 : vector<1x1x64x64xbf16> to vector<64x64xbf16>
    %cst_53 = arith.constant dense<0.000000e+00> : vector<128x64xf32>
    %72 = tpu.matmul %69, %71, %cst_53 {dimension_numbers = #tpu.dot_dimension_numbers<[1], [0], [0], [1], [0, 0, 1, 1], [], []>} : vector<128x64xbf16>, vector<64x64xbf16>, vector<128x64xf32> -> vector<128x64xf32>
    %73 = arith.addf %68, %72 : vector<128x64xf32>
    %c159_i32 = arith.constant 159 : i32
    %74 = tpu.dynamic_rotate %38 by %c159_i32 dim 0 : vector<160x64xf32>, i32 -> vector<160x64xf32>
    %75 = arith.mulf %74, %24 : vector<160x64xf32>
    %76 = arith.truncf %75 : vector<160x64xf32> to vector<160x64xbf16>
    %77 = vector.extract_strided_slice %76 {offsets = [0, 0], sizes = [128, 64], strides = [1, 1]} : vector<160x64xbf16> to vector<128x64xbf16>
    %c0_54 = arith.constant 0 : index
    %c2_55 = arith.constant 2 : index
    %c0_56 = arith.constant 0 : index
    %c0_57 = arith.constant 0 : index
    %78 = vector.load %arg2[%c0_54, %c2_55, %c0_56, %c0_57] : memref<3x3x64x64xbf16, #tpu.memory_space<vmem>>, vector<1x1x64x64xbf16>
    %79 = vector.shape_cast %78 : vector<1x1x64x64xbf16> to vector<64x64xbf16>
    %cst_58 = arith.constant dense<0.000000e+00> : vector<128x64xf32>
    %80 = tpu.matmul %77, %79, %cst_58 {dimension_numbers = #tpu.dot_dimension_numbers<[1], [0], [0], [1], [0, 0, 1, 1], [], []>} : vector<128x64xbf16>, vector<64x64xbf16>, vector<128x64xf32> -> vector<128x64xf32>
    %81 = arith.addf %73, %80 : vector<128x64xf32>
    %82 = vector.extract_strided_slice %76 {offsets = [16, 0], sizes = [128, 64], strides = [1, 1]} : vector<160x64xbf16> to vector<128x64xbf16>
    %c1_59 = arith.constant 1 : index
    %c2_60 = arith.constant 2 : index
    %c0_61 = arith.constant 0 : index
    %c0_62 = arith.constant 0 : index
    %83 = vector.load %arg2[%c1_59, %c2_60, %c0_61, %c0_62] : memref<3x3x64x64xbf16, #tpu.memory_space<vmem>>, vector<1x1x64x64xbf16>
    %84 = vector.shape_cast %83 : vector<1x1x64x64xbf16> to vector<64x64xbf16>
    %cst_63 = arith.constant dense<0.000000e+00> : vector<128x64xf32>
    %85 = tpu.matmul %82, %84, %cst_63 {dimension_numbers = #tpu.dot_dimension_numbers<[1], [0], [0], [1], [0, 0, 1, 1], [], []>} : vector<128x64xbf16>, vector<64x64xbf16>, vector<128x64xf32> -> vector<128x64xf32>
    %86 = arith.addf %81, %85 : vector<128x64xf32>
    %87 = vector.extract_strided_slice %76 {offsets = [32, 0], sizes = [128, 64], strides = [1, 1]} : vector<160x64xbf16> to vector<128x64xbf16>
    %c2_64 = arith.constant 2 : index
    %c2_65 = arith.constant 2 : index
    %c0_66 = arith.constant 0 : index
    %c0_67 = arith.constant 0 : index
    %88 = vector.load %arg2[%c2_64, %c2_65, %c0_66, %c0_67] : memref<3x3x64x64xbf16, #tpu.memory_space<vmem>>, vector<1x1x64x64xbf16>
    %89 = vector.shape_cast %88 : vector<1x1x64x64xbf16> to vector<64x64xbf16>
    %cst_68 = arith.constant dense<0.000000e+00> : vector<128x64xf32>
    %90 = tpu.matmul %87, %89, %cst_68 {dimension_numbers = #tpu.dot_dimension_numbers<[1], [0], [0], [1], [0, 0, 1, 1], [], []>} : vector<128x64xbf16>, vector<64x64xbf16>, vector<128x64xf32> -> vector<128x64xf32>
    %91 = arith.addf %86, %90 : vector<128x64xf32>
    %92 = vector.broadcast %34 : vector<1x64xf32> to vector<128x64xf32>
    %93 = arith.mulf %91, %92 : vector<128x64xf32>
    %94 = vector.broadcast %35 : vector<1x64xf32> to vector<128x64xf32>
    %95 = arith.addf %93, %94 : vector<128x64xf32>
    %cst_69 = arith.constant 0.000000e+00 : f32
    %96 = vector.broadcast %cst_69 : f32 to vector<128x64xf32>
    %97 = arith.maximumf %95, %96 : vector<128x64xf32>
    %c16_70 = arith.constant 16 : index
    %c0_71 = arith.constant 0 : index
    %98 = vector.load %arg10[%c16_70, %c0_71] : memref<288x64xf32, #tpu.memory_space<vmem>>, vector<128x64xf32>
    tpu.vector_store %arg10[%c16_70, %c0_71], %97 {strides = array<i32>} : memref<288x64xf32, #tpu.memory_space<vmem>>, vector<128x64xf32>,
    %c128 = arith.constant 128 : index
    %c0_72 = arith.constant 0 : index
    %99 = vector.load %arg9[%c128, %c0_72] : memref<288x64xf32, #tpu.memory_space<vmem>>, vector<160x64xf32>
    %cst_73 = arith.constant 0.000000e+00 : f32
    %100 = vector.broadcast %cst_73 : f32 to vector<128x64xf32>
    %c1_i32_74 = arith.constant 1 : i32
    %101 = tpu.dynamic_rotate %99 by %c1_i32_74 dim 0 : vector<160x64xf32>, i32 -> vector<160x64xf32>
    %102 = arith.mulf %101, %20 : vector<160x64xf32>
    %103 = arith.truncf %102 : vector<160x64xf32> to vector<160x64xbf16>
    %104 = vector.extract_strided_slice %103 {offsets = [0, 0], sizes = [128, 64], strides = [1, 1]} : vector<160x64xbf16> to vector<128x64xbf16>
    %c0_75 = arith.constant 0 : index
    %c0_76 = arith.constant 0 : index
    %c0_77 = arith.constant 0 : index
    %c0_78 = arith.constant 0 : index
    %105 = vector.load %arg2[%c0_75, %c0_76, %c0_77, %c0_78] : memref<3x3x64x64xbf16, #tpu.memory_space<vmem>>, vector<1x1x64x64xbf16>
    %106 = vector.shape_cast %105 : vector<1x1x64x64xbf16> to vector<64x64xbf16>
    %cst_79 = arith.constant dense<0.000000e+00> : vector<128x64xf32>
    %107 = tpu.matmul %104, %106, %cst_79 {dimension_numbers = #tpu.dot_dimension_numbers<[1], [0], [0], [1], [0, 0, 1, 1], [], []>} : vector<128x64xbf16>, vector<64x64xbf16>, vector<128x64xf32> -> vector<128x64xf32>
    %108 = arith.addf %100, %107 : vector<128x64xf32>
    %109 = vector.extract_strided_slice %103 {offsets = [16, 0], sizes = [128, 64], strides = [1, 1]} : vector<160x64xbf16> to vector<128x64xbf16>
    %c1_80 = arith.constant 1 : index
    %c0_81 = arith.constant 0 : index
    %c0_82 = arith.constant 0 : index
    %c0_83 = arith.constant 0 : index
    %110 = vector.load %arg2[%c1_80, %c0_81, %c0_82, %c0_83] : memref<3x3x64x64xbf16, #tpu.memory_space<vmem>>, vector<1x1x64x64xbf16>
    %111 = vector.shape_cast %110 : vector<1x1x64x64xbf16> to vector<64x64xbf16>
    %cst_84 = arith.constant dense<0.000000e+00> : vector<128x64xf32>
    %112 = tpu.matmul %109, %111, %cst_84 {dimension_numbers = #tpu.dot_dimension_numbers<[1], [0], [0], [1], [0, 0, 1, 1], [], []>} : vector<128x64xbf16>, vector<64x64xbf16>, vector<128x64xf32> -> vector<128x64xf32>
    %113 = arith.addf %108, %112 : vector<128x64xf32>
    %114 = vector.extract_strided_slice %103 {offsets = [32, 0], sizes = [128, 64], strides = [1, 1]} : vector<160x64xbf16> to vector<128x64xbf16>
    %c2_85 = arith.constant 2 : index
    %c0_86 = arith.constant 0 : index
    %c0_87 = arith.constant 0 : index
    %c0_88 = arith.constant 0 : index
    %115 = vector.load %arg2[%c2_85, %c0_86, %c0_87, %c0_88] : memref<3x3x64x64xbf16, #tpu.memory_space<vmem>>, vector<1x1x64x64xbf16>
    %116 = vector.shape_cast %115 : vector<1x1x64x64xbf16> to vector<64x64xbf16>
    %cst_89 = arith.constant dense<0.000000e+00> : vector<128x64xf32>
    %117 = tpu.matmul %114, %116, %cst_89 {dimension_numbers = #tpu.dot_dimension_numbers<[1], [0], [0], [1], [0, 0, 1, 1], [], []>} : vector<128x64xbf16>, vector<64x64xbf16>, vector<128x64xf32> -> vector<128x64xf32>
    %118 = arith.addf %113, %117 : vector<128x64xf32>
    %119 = arith.truncf %99 : vector<160x64xf32> to vector<160x64xbf16>
    %120 = vector.extract_strided_slice %119 {offsets = [0, 0], sizes = [128, 64], strides = [1, 1]} : vector<160x64xbf16> to vector<128x64xbf16>
    %c0_90 = arith.constant 0 : index
    %c1_91 = arith.constant 1 : index
    %c0_92 = arith.constant 0 : index
    %c0_93 = arith.constant 0 : index
    %121 = vector.load %arg2[%c0_90, %c1_91, %c0_92, %c0_93] : memref<3x3x64x64xbf16, #tpu.memory_space<vmem>>, vector<1x1x64x64xbf16>
    %122 = vector.shape_cast %121 : vector<1x1x64x64xbf16> to vector<64x64xbf16>
    %cst_94 = arith.constant dense<0.000000e+00> : vector<128x64xf32>
    %123 = tpu.matmul %120, %122, %cst_94 {dimension_numbers = #tpu.dot_dimension_numbers<[1], [0], [0], [1], [0, 0, 1, 1], [], []>} : vector<128x64xbf16>, vector<64x64xbf16>, vector<128x64xf32> -> vector<128x64xf32>
    %124 = arith.addf %118, %123 : vector<128x64xf32>
    %125 = vector.extract_strided_slice %119 {offsets = [16, 0], sizes = [128, 64], strides = [1, 1]} : vector<160x64xbf16> to vector<128x64xbf16>
    %c1_95 = arith.constant 1 : index
    %c1_96 = arith.constant 1 : index
    %c0_97 = arith.constant 0 : index
    %c0_98 = arith.constant 0 : index
    %126 = vector.load %arg2[%c1_95, %c1_96, %c0_97, %c0_98] : memref<3x3x64x64xbf16, #tpu.memory_space<vmem>>, vector<1x1x64x64xbf16>
    %127 = vector.shape_cast %126 : vector<1x1x64x64xbf16> to vector<64x64xbf16>
    %cst_99 = arith.constant dense<0.000000e+00> : vector<128x64xf32>
    %128 = tpu.matmul %125, %127, %cst_99 {dimension_numbers = #tpu.dot_dimension_numbers<[1], [0], [0], [1], [0, 0, 1, 1], [], []>} : vector<128x64xbf16>, vector<64x64xbf16>, vector<128x64xf32> -> vector<128x64xf32>
    %129 = arith.addf %124, %128 : vector<128x64xf32>
    %130 = vector.extract_strided_slice %119 {offsets = [32, 0], sizes = [128, 64], strides = [1, 1]} : vector<160x64xbf16> to vector<128x64xbf16>
    %c2_100 = arith.constant 2 : index
    %c1_101 = arith.constant 1 : index
    %c0_102 = arith.constant 0 : index
    %c0_103 = arith.constant 0 : index
    %131 = vector.load %arg2[%c2_100, %c1_101, %c0_102, %c0_103] : memref<3x3x64x64xbf16, #tpu.memory_space<vmem>>, vector<1x1x64x64xbf16>
    %132 = vector.shape_cast %131 : vector<1x1x64x64xbf16> to vector<64x64xbf16>
    %cst_104 = arith.constant dense<0.000000e+00> : vector<128x64xf32>
    %133 = tpu.matmul %130, %132, %cst_104 {dimension_numbers = #tpu.dot_dimension_numbers<[1], [0], [0], [1], [0, 0, 1, 1], [], []>} : vector<128x64xbf16>, vector<64x64xbf16>, vector<128x64xf32> -> vector<128x64xf32>
    %134 = arith.addf %129, %133 : vector<128x64xf32>
    %c159_i32_105 = arith.constant 159 : i32
    %135 = tpu.dynamic_rotate %99 by %c159_i32_105 dim 0 : vector<160x64xf32>, i32 -> vector<160x64xf32>
    %136 = arith.mulf %135, %24 : vector<160x64xf32>
    %137 = arith.truncf %136 : vector<160x64xf32> to vector<160x64xbf16>
    %138 = vector.extract_strided_slice %137 {offsets = [0, 0], sizes = [128, 64], strides = [1, 1]} : vector<160x64xbf16> to vector<128x64xbf16>
    %c0_106 = arith.constant 0 : index
    %c2_107 = arith.constant 2 : index
    %c0_108 = arith.constant 0 : index
    %c0_109 = arith.constant 0 : index
    %139 = vector.load %arg2[%c0_106, %c2_107, %c0_108, %c0_109] : memref<3x3x64x64xbf16, #tpu.memory_space<vmem>>, vector<1x1x64x64xbf16>
    %140 = vector.shape_cast %139 : vector<1x1x64x64xbf16> to vector<64x64xbf16>
    %cst_110 = arith.constant dense<0.000000e+00> : vector<128x64xf32>
    %141 = tpu.matmul %138, %140, %cst_110 {dimension_numbers = #tpu.dot_dimension_numbers<[1], [0], [0], [1], [0, 0, 1, 1], [], []>} : vector<128x64xbf16>, vector<64x64xbf16>, vector<128x64xf32> -> vector<128x64xf32>
    %142 = arith.addf %134, %141 : vector<128x64xf32>
    %143 = vector.extract_strided_slice %137 {offsets = [16, 0], sizes = [128, 64], strides = [1, 1]} : vector<160x64xbf16> to vector<128x64xbf16>
    %c1_111 = arith.constant 1 : index
    %c2_112 = arith.constant 2 : index
    %c0_113 = arith.constant 0 : index
    %c0_114 = arith.constant 0 : index
    %144 = vector.load %arg2[%c1_111, %c2_112, %c0_113, %c0_114] : memref<3x3x64x64xbf16, #tpu.memory_space<vmem>>, vector<1x1x64x64xbf16>
    %145 = vector.shape_cast %144 : vector<1x1x64x64xbf16> to vector<64x64xbf16>
    %cst_115 = arith.constant dense<0.000000e+00> : vector<128x64xf32>
    %146 = tpu.matmul %143, %145, %cst_115 {dimension_numbers = #tpu.dot_dimension_numbers<[1], [0], [0], [1], [0, 0, 1, 1], [], []>} : vector<128x64xbf16>, vector<64x64xbf16>, vector<128x64xf32> -> vector<128x64xf32>
    %147 = arith.addf %142, %146 : vector<128x64xf32>
    %148 = vector.extract_strided_slice %137 {offsets = [32, 0], sizes = [128, 64], strides = [1, 1]} : vector<160x64xbf16> to vector<128x64xbf16>
    %c2_116 = arith.constant 2 : index
    %c2_117 = arith.constant 2 : index
    %c0_118 = arith.constant 0 : index
    %c0_119 = arith.constant 0 : index
    %149 = vector.load %arg2[%c2_116, %c2_117, %c0_118, %c0_119] : memref<3x3x64x64xbf16, #tpu.memory_space<vmem>>, vector<1x1x64x64xbf16>
    %150 = vector.shape_cast %149 : vector<1x1x64x64xbf16> to vector<64x64xbf16>
    %cst_120 = arith.constant dense<0.000000e+00> : vector<128x64xf32>
    %151 = tpu.matmul %148, %150, %cst_120 {dimension_numbers = #tpu.dot_dimension_numbers<[1], [0], [0], [1], [0, 0, 1, 1], [], []>} : vector<128x64xbf16>, vector<64x64xbf16>, vector<128x64xf32> -> vector<128x64xf32>
    %152 = arith.addf %147, %151 : vector<128x64xf32>
    %153 = vector.broadcast %34 : vector<1x64xf32> to vector<128x64xf32>
    %154 = arith.mulf %152, %153 : vector<128x64xf32>
    %155 = vector.broadcast %35 : vector<1x64xf32> to vector<128x64xf32>
    %156 = arith.addf %154, %155 : vector<128x64xf32>
    %cst_121 = arith.constant 0.000000e+00 : f32
    %157 = vector.broadcast %cst_121 : f32 to vector<128x64xf32>
    %158 = arith.maximumf %156, %157 : vector<128x64xf32>
    %c144 = arith.constant 144 : index
    %c0_122 = arith.constant 0 : index
    %159 = vector.load %arg10[%c144, %c0_122] : memref<288x64xf32, #tpu.memory_space<vmem>>, vector<128x64xf32>
    tpu.vector_store %arg10[%c144, %c0_122], %158 {strides = array<i32>} : memref<288x64xf32, #tpu.memory_space<vmem>>, vector<128x64xf32>,
    %c0_123 = arith.constant 0 : index
    %c0_124 = arith.constant 0 : index
    %160 = vector.load %arg10[%c0_123, %c0_124] : memref<288x64xf32, #tpu.memory_space<vmem>>, vector<160x64xf32>
    %cst_125 = arith.constant 0.000000e+00 : f32
    %161 = vector.broadcast %cst_125 : f32 to vector<128x64xf32>
    %c1_i32_126 = arith.constant 1 : i32
    %162 = tpu.dynamic_rotate %160 by %c1_i32_126 dim 0 : vector<160x64xf32>, i32 -> vector<160x64xf32>
    %163 = arith.mulf %162, %20 : vector<160x64xf32>
    %164 = arith.truncf %163 : vector<160x64xf32> to vector<160x64xbf16>
    %165 = vector.extract_strided_slice %164 {offsets = [0, 0], sizes = [128, 64], strides = [1, 1]} : vector<160x64xbf16> to vector<128x64xbf16>
    %c0_127 = arith.constant 0 : index
    %c0_128 = arith.constant 0 : index
    %c0_129 = arith.constant 0 : index
    %c0_130 = arith.constant 0 : index
    %166 = vector.load %arg5[%c0_127, %c0_128, %c0_129, %c0_130] : memref<3x3x64x64xbf16, #tpu.memory_space<vmem>>, vector<1x1x64x64xbf16>
    %167 = vector.shape_cast %166 : vector<1x1x64x64xbf16> to vector<64x64xbf16>
    %cst_131 = arith.constant dense<0.000000e+00> : vector<128x64xf32>
    %168 = tpu.matmul %165, %167, %cst_131 {dimension_numbers = #tpu.dot_dimension_numbers<[1], [0], [0], [1], [0, 0, 1, 1], [], []>} : vector<128x64xbf16>, vector<64x64xbf16>, vector<128x64xf32> -> vector<128x64xf32>
    %169 = arith.addf %161, %168 : vector<128x64xf32>
    %170 = vector.extract_strided_slice %164 {offsets = [16, 0], sizes = [128, 64], strides = [1, 1]} : vector<160x64xbf16> to vector<128x64xbf16>
    %c1_132 = arith.constant 1 : index
    %c0_133 = arith.constant 0 : index
    %c0_134 = arith.constant 0 : index
    %c0_135 = arith.constant 0 : index
    %171 = vector.load %arg5[%c1_132, %c0_133, %c0_134, %c0_135] : memref<3x3x64x64xbf16, #tpu.memory_space<vmem>>, vector<1x1x64x64xbf16>
    %172 = vector.shape_cast %171 : vector<1x1x64x64xbf16> to vector<64x64xbf16>
    %cst_136 = arith.constant dense<0.000000e+00> : vector<128x64xf32>
    %173 = tpu.matmul %170, %172, %cst_136 {dimension_numbers = #tpu.dot_dimension_numbers<[1], [0], [0], [1], [0, 0, 1, 1], [], []>} : vector<128x64xbf16>, vector<64x64xbf16>, vector<128x64xf32> -> vector<128x64xf32>
    %174 = arith.addf %169, %173 : vector<128x64xf32>
    %175 = vector.extract_strided_slice %164 {offsets = [32, 0], sizes = [128, 64], strides = [1, 1]} : vector<160x64xbf16> to vector<128x64xbf16>
    %c2_137 = arith.constant 2 : index
    %c0_138 = arith.constant 0 : index
    %c0_139 = arith.constant 0 : index
    %c0_140 = arith.constant 0 : index
    %176 = vector.load %arg5[%c2_137, %c0_138, %c0_139, %c0_140] : memref<3x3x64x64xbf16, #tpu.memory_space<vmem>>, vector<1x1x64x64xbf16>
    %177 = vector.shape_cast %176 : vector<1x1x64x64xbf16> to vector<64x64xbf16>
    %cst_141 = arith.constant dense<0.000000e+00> : vector<128x64xf32>
    %178 = tpu.matmul %175, %177, %cst_141 {dimension_numbers = #tpu.dot_dimension_numbers<[1], [0], [0], [1], [0, 0, 1, 1], [], []>} : vector<128x64xbf16>, vector<64x64xbf16>, vector<128x64xf32> -> vector<128x64xf32>
    %179 = arith.addf %174, %178 : vector<128x64xf32>
    %180 = arith.truncf %160 : vector<160x64xf32> to vector<160x64xbf16>
    %181 = vector.extract_strided_slice %180 {offsets = [0, 0], sizes = [128, 64], strides = [1, 1]} : vector<160x64xbf16> to vector<128x64xbf16>
    %c0_142 = arith.constant 0 : index
    %c1_143 = arith.constant 1 : index
    %c0_144 = arith.constant 0 : index
    %c0_145 = arith.constant 0 : index
    %182 = vector.load %arg5[%c0_142, %c1_143, %c0_144, %c0_145] : memref<3x3x64x64xbf16, #tpu.memory_space<vmem>>, vector<1x1x64x64xbf16>
    %183 = vector.shape_cast %182 : vector<1x1x64x64xbf16> to vector<64x64xbf16>
    %cst_146 = arith.constant dense<0.000000e+00> : vector<128x64xf32>
    %184 = tpu.matmul %181, %183, %cst_146 {dimension_numbers = #tpu.dot_dimension_numbers<[1], [0], [0], [1], [0, 0, 1, 1], [], []>} : vector<128x64xbf16>, vector<64x64xbf16>, vector<128x64xf32> -> vector<128x64xf32>
    %185 = arith.addf %179, %184 : vector<128x64xf32>
    %186 = vector.extract_strided_slice %180 {offsets = [16, 0], sizes = [128, 64], strides = [1, 1]} : vector<160x64xbf16> to vector<128x64xbf16>
    %c1_147 = arith.constant 1 : index
    %c1_148 = arith.constant 1 : index
    %c0_149 = arith.constant 0 : index
    %c0_150 = arith.constant 0 : index
    %187 = vector.load %arg5[%c1_147, %c1_148, %c0_149, %c0_150] : memref<3x3x64x64xbf16, #tpu.memory_space<vmem>>, vector<1x1x64x64xbf16>
    %188 = vector.shape_cast %187 : vector<1x1x64x64xbf16> to vector<64x64xbf16>
    %cst_151 = arith.constant dense<0.000000e+00> : vector<128x64xf32>
    %189 = tpu.matmul %186, %188, %cst_151 {dimension_numbers = #tpu.dot_dimension_numbers<[1], [0], [0], [1], [0, 0, 1, 1], [], []>} : vector<128x64xbf16>, vector<64x64xbf16>, vector<128x64xf32> -> vector<128x64xf32>
    %190 = arith.addf %185, %189 : vector<128x64xf32>
    %191 = vector.extract_strided_slice %180 {offsets = [32, 0], sizes = [128, 64], strides = [1, 1]} : vector<160x64xbf16> to vector<128x64xbf16>
    %c2_152 = arith.constant 2 : index
    %c1_153 = arith.constant 1 : index
    %c0_154 = arith.constant 0 : index
    %c0_155 = arith.constant 0 : index
    %192 = vector.load %arg5[%c2_152, %c1_153, %c0_154, %c0_155] : memref<3x3x64x64xbf16, #tpu.memory_space<vmem>>, vector<1x1x64x64xbf16>
    %193 = vector.shape_cast %192 : vector<1x1x64x64xbf16> to vector<64x64xbf16>
    %cst_156 = arith.constant dense<0.000000e+00> : vector<128x64xf32>
    %194 = tpu.matmul %191, %193, %cst_156 {dimension_numbers = #tpu.dot_dimension_numbers<[1], [0], [0], [1], [0, 0, 1, 1], [], []>} : vector<128x64xbf16>, vector<64x64xbf16>, vector<128x64xf32> -> vector<128x64xf32>
    %195 = arith.addf %190, %194 : vector<128x64xf32>
    %c159_i32_157 = arith.constant 159 : i32
    %196 = tpu.dynamic_rotate %160 by %c159_i32_157 dim 0 : vector<160x64xf32>, i32 -> vector<160x64xf32>
    %197 = arith.mulf %196, %24 : vector<160x64xf32>
    %198 = arith.truncf %197 : vector<160x64xf32> to vector<160x64xbf16>
    %199 = vector.extract_strided_slice %198 {offsets = [0, 0], sizes = [128, 64], strides = [1, 1]} : vector<160x64xbf16> to vector<128x64xbf16>
    %c0_158 = arith.constant 0 : index
    %c2_159 = arith.constant 2 : index
    %c0_160 = arith.constant 0 : index
    %c0_161 = arith.constant 0 : index
    %200 = vector.load %arg5[%c0_158, %c2_159, %c0_160, %c0_161] : memref<3x3x64x64xbf16, #tpu.memory_space<vmem>>, vector<1x1x64x64xbf16>
    %201 = vector.shape_cast %200 : vector<1x1x64x64xbf16> to vector<64x64xbf16>
    %cst_162 = arith.constant dense<0.000000e+00> : vector<128x64xf32>
    %202 = tpu.matmul %199, %201, %cst_162 {dimension_numbers = #tpu.dot_dimension_numbers<[1], [0], [0], [1], [0, 0, 1, 1], [], []>} : vector<128x64xbf16>, vector<64x64xbf16>, vector<128x64xf32> -> vector<128x64xf32>
    %203 = arith.addf %195, %202 : vector<128x64xf32>
    %204 = vector.extract_strided_slice %198 {offsets = [16, 0], sizes = [128, 64], strides = [1, 1]} : vector<160x64xbf16> to vector<128x64xbf16>
    %c1_163 = arith.constant 1 : index
    %c2_164 = arith.constant 2 : index
    %c0_165 = arith.constant 0 : index
    %c0_166 = arith.constant 0 : index
    %205 = vector.load %arg5[%c1_163, %c2_164, %c0_165, %c0_166] : memref<3x3x64x64xbf16, #tpu.memory_space<vmem>>, vector<1x1x64x64xbf16>
    %206 = vector.shape_cast %205 : vector<1x1x64x64xbf16> to vector<64x64xbf16>
    %cst_167 = arith.constant dense<0.000000e+00> : vector<128x64xf32>
    %207 = tpu.matmul %204, %206, %cst_167 {dimension_numbers = #tpu.dot_dimension_numbers<[1], [0], [0], [1], [0, 0, 1, 1], [], []>} : vector<128x64xbf16>, vector<64x64xbf16>, vector<128x64xf32> -> vector<128x64xf32>
    %208 = arith.addf %203, %207 : vector<128x64xf32>
    %209 = vector.extract_strided_slice %198 {offsets = [32, 0], sizes = [128, 64], strides = [1, 1]} : vector<160x64xbf16> to vector<128x64xbf16>
    %c2_168 = arith.constant 2 : index
    %c2_169 = arith.constant 2 : index
    %c0_170 = arith.constant 0 : index
    %c0_171 = arith.constant 0 : index
    %210 = vector.load %arg5[%c2_168, %c2_169, %c0_170, %c0_171] : memref<3x3x64x64xbf16, #tpu.memory_space<vmem>>, vector<1x1x64x64xbf16>
    %211 = vector.shape_cast %210 : vector<1x1x64x64xbf16> to vector<64x64xbf16>
    %cst_172 = arith.constant dense<0.000000e+00> : vector<128x64xf32>
    %212 = tpu.matmul %209, %211, %cst_172 {dimension_numbers = #tpu.dot_dimension_numbers<[1], [0], [0], [1], [0, 0, 1, 1], [], []>} : vector<128x64xbf16>, vector<64x64xbf16>, vector<128x64xf32> -> vector<128x64xf32>
    %213 = arith.addf %208, %212 : vector<128x64xf32>
    %214 = vector.broadcast %36 : vector<1x64xf32> to vector<128x64xf32>
    %215 = arith.mulf %213, %214 : vector<128x64xf32>
    %216 = vector.broadcast %37 : vector<1x64xf32> to vector<128x64xf32>
    %217 = arith.addf %215, %216 : vector<128x64xf32>
    %c16_173 = arith.constant 16 : index
    %c0_174 = arith.constant 0 : index
    %218 = vector.load %arg9[%c16_173, %c0_174] : memref<288x64xf32, #tpu.memory_space<vmem>>, vector<128x64xf32>
    %219 = arith.addf %217, %218 : vector<128x64xf32>
    %cst_175 = arith.constant 0.000000e+00 : f32
    %220 = vector.broadcast %cst_175 : f32 to vector<128x64xf32>
    %221 = arith.maximumf %219, %220 : vector<128x64xf32>
    %c0_176 = arith.constant 0 : index
    %c0_177 = arith.constant 0 : index
    %c0_178 = arith.constant 0 : index
    %222 = vector.load %arg8[%c0_176, %c0_177, %c0_178] : memref<1x256x64xf32, #tpu.memory_space<vmem>>, vector<1x128x64xf32>
    %223 = vector.shape_cast %222 : vector<1x128x64xf32> to vector<128x64xf32>
    %224 = vector.shape_cast %221 : vector<128x64xf32> to vector<1x128x64xf32>
    tpu.vector_store %arg8[%c0_176, %c0_177, %c0_178], %224 {strides = array<i32>} : memref<1x256x64xf32, #tpu.memory_space<vmem>>, vector<1x128x64xf32>,
    %c128_179 = arith.constant 128 : index
    %c0_180 = arith.constant 0 : index
    %225 = vector.load %arg10[%c128_179, %c0_180] : memref<288x64xf32, #tpu.memory_space<vmem>>, vector<160x64xf32>
    %cst_181 = arith.constant 0.000000e+00 : f32
    %226 = vector.broadcast %cst_181 : f32 to vector<128x64xf32>
    %c1_i32_182 = arith.constant 1 : i32
    %227 = tpu.dynamic_rotate %225 by %c1_i32_182 dim 0 : vector<160x64xf32>, i32 -> vector<160x64xf32>
    %228 = arith.mulf %227, %20 : vector<160x64xf32>
    %229 = arith.truncf %228 : vector<160x64xf32> to vector<160x64xbf16>
    %230 = vector.extract_strided_slice %229 {offsets = [0, 0], sizes = [128, 64], strides = [1, 1]} : vector<160x64xbf16> to vector<128x64xbf16>
    %c0_183 = arith.constant 0 : index
    %c0_184 = arith.constant 0 : index
    %c0_185 = arith.constant 0 : index
    %c0_186 = arith.constant 0 : index
    %231 = vector.load %arg5[%c0_183, %c0_184, %c0_185, %c0_186] : memref<3x3x64x64xbf16, #tpu.memory_space<vmem>>, vector<1x1x64x64xbf16>
    %232 = vector.shape_cast %231 : vector<1x1x64x64xbf16> to vector<64x64xbf16>
    %cst_187 = arith.constant dense<0.000000e+00> : vector<128x64xf32>
    %233 = tpu.matmul %230, %232, %cst_187 {dimension_numbers = #tpu.dot_dimension_numbers<[1], [0], [0], [1], [0, 0, 1, 1], [], []>} : vector<128x64xbf16>, vector<64x64xbf16>, vector<128x64xf32> -> vector<128x64xf32>
    %234 = arith.addf %226, %233 : vector<128x64xf32>
    %235 = vector.extract_strided_slice %229 {offsets = [16, 0], sizes = [128, 64], strides = [1, 1]} : vector<160x64xbf16> to vector<128x64xbf16>
    %c1_188 = arith.constant 1 : index
    %c0_189 = arith.constant 0 : index
    %c0_190 = arith.constant 0 : index
    %c0_191 = arith.constant 0 : index
    %236 = vector.load %arg5[%c1_188, %c0_189, %c0_190, %c0_191] : memref<3x3x64x64xbf16, #tpu.memory_space<vmem>>, vector<1x1x64x64xbf16>
    %237 = vector.shape_cast %236 : vector<1x1x64x64xbf16> to vector<64x64xbf16>
    %cst_192 = arith.constant dense<0.000000e+00> : vector<128x64xf32>
    %238 = tpu.matmul %235, %237, %cst_192 {dimension_numbers = #tpu.dot_dimension_numbers<[1], [0], [0], [1], [0, 0, 1, 1], [], []>} : vector<128x64xbf16>, vector<64x64xbf16>, vector<128x64xf32> -> vector<128x64xf32>
    %239 = arith.addf %234, %238 : vector<128x64xf32>
    %240 = vector.extract_strided_slice %229 {offsets = [32, 0], sizes = [128, 64], strides = [1, 1]} : vector<160x64xbf16> to vector<128x64xbf16>
    %c2_193 = arith.constant 2 : index
    %c0_194 = arith.constant 0 : index
    %c0_195 = arith.constant 0 : index
    %c0_196 = arith.constant 0 : index
    %241 = vector.load %arg5[%c2_193, %c0_194, %c0_195, %c0_196] : memref<3x3x64x64xbf16, #tpu.memory_space<vmem>>, vector<1x1x64x64xbf16>
    %242 = vector.shape_cast %241 : vector<1x1x64x64xbf16> to vector<64x64xbf16>
    %cst_197 = arith.constant dense<0.000000e+00> : vector<128x64xf32>
    %243 = tpu.matmul %240, %242, %cst_197 {dimension_numbers = #tpu.dot_dimension_numbers<[1], [0], [0], [1], [0, 0, 1, 1], [], []>} : vector<128x64xbf16>, vector<64x64xbf16>, vector<128x64xf32> -> vector<128x64xf32>
    %244 = arith.addf %239, %243 : vector<128x64xf32>
    %245 = arith.truncf %225 : vector<160x64xf32> to vector<160x64xbf16>
    %246 = vector.extract_strided_slice %245 {offsets = [0, 0], sizes = [128, 64], strides = [1, 1]} : vector<160x64xbf16> to vector<128x64xbf16>
    %c0_198 = arith.constant 0 : index
    %c1_199 = arith.constant 1 : index
    %c0_200 = arith.constant 0 : index
    %c0_201 = arith.constant 0 : index
    %247 = vector.load %arg5[%c0_198, %c1_199, %c0_200, %c0_201] : memref<3x3x64x64xbf16, #tpu.memory_space<vmem>>, vector<1x1x64x64xbf16>
    %248 = vector.shape_cast %247 : vector<1x1x64x64xbf16> to vector<64x64xbf16>
    %cst_202 = arith.constant dense<0.000000e+00> : vector<128x64xf32>
    %249 = tpu.matmul %246, %248, %cst_202 {dimension_numbers = #tpu.dot_dimension_numbers<[1], [0], [0], [1], [0, 0, 1, 1], [], []>} : vector<128x64xbf16>, vector<64x64xbf16>, vector<128x64xf32> -> vector<128x64xf32>
    %250 = arith.addf %244, %249 : vector<128x64xf32>
    %251 = vector.extract_strided_slice %245 {offsets = [16, 0], sizes = [128, 64], strides = [1, 1]} : vector<160x64xbf16> to vector<128x64xbf16>
    %c1_203 = arith.constant 1 : index
    %c1_204 = arith.constant 1 : index
    %c0_205 = arith.constant 0 : index
    %c0_206 = arith.constant 0 : index
    %252 = vector.load %arg5[%c1_203, %c1_204, %c0_205, %c0_206] : memref<3x3x64x64xbf16, #tpu.memory_space<vmem>>, vector<1x1x64x64xbf16>
    %253 = vector.shape_cast %252 : vector<1x1x64x64xbf16> to vector<64x64xbf16>
    %cst_207 = arith.constant dense<0.000000e+00> : vector<128x64xf32>
    %254 = tpu.matmul %251, %253, %cst_207 {dimension_numbers = #tpu.dot_dimension_numbers<[1], [0], [0], [1], [0, 0, 1, 1], [], []>} : vector<128x64xbf16>, vector<64x64xbf16>, vector<128x64xf32> -> vector<128x64xf32>
    %255 = arith.addf %250, %254 : vector<128x64xf32>
    %256 = vector.extract_strided_slice %245 {offsets = [32, 0], sizes = [128, 64], strides = [1, 1]} : vector<160x64xbf16> to vector<128x64xbf16>
    %c2_208 = arith.constant 2 : index
    %c1_209 = arith.constant 1 : index
    %c0_210 = arith.constant 0 : index
    %c0_211 = arith.constant 0 : index
    %257 = vector.load %arg5[%c2_208, %c1_209, %c0_210, %c0_211] : memref<3x3x64x64xbf16, #tpu.memory_space<vmem>>, vector<1x1x64x64xbf16>
    %258 = vector.shape_cast %257 : vector<1x1x64x64xbf16> to vector<64x64xbf16>
    %cst_212 = arith.constant dense<0.000000e+00> : vector<128x64xf32>
    %259 = tpu.matmul %256, %258, %cst_212 {dimension_numbers = #tpu.dot_dimension_numbers<[1], [0], [0], [1], [0, 0, 1, 1], [], []>} : vector<128x64xbf16>, vector<64x64xbf16>, vector<128x64xf32> -> vector<128x64xf32>
    %260 = arith.addf %255, %259 : vector<128x64xf32>
    %c159_i32_213 = arith.constant 159 : i32
    %261 = tpu.dynamic_rotate %225 by %c159_i32_213 dim 0 : vector<160x64xf32>, i32 -> vector<160x64xf32>
    %262 = arith.mulf %261, %24 : vector<160x64xf32>
    %263 = arith.truncf %262 : vector<160x64xf32> to vector<160x64xbf16>
    %264 = vector.extract_strided_slice %263 {offsets = [0, 0], sizes = [128, 64], strides = [1, 1]} : vector<160x64xbf16> to vector<128x64xbf16>
    %c0_214 = arith.constant 0 : index
    %c2_215 = arith.constant 2 : index
    %c0_216 = arith.constant 0 : index
    %c0_217 = arith.constant 0 : index
    %265 = vector.load %arg5[%c0_214, %c2_215, %c0_216, %c0_217] : memref<3x3x64x64xbf16, #tpu.memory_space<vmem>>, vector<1x1x64x64xbf16>
    %266 = vector.shape_cast %265 : vector<1x1x64x64xbf16> to vector<64x64xbf16>
    %cst_218 = arith.constant dense<0.000000e+00> : vector<128x64xf32>
    %267 = tpu.matmul %264, %266, %cst_218 {dimension_numbers = #tpu.dot_dimension_numbers<[1], [0], [0], [1], [0, 0, 1, 1], [], []>} : vector<128x64xbf16>, vector<64x64xbf16>, vector<128x64xf32> -> vector<128x64xf32>
    %268 = arith.addf %260, %267 : vector<128x64xf32>
    %269 = vector.extract_strided_slice %263 {offsets = [16, 0], sizes = [128, 64], strides = [1, 1]} : vector<160x64xbf16> to vector<128x64xbf16>
    %c1_219 = arith.constant 1 : index
    %c2_220 = arith.constant 2 : index
    %c0_221 = arith.constant 0 : index
    %c0_222 = arith.constant 0 : index
    %270 = vector.load %arg5[%c1_219, %c2_220, %c0_221, %c0_222] : memref<3x3x64x64xbf16, #tpu.memory_space<vmem>>, vector<1x1x64x64xbf16>
    %271 = vector.shape_cast %270 : vector<1x1x64x64xbf16> to vector<64x64xbf16>
    %cst_223 = arith.constant dense<0.000000e+00> : vector<128x64xf32>
    %272 = tpu.matmul %269, %271, %cst_223 {dimension_numbers = #tpu.dot_dimension_numbers<[1], [0], [0], [1], [0, 0, 1, 1], [], []>} : vector<128x64xbf16>, vector<64x64xbf16>, vector<128x64xf32> -> vector<128x64xf32>
    %273 = arith.addf %268, %272 : vector<128x64xf32>
    %274 = vector.extract_strided_slice %263 {offsets = [32, 0], sizes = [128, 64], strides = [1, 1]} : vector<160x64xbf16> to vector<128x64xbf16>
    %c2_224 = arith.constant 2 : index
    %c2_225 = arith.constant 2 : index
    %c0_226 = arith.constant 0 : index
    %c0_227 = arith.constant 0 : index
    %275 = vector.load %arg5[%c2_224, %c2_225, %c0_226, %c0_227] : memref<3x3x64x64xbf16, #tpu.memory_space<vmem>>, vector<1x1x64x64xbf16>
    %276 = vector.shape_cast %275 : vector<1x1x64x64xbf16> to vector<64x64xbf16>
    %cst_228 = arith.constant dense<0.000000e+00> : vector<128x64xf32>
    %277 = tpu.matmul %274, %276, %cst_228 {dimension_numbers = #tpu.dot_dimension_numbers<[1], [0], [0], [1], [0, 0, 1, 1], [], []>} : vector<128x64xbf16>, vector<64x64xbf16>, vector<128x64xf32> -> vector<128x64xf32>
    %278 = arith.addf %273, %277 : vector<128x64xf32>
    %279 = vector.broadcast %36 : vector<1x64xf32> to vector<128x64xf32>
    %280 = arith.mulf %278, %279 : vector<128x64xf32>
    %281 = vector.broadcast %37 : vector<1x64xf32> to vector<128x64xf32>
    %282 = arith.addf %280, %281 : vector<128x64xf32>
    %c144_229 = arith.constant 144 : index
    %c0_230 = arith.constant 0 : index
    %283 = vector.load %arg9[%c144_229, %c0_230] : memref<288x64xf32, #tpu.memory_space<vmem>>, vector<128x64xf32>
    %284 = arith.addf %282, %283 : vector<128x64xf32>
    %cst_231 = arith.constant 0.000000e+00 : f32
    %285 = vector.broadcast %cst_231 : f32 to vector<128x64xf32>
    %286 = arith.maximumf %284, %285 : vector<128x64xf32>
    %c0_232 = arith.constant 0 : index
    %c128_233 = arith.constant 128 : index
    %c0_234 = arith.constant 0 : index
    %287 = vector.load %arg8[%c0_232, %c128_233, %c0_234] : memref<1x256x64xf32, #tpu.memory_space<vmem>>, vector<1x128x64xf32>
    %288 = vector.shape_cast %287 : vector<1x128x64xf32> to vector<128x64xf32>
    %289 = vector.shape_cast %286 : vector<128x64xf32> to vector<1x128x64xf32>
    tpu.vector_store %arg8[%c0_232, %c128_233, %c0_234], %289 {strides = array<i32>} : memref<1x256x64xf32, #tpu.memory_space<vmem>>, vector<1x128x64xf32>,
    return
  }
  func.func @transform_0(%arg0: i32) -> (i32, i32, i32) {
    %c0_i32 = arith.constant 0 : i32
    %c0_i32_0 = arith.constant 0 : i32
    %c0_i32_1 = arith.constant 0 : i32
    return %arg0, %c0_i32, %c0_i32_0 : i32, i32, i32
  }
  func.func @transform_1(%arg0: i32) -> (i32, i32, i32, i32) {
    %c0_i32 = arith.constant 0 : i32
    %c0_i32_0 = arith.constant 0 : i32
    %c0_i32_1 = arith.constant 0 : i32
    %c0_i32_2 = arith.constant 0 : i32
    %c0_i32_3 = arith.constant 0 : i32
    return %c0_i32, %c0_i32_0, %c0_i32_1, %c0_i32_2 : i32, i32, i32, i32
  }
  func.func @transform_2(%arg0: i32) -> (i32, i32) {
    %c0_i32 = arith.constant 0 : i32
    %c0_i32_0 = arith.constant 0 : i32
    %c0_i32_1 = arith.constant 0 : i32
    return %c0_i32, %c0_i32_0 : i32, i32
  }
  func.func @transform_3(%arg0: i32) -> (i32, i32) {
    %c0_i32 = arith.constant 0 : i32
    %c0_i32_0 = arith.constant 0 : i32
    %c0_i32_1 = arith.constant 0 : i32
    return %c0_i32, %c0_i32_0 : i32, i32
  }
  func.func @transform_4(%arg0: i32) -> (i32, i32, i32, i32) {
    %c0_i32 = arith.constant 0 : i32
    %c0_i32_0 = arith.constant 0 : i32
    %c0_i32_1 = arith.constant 0 : i32
    %c0_i32_2 = arith.constant 0 : i32
    %c0_i32_3 = arith.constant 0 : i32
    return %c0_i32, %c0_i32_0, %c0_i32_1, %c0_i32_2 : i32, i32, i32, i32
  }
  func.func @transform_5(%arg0: i32) -> (i32, i32) {
    %c0_i32 = arith.constant 0 : i32
    %c0_i32_0 = arith.constant 0 : i32
    %c0_i32_1 = arith.constant 0 : i32
    return %c0_i32, %c0_i32_0 : i32, i32
  }
  func.func @transform_6(%arg0: i32) -> (i32, i32) {
    %c0_i32 = arith.constant 0 : i32
    %c0_i32_0 = arith.constant 0 : i32
    %c0_i32_1 = arith.constant 0 : i32
    return %c0_i32, %c0_i32_0 : i32, i32
  }
  func.func @transform_7(%arg0: i32) -> (i32, i32, i32) {
    %c0_i32 = arith.constant 0 : i32
    %c0_i32_0 = arith.constant 0 : i32
    %c0_i32_1 = arith.constant 0 : i32
    return %arg0, %c0_i32, %c0_i32_0 : i32, i32, i32
  }
}

</mosaic_0001>

<llo_original>
// kernel: tpu_custom_call.1
$region0: #{tpu_custom_call.1}
  #allocation0 [shape = 'u32[]', space=smem, size = 0x4, offset = 0x4, fixed_abs, tag = 'smem constant byte address 0x4 - core index']
  #allocation1 [shape = 'u32[144,128]{1,0:T(1,128)}', space=vmem, size = 0x12000, scoped, tag = 'internal scratch']
  #allocation2 [shape = 'f32[288,64]{1,0:T(8,128)}', space=vmem, size = 0x24000, scoped, tag = 'scratch operand']
  #allocation3 [shape = 'f32[288,64]{1,0:T(8,128)}', space=vmem, size = 0x24000, scoped, tag = 'scratch operand']
  %s0 = inlined_call_operand.vmem [shape: bf16[2,256,64], index: 0, kind: input, shape index: {}]
  %s1 = inlined_call_operand.vmem [shape: bf16[3,3,64,64], index: 1, kind: input, shape index: {}]
  %s2 = inlined_call_operand.vmem [shape: f32[1,64], index: 2, kind: input, shape index: {}]
  %s3 = inlined_call_operand.vmem [shape: f32[1,64], index: 3, kind: input, shape index: {}]
  %s4 = inlined_call_operand.hbm [shape: bf16[3,3,64,64], index: 4, kind: input, shape index: {}]
  %s5 = inlined_call_operand.vmem [shape: f32[1,64], index: 5, kind: input, shape index: {}]
  %s6 = inlined_call_operand.vmem [shape: f32[1,64], index: 6, kind: input, shape index: {}]
  %s7 = inlined_call_operand.vmem [shape: f32[2,256,64], index: 7, kind: output, shape index: {}]
  %s8 = sld [smem:[#allocation0]]
  $region65: #{tpu_custom_call.1} parent=0
    _
  %s10 = ssub.s32 1, %s8
  %s11 = scalar_select 0, %s10, %s8
  $region1: #{tpu_custom_call.1} parent=0
    #allocation4 [shape = 'u8[147456]{0}', space=vmem, size = 0x24000, scoped, tag = 'input window, operand 4, single buffered']
    #allocation5 [shape = 's32[2]{0}', space=sflag, size = 0x8, scoped, tag = 'scoped memory for tpu_custom_call.1']
    %12 = vsyncpa [#allocation5], 0
    loop: start=0, step=1, limit=4
    $region2: #{tpu_custom_call.1} parent=1 // loop_pre_header
      _
    $region3: #{tpu_custom_call.1} parent=1 // loop_header
      %s14 = sphi 0, %s18
      %p15 = scmp.ge.s32.totalorder %s14, 4
      %s24 = sphi 0, %s26
      %s27 = sphi 0, %s24
      %s28 = sphi 0, %s27
      %s44 = sphi 0, %s28
      %s48 = sphi 0, %s48
      %s50 = sphi 0, %s48
      %s51 = sphi 0, %s50
      %s65 = sphi 0, %s51
      %s69 = sphi 0, %s69
      %s71 = sphi 0, %s69
      %s72 = sphi 0, %s71
      %s86 = sphi 0, %s72
      %s90 = sphi 0, %s90
      %s92 = sphi 0, %s90
      %s93 = sphi 0, %s92
      %s107 = sphi 0, %s93
      %s111 = sphi 0, %s111
      %s113 = sphi 0, %s111
      %s114 = sphi 0, %s113
      %s128 = sphi 0, %s114
      %s132 = sphi 0, %s132
      %s134 = sphi 0, %s132
      %s135 = sphi 0, %s134
      %s149 = sphi 0, %s135
      %s153 = sphi 0, %s153
      %s155 = sphi 0, %s153
      %s156 = sphi 0, %s155
      %s170 = sphi 0, %s156
      %s176 = sphi 0, %s178
      %s179 = sphi 0, %s176
      %s180 = sphi 0, %s179
      %s196 = sphi 0, %s180
    $region4: #{tpu_custom_call.1} parent=1 // loop_header_branch
      %17 = sbr.rel (%p15) target = $region8
    $region5: #{tpu_custom_call.1} parent=1 // loop_body
      %s19 = ssub.s32 %s14, 1
      %s20 = ssub.s32 %s14, 2
      %s21 = sadd.s32 %s14, 1
      %s22 = ssub.s32 %s14, %s21
      %p23 = scmp.eq.s32.totalorder %s22, 0
      %s25 = sadd.s32 %s24, 1
      %s26 = scalar_select %p23, %s24, %s25
      %p29 = pneg %p23
      %p30 = scmp.eq.s32.totalorder %s14, 1
      %p31 = por %p29, %p30
      %p32 = scmp.ne.s32.totalorder %s24, %s27
      %p33 = scmp.eq.s32.totalorder %s14, 0
      %p34 = por %p32, %p33
      %p35 = scmp.ne.s32.totalorder %s24, %s27
      %p36 = scmp.eq.s32.totalorder %s19, 1
      %p37 = por %p35, %p36
      %p38 = scmp.ne.s32.totalorder %s27, %s28
      %p39 = scmp.eq.s32.totalorder %s19, 0
      %p40 = por %p38, %p39
      %p41 = scmp.ne.s32.totalorder %s27, %s28
      %p42 = scmp.eq.s32.totalorder %s20, 1
      %p43 = por %p41, %p42
      %p45 = scmp.ne.s32.totalorder %s28, %s44
      %p46 = scmp.eq.s32.totalorder %s20, 0
      %p47 = por %p45, %p46
      %s49 = sadd.s32 %s48, 1
      %p52 = scmp.eq.s32.totalorder %s14, 1
      %p53 = scmp.ne.s32.totalorder %s48, %s50
      %p54 = scmp.eq.s32.totalorder %s14, 0
      %p55 = por %p53, %p54
      %p56 = scmp.ne.s32.totalorder %s48, %s50
      %p57 = scmp.eq.s32.totalorder %s19, 1
      %p58 = por %p56, %p57
      %p59 = scmp.ne.s32.totalorder %s50, %s51
      %p60 = scmp.eq.s32.totalorder %s19, 0
      %p61 = por %p59, %p60
      %p62 = scmp.ne.s32.totalorder %s50, %s51
      %p63 = scmp.eq.s32.totalorder %s20, 1
      %p64 = por %p62, %p63
      %p66 = scmp.ne.s32.totalorder %s51, %s65
      %p67 = scmp.eq.s32.totalorder %s20, 0
      %p68 = por %p66, %p67
      %s70 = sadd.s32 %s69, 1
      %p73 = scmp.eq.s32.totalorder %s14, 1
      %p74 = scmp.ne.s32.totalorder %s69, %s71
      %p75 = scmp.eq.s32.totalorder %s14, 0
      %p76 = por %p74, %p75
      %p77 = scmp.ne.s32.totalorder %s69, %s71
      %p78 = scmp.eq.s32.totalorder %s19, 1
      %p79 = por %p77, %p78
      %p80 = scmp.ne.s32.totalorder %s71, %s72
      %p81 = scmp.eq.s32.totalorder %s19, 0
      %p82 = por %p80, %p81
      %p83 = scmp.ne.s32.totalorder %s71, %s72
      %p84 = scmp.eq.s32.totalorder %s20, 1
      %p85 = por %p83, %p84
      %p87 = scmp.ne.s32.totalorder %s72, %s86
      %p88 = scmp.eq.s32.totalorder %s20, 0
      %p89 = por %p87, %p88
      %s91 = sadd.s32 %s90, 1
      %p94 = scmp.eq.s32.totalorder %s14, 1
      %p95 = scmp.ne.s32.totalorder %s90, %s92
      %p96 = scmp.eq.s32.totalorder %s14, 0
      %p97 = por %p95, %p96
      %p98 = scmp.ne.s32.totalorder %s90, %s92
      %p99 = scmp.eq.s32.totalorder %s19, 1
      %p100 = por %p98, %p99
      %p101 = scmp.ne.s32.totalorder %s92, %s93
      %p102 = scmp.eq.s32.totalorder %s19, 0
      %p103 = por %p101, %p102
      %p104 = scmp.ne.s32.totalorder %s92, %s93
      %p105 = scmp.eq.s32.totalorder %s20, 1
      %p106 = por %p104, %p105
      %p108 = scmp.ne.s32.totalorder %s93, %s107
      %p109 = scmp.eq.s32.totalorder %s20, 0
      %p110 = por %p108, %p109
      %s112 = sadd.s32 %s111, 1
      %p115 = scmp.eq.s32.totalorder %s14, 1
      %p116 = scmp.ne.s32.totalorder %s111, %s113
      %p117 = scmp.eq.s32.totalorder %s14, 0
      %p118 = por %p116, %p117
      %p119 = scmp.ne.s32.totalorder %s111, %s113
      %p120 = scmp.eq.s32.totalorder %s19, 1
      %p121 = por %p119, %p120
      %p122 = scmp.ne.s32.totalorder %s113, %s114
      %p123 = scmp.eq.s32.totalorder %s19, 0
      %p124 = por %p122, %p123
      %p125 = scmp.ne.s32.totalorder %s113, %s114
      %p126 = scmp.eq.s32.totalorder %s20, 1
      %p127 = por %p125, %p126
      %p129 = scmp.ne.s32.totalorder %s114, %s128
      %p130 = scmp.eq.s32.totalorder %s20, 0
      %p131 = por %p129, %p130
      %s133 = sadd.s32 %s132, 1
      %p136 = scmp.eq.s32.totalorder %s14, 1
      %p137 = scmp.ne.s32.totalorder %s132, %s134
      %p138 = scmp.eq.s32.totalorder %s14, 0
      %p139 = por %p137, %p138
      %p140 = scmp.ne.s32.totalorder %s132, %s134
      %p141 = scmp.eq.s32.totalorder %s19, 1
      %p142 = por %p140, %p141
      %p143 = scmp.ne.s32.totalorder %s134, %s135
      %p144 = scmp.eq.s32.totalorder %s19, 0
      %p145 = por %p143, %p144
      %p146 = scmp.ne.s32.totalorder %s134, %s135
      %p147 = scmp.eq.s32.totalorder %s20, 1
      %p148 = por %p146, %p147
      %p150 = scmp.ne.s32.totalorder %s135, %s149
      %p151 = scmp.eq.s32.totalorder %s20, 0
      %p152 = por %p150, %p151
      %s154 = sadd.s32 %s153, 1
      %p157 = scmp.eq.s32.totalorder %s14, 1
      %p158 = scmp.ne.s32.totalorder %s153, %s155
      %p159 = scmp.eq.s32.totalorder %s14, 0
      %p160 = por %p158, %p159
      %p161 = scmp.ne.s32.totalorder %s153, %s155
      %p162 = scmp.eq.s32.totalorder %s19, 1
      %p163 = por %p161, %p162
      %p164 = scmp.ne.s32.totalorder %s155, %s156
      %p165 = scmp.eq.s32.totalorder %s19, 0
      %p166 = por %p164, %p165
      %p167 = scmp.ne.s32.totalorder %s155, %s156
      %p168 = scmp.eq.s32.totalorder %s20, 1
      %p169 = por %p167, %p168
      %p171 = scmp.ne.s32.totalorder %s156, %s170
      %p172 = scmp.eq.s32.totalorder %s20, 0
      %p173 = por %p171, %p172
      %s174 = ssub.s32 %s14, %s21
      %p175 = scmp.eq.s32.totalorder %s174, 0
      %s177 = sadd.s32 %s176, 1
      %s178 = scalar_select %p175, %s176, %s177
      %p181 = pneg %p175
      %p182 = scmp.eq.s32.totalorder %s14, 1
      %p183 = por %p181, %p182
      %p184 = scmp.ne.s32.totalorder %s176, %s179
      %p185 = scmp.eq.s32.totalorder %s14, 0
      %p186 = por %p184, %p185
      %p187 = scmp.ne.s32.totalorder %s176, %s179
      %p188 = scmp.eq.s32.totalorder %s19, 1
      %p189 = por %p187, %p188
      %p190 = scmp.ne.s32.totalorder %s179, %s180
      %p191 = scmp.eq.s32.totalorder %s19, 0
      %p192 = por %p190, %p191
      %p193 = scmp.ne.s32.totalorder %s179, %s180
      %p194 = scmp.eq.s32.totalorder %s20, 1
      %p195 = por %p193, %p194
      %p197 = scmp.ne.s32.totalorder %s180, %s196
      %p198 = scmp.eq.s32.totalorder %s20, 0
      %p199 = por %p197, %p198
      %p200 = scmp.le.s32.totalorder 1, %s14
      %p201 = scmp.lt.s32.totalorder %s14, 3
      %p202 = pnand %p200, %p201
      %p203 = pneg %p202
      // Predicated region
      $region9: #{tpu_custom_call.1} parent=5 // pred_check
        _
      $region10: #{tpu_custom_call.1} parent=5 // pred_check_branch
        %205 = sbr.rel (%p202) target = $region12
      $region11: #{tpu_custom_call.1} parent=5 // pred_region
        %s206 = ssub.s32 %s14, 1
        // Predicated region
        $region13: #{tpu_custom_call.1} parent=11 // pred_check
          %p207 = pneg %p61
        $region14: #{tpu_custom_call.1} parent=11 // pred_check_branch
          %209 = sbr.rel (%p207) target = $region16
        $region15: #{tpu_custom_call.1} parent=11 // pred_region
          _
        $region16: #{tpu_custom_call.1} parent=11 // pred_fallthru
          _
        // Predicated region
        $region17: #{tpu_custom_call.1} parent=11 // pred_check
          %p210 = pneg %p82
        $region18: #{tpu_custom_call.1} parent=11 // pred_check_branch
          %212 = sbr.rel (%p210) target = $region20
        $region19: #{tpu_custom_call.1} parent=11 // pred_region
          _
        $region20: #{tpu_custom_call.1} parent=11 // pred_fallthru
          _
        // Predicated region
        $region21: #{tpu_custom_call.1} parent=11 // pred_check
          %p213 = pneg %p103
        $region22: #{tpu_custom_call.1} parent=11 // pred_check_branch
          %215 = sbr.rel (%p213) target = $region24
        $region23: #{tpu_custom_call.1} parent=11 // pred_region
          _
        $region24: #{tpu_custom_call.1} parent=11 // pred_fallthru
          _
        // Predicated region
        $region25: #{tpu_custom_call.1} parent=11 // pred_check
          %p216 = pneg %p124
        $region26: #{tpu_custom_call.1} parent=11 // pred_check_branch
          %218 = sbr.rel (%p216) target = $region28
        $region27: #{tpu_custom_call.1} parent=11 // pred_region
          %s220 = ssub.s32 4608, 4608
          %221 = vsyncadd [#allocation5], %s220
          %s222 = sshll.u32 [#allocation4], 4
          %s223 = int_to_ptr.vmem [resolvable:$true] %s222
          %228 = dma.hbm_to_vmem [thread:$0]  %s4, 4608, %s223, [#allocation5], 64, 64, 4
        $region28: #{tpu_custom_call.1} parent=11 // pred_fallthru
          _
        // Predicated region
        $region29: #{tpu_custom_call.1} parent=11 // pred_check
          %p229 = pneg %p145
        $region30: #{tpu_custom_call.1} parent=11 // pred_check_branch
          %231 = sbr.rel (%p229) target = $region32
        $region31: #{tpu_custom_call.1} parent=11 // pred_region
          _
        $region32: #{tpu_custom_call.1} parent=11 // pred_fallthru
          _
        // Predicated region
        $region33: #{tpu_custom_call.1} parent=11 // pred_check
          %p232 = pneg %p166
        $region34: #{tpu_custom_call.1} parent=11 // pred_check_branch
          %234 = sbr.rel (%p232) target = $region36
        $region35: #{tpu_custom_call.1} parent=11 // pred_region
          _
        $region36: #{tpu_custom_call.1} parent=11 // pred_fallthru
          _
      $region12: #{tpu_custom_call.1} parent=5 // pred_fallthru
        _
      %p235 = scmp.lt.s32.totalorder %s14, 2
      // Predicated region
      $region37: #{tpu_custom_call.1} parent=5 // pred_check
        %p236 = pneg %p235
      $region38: #{tpu_custom_call.1} parent=5 // pred_check_branch
        %238 = sbr.rel (%p236) target = $region40
      $region39: #{tpu_custom_call.1} parent=5 // pred_region
        // Predicated region
        $region41: #{tpu_custom_call.1} parent=39 // pred_check
          %p239 = pneg %p34
        $region42: #{tpu_custom_call.1} parent=39 // pred_check_branch
          %241 = sbr.rel (%p239) target = $region44
        $region43: #{tpu_custom_call.1} parent=39 // pred_region
          %p242 = scmp.lt.s32.totalorder %s14, 1
          %s243 = scalar_select %p242, %s14, 1
          %s244 = smul.addr %s243, 32
          %s245 = smul.addr %s244, 4
          %s246 = scalar_lea.vmem %s0, %s245
        $region44: #{tpu_custom_call.1} parent=39 // pred_fallthru
          _
      $region40: #{tpu_custom_call.1} parent=5 // pred_fallthru
        _
      %p247 = scmp.le.s32.totalorder 1, %s14
      %p248 = scmp.lt.s32.totalorder %s14, 3
      %p249 = pnand %p247, %p248
      %p250 = pneg %p249
      // Predicated region
      $region45: #{tpu_custom_call.1} parent=5 // pred_check
        _
      $region46: #{tpu_custom_call.1} parent=5 // pred_check_branch
        %252 = sbr.rel (%p249) target = $region48
      $region47: #{tpu_custom_call.1} parent=5 // pred_region
        %s253 = ssub.s32 %s14, 1
        // Predicated region
        $region49: #{tpu_custom_call.1} parent=47 // pred_check
          %p254 = pneg %p124
        $region50: #{tpu_custom_call.1} parent=47 // pred_check_branch
          %256 = sbr.rel (%p254) target = $region52
        $region51: #{tpu_custom_call.1} parent=47 // pred_region
          %257 = dma.done [#allocation5], 4608
        $region52: #{tpu_custom_call.1} parent=47 // pred_fallthru
          _
        %p258 = scmp.lt.s32.totalorder %s19, 1
        %s259 = scalar_select %p258, %s19, 1
        %s260 = smul.addr %s259, 32
        %s261 = smul.addr %s260, 4
        %s262 = scalar_lea.vmem %s0, %s261
        %p263 = pneg %p40
        %p264 = pneg %p37
        %p265 = pneg %p61
        %p266 = pneg %p58
        %p267 = pneg %p82
        %p268 = pneg %p79
        %p269 = pneg %p103
        %p270 = pneg %p100
        %p271 = pneg %p124
        %p272 = pneg %p121
        %p273 = pneg %p145
        %p274 = pneg %p142
        %p275 = pneg %p166
        %p276 = pneg %p163
        %p277 = pneg %p192
        %p278 = pneg %p189
        %p279 = scmp.lt.s32.totalorder %s19, 1
        %s280 = scalar_select %p279, %s19, 1
        %s281 = smul.addr %s280, 32
        %s282 = smul.addr %s281, 8
        %s283 = scalar_lea.vmem %s7, %s282
        %p284 = scmp.lt.s32.totalorder %s19, 1
        %s285 = scalar_select %p284, %s19, 1
        %s286 = smul.addr %s285, 32
        %s287 = smul.addr %s286, 4
        %s288 = scalar_lea.vmem %s0, %s287
        %p289 = scmp.lt.s32.totalorder %s19, 1
        %s290 = scalar_select %p289, %s19, 1
        %s291 = smul.addr %s290, 32
        %s292 = smul.addr %s291, 8
        %s293 = scalar_lea.vmem %s7, %s292
        %v295 = vlaneseq
        %v296 = vshrl.u32 %v295, 7
        %v297 = vadd.s32 %v296, 8
        %v298 = vadd.s32 %v296, 16
        %v299 = vadd.s32 %v296, 24
        %v300 = vadd.s32 %v296, 32
        %v301 = vadd.s32 %v296, 40
        %v302 = vadd.s32 %v296, 48
        %v303 = vadd.s32 %v296, 56
        %v304 = vadd.s32 %v296, 64
        %v305 = vadd.s32 %v296, 72
        %v306 = vadd.s32 %v296, 80
        %v307 = vadd.s32 %v296, 88
        %v308 = vadd.s32 %v296, 96
        %v309 = vadd.s32 %v296, 104
        %v310 = vadd.s32 %v296, 112
        %v311 = vadd.s32 %v296, 120
        %v312 = vadd.s32 %v296, 128
        %v313 = vadd.s32 %v296, 136
        %v314 = vadd.s32 %v296, 144
        %v315 = vadd.s32 %v296, 152
        %vm316 = vcmp.lt.s32.totalorder %v296, 0
        %v317 = vsub.s32 0, %v296
        %v318 = vsel %vm316, %v317, %v296
        %v319 = vshrl.u32 %v318, 4
        %v320 = vand.u32 %v318, 15
        %v321 = vsub.s32 0, %v320
        %v322 = vsel %vm316, %v321, %v320
        %vm323 = vcmp.lt.s32.totalorder %v297, 0
        %v324 = vsub.s32 0, %v297
        %v325 = vsel %vm323, %v324, %v297
        %v326 = vshrl.u32 %v325, 4
        %v327 = vand.u32 %v325, 15
        %v328 = vsub.s32 0, %v327
        %v329 = vsel %vm323, %v328, %v327
        %vm330 = vcmp.lt.s32.totalorder %v298, 0
        %v331 = vsub.s32 0, %v298
        %v332 = vsel %vm330, %v331, %v298
        %v333 = vshrl.u32 %v332, 4
        %v334 = vand.u32 %v332, 15
        %v335 = vsub.s32 0, %v334
        %v336 = vsel %vm330, %v335, %v334
        %vm337 = vcmp.lt.s32.totalorder %v299, 0
        %v338 = vsub.s32 0, %v299
        %v339 = vsel %vm337, %v338, %v299
        %v340 = vshrl.u32 %v339, 4
        %v341 = vand.u32 %v339, 15
        %v342 = vsub.s32 0, %v341
        %v343 = vsel %vm337, %v342, %v341
        %vm344 = vcmp.lt.s32.totalorder %v300, 0
        %v345 = vsub.s32 0, %v300
        %v346 = vsel %vm344, %v345, %v300
        %v347 = vshrl.u32 %v346, 4
        %v348 = vand.u32 %v346, 15
        %v349 = vsub.s32 0, %v348
        %v350 = vsel %vm344, %v349, %v348
        %vm351 = vcmp.lt.s32.totalorder %v301, 0
        %v352 = vsub.s32 0, %v301
        %v353 = vsel %vm351, %v352, %v301
        %v354 = vshrl.u32 %v353, 4
        %v355 = vand.u32 %v353, 15
        %v356 = vsub.s32 0, %v355
        %v357 = vsel %vm351, %v356, %v355
        %vm358 = vcmp.lt.s32.totalorder %v302, 0
        %v359 = vsub.s32 0, %v302
        %v360 = vsel %vm358, %v359, %v302
        %v361 = vshrl.u32 %v360, 4
        %v362 = vand.u32 %v360, 15
        %v363 = vsub.s32 0, %v362
        %v364 = vsel %vm358, %v363, %v362
        %vm365 = vcmp.lt.s32.totalorder %v303, 0
        %v366 = vsub.s32 0, %v303
        %v367 = vsel %vm365, %v366, %v303
        %v368 = vshrl.u32 %v367, 4
        %v369 = vand.u32 %v367, 15
        %v370 = vsub.s32 0, %v369
        %v371 = vsel %vm365, %v370, %v369
        %vm372 = vcmp.lt.s32.totalorder %v304, 0
        %v373 = vsub.s32 0, %v304
        %v374 = vsel %vm372, %v373, %v304
        %v375 = vshrl.u32 %v374, 4
        %v376 = vand.u32 %v374, 15
        %v377 = vsub.s32 0, %v376
        %v378 = vsel %vm372, %v377, %v376
        %vm379 = vcmp.lt.s32.totalorder %v305, 0
        %v380 = vsub.s32 0, %v305
        %v381 = vsel %vm379, %v380, %v305
        %v382 = vshrl.u32 %v381, 4
        %v383 = vand.u32 %v381, 15
        %v384 = vsub.s32 0, %v383
        %v385 = vsel %vm379, %v384, %v383
        %vm386 = vcmp.lt.s32.totalorder %v306, 0
        %v387 = vsub.s32 0, %v306
        %v388 = vsel %vm386, %v387, %v306
        %v389 = vshrl.u32 %v388, 4
        %v390 = vand.u32 %v388, 15
        %v391 = vsub.s32 0, %v390
        %v392 = vsel %vm386, %v391, %v390
        %vm393 = vcmp.lt.s32.totalorder %v307, 0
        %v394 = vsub.s32 0, %v307
        %v395 = vsel %vm393, %v394, %v307
        %v396 = vshrl.u32 %v395, 4
        %v397 = vand.u32 %v395, 15
        %v398 = vsub.s32 0, %v397
        %v399 = vsel %vm393, %v398, %v397
        %vm400 = vcmp.lt.s32.totalorder %v308, 0
        %v401 = vsub.s32 0, %v308
        %v402 = vsel %vm400, %v401, %v308
        %v403 = vshrl.u32 %v402, 4
        %v404 = vand.u32 %v402, 15
        %v405 = vsub.s32 0, %v404
        %v406 = vsel %vm400, %v405, %v404
        %vm407 = vcmp.lt.s32.totalorder %v309, 0
        %v408 = vsub.s32 0, %v309
        %v409 = vsel %vm407, %v408, %v309
        %v410 = vshrl.u32 %v409, 4
        %v411 = vand.u32 %v409, 15
        %v412 = vsub.s32 0, %v411
        %v413 = vsel %vm407, %v412, %v411
        %vm414 = vcmp.lt.s32.totalorder %v310, 0
        %v415 = vsub.s32 0, %v310
        %v416 = vsel %vm414, %v415, %v310
        %v417 = vshrl.u32 %v416, 4
        %v418 = vand.u32 %v416, 15
        %v419 = vsub.s32 0, %v418
        %v420 = vsel %vm414, %v419, %v418
        %vm421 = vcmp.lt.s32.totalorder %v311, 0
        %v422 = vsub.s32 0, %v311
        %v423 = vsel %vm421, %v422, %v311
        %v424 = vshrl.u32 %v423, 4
        %v425 = vand.u32 %v423, 15
        %v426 = vsub.s32 0, %v425
        %v427 = vsel %vm421, %v426, %v425
        %vm428 = vcmp.lt.s32.totalorder %v312, 0
        %v429 = vsub.s32 0, %v312
        %v430 = vsel %vm428, %v429, %v312
        %v431 = vshrl.u32 %v430, 4
        %v432 = vand.u32 %v430, 15
        %v433 = vsub.s32 0, %v432
        %v434 = vsel %vm428, %v433, %v432
        %vm435 = vcmp.lt.s32.totalorder %v313, 0
        %v436 = vsub.s32 0, %v313
        %v437 = vsel %vm435, %v436, %v313
        %v438 = vshrl.u32 %v437, 4
        %v439 = vand.u32 %v437, 15
        %v440 = vsub.s32 0, %v439
        %v441 = vsel %vm435, %v440, %v439
        %vm442 = vcmp.lt.s32.totalorder %v314, 0
        %v443 = vsub.s32 0, %v314
        %v444 = vsel %vm442, %v443, %v314
        %v445 = vshrl.u32 %v444, 4
        %v446 = vand.u32 %v444, 15
        %v447 = vsub.s32 0, %v446
        %v448 = vsel %vm442, %v447, %v446
        %vm449 = vcmp.lt.s32.totalorder %v315, 0
        %v450 = vsub.s32 0, %v315
        %v451 = vsel %vm449, %v450, %v315
        %v452 = vshrl.u32 %v451, 4
        %v453 = vand.u32 %v451, 15
        %v454 = vsub.s32 0, %v453
        %v455 = vsel %vm449, %v454, %v453
        %vm456 = vcmp.ne.s32.totalorder %v322, 0
        %vm457 = vcmp.ne.s32.totalorder %v329, 0
        %vm458 = vcmp.ne.s32.totalorder %v336, 0
        %vm459 = vcmp.ne.s32.totalorder %v343, 0
        %vm460 = vcmp.ne.s32.totalorder %v350, 0
        %vm461 = vcmp.ne.s32.totalorder %v357, 0
        %vm462 = vcmp.ne.s32.totalorder %v364, 0
        %vm463 = vcmp.ne.s32.totalorder %v371, 0
        %vm464 = vcmp.ne.s32.totalorder %v378, 0
        %vm465 = vcmp.ne.s32.totalorder %v385, 0
        %vm466 = vcmp.ne.s32.totalorder %v392, 0
        %vm467 = vcmp.ne.s32.totalorder %v399, 0
        %vm468 = vcmp.ne.s32.totalorder %v406, 0
        %vm469 = vcmp.ne.s32.totalorder %v413, 0
        %vm470 = vcmp.ne.s32.totalorder %v420, 0
        %vm471 = vcmp.ne.s32.totalorder %v427, 0
        %vm472 = vcmp.ne.s32.totalorder %v434, 0
        %vm473 = vcmp.ne.s32.totalorder %v441, 0
        %vm474 = vcmp.ne.s32.totalorder %v448, 0
        %vm475 = vcmp.ne.s32.totalorder %v455, 0
        %vm476 = vcmp.lt.s32.totalorder %v322, 0
        %vm477 = vcmp.lt.s32.totalorder %v329, 0
        %vm478 = vcmp.lt.s32.totalorder %v336, 0
        %vm479 = vcmp.lt.s32.totalorder %v343, 0
        %vm480 = vcmp.lt.s32.totalorder %v350, 0
        %vm481 = vcmp.lt.s32.totalorder %v357, 0
        %vm482 = vcmp.lt.s32.totalorder %v364, 0
        %vm483 = vcmp.lt.s32.totalorder %v371, 0
        %vm484 = vcmp.lt.s32.totalorder %v378, 0
        %vm485 = vcmp.lt.s32.totalorder %v385, 0
        %vm486 = vcmp.lt.s32.totalorder %v392, 0
        %vm487 = vcmp.lt.s32.totalorder %v399, 0
        %vm488 = vcmp.lt.s32.totalorder %v406, 0
        %vm489 = vcmp.lt.s32.totalorder %v413, 0
        %vm490 = vcmp.lt.s32.totalorder %v420, 0
        %vm491 = vcmp.lt.s32.totalorder %v427, 0
        %vm492 = vcmp.lt.s32.totalorder %v434, 0
        %vm493 = vcmp.lt.s32.totalorder %v441, 0
        %vm494 = vcmp.lt.s32.totalorder %v448, 0
        %vm495 = vcmp.lt.s32.totalorder %v455, 0
        %vm496 = vmand %vm476, %vm456
        %vm497 = vmand %vm477, %vm457
        %vm498 = vmand %vm478, %vm458
        %vm499 = vmand %vm479, %vm459
        %vm500 = vmand %vm480, %vm460
        %vm501 = vmand %vm481, %vm461
        %vm502 = vmand %vm482, %vm462
        %vm503 = vmand %vm483, %vm463
        %vm504 = vmand %vm484, %vm464
        %vm505 = vmand %vm485, %vm465
        %vm506 = vmand %vm486, %vm466
        %vm507 = vmand %vm487, %vm467
        %vm508 = vmand %vm488, %vm468
        %vm509 = vmand %vm489, %vm469
        %vm510 = vmand %vm490, %vm470
        %vm511 = vmand %vm491, %vm471
        %vm512 = vmand %vm492, %vm472
        %vm513 = vmand %vm493, %vm473
        %vm514 = vmand %vm494, %vm474
        %vm515 = vmand %vm495, %vm475
        %v516 = vadd.s32 %v322, 16
        %v517 = vadd.s32 %v329, 16
        %v518 = vadd.s32 %v336, 16
        %v519 = vadd.s32 %v343, 16
        %v520 = vadd.s32 %v350, 16
        %v521 = vadd.s32 %v357, 16
        %v522 = vadd.s32 %v364, 16
        %v523 = vadd.s32 %v371, 16
        %v524 = vadd.s32 %v378, 16
        %v525 = vadd.s32 %v385, 16
        %v526 = vadd.s32 %v392, 16
        %v527 = vadd.s32 %v399, 16
        %v528 = vadd.s32 %v406, 16
        %v529 = vadd.s32 %v413, 16
        %v530 = vadd.s32 %v420, 16
        %v531 = vadd.s32 %v427, 16
        %v532 = vadd.s32 %v434, 16
        %v533 = vadd.s32 %v441, 16
        %v534 = vadd.s32 %v448, 16
        %v535 = vadd.s32 %v455, 16
        %v536 = vsel %vm496, %v516, %v322
        %v537 = vsel %vm497, %v517, %v329
        %v538 = vsel %vm498, %v518, %v336
        %v539 = vsel %vm499, %v519, %v343
        %v540 = vsel %vm500, %v520, %v350
        %v541 = vsel %vm501, %v521, %v357
        %v542 = vsel %vm502, %v522, %v364
        %v543 = vsel %vm503, %v523, %v371
        %v544 = vsel %vm504, %v524, %v378
        %v545 = vsel %vm505, %v525, %v385
        %v546 = vsel %vm506, %v526, %v392
        %v547 = vsel %vm507, %v527, %v399
        %v548 = vsel %vm508, %v528, %v406
        %v549 = vsel %vm509, %v529, %v413
        %v550 = vsel %vm510, %v530, %v420
        %v551 = vsel %vm511, %v531, %v427
        %v552 = vsel %vm512, %v532, %v434
        %v553 = vsel %vm513, %v533, %v441
        %v554 = vsel %vm514, %v534, %v448
        %v555 = vsel %vm515, %v535, %v455
        %vm556 = vcmp.ne.s32.totalorder %v536, 0
        %vm557 = vcmp.ne.s32.totalorder %v537, 0
        %vm558 = vcmp.ne.s32.totalorder %v538, 0
        %vm559 = vcmp.ne.s32.totalorder %v539, 0
        %vm560 = vcmp.ne.s32.totalorder %v540, 0
        %vm561 = vcmp.ne.s32.totalorder %v541, 0
        %vm562 = vcmp.ne.s32.totalorder %v542, 0
        %vm563 = vcmp.ne.s32.totalorder %v543, 0
        %vm564 = vcmp.ne.s32.totalorder %v544, 0
        %vm565 = vcmp.ne.s32.totalorder %v545, 0
        %vm566 = vcmp.ne.s32.totalorder %v546, 0
        %vm567 = vcmp.ne.s32.totalorder %v547, 0
        %vm568 = vcmp.ne.s32.totalorder %v548, 0
        %vm569 = vcmp.ne.s32.totalorder %v549, 0
        %vm570 = vcmp.ne.s32.totalorder %v550, 0
        %vm571 = vcmp.ne.s32.totalorder %v551, 0
        %vm572 = vcmp.ne.s32.totalorder %v552, 0
        %vm573 = vcmp.ne.s32.totalorder %v553, 0
        %vm574 = vcmp.ne.s32.totalorder %v554, 0
        %vm575 = vcmp.ne.s32.totalorder %v555, 0
        %v576 = vsel %vm556, 1, 0
        %v577 = vsel %vm557, 1, 0
        %v578 = vsel %vm558, 1, 0
        %v579 = vsel %vm559, 1, 0
        %v580 = vsel %vm560, 1, 0
        %v581 = vsel %vm561, 1, 0
        %v582 = vsel %vm562, 1, 0
        %v583 = vsel %vm563, 1, 0
        %v584 = vsel %vm564, 1, 0
        %v585 = vsel %vm565, 1, 0
        %v586 = vsel %vm566, 1, 0
        %v587 = vsel %vm567, 1, 0
        %v588 = vsel %vm568, 1, 0
        %v589 = vsel %vm569, 1, 0
        %v590 = vsel %vm570, 1, 0
        %v591 = vsel %vm571, 1, 0
        %v592 = vsel %vm572, 1, 0
        %v593 = vsel %vm573, 1, 0
        %v594 = vsel %vm574, 1, 0
        %v595 = vsel %vm575, 1, 0
        %v596 = vcvt.s32.f32 %v576
        %v597 = vcvt.s32.f32 %v577
        %v598 = vcvt.s32.f32 %v578
        %v599 = vcvt.s32.f32 %v579
        %v600 = vcvt.s32.f32 %v580
        %v601 = vcvt.s32.f32 %v581
        %v602 = vcvt.s32.f32 %v582
        %v603 = vcvt.s32.f32 %v583
        %v604 = vcvt.s32.f32 %v584
        %v605 = vcvt.s32.f32 %v585
        %v606 = vcvt.s32.f32 %v586
        %v607 = vcvt.s32.f32 %v587
        %v608 = vcvt.s32.f32 %v588
        %v609 = vcvt.s32.f32 %v589
        %v610 = vcvt.s32.f32 %v590
        %v611 = vcvt.s32.f32 %v591
        %v612 = vcvt.s32.f32 %v592
        %v613 = vcvt.s32.f32 %v593
        %v614 = vcvt.s32.f32 %v594
        %v615 = vcvt.s32.f32 %v595
        %vm616 = vcmp.ne.s32.totalorder %v536, 15
        %vm617 = vcmp.ne.s32.totalorder %v537, 15
        %vm618 = vcmp.ne.s32.totalorder %v538, 15
        %vm619 = vcmp.ne.s32.totalorder %v539, 15
        %vm620 = vcmp.ne.s32.totalorder %v540, 15
        %vm621 = vcmp.ne.s32.totalorder %v541, 15
        %vm622 = vcmp.ne.s32.totalorder %v542, 15
        %vm623 = vcmp.ne.s32.totalorder %v543, 15
        %vm624 = vcmp.ne.s32.totalorder %v544, 15
        %vm625 = vcmp.ne.s32.totalorder %v545, 15
        %vm626 = vcmp.ne.s32.totalorder %v546, 15
        %vm627 = vcmp.ne.s32.totalorder %v547, 15
        %vm628 = vcmp.ne.s32.totalorder %v548, 15
        %vm629 = vcmp.ne.s32.totalorder %v549, 15
        %vm630 = vcmp.ne.s32.totalorder %v550, 15
        %vm631 = vcmp.ne.s32.totalorder %v551, 15
        %vm632 = vcmp.ne.s32.totalorder %v552, 15
        %vm633 = vcmp.ne.s32.totalorder %v553, 15
        %vm634 = vcmp.ne.s32.totalorder %v554, 15
        %vm635 = vcmp.ne.s32.totalorder %v555, 15
        %v636 = vsel %vm616, 1, 0
        %v637 = vsel %vm617, 1, 0
        %v638 = vsel %vm618, 1, 0
        %v639 = vsel %vm619, 1, 0
        %v640 = vsel %vm620, 1, 0
        %v641 = vsel %vm621, 1, 0
        %v642 = vsel %vm622, 1, 0
        %v643 = vsel %vm623, 1, 0
        %v644 = vsel %vm624, 1, 0
        %v645 = vsel %vm625, 1, 0
        %v646 = vsel %vm626, 1, 0
        %v647 = vsel %vm627, 1, 0
        %v648 = vsel %vm628, 1, 0
        %v649 = vsel %vm629, 1, 0
        %v650 = vsel %vm630, 1, 0
        %v651 = vsel %vm631, 1, 0
        %v652 = vsel %vm632, 1, 0
        %v653 = vsel %vm633, 1, 0
        %v654 = vsel %vm634, 1, 0
        %v655 = vsel %vm635, 1, 0
        %v656 = vcvt.s32.f32 %v636
        %v657 = vcvt.s32.f32 %v637
        %v658 = vcvt.s32.f32 %v638
        %v659 = vcvt.s32.f32 %v639
        %v660 = vcvt.s32.f32 %v640
        %v661 = vcvt.s32.f32 %v641
        %v662 = vcvt.s32.f32 %v642
        %v663 = vcvt.s32.f32 %v643
        %v664 = vcvt.s32.f32 %v644
        %v665 = vcvt.s32.f32 %v645
        %v666 = vcvt.s32.f32 %v646
        %v667 = vcvt.s32.f32 %v647
        %v668 = vcvt.s32.f32 %v648
        %v669 = vcvt.s32.f32 %v649
        %v670 = vcvt.s32.f32 %v650
        %v671 = vcvt.s32.f32 %v651
        %v672 = vcvt.s32.f32 %v652
        %v673 = vcvt.s32.f32 %v653
        %v674 = vcvt.s32.f32 %v654
        %v675 = vcvt.s32.f32 %v655
        %vm676 = vcmask 523264
        %677 = vst.msk [vmem:[#allocation2] sm:$0xff] %vm676, 0.0
        %678 = vst.msk [vmem:[#allocation2 + $0x8] sm:$0xff] %vm676, 0.0
        %679 = vst.msk [vmem:[#allocation2 + $0x110] sm:$0xff] %vm676, 0.0
        %680 = vst.msk [vmem:[#allocation2 + $0x118] sm:$0xff] %vm676, 0.0
        %v681 = vld [vmem:[%s288] sm:$0xf]
        %v682 = vld [vmem:[%s288 + $0x4] sm:$0xf]
        %v683 = vld [vmem:[%s288 + $0x8] sm:$0xf]
        %v684 = vld [vmem:[%s288 + $0xc] sm:$0xf]
        %v685 = vld [vmem:[%s288 + $0x10] sm:$0xf]
        %v686 = vld [vmem:[%s288 + $0x14] sm:$0xf]
        %v687 = vld [vmem:[%s288 + $0x18] sm:$0xf]
        %v688 = vld [vmem:[%s288 + $0x1c] sm:$0xf]
        %v689 = vld [vmem:[%s288 + $0x20] sm:$0xf]
        %v690 = vld [vmem:[%s288 + $0x24] sm:$0xf]
        %v691 = vld [vmem:[%s288 + $0x28] sm:$0xf]
        %v692 = vld [vmem:[%s288 + $0x2c] sm:$0xf]
        %v693 = vld [vmem:[%s288 + $0x30] sm:$0xf]
        %v694 = vld [vmem:[%s288 + $0x34] sm:$0xf]
        %v695 = vld [vmem:[%s288 + $0x38] sm:$0xf]
        %v696 = vld [vmem:[%s288 + $0x3c] sm:$0xf]
        %v697 = vld [vmem:[%s288 + $0x40] sm:$0xf]
        %v698 = vld [vmem:[%s288 + $0x44] sm:$0xf]
        %v699 = vld [vmem:[%s288 + $0x48] sm:$0xf]
        %v700 = vld [vmem:[%s288 + $0x4c] sm:$0xf]
        %v701 = vld [vmem:[%s288 + $0x50] sm:$0xf]
        %v702 = vld [vmem:[%s288 + $0x54] sm:$0xf]
        %v703 = vld [vmem:[%s288 + $0x58] sm:$0xf]
        %v704 = vld [vmem:[%s288 + $0x5c] sm:$0xf]
        %v705 = vld [vmem:[%s288 + $0x60] sm:$0xf]
        %v706 = vld [vmem:[%s288 + $0x64] sm:$0xf]
        %v707 = vld [vmem:[%s288 + $0x68] sm:$0xf]
        %v708 = vld [vmem:[%s288 + $0x6c] sm:$0xf]
        %v709 = vld [vmem:[%s288 + $0x70] sm:$0xf]
        %v710 = vld [vmem:[%s288 + $0x74] sm:$0xf]
        %v711 = vld [vmem:[%s288 + $0x78] sm:$0xf]
        %v712 = vld [vmem:[%s288 + $0x7c] sm:$0xf]
        %v713 = vunpack.c.l.bf16 %v681
        %v714 = vunpack.c.l.bf16 %v682
        %v715 = vunpack.c.l.bf16 %v683
        %v716 = vunpack.c.l.bf16 %v684
        %v717 = vunpack.c.l.bf16 %v685
        %v718 = vunpack.c.l.bf16 %v686
        %v719 = vunpack.c.l.bf16 %v687
        %v720 = vunpack.c.l.bf16 %v688
        %v721 = vunpack.c.l.bf16 %v689
        %v722 = vunpack.c.l.bf16 %v690
        %v723 = vunpack.c.l.bf16 %v691
        %v724 = vunpack.c.l.bf16 %v692
        %v725 = vunpack.c.l.bf16 %v693
        %v726 = vunpack.c.l.bf16 %v694
        %v727 = vunpack.c.l.bf16 %v695
        %v728 = vunpack.c.l.bf16 %v696
        %v729 = vunpack.c.l.bf16 %v697
        %v730 = vunpack.c.l.bf16 %v698
        %v731 = vunpack.c.l.bf16 %v699
        %v732 = vunpack.c.l.bf16 %v700
        %v733 = vunpack.c.l.bf16 %v701
        %v734 = vunpack.c.l.bf16 %v702
        %v735 = vunpack.c.l.bf16 %v703
        %v736 = vunpack.c.l.bf16 %v704
        %v737 = vunpack.c.l.bf16 %v705
        %v738 = vunpack.c.l.bf16 %v706
        %v739 = vunpack.c.l.bf16 %v707
        %v740 = vunpack.c.l.bf16 %v708
        %v741 = vunpack.c.l.bf16 %v709
        %v742 = vunpack.c.l.bf16 %v710
        %v743 = vunpack.c.l.bf16 %v711
        %v744 = vunpack.c.l.bf16 %v712
        %745 = vst.msk [vmem:[#allocation2 + $0x10] sm:$0xff] %vm676, %v713
        %746 = vst.msk [vmem:[#allocation2 + $0x18] sm:$0xff] %vm676, %v714
        %747 = vst.msk [vmem:[#allocation2 + $0x20] sm:$0xff] %vm676, %v715
        %748 = vst.msk [vmem:[#allocation2 + $0x28] sm:$0xff] %vm676, %v716
        %749 = vst.msk [vmem:[#allocation2 + $0x30] sm:$0xff] %vm676, %v717
        %750 = vst.msk [vmem:[#allocation2 + $0x38] sm:$0xff] %vm676, %v718
        %751 = vst.msk [vmem:[#allocation2 + $0x40] sm:$0xff] %vm676, %v719
        %752 = vst.msk [vmem:[#allocation2 + $0x48] sm:$0xff] %vm676, %v720
        %753 = vst.msk [vmem:[#allocation2 + $0x50] sm:$0xff] %vm676, %v721
        %754 = vst.msk [vmem:[#allocation2 + $0x58] sm:$0xff] %vm676, %v722
        %755 = vst.msk [vmem:[#allocation2 + $0x60] sm:$0xff] %vm676, %v723
        %756 = vst.msk [vmem:[#allocation2 + $0x68] sm:$0xff] %vm676, %v724
        %757 = vst.msk [vmem:[#allocation2 + $0x70] sm:$0xff] %vm676, %v725
        %758 = vst.msk [vmem:[#allocation2 + $0x78] sm:$0xff] %vm676, %v726
        %759 = vst.msk [vmem:[#allocation2 + $0x80] sm:$0xff] %vm676, %v727
        %760 = vst.msk [vmem:[#allocation2 + $0x88] sm:$0xff] %vm676, %v728
        %761 = vst.msk [vmem:[#allocation2 + $0x90] sm:$0xff] %vm676, %v729
        %762 = vst.msk [vmem:[#allocation2 + $0x98] sm:$0xff] %vm676, %v730
        %763 = vst.msk [vmem:[#allocation2 + $0xa0] sm:$0xff] %vm676, %v731
        %764 = vst.msk [vmem:[#allocation2 + $0xa8] sm:$0xff] %vm676, %v732
        %765 = vst.msk [vmem:[#allocation2 + $0xb0] sm:$0xff] %vm676, %v733
        %766 = vst.msk [vmem:[#allocation2 + $0xb8] sm:$0xff] %vm676, %v734
        %767 = vst.msk [vmem:[#allocation2 + $0xc0] sm:$0xff] %vm676, %v735
        %768 = vst.msk [vmem:[#allocation2 + $0xc8] sm:$0xff] %vm676, %v736
        %769 = vst.msk [vmem:[#allocation2 + $0xd0] sm:$0xff] %vm676, %v737
        %770 = vst.msk [vmem:[#allocation2 + $0xd8] sm:$0xff] %vm676, %v738
        %771 = vst.msk [vmem:[#allocation2 + $0xe0] sm:$0xff] %vm676, %v739
        %772 = vst.msk [vmem:[#allocation2 + $0xe8] sm:$0xff] %vm676, %v740
        %773 = vst.msk [vmem:[#allocation2 + $0xf0] sm:$0xff] %vm676, %v741
        %774 = vst.msk [vmem:[#allocation2 + $0xf8] sm:$0xff] %vm676, %v742
        %775 = vst.msk [vmem:[#allocation2 + $0x100] sm:$0xff] %vm676, %v743
        %776 = vst.msk [vmem:[#allocation2 + $0x108] sm:$0xff] %vm676, %v744
        %777 = vst.msk [vmem:[#allocation3] sm:$0xff] %vm676, 0.0
        %778 = vst.msk [vmem:[#allocation3 + $0x8] sm:$0xff] %vm676, 0.0
        %779 = vst.msk [vmem:[#allocation3 + $0x110] sm:$0xff] %vm676, 0.0
        %780 = vst.msk [vmem:[#allocation3 + $0x118] sm:$0xff] %vm676, 0.0
        %v781 = vld [vmem:[%s2] sm:$0x1]
        %v782 = vld [vmem:[%s3] sm:$0x1]
        %v783 = vld [vmem:[%s5] sm:$0x1]
        %v784 = vld [vmem:[%s6] sm:$0x1]
        %v785 = vld [vmem:[#allocation2] sm:$0xff]
        %v786 = vld [vmem:[#allocation2 + $0x8] sm:$0xff]
        %v787 = vld [vmem:[#allocation2 + $0x10] sm:$0xff]
        %v788 = vld [vmem:[#allocation2 + $0x18] sm:$0xff]
        %v789 = vld [vmem:[#allocation2 + $0x20] sm:$0xff]
        %v790 = vld [vmem:[#allocation2 + $0x28] sm:$0xff]
        %v791 = vld [vmem:[#allocation2 + $0x30] sm:$0xff]
        %v792 = vld [vmem:[#allocation2 + $0x38] sm:$0xff]
        %v793 = vld [vmem:[#allocation2 + $0x40] sm:$0xff]
        %v794 = vld [vmem:[#allocation2 + $0x48] sm:$0xff]
        %v795 = vld [vmem:[#allocation2 + $0x50] sm:$0xff]
        %v796 = vld [vmem:[#allocation2 + $0x58] sm:$0xff]
        %v797 = vld [vmem:[#allocation2 + $0x60] sm:$0xff]
        %v798 = vld [vmem:[#allocation2 + $0x68] sm:$0xff]
        %v799 = vld [vmem:[#allocation2 + $0x70] sm:$0xff]
        %v800 = vld [vmem:[#allocation2 + $0x78] sm:$0xff]
        %v801 = vld [vmem:[#allocation2 + $0x80] sm:$0xff]
        %v802 = vld [vmem:[#allocation2 + $0x88] sm:$0xff]
        %v803 = vld [vmem:[#allocation2 + $0x90] sm:$0xff]
        %v804 = vld [vmem:[#allocation2 + $0x98] sm:$0xff]
        %v805 = vrot.slane %v785, 7
        %v806 = vrot.slane %v786, 7
        %v807 = vrot.slane %v787, 7
        %v808 = vrot.slane %v788, 7
        %v809 = vrot.slane %v789, 7
        %v810 = vrot.slane %v790, 7
        %v811 = vrot.slane %v791, 7
        %v812 = vrot.slane %v792, 7
        %v813 = vrot.slane %v793, 7
        %v814 = vrot.slane %v794, 7
        %v815 = vrot.slane %v795, 7
        %v816 = vrot.slane %v796, 7
        %v817 = vrot.slane %v797, 7
        %v818 = vrot.slane %v798, 7
        %v819 = vrot.slane %v799, 7
        %v820 = vrot.slane %v800, 7
        %v821 = vrot.slane %v801, 7
        %v822 = vrot.slane %v802, 7
        %v823 = vrot.slane %v803, 7
        %v824 = vrot.slane %v804, 7
        %vm825 = vcmp.lt.s32.totalorder %v296, 1
        %v826 = vsel %vm825, %v823, %v824
        %v827 = vsel %vm825, %v822, %v823
        %v828 = vsel %vm825, %v821, %v822
        %v829 = vsel %vm825, %v820, %v821
        %v830 = vsel %vm825, %v819, %v820
        %v831 = vsel %vm825, %v818, %v819
        %v832 = vsel %vm825, %v817, %v818
        %v833 = vsel %vm825, %v816, %v817
        %v834 = vsel %vm825, %v815, %v816
        %v835 = vsel %vm825, %v814, %v815
        %v836 = vsel %vm825, %v813, %v814
        %v837 = vsel %vm825, %v812, %v813
        %v838 = vsel %vm825, %v811, %v812
        %v839 = vsel %vm825, %v810, %v811
        %v840 = vsel %vm825, %v809, %v810
        %v841 = vsel %vm825, %v808, %v809
        %v842 = vsel %vm825, %v807, %v808
        %v843 = vsel %vm825, %v806, %v807
        %v844 = vsel %vm825, %v805, %v806
        %v845 = vsel %vm825, %v824, %v805
        %v846 = vmul.f32 %v845, %v596
        %v847 = vmul.f32 %v844, %v597
        %v848 = vmul.f32 %v843, %v598
        %v849 = vmul.f32 %v842, %v599
        %v850 = vmul.f32 %v841, %v600
        %v851 = vmul.f32 %v840, %v601
        %v852 = vmul.f32 %v839, %v602
        %v853 = vmul.f32 %v838, %v603
        %v854 = vmul.f32 %v837, %v604
        %v855 = vmul.f32 %v836, %v605
        %v856 = vmul.f32 %v835, %v606
        %v857 = vmul.f32 %v834, %v607
        %v858 = vmul.f32 %v833, %v608
        %v859 = vmul.f32 %v832, %v609
        %v860 = vmul.f32 %v831, %v610
        %v861 = vmul.f32 %v830, %v611
        %v862 = vmul.f32 %v829, %v612
        %v863 = vmul.f32 %v828, %v613
        %v864 = vmul.f32 %v827, %v614
        %v865 = vmul.f32 %v826, %v615
        %v866 = vpack.c.bf16 %v847, %v846
        %v867 = vpack.c.bf16 %v849, %v848
        %v868 = vpack.c.bf16 %v851, %v850
        %v869 = vpack.c.bf16 %v853, %v852
        %v870 = vpack.c.bf16 %v855, %v854
        %v871 = vpack.c.bf16 %v857, %v856
        %v872 = vpack.c.bf16 %v859, %v858
        %v873 = vpack.c.bf16 %v861, %v860
        %v874 = vpack.c.bf16 %v863, %v862
        %v875 = vpack.c.bf16 %v865, %v864
        %v876 = vld [vmem:[%s1] sm:$0xf]
        %v877 = vld [vmem:[%s1 + $0x4] sm:$0xf]
        %v878 = vld [vmem:[%s1 + $0x8] sm:$0xf]
        %v879 = vld [vmem:[%s1 + $0xc] sm:$0xf]
        %v880 = vld [vmem:[%s1 + $0x10] sm:$0xf]
        %v881 = vld [vmem:[%s1 + $0x14] sm:$0xf]
        %v882 = vld [vmem:[%s1 + $0x18] sm:$0xf]
        %v883 = vld [vmem:[%s1 + $0x1c] sm:$0xf]
        %s884 = scalar_lea.vmem %s1, 96
        %v885 = vld [vmem:[%s884] sm:$0xf]
        %v886 = vld [vmem:[%s884 + $0x4] sm:$0xf]
        %v887 = vld [vmem:[%s884 + $0x8] sm:$0xf]
        %v888 = vld [vmem:[%s884 + $0xc] sm:$0xf]
        %v889 = vld [vmem:[%s884 + $0x10] sm:$0xf]
        %v890 = vld [vmem:[%s884 + $0x14] sm:$0xf]
        %v891 = vld [vmem:[%s884 + $0x18] sm:$0xf]
        %v892 = vld [vmem:[%s884 + $0x1c] sm:$0xf]
        %v901 = vunpack.c.l.b16 %v885
        %v902 = vunpack.c.l.b16 %v886
        %v903 = vunpack.c.l.b16 %v887
        %v904 = vunpack.c.l.b16 %v888
        %v905 = vunpack.c.l.b16 %v889
        %v906 = vunpack.c.l.b16 %v890
        %v907 = vunpack.c.l.b16 %v891
        %v908 = vunpack.c.l.b16 %v892
        %v909 = vpack.c.b16 %v902, %v901
        %v910 = vpack.c.b16 %v904, %v903
        %v911 = vpack.c.b16 %v906, %v905
        %v912 = vpack.c.b16 %v908, %v907
        %v918 = vsel %vm676, %v867, 0
        %v921 = vsel %vm676, %v868, 0
        %v924 = vsel %vm676, %v869, 0
        %v927 = vsel %vm676, %v870, 0
        %v930 = vsel %vm676, %v871, 0
        %v933 = vsel %vm676, %v872, 0
        %v936 = vsel %vm676, %v873, 0
        %v939 = vsel %vm676, %v874, 0
        %941 = vmatprep.subr.bf16.mxu0 0
        %942 = vmatpush1.bf16.msra.mxu0 %v909
        %943 = vmatprep.subr.bf16.mxu0 0
        %944 = vmatpush1.bf16.msra.mxu0 %v910
        %945 = vmatprep.subr.bf16.mxu0 0
        %946 = vmatpush1.bf16.msra.mxu0 %v911
        %947 = vmatprep.subr.bf16.mxu0 0
        %948 = vmatpush1.bf16.msra.mxu0 %v912
        %949 = vmatprep.subr.bf16.mxu0 0
        %950 = vmatpush1.bf16.msra.mxu0 0
        %951 = vmatprep.subr.bf16.mxu0 0
        %952 = vmatpush1.bf16.msra.mxu0 0
        %953 = vmatprep.subr.bf16.mxu0 0
        %954 = vmatpush1.bf16.msra.mxu0 0
        %955 = vmatprep.subr.bf16.mxu0 0
        %956 = vmatpush1.bf16.msra.mxu0 0
        %957 = vmatprep.subr.bf16.mxu0 0
        %958 = vmatpush1.bf16.msra.mxu0 0
        %959 = vmatprep.subr.bf16.mxu0 0
        %960 = vmatpush1.bf16.msra.mxu0 0
        %961 = vmatprep.subr.bf16.mxu0 0
        %962 = vmatpush1.bf16.msra.mxu0 0
        %963 = vmatprep.subr.bf16.mxu0 0
        %964 = vmatpush1.bf16.msra.mxu0 0
        %965 = vmatprep.subr.bf16.mxu0 0
        %966 = vmatpush1.bf16.msra.mxu0 0
        %967 = vmatprep.subr.bf16.mxu0 0
        %968 = vmatpush1.bf16.msra.mxu0 0
        %969 = vmatprep.subr.bf16.mxu0 0
        %970 = vmatpush1.bf16.msra.mxu0 0
        %971 = vmatprep.subr.bf16.mxu0 0
        %972 = vmatpush1.bf16.msra.mxu0 0
        %973 = vmatprep.mubr.bf16.mxu0 0
        %974 = vmatmul.mubr.bf16.gmra.mrb[0].mxu0 %v918
        %v975 = vpop.f32.mrb[0].mxu0
        %v976 = vadd.f32 0.0, %v975
        %v977 = vpop.f32.mrb[0].mxu0
        %v978 = vpop.f32.mrb[0].mxu0
        %v979 = vadd.f32 0.0, %v978
        %v980 = vpop.f32.mrb[0].mxu0
        %981 = vmatprep.mubr.bf16.mxu0 0
        %982 = vmatmul.mubr.bf16.gmra.mrb[0].mxu0 %v921
        %v983 = vpop.f32.mrb[0].mxu0
        %v984 = vadd.f32 0.0, %v983
        %v985 = vpop.f32.mrb[0].mxu0
        %v986 = vpop.f32.mrb[0].mxu0
        %v987 = vadd.f32 0.0, %v986
        %v988 = vpop.f32.mrb[0].mxu0
        %989 = vmatprep.mubr.bf16.mxu0 0
        %990 = vmatmul.mubr.bf16.gmra.mrb[0].mxu0 %v924
        %v991 = vpop.f32.mrb[0].mxu0
        %v992 = vadd.f32 0.0, %v991
        %v993 = vpop.f32.mrb[0].mxu0
        %v994 = vpop.f32.mrb[0].mxu0
        %v995 = vadd.f32 0.0, %v994
        %v996 = vpop.f32.mrb[0].mxu0
        %997 = vmatprep.mubr.bf16.mxu0 0
        %998 = vmatmul.mubr.bf16.gmra.mrb[0].mxu0 %v927
        %v999 = vpop.f32.mrb[0].mxu0
        %v1000 = vadd.f32 0.0, %v999
        %v1001 = vpop.f32.mrb[0].mxu0
        %v1002 = vpop.f32.mrb[0].mxu0
        %v1003 = vadd.f32 0.0, %v1002
        %v1004 = vpop.f32.mrb[0].mxu0
        %1005 = vmatprep.mubr.bf16.mxu0 0
        %1006 = vmatmul.mubr.bf16.gmra.mrb[0].mxu0 %v930
        %v1007 = vpop.f32.mrb[0].mxu0
        %v1008 = vadd.f32 0.0, %v1007
        %v1009 = vpop.f32.mrb[0].mxu0
        %v1010 = vpop.f32.mrb[0].mxu0
        %v1011 = vadd.f32 0.0, %v1010
        %v1012 = vpop.f32.mrb[0].mxu0
        %1013 = vmatprep.mubr.bf16.mxu0 0
        %1014 = vmatmul.mubr.bf16.gmra.mrb[0].mxu0 %v933
        %v1015 = vpop.f32.mrb[0].mxu0
        %v1016 = vadd.f32 0.0, %v1015
        %v1017 = vpop.f32.mrb[0].mxu0
        %v1018 = vpop.f32.mrb[0].mxu0
        %v1019 = vadd.f32 0.0, %v1018
        %v1020 = vpop.f32.mrb[0].mxu0
        %1021 = vmatprep.mubr.bf16.mxu0 0
        %1022 = vmatmul.mubr.bf16.gmra.mrb[0].mxu0 %v936
        %v1023 = vpop.f32.mrb[0].mxu0
        %v1024 = vadd.f32 0.0, %v1023
        %v1025 = vpop.f32.mrb[0].mxu0
        %v1026 = vpop.f32.mrb[0].mxu0
        %v1027 = vadd.f32 0.0, %v1026
        %v1028 = vpop.f32.mrb[0].mxu0
        %1029 = vmatprep.mubr.bf16.mxu0 0
        %1030 = vmatmul.mubr.bf16.gmra.mrb[0].mxu0 %v939
        %v1031 = vpop.f32.mrb[0].mxu0
        %v1032 = vadd.f32 0.0, %v1031
        %v1033 = vpop.f32.mrb[0].mxu0
        %v1034 = vpop.f32.mrb[0].mxu0
        %v1035 = vadd.f32 0.0, %v1034
        %v1036 = vpop.f32.mrb[0].mxu0
        %1037 = vdwg.mxu0
        %v1046 = vunpack.c.l.b16 %v876
        %v1047 = vunpack.c.l.b16 %v877
        %v1048 = vunpack.c.l.b16 %v878
        %v1049 = vunpack.c.l.b16 %v879
        %v1050 = vunpack.c.l.b16 %v880
        %v1051 = vunpack.c.l.b16 %v881
        %v1052 = vunpack.c.l.b16 %v882
        %v1053 = vunpack.c.l.b16 %v883
        %v1054 = vpack.c.b16 %v1047, %v1046
        %v1055 = vpack.c.b16 %v1049, %v1048
        %v1056 = vpack.c.b16 %v1051, %v1050
        %v1057 = vpack.c.b16 %v1053, %v1052
        %v1063 = vsel %vm676, %v866, 0
        %1065 = vmatprep.subr.bf16.mxu0 0
        %1066 = vmatpush1.bf16.msra.mxu0 %v1054
        %1067 = vmatprep.subr.bf16.mxu0 0
        %1068 = vmatpush1.bf16.msra.mxu0 %v1055
        %1069 = vmatprep.subr.bf16.mxu0 0
        %1070 = vmatpush1.bf16.msra.mxu0 %v1056
        %1071 = vmatprep.subr.bf16.mxu0 0
        %1072 = vmatpush1.bf16.msra.mxu0 %v1057
        %1073 = vmatprep.subr.bf16.mxu0 0
        %1074 = vmatpush1.bf16.msra.mxu0 0
        %1075 = vmatprep.subr.bf16.mxu0 0
        %1076 = vmatpush1.bf16.msra.mxu0 0
        %1077 = vmatprep.subr.bf16.mxu0 0
        %1078 = vmatpush1.bf16.msra.mxu0 0
        %1079 = vmatprep.subr.bf16.mxu0 0
        %1080 = vmatpush1.bf16.msra.mxu0 0
        %1081 = vmatprep.subr.bf16.mxu0 0
        %1082 = vmatpush1.bf16.msra.mxu0 0
        %1083 = vmatprep.subr.bf16.mxu0 0
        %1084 = vmatpush1.bf16.msra.mxu0 0
        %1085 = vmatprep.subr.bf16.mxu0 0
        %1086 = vmatpush1.bf16.msra.mxu0 0
        %1087 = vmatprep.subr.bf16.mxu0 0
        %1088 = vmatpush1.bf16.msra.mxu0 0
        %1089 = vmatprep.subr.bf16.mxu0 0
        %1090 = vmatpush1.bf16.msra.mxu0 0
        %1091 = vmatprep.subr.bf16.mxu0 0
        %1092 = vmatpush1.bf16.msra.mxu0 0
        %1093 = vmatprep.subr.bf16.mxu0 0
        %1094 = vmatpush1.bf16.msra.mxu0 0
        %1095 = vmatprep.subr.bf16.mxu0 0
        %1096 = vmatpush1.bf16.msra.mxu0 0
        %1097 = vmatprep.mubr.bf16.mxu0 0
        %1098 = vmatmul.mubr.bf16.gmra.mrb[0].mxu0 %v1063
        %v1099 = vpop.f32.mrb[0].mxu0
        %v1100 = vadd.f32 %v976, %v1099
        %v1101 = vpop.f32.mrb[0].mxu0
        %v1102 = vpop.f32.mrb[0].mxu0
        %v1103 = vadd.f32 %v979, %v1102
        %v1104 = vpop.f32.mrb[0].mxu0
        %1105 = vmatprep.mubr.bf16.mxu0 0
        %1106 = vmatmul.mubr.bf16.gmra.mrb[0].mxu0 %v918
        %v1107 = vpop.f32.mrb[0].mxu0
        %v1108 = vadd.f32 %v984, %v1107
        %v1109 = vpop.f32.mrb[0].mxu0
        %v1110 = vpop.f32.mrb[0].mxu0
        %v1111 = vadd.f32 %v987, %v1110
        %v1112 = vpop.f32.mrb[0].mxu0
        %1113 = vmatprep.mubr.bf16.mxu0 0
        %1114 = vmatmul.mubr.bf16.gmra.mrb[0].mxu0 %v921
        %v1115 = vpop.f32.mrb[0].mxu0
        %v1116 = vadd.f32 %v992, %v1115
        %v1117 = vpop.f32.mrb[0].mxu0
        %v1118 = vpop.f32.mrb[0].mxu0
        %v1119 = vadd.f32 %v995, %v1118
        %v1120 = vpop.f32.mrb[0].mxu0
        %1121 = vmatprep.mubr.bf16.mxu0 0
        %1122 = vmatmul.mubr.bf16.gmra.mrb[0].mxu0 %v924
        %v1123 = vpop.f32.mrb[0].mxu0
        %v1124 = vadd.f32 %v1000, %v1123
        %v1125 = vpop.f32.mrb[0].mxu0
        %v1126 = vpop.f32.mrb[0].mxu0
        %v1127 = vadd.f32 %v1003, %v1126
        %v1128 = vpop.f32.mrb[0].mxu0
        %1129 = vmatprep.mubr.bf16.mxu0 0
        %1130 = vmatmul.mubr.bf16.gmra.mrb[0].mxu0 %v927
        %v1131 = vpop.f32.mrb[0].mxu0
        %v1132 = vadd.f32 %v1008, %v1131
        %v1133 = vpop.f32.mrb[0].mxu0
        %v1134 = vpop.f32.mrb[0].mxu0
        %v1135 = vadd.f32 %v1011, %v1134
        %v1136 = vpop.f32.mrb[0].mxu0
        %1137 = vmatprep.mubr.bf16.mxu0 0
        %1138 = vmatmul.mubr.bf16.gmra.mrb[0].mxu0 %v930
        %v1139 = vpop.f32.mrb[0].mxu0
        %v1140 = vadd.f32 %v1016, %v1139
        %v1141 = vpop.f32.mrb[0].mxu0
        %v1142 = vpop.f32.mrb[0].mxu0
        %v1143 = vadd.f32 %v1019, %v1142
        %v1144 = vpop.f32.mrb[0].mxu0
        %1145 = vmatprep.mubr.bf16.mxu0 0
        %1146 = vmatmul.mubr.bf16.gmra.mrb[0].mxu0 %v933
        %v1147 = vpop.f32.mrb[0].mxu0
        %v1148 = vadd.f32 %v1024, %v1147
        %v1149 = vpop.f32.mrb[0].mxu0
        %v1150 = vpop.f32.mrb[0].mxu0
        %v1151 = vadd.f32 %v1027, %v1150
        %v1152 = vpop.f32.mrb[0].mxu0
        %1153 = vmatprep.mubr.bf16.mxu0 0
        %1154 = vmatmul.mubr.bf16.gmra.mrb[0].mxu0 %v936
        %v1155 = vpop.f32.mrb[0].mxu0
        %v1156 = vadd.f32 %v1032, %v1155
        %v1157 = vpop.f32.mrb[0].mxu0
        %v1158 = vpop.f32.mrb[0].mxu0
        %v1159 = vadd.f32 %v1035, %v1158
        %v1160 = vpop.f32.mrb[0].mxu0
        %1161 = vdwg.mxu0
        %s1162 = scalar_lea.vmem %s1, 192
        %v1163 = vld [vmem:[%s1162] sm:$0xf]
        %v1164 = vld [vmem:[%s1162 + $0x4] sm:$0xf]
        %v1165 = vld [vmem:[%s1162 + $0x8] sm:$0xf]
        %v1166 = vld [vmem:[%s1162 + $0xc] sm:$0xf]
        %v1167 = vld [vmem:[%s1162 + $0x10] sm:$0xf]
        %v1168 = vld [vmem:[%s1162 + $0x14] sm:$0xf]
        %v1169 = vld [vmem:[%s1162 + $0x18] sm:$0xf]
        %v1170 = vld [vmem:[%s1162 + $0x1c] sm:$0xf]
        %v1179 = vunpack.c.l.b16 %v1163
        %v1180 = vunpack.c.l.b16 %v1164
        %v1181 = vunpack.c.l.b16 %v1165
        %v1182 = vunpack.c.l.b16 %v1166
        %v1183 = vunpack.c.l.b16 %v1167
        %v1184 = vunpack.c.l.b16 %v1168
        %v1185 = vunpack.c.l.b16 %v1169
        %v1186 = vunpack.c.l.b16 %v1170
        %v1187 = vpack.c.b16 %v1180, %v1179
        %v1188 = vpack.c.b16 %v1182, %v1181
        %v1189 = vpack.c.b16 %v1184, %v1183
        %v1190 = vpack.c.b16 %v1186, %v1185
        %v1196 = vsel %vm676, %v875, 0
        %1198 = vmatprep.subr.bf16.mxu0 0
        %1199 = vmatpush1.bf16.msra.mxu0 %v1187
        %1200 = vmatprep.subr.bf16.mxu0 0
        %1201 = vmatpush1.bf16.msra.mxu0 %v1188
        %1202 = vmatprep.subr.bf16.mxu0 0
        %1203 = vmatpush1.bf16.msra.mxu0 %v1189
        %1204 = vmatprep.subr.bf16.mxu0 0
        %1205 = vmatpush1.bf16.msra.mxu0 %v1190
        %1206 = vmatprep.subr.bf16.mxu0 0
        %1207 = vmatpush1.bf16.msra.mxu0 0
        %1208 = vmatprep.subr.bf16.mxu0 0
        %1209 = vmatpush1.bf16.msra.mxu0 0
        %1210 = vmatprep.subr.bf16.mxu0 0
        %1211 = vmatpush1.bf16.msra.mxu0 0
        %1212 = vmatprep.subr.bf16.mxu0 0
        %1213 = vmatpush1.bf16.msra.mxu0 0
        %1214 = vmatprep.subr.bf16.mxu0 0
        %1215 = vmatpush1.bf16.msra.mxu0 0
        %1216 = vmatprep.subr.bf16.mxu0 0
        %1217 = vmatpush1.bf16.msra.mxu0 0
        %1218 = vmatprep.subr.bf16.mxu0 0
        %1219 = vmatpush1.bf16.msra.mxu0 0
        %1220 = vmatprep.subr.bf16.mxu0 0
        %1221 = vmatpush1.bf16.msra.mxu0 0
        %1222 = vmatprep.subr.bf16.mxu0 0
        %1223 = vmatpush1.bf16.msra.mxu0 0
        %1224 = vmatprep.subr.bf16.mxu0 0
        %1225 = vmatpush1.bf16.msra.mxu0 0
        %1226 = vmatprep.subr.bf16.mxu0 0
        %1227 = vmatpush1.bf16.msra.mxu0 0
        %1228 = vmatprep.subr.bf16.mxu0 0
        %1229 = vmatpush1.bf16.msra.mxu0 0
        %1230 = vmatprep.mubr.bf16.mxu0 0
        %1231 = vmatmul.mubr.bf16.gmra.mrb[0].mxu0 %v921
        %v1232 = vpop.f32.mrb[0].mxu0
        %v1233 = vadd.f32 0.0, %v1232
        %v1234 = vpop.f32.mrb[0].mxu0
        %v1235 = vpop.f32.mrb[0].mxu0
        %v1236 = vadd.f32 0.0, %v1235
        %v1237 = vpop.f32.mrb[0].mxu0
        %1238 = vmatprep.mubr.bf16.mxu0 0
        %1239 = vmatmul.mubr.bf16.gmra.mrb[0].mxu0 %v924
        %v1240 = vpop.f32.mrb[0].mxu0
        %v1241 = vadd.f32 0.0, %v1240
        %v1242 = vpop.f32.mrb[0].mxu0
        %v1243 = vpop.f32.mrb[0].mxu0
        %v1244 = vadd.f32 0.0, %v1243
        %v1245 = vpop.f32.mrb[0].mxu0
        %1246 = vmatprep.mubr.bf16.mxu0 0
        %1247 = vmatmul.mubr.bf16.gmra.mrb[0].mxu0 %v927
        %v1248 = vpop.f32.mrb[0].mxu0
        %v1249 = vadd.f32 0.0, %v1248
        %v1250 = vpop.f32.mrb[0].mxu0
        %v1251 = vpop.f32.mrb[0].mxu0
        %v1252 = vadd.f32 0.0, %v1251
        %v1253 = vpop.f32.mrb[0].mxu0
        %1254 = vmatprep.mubr.bf16.mxu0 0
        %1255 = vmatmul.mubr.bf16.gmra.mrb[0].mxu0 %v930
        %v1256 = vpop.f32.mrb[0].mxu0
        %v1257 = vadd.f32 0.0, %v1256
        %v1258 = vpop.f32.mrb[0].mxu0
        %v1259 = vpop.f32.mrb[0].mxu0
        %v1260 = vadd.f32 0.0, %v1259
        %v1261 = vpop.f32.mrb[0].mxu0
        %1262 = vmatprep.mubr.bf16.mxu0 0
        %1263 = vmatmul.mubr.bf16.gmra.mrb[0].mxu0 %v933
        %v1264 = vpop.f32.mrb[0].mxu0
        %v1265 = vadd.f32 0.0, %v1264
        %v1266 = vpop.f32.mrb[0].mxu0
        %v1267 = vpop.f32.mrb[0].mxu0
        %v1268 = vadd.f32 0.0, %v1267
        %v1269 = vpop.f32.mrb[0].mxu0
        %1270 = vmatprep.mubr.bf16.mxu0 0
        %1271 = vmatmul.mubr.bf16.gmra.mrb[0].mxu0 %v936
        %v1272 = vpop.f32.mrb[0].mxu0
        %v1273 = vadd.f32 0.0, %v1272
        %v1274 = vpop.f32.mrb[0].mxu0
        %v1275 = vpop.f32.mrb[0].mxu0
        %v1276 = vadd.f32 0.0, %v1275
        %v1277 = vpop.f32.mrb[0].mxu0
        %1278 = vmatprep.mubr.bf16.mxu0 0
        %1279 = vmatmul.mubr.bf16.gmra.mrb[0].mxu0 %v939
        %v1280 = vpop.f32.mrb[0].mxu0
        %v1281 = vadd.f32 0.0, %v1280
        %v1282 = vpop.f32.mrb[0].mxu0
        %v1283 = vpop.f32.mrb[0].mxu0
        %v1284 = vadd.f32 0.0, %v1283
        %v1285 = vpop.f32.mrb[0].mxu0
        %1286 = vmatprep.mubr.bf16.mxu0 0
        %1287 = vmatmul.mubr.bf16.gmra.mrb[0].mxu0 %v1196
        %v1288 = vpop.f32.mrb[0].mxu0
        %v1289 = vadd.f32 0.0, %v1288
        %v1290 = vpop.f32.mrb[0].mxu0
        %v1291 = vpop.f32.mrb[0].mxu0
        %v1292 = vadd.f32 0.0, %v1291
        %v1293 = vpop.f32.mrb[0].mxu0
        %1294 = vdwg.mxu0
        %v1295 = vadd.f32 %v1100, %v1233
        %v1296 = vadd.f32 %v1103, %v1236
        %v1297 = vadd.f32 %v1108, %v1241
        %v1298 = vadd.f32 %v1111, %v1244
        %v1299 = vadd.f32 %v1116, %v1249
        %v1300 = vadd.f32 %v1119, %v1252
        %v1301 = vadd.f32 %v1124, %v1257
        %v1302 = vadd.f32 %v1127, %v1260
        %v1303 = vadd.f32 %v1132, %v1265
        %v1304 = vadd.f32 %v1135, %v1268
        %v1305 = vadd.f32 %v1140, %v1273
        %v1306 = vadd.f32 %v1143, %v1276
        %v1307 = vadd.f32 %v1148, %v1281
        %v1308 = vadd.f32 %v1151, %v1284
        %v1309 = vadd.f32 %v1156, %v1289
        %v1310 = vadd.f32 %v1159, %v1292
        %v1311 = vpack.c.bf16 %v786, %v785
        %v1312 = vpack.c.bf16 %v788, %v787
        %v1313 = vpack.c.bf16 %v790, %v789
        %v1314 = vpack.c.bf16 %v792, %v791
        %v1315 = vpack.c.bf16 %v794, %v793
        %v1316 = vpack.c.bf16 %v796, %v795
        %v1317 = vpack.c.bf16 %v798, %v797
        %v1318 = vpack.c.bf16 %v800, %v799
        %v1319 = vpack.c.bf16 %v802, %v801
        %v1320 = vpack.c.bf16 %v804, %v803
        %s1321 = scalar_lea.vmem %s1, 32
        %v1322 = vld [vmem:[%s1321] sm:$0xf]
        %v1323 = vld [vmem:[%s1321 + $0x4] sm:$0xf]
        %v1324 = vld [vmem:[%s1321 + $0x8] sm:$0xf]
        %v1325 = vld [vmem:[%s1321 + $0xc] sm:$0xf]
        %v1326 = vld [vmem:[%s1321 + $0x10] sm:$0xf]
        %v1327 = vld [vmem:[%s1321 + $0x14] sm:$0xf]
        %v1328 = vld [vmem:[%s1321 + $0x18] sm:$0xf]
        %v1329 = vld [vmem:[%s1321 + $0x1c] sm:$0xf]
        %v1338 = vunpack.c.l.b16 %v1322
        %v1339 = vunpack.c.l.b16 %v1323
        %v1340 = vunpack.c.l.b16 %v1324
        %v1341 = vunpack.c.l.b16 %v1325
        %v1342 = vunpack.c.l.b16 %v1326
        %v1343 = vunpack.c.l.b16 %v1327
        %v1344 = vunpack.c.l.b16 %v1328
        %v1345 = vunpack.c.l.b16 %v1329
        %v1346 = vpack.c.b16 %v1339, %v1338
        %v1347 = vpack.c.b16 %v1341, %v1340
        %v1348 = vpack.c.b16 %v1343, %v1342
        %v1349 = vpack.c.b16 %v1345, %v1344
        %v1355 = vsel %vm676, %v1311, 0
        %v1358 = vsel %vm676, %v1312, 0
        %v1361 = vsel %vm676, %v1313, 0
        %v1364 = vsel %vm676, %v1314, 0
        %v1367 = vsel %vm676, %v1315, 0
        %v1370 = vsel %vm676, %v1316, 0
        %v1373 = vsel %vm676, %v1317, 0
        %v1376 = vsel %vm676, %v1318, 0
        %1378 = vmatprep.subr.bf16.mxu0 0
        %1379 = vmatpush1.bf16.msra.mxu0 %v1346
        %1380 = vmatprep.subr.bf16.mxu0 0
        %1381 = vmatpush1.bf16.msra.mxu0 %v1347
        %1382 = vmatprep.subr.bf16.mxu0 0
        %1383 = vmatpush1.bf16.msra.mxu0 %v1348
        %1384 = vmatprep.subr.bf16.mxu0 0
        %1385 = vmatpush1.bf16.msra.mxu0 %v1349
        %1386 = vmatprep.subr.bf16.mxu0 0
        %1387 = vmatpush1.bf16.msra.mxu0 0
        %1388 = vmatprep.subr.bf16.mxu0 0
        %1389 = vmatpush1.bf16.msra.mxu0 0
        %1390 = vmatprep.subr.bf16.mxu0 0
        %1391 = vmatpush1.bf16.msra.mxu0 0
        %1392 = vmatprep.subr.bf16.mxu0 0
        %1393 = vmatpush1.bf16.msra.mxu0 0
        %1394 = vmatprep.subr.bf16.mxu0 0
        %1395 = vmatpush1.bf16.msra.mxu0 0
        %1396 = vmatprep.subr.bf16.mxu0 0
        %1397 = vmatpush1.bf16.msra.mxu0 0
        %1398 = vmatprep.subr.bf16.mxu0 0
        %1399 = vmatpush1.bf16.msra.mxu0 0
        %1400 = vmatprep.subr.bf16.mxu0 0
        %1401 = vmatpush1.bf16.msra.mxu0 0
        %1402 = vmatprep.subr.bf16.mxu0 0
        %1403 = vmatpush1.bf16.msra.mxu0 0
        %1404 = vmatprep.subr.bf16.mxu0 0
        %1405 = vmatpush1.bf16.msra.mxu0 0
        %1406 = vmatprep.subr.bf16.mxu0 0
        %1407 = vmatpush1.bf16.msra.mxu0 0
        %1408 = vmatprep.subr.bf16.mxu0 0
        %1409 = vmatpush1.bf16.msra.mxu0 0
        %1410 = vmatprep.mubr.bf16.mxu0 0
        %1411 = vmatmul.mubr.bf16.gmra.mrb[0].mxu0 %v1355
        %v1412 = vpop.f32.mrb[0].mxu0
        %v1413 = vadd.f32 0.0, %v1412
        %v1414 = vpop.f32.mrb[0].mxu0
        %v1415 = vpop.f32.mrb[0].mxu0
        %v1416 = vadd.f32 0.0, %v1415
        %v1417 = vpop.f32.mrb[0].mxu0
        %1418 = vmatprep.mubr.bf16.mxu0 0
        %1419 = vmatmul.mubr.bf16.gmra.mrb[0].mxu0 %v1358
        %v1420 = vpop.f32.mrb[0].mxu0
        %v1421 = vadd.f32 0.0, %v1420
        %v1422 = vpop.f32.mrb[0].mxu0
        %v1423 = vpop.f32.mrb[0].mxu0
        %v1424 = vadd.f32 0.0, %v1423
        %v1425 = vpop.f32.mrb[0].mxu0
        %1426 = vmatprep.mubr.bf16.mxu0 0
        %1427 = vmatmul.mubr.bf16.gmra.mrb[0].mxu0 %v1361
        %v1428 = vpop.f32.mrb[0].mxu0
        %v1429 = vadd.f32 0.0, %v1428
        %v1430 = vpop.f32.mrb[0].mxu0
        %v1431 = vpop.f32.mrb[0].mxu0
        %v1432 = vadd.f32 0.0, %v1431
        %v1433 = vpop.f32.mrb[0].mxu0
        %1434 = vmatprep.mubr.bf16.mxu0 0
        %1435 = vmatmul.mubr.bf16.gmra.mrb[0].mxu0 %v1364
        %v1436 = vpop.f32.mrb[0].mxu0
        %v1437 = vadd.f32 0.0, %v1436
        %v1438 = vpop.f32.mrb[0].mxu0
        %v1439 = vpop.f32.mrb[0].mxu0
        %v1440 = vadd.f32 0.0, %v1439
        %v1441 = vpop.f32.mrb[0].mxu0
        %1442 = vmatprep.mubr.bf16.mxu0 0
        %1443 = vmatmul.mubr.bf16.gmra.mrb[0].mxu0 %v1367
        %v1444 = vpop.f32.mrb[0].mxu0
        %v1445 = vadd.f32 0.0, %v1444
        %v1446 = vpop.f32.mrb[0].mxu0
        %v1447 = vpop.f32.mrb[0].mxu0
        %v1448 = vadd.f32 0.0, %v1447
        %v1449 = vpop.f32.mrb[0].mxu0
        %1450 = vmatprep.mubr.bf16.mxu0 0
        %1451 = vmatmul.mubr.bf16.gmra.mrb[0].mxu0 %v1370
        %v1452 = vpop.f32.mrb[0].mxu0
        %v1453 = vadd.f32 0.0, %v1452
        %v1454 = vpop.f32.mrb[0].mxu0
        %v1455 = vpop.f32.mrb[0].mxu0
        %v1456 = vadd.f32 0.0, %v1455
        %v1457 = vpop.f32.mrb[0].mxu0
        %1458 = vmatprep.mubr.bf16.mxu0 0
        %1459 = vmatmul.mubr.bf16.gmra.mrb[0].mxu0 %v1373
        %v1460 = vpop.f32.mrb[0].mxu0
        %v1461 = vadd.f32 0.0, %v1460
        %v1462 = vpop.f32.mrb[0].mxu0
        %v1463 = vpop.f32.mrb[0].mxu0
        %v1464 = vadd.f32 0.0, %v1463
        %v1465 = vpop.f32.mrb[0].mxu0
        %1466 = vmatprep.mubr.bf16.mxu0 0
        %1467 = vmatmul.mubr.bf16.gmra.mrb[0].mxu0 %v1376
        %v1468 = vpop.f32.mrb[0].mxu0
        %v1469 = vadd.f32 0.0, %v1468
        %v1470 = vpop.f32.mrb[0].mxu0
        %v1471 = vpop.f32.mrb[0].mxu0
        %v1472 = vadd.f32 0.0, %v1471
        %v1473 = vpop.f32.mrb[0].mxu0
        %1474 = vdwg.mxu0
        %v1475 = vadd.f32 %v1295, %v1413
        %v1476 = vadd.f32 %v1296, %v1416
        %v1477 = vadd.f32 %v1297, %v1421
        %v1478 = vadd.f32 %v1298, %v1424
        %v1479 = vadd.f32 %v1299, %v1429
        %v1480 = vadd.f32 %v1300, %v1432
        %v1481 = vadd.f32 %v1301, %v1437
        %v1482 = vadd.f32 %v1302, %v1440
        %v1483 = vadd.f32 %v1303, %v1445
        %v1484 = vadd.f32 %v1304, %v1448
        %v1485 = vadd.f32 %v1305, %v1453
        %v1486 = vadd.f32 %v1306, %v1456
        %v1487 = vadd.f32 %v1307, %v1461
        %v1488 = vadd.f32 %v1308, %v1464
        %v1489 = vadd.f32 %v1309, %v1469
        %v1490 = vadd.f32 %v1310, %v1472
        %s1491 = scalar_lea.vmem %s1, 128
        %v1492 = vld [vmem:[%s1491] sm:$0xf]
        %v1493 = vld [vmem:[%s1491 + $0x4] sm:$0xf]
        %v1494 = vld [vmem:[%s1491 + $0x8] sm:$0xf]
        %v1495 = vld [vmem:[%s1491 + $0xc] sm:$0xf]
        %v1496 = vld [vmem:[%s1491 + $0x10] sm:$0xf]
        %v1497 = vld [vmem:[%s1491 + $0x14] sm:$0xf]
        %v1498 = vld [vmem:[%s1491 + $0x18] sm:$0xf]
        %v1499 = vld [vmem:[%s1491 + $0x1c] sm:$0xf]
        %v1508 = vunpack.c.l.b16 %v1492
        %v1509 = vunpack.c.l.b16 %v1493
        %v1510 = vunpack.c.l.b16 %v1494
        %v1511 = vunpack.c.l.b16 %v1495
        %v1512 = vunpack.c.l.b16 %v1496
        %v1513 = vunpack.c.l.b16 %v1497
        %v1514 = vunpack.c.l.b16 %v1498
        %v1515 = vunpack.c.l.b16 %v1499
        %v1516 = vpack.c.b16 %v1509, %v1508
        %v1517 = vpack.c.b16 %v1511, %v1510
        %v1518 = vpack.c.b16 %v1513, %v1512
        %v1519 = vpack.c.b16 %v1515, %v1514
        %v1525 = vsel %vm676, %v1319, 0
        %1527 = vmatprep.subr.bf16.mxu0 0
        %1528 = vmatpush1.bf16.msra.mxu0 %v1516
        %1529 = vmatprep.subr.bf16.mxu0 0
        %1530 = vmatpush1.bf16.msra.mxu0 %v1517
        %1531 = vmatprep.subr.bf16.mxu0 0
        %1532 = vmatpush1.bf16.msra.mxu0 %v1518
        %1533 = vmatprep.subr.bf16.mxu0 0
        %1534 = vmatpush1.bf16.msra.mxu0 %v1519
        %1535 = vmatprep.subr.bf16.mxu0 0
        %1536 = vmatpush1.bf16.msra.mxu0 0
        %1537 = vmatprep.subr.bf16.mxu0 0
        %1538 = vmatpush1.bf16.msra.mxu0 0
        %1539 = vmatprep.subr.bf16.mxu0 0
        %1540 = vmatpush1.bf16.msra.mxu0 0
        %1541 = vmatprep.subr.bf16.mxu0 0
        %1542 = vmatpush1.bf16.msra.mxu0 0
        %1543 = vmatprep.subr.bf16.mxu0 0
        %1544 = vmatpush1.bf16.msra.mxu0 0
        %1545 = vmatprep.subr.bf16.mxu0 0
        %1546 = vmatpush1.bf16.msra.mxu0 0
        %1547 = vmatprep.subr.bf16.mxu0 0
        %1548 = vmatpush1.bf16.msra.mxu0 0
        %1549 = vmatprep.subr.bf16.mxu0 0
        %1550 = vmatpush1.bf16.msra.mxu0 0
        %1551 = vmatprep.subr.bf16.mxu0 0
        %1552 = vmatpush1.bf16.msra.mxu0 0
        %1553 = vmatprep.subr.bf16.mxu0 0
        %1554 = vmatpush1.bf16.msra.mxu0 0
        %1555 = vmatprep.subr.bf16.mxu0 0
        %1556 = vmatpush1.bf16.msra.mxu0 0
        %1557 = vmatprep.subr.bf16.mxu0 0
        %1558 = vmatpush1.bf16.msra.mxu0 0
        %1559 = vmatprep.mubr.bf16.mxu0 0
        %1560 = vmatmul.mubr.bf16.gmra.mrb[0].mxu0 %v1358
        %v1561 = vpop.f32.mrb[0].mxu0
        %v1562 = vadd.f32 0.0, %v1561
        %v1563 = vpop.f32.mrb[0].mxu0
        %v1564 = vpop.f32.mrb[0].mxu0
        %v1565 = vadd.f32 0.0, %v1564
        %v1566 = vpop.f32.mrb[0].mxu0
        %1567 = vmatprep.mubr.bf16.mxu0 0
        %1568 = vmatmul.mubr.bf16.gmra.mrb[0].mxu0 %v1361
        %v1569 = vpop.f32.mrb[0].mxu0
        %v1570 = vadd.f32 0.0, %v1569
        %v1571 = vpop.f32.mrb[0].mxu0
        %v1572 = vpop.f32.mrb[0].mxu0
        %v1573 = vadd.f32 0.0, %v1572
        %v1574 = vpop.f32.mrb[0].mxu0
        %1575 = vmatprep.mubr.bf16.mxu0 0
        %1576 = vmatmul.mubr.bf16.gmra.mrb[0].mxu0 %v1364
        %v1577 = vpop.f32.mrb[0].mxu0
        %v1578 = vadd.f32 0.0, %v1577
        %v1579 = vpop.f32.mrb[0].mxu0
        %v1580 = vpop.f32.mrb[0].mxu0
        %v1581 = vadd.f32 0.0, %v1580
        %v1582 = vpop.f32.mrb[0].mxu0
        %1583 = vmatprep.mubr.bf16.mxu0 0
        %1584 = vmatmul.mubr.bf16.gmra.mrb[0].mxu0 %v1367
        %v1585 = vpop.f32.mrb[0].mxu0
        %v1586 = vadd.f32 0.0, %v1585
        %v1587 = vpop.f32.mrb[0].mxu0
        %v1588 = vpop.f32.mrb[0].mxu0
        %v1589 = vadd.f32 0.0, %v1588
        %v1590 = vpop.f32.mrb[0].mxu0
        %1591 = vmatprep.mubr.bf16.mxu0 0
        %1592 = vmatmul.mubr.bf16.gmra.mrb[0].mxu0 %v1370
        %v1593 = vpop.f32.mrb[0].mxu0
        %v1594 = vadd.f32 0.0, %v1593
        %v1595 = vpop.f32.mrb[0].mxu0
        %v1596 = vpop.f32.mrb[0].mxu0
        %v1597 = vadd.f32 0.0, %v1596
        %v1598 = vpop.f32.mrb[0].mxu0
        %1599 = vmatprep.mubr.bf16.mxu0 0
        %1600 = vmatmul.mubr.bf16.gmra.mrb[0].mxu0 %v1373
        %v1601 = vpop.f32.mrb[0].mxu0
        %v1602 = vadd.f32 0.0, %v1601
        %v1603 = vpop.f32.mrb[0].mxu0
        %v1604 = vpop.f32.mrb[0].mxu0
        %v1605 = vadd.f32 0.0, %v1604
        %v1606 = vpop.f32.mrb[0].mxu0
        %1607 = vmatprep.mubr.bf16.mxu0 0
        %1608 = vmatmul.mubr.bf16.gmra.mrb[0].mxu0 %v1376
        %v1609 = vpop.f32.mrb[0].mxu0
        %v1610 = vadd.f32 0.0, %v1609
        %v1611 = vpop.f32.mrb[0].mxu0
        %v1612 = vpop.f32.mrb[0].mxu0
        %v1613 = vadd.f32 0.0, %v1612
        %v1614 = vpop.f32.mrb[0].mxu0
        %1615 = vmatprep.mubr.bf16.mxu0 0
        %1616 = vmatmul.mubr.bf16.gmra.mrb[0].mxu0 %v1525
        %v1617 = vpop.f32.mrb[0].mxu0
        %v1618 = vadd.f32 0.0, %v1617
        %v1619 = vpop.f32.mrb[0].mxu0
        %v1620 = vpop.f32.mrb[0].mxu0
        %v1621 = vadd.f32 0.0, %v1620
        %v1622 = vpop.f32.mrb[0].mxu0
        %1623 = vdwg.mxu0
        %v1624 = vadd.f32 %v1475, %v1562
        %v1625 = vadd.f32 %v1476, %v1565
        %v1626 = vadd.f32 %v1477, %v1570
        %v1627 = vadd.f32 %v1478, %v1573
        %v1628 = vadd.f32 %v1479, %v1578
        %v1629 = vadd.f32 %v1480, %v1581
        %v1630 = vadd.f32 %v1481, %v1586
        %v1631 = vadd.f32 %v1482, %v1589
        %v1632 = vadd.f32 %v1483, %v1594
        %v1633 = vadd.f32 %v1484, %v1597
        %v1634 = vadd.f32 %v1485, %v1602
        %v1635 = vadd.f32 %v1486, %v1605
        %v1636 = vadd.f32 %v1487, %v1610
        %v1637 = vadd.f32 %v1488, %v1613
        %v1638 = vadd.f32 %v1489, %v1618
        %v1639 = vadd.f32 %v1490, %v1621
        %s1640 = scalar_lea.vmem %s1, 224
        %v1641 = vld [vmem:[%s1640] sm:$0xf]
        %v1642 = vld [vmem:[%s1640 + $0x4] sm:$0xf]
        %v1643 = vld [vmem:[%s1640 + $0x8] sm:$0xf]
        %v1644 = vld [vmem:[%s1640 + $0xc] sm:$0xf]
        %v1645 = vld [vmem:[%s1640 + $0x10] sm:$0xf]
        %v1646 = vld [vmem:[%s1640 + $0x14] sm:$0xf]
        %v1647 = vld [vmem:[%s1640 + $0x18] sm:$0xf]
        %v1648 = vld [vmem:[%s1640 + $0x1c] sm:$0xf]
        %v1657 = vunpack.c.l.b16 %v1641
        %v1658 = vunpack.c.l.b16 %v1642
        %v1659 = vunpack.c.l.b16 %v1643
        %v1660 = vunpack.c.l.b16 %v1644
        %v1661 = vunpack.c.l.b16 %v1645
        %v1662 = vunpack.c.l.b16 %v1646
        %v1663 = vunpack.c.l.b16 %v1647
        %v1664 = vunpack.c.l.b16 %v1648
        %v1665 = vpack.c.b16 %v1658, %v1657
        %v1666 = vpack.c.b16 %v1660, %v1659
        %v1667 = vpack.c.b16 %v1662, %v1661
        %v1668 = vpack.c.b16 %v1664, %v1663
        %v1674 = vsel %vm676, %v1320, 0
        %1676 = vmatprep.subr.bf16.mxu0 0
        %1677 = vmatpush1.bf16.msra.mxu0 %v1665
        %1678 = vmatprep.subr.bf16.mxu0 0
        %1679 = vmatpush1.bf16.msra.mxu0 %v1666
        %1680 = vmatprep.subr.bf16.mxu0 0
        %1681 = vmatpush1.bf16.msra.mxu0 %v1667
        %1682 = vmatprep.subr.bf16.mxu0 0
        %1683 = vmatpush1.bf16.msra.mxu0 %v1668
        %1684 = vmatprep.subr.bf16.mxu0 0
        %1685 = vmatpush1.bf16.msra.mxu0 0
        %1686 = vmatprep.subr.bf16.mxu0 0
        %1687 = vmatpush1.bf16.msra.mxu0 0
        %1688 = vmatprep.subr.bf16.mxu0 0
        %1689 = vmatpush1.bf16.msra.mxu0 0
        %1690 = vmatprep.subr.bf16.mxu0 0
        %1691 = vmatpush1.bf16.msra.mxu0 0
        %1692 = vmatprep.subr.bf16.mxu0 0
        %1693 = vmatpush1.bf16.msra.mxu0 0
        %1694 = vmatprep.subr.bf16.mxu0 0
        %1695 = vmatpush1.bf16.msra.mxu0 0
        %1696 = vmatprep.subr.bf16.mxu0 0
        %1697 = vmatpush1.bf16.msra.mxu0 0
        %1698 = vmatprep.subr.bf16.mxu0 0
        %1699 = vmatpush1.bf16.msra.mxu0 0
        %1700 = vmatprep.subr.bf16.mxu0 0
        %1701 = vmatpush1.bf16.msra.mxu0 0
        %1702 = vmatprep.subr.bf16.mxu0 0
        %1703 = vmatpush1.bf16.msra.mxu0 0
        %1704 = vmatprep.subr.bf16.mxu0 0
        %1705 = vmatpush1.bf16.msra.mxu0 0
        %1706 = vmatprep.subr.bf16.mxu0 0
        %1707 = vmatpush1.bf16.msra.mxu0 0
        %1708 = vmatprep.mubr.bf16.mxu0 0
        %1709 = vmatmul.mubr.bf16.gmra.mrb[0].mxu0 %v1361
        %v1710 = vpop.f32.mrb[0].mxu0
        %v1711 = vadd.f32 0.0, %v1710
        %v1712 = vpop.f32.mrb[0].mxu0
        %v1713 = vpop.f32.mrb[0].mxu0
        %v1714 = vadd.f32 0.0, %v1713
        %v1715 = vpop.f32.mrb[0].mxu0
        %1716 = vmatprep.mubr.bf16.mxu0 0
        %1717 = vmatmul.mubr.bf16.gmra.mrb[0].mxu0 %v1364
        %v1718 = vpop.f32.mrb[0].mxu0
        %v1719 = vadd.f32 0.0, %v1718
        %v1720 = vpop.f32.mrb[0].mxu0
        %v1721 = vpop.f32.mrb[0].mxu0
        %v1722 = vadd.f32 0.0, %v1721
        %v1723 = vpop.f32.mrb[0].mxu0
        %1724 = vmatprep.mubr.bf16.mxu0 0
        %1725 = vmatmul.mubr.bf16.gmra.mrb[0].mxu0 %v1367
        %v1726 = vpop.f32.mrb[0].mxu0
        %v1727 = vadd.f32 0.0, %v1726
        %v1728 = vpop.f32.mrb[0].mxu0
        %v1729 = vpop.f32.mrb[0].mxu0
        %v1730 = vadd.f32 0.0, %v1729
        %v1731 = vpop.f32.mrb[0].mxu0
        %1732 = vmatprep.mubr.bf16.mxu0 0
        %1733 = vmatmul.mubr.bf16.gmra.mrb[0].mxu0 %v1370
        %v1734 = vpop.f32.mrb[0].mxu0
        %v1735 = vadd.f32 0.0, %v1734
        %v1736 = vpop.f32.mrb[0].mxu0
        %v1737 = vpop.f32.mrb[0].mxu0
        %v1738 = vadd.f32 0.0, %v1737
        %v1739 = vpop.f32.mrb[0].mxu0
        %1740 = vmatprep.mubr.bf16.mxu0 0
        %1741 = vmatmul.mubr.bf16.gmra.mrb[0].mxu0 %v1373
        %v1742 = vpop.f32.mrb[0].mxu0
        %v1743 = vadd.f32 0.0, %v1742
        %v1744 = vpop.f32.mrb[0].mxu0
        %v1745 = vpop.f32.mrb[0].mxu0
        %v1746 = vadd.f32 0.0, %v1745
        %v1747 = vpop.f32.mrb[0].mxu0
        %1748 = vmatprep.mubr.bf16.mxu0 0
        %1749 = vmatmul.mubr.bf16.gmra.mrb[0].mxu0 %v1376
        %v1750 = vpop.f32.mrb[0].mxu0
        %v1751 = vadd.f32 0.0, %v1750
        %v1752 = vpop.f32.mrb[0].mxu0
        %v1753 = vpop.f32.mrb[0].mxu0
        %v1754 = vadd.f32 0.0, %v1753
        %v1755 = vpop.f32.mrb[0].mxu0
        %1756 = vmatprep.mubr.bf16.mxu0 0
        %1757 = vmatmul.mubr.bf16.gmra.mrb[0].mxu0 %v1525
        %v1758 = vpop.f32.mrb[0].mxu0
        %v1759 = vadd.f32 0.0, %v1758
        %v1760 = vpop.f32.mrb[0].mxu0
        %v1761 = vpop.f32.mrb[0].mxu0
        %v1762 = vadd.f32 0.0, %v1761
        %v1763 = vpop.f32.mrb[0].mxu0
        %1764 = vmatprep.mubr.bf16.mxu0 0
        %1765 = vmatmul.mubr.bf16.gmra.mrb[0].mxu0 %v1674
        %v1766 = vpop.f32.mrb[0].mxu0
        %v1767 = vadd.f32 0.0, %v1766
        %v1768 = vpop.f32.mrb[0].mxu0
        %v1769 = vpop.f32.mrb[0].mxu0
        %v1770 = vadd.f32 0.0, %v1769
        %v1771 = vpop.f32.mrb[0].mxu0
        %1772 = vdwg.mxu0
        %v1773 = vadd.f32 %v1624, %v1711
        %v1774 = vadd.f32 %v1625, %v1714
        %v1775 = vadd.f32 %v1626, %v1719
        %v1776 = vadd.f32 %v1627, %v1722
        %v1777 = vadd.f32 %v1628, %v1727
        %v1778 = vadd.f32 %v1629, %v1730
        %v1779 = vadd.f32 %v1630, %v1735
        %v1780 = vadd.f32 %v1631, %v1738
        %v1781 = vadd.f32 %v1632, %v1743
        %v1782 = vadd.f32 %v1633, %v1746
        %v1783 = vadd.f32 %v1634, %v1751
        %v1784 = vadd.f32 %v1635, %v1754
        %v1785 = vadd.f32 %v1636, %v1759
        %v1786 = vadd.f32 %v1637, %v1762
        %v1787 = vadd.f32 %v1638, %v1767
        %v1788 = vadd.f32 %v1639, %v1770
        %v1789 = vrot.slane %v785, 1
        %v1790 = vrot.slane %v786, 1
        %v1791 = vrot.slane %v787, 1
        %v1792 = vrot.slane %v788, 1
        %v1793 = vrot.slane %v789, 1
        %v1794 = vrot.slane %v790, 1
        %v1795 = vrot.slane %v791, 1
        %v1796 = vrot.slane %v792, 1
        %v1797 = vrot.slane %v793, 1
        %v1798 = vrot.slane %v794, 1
        %v1799 = vrot.slane %v795, 1
        %v1800 = vrot.slane %v796, 1
        %v1801 = vrot.slane %v797, 1
        %v1802 = vrot.slane %v798, 1
        %v1803 = vrot.slane %v799, 1
        %v1804 = vrot.slane %v800, 1
        %v1805 = vrot.slane %v801, 1
        %v1806 = vrot.slane %v802, 1
        %v1807 = vrot.slane %v803, 1
        %v1808 = vrot.slane %v804, 1
        %vm1809 = vcmp.lt.s32.totalorder %v296, 7
        %v1810 = vsel %vm1809, %v1807, %v1808
        %v1811 = vsel %vm1809, %v1806, %v1807
        %v1812 = vsel %vm1809, %v1805, %v1806
        %v1813 = vsel %vm1809, %v1804, %v1805
        %v1814 = vsel %vm1809, %v1803, %v1804
        %v1815 = vsel %vm1809, %v1802, %v1803
        %v1816 = vsel %vm1809, %v1801, %v1802
        %v1817 = vsel %vm1809, %v1800, %v1801
        %v1818 = vsel %vm1809, %v1799, %v1800
        %v1819 = vsel %vm1809, %v1798, %v1799
        %v1820 = vsel %vm1809, %v1797, %v1798
        %v1821 = vsel %vm1809, %v1796, %v1797
        %v1822 = vsel %vm1809, %v1795, %v1796
        %v1823 = vsel %vm1809, %v1794, %v1795
        %v1824 = vsel %vm1809, %v1793, %v1794
        %v1825 = vsel %vm1809, %v1792, %v1793
        %v1826 = vsel %vm1809, %v1791, %v1792
        %v1827 = vsel %vm1809, %v1790, %v1791
        %v1828 = vsel %vm1809, %v1789, %v1790
        %v1829 = vsel %vm1809, %v1808, %v1789
        %v1830 = vmul.f32 %v1828, %v656
        %v1831 = vmul.f32 %v1827, %v657
        %v1832 = vmul.f32 %v1826, %v658
        %v1833 = vmul.f32 %v1825, %v659
        %v1834 = vmul.f32 %v1824, %v660
        %v1835 = vmul.f32 %v1823, %v661
        %v1836 = vmul.f32 %v1822, %v662
        %v1837 = vmul.f32 %v1821, %v663
        %v1838 = vmul.f32 %v1820, %v664
        %v1839 = vmul.f32 %v1819, %v665
        %v1840 = vmul.f32 %v1818, %v666
        %v1841 = vmul.f32 %v1817, %v667
        %v1842 = vmul.f32 %v1816, %v668
        %v1843 = vmul.f32 %v1815, %v669
        %v1844 = vmul.f32 %v1814, %v670
        %v1845 = vmul.f32 %v1813, %v671
        %v1846 = vmul.f32 %v1812, %v672
        %v1847 = vmul.f32 %v1811, %v673
        %v1848 = vmul.f32 %v1810, %v674
        %v1849 = vmul.f32 %v1829, %v675
        %v1850 = vpack.c.bf16 %v1831, %v1830
        %v1851 = vpack.c.bf16 %v1833, %v1832
        %v1852 = vpack.c.bf16 %v1835, %v1834
        %v1853 = vpack.c.bf16 %v1837, %v1836
        %v1854 = vpack.c.bf16 %v1839, %v1838
        %v1855 = vpack.c.bf16 %v1841, %v1840
        %v1856 = vpack.c.bf16 %v1843, %v1842
        %v1857 = vpack.c.bf16 %v1845, %v1844
        %v1858 = vpack.c.bf16 %v1847, %v1846
        %v1859 = vpack.c.bf16 %v1849, %v1848
        %s1860 = scalar_lea.vmem %s1, 64
        %v1861 = vld [vmem:[%s1860] sm:$0xf]
        %v1862 = vld [vmem:[%s1860 + $0x4] sm:$0xf]
        %v1863 = vld [vmem:[%s1860 + $0x8] sm:$0xf]
        %v1864 = vld [vmem:[%s1860 + $0xc] sm:$0xf]
        %v1865 = vld [vmem:[%s1860 + $0x10] sm:$0xf]
        %v1866 = vld [vmem:[%s1860 + $0x14] sm:$0xf]
        %v1867 = vld [vmem:[%s1860 + $0x18] sm:$0xf]
        %v1868 = vld [vmem:[%s1860 + $0x1c] sm:$0xf]
        %v1877 = vunpack.c.l.b16 %v1861
        %v1878 = vunpack.c.l.b16 %v1862
        %v1879 = vunpack.c.l.b16 %v1863
        %v1880 = vunpack.c.l.b16 %v1864
        %v1881 = vunpack.c.l.b16 %v1865
        %v1882 = vunpack.c.l.b16 %v1866
        %v1883 = vunpack.c.l.b16 %v1867
        %v1884 = vunpack.c.l.b16 %v1868
        %v1885 = vpack.c.b16 %v1878, %v1877
        %v1886 = vpack.c.b16 %v1880, %v1879
        %v1887 = vpack.c.b16 %v1882, %v1881
        %v1888 = vpack.c.b16 %v1884, %v1883
        %v1894 = vsel %vm676, %v1850, 0
        %v1897 = vsel %vm676, %v1851, 0
        %v1900 = vsel %vm676, %v1852, 0
        %v1903 = vsel %vm676, %v1853, 0
        %v1906 = vsel %vm676, %v1854, 0
        %v1909 = vsel %vm676, %v1855, 0
        %v1912 = vsel %vm676, %v1856, 0
        %v1915 = vsel %vm676, %v1857, 0
        %1917 = vmatprep.subr.bf16.mxu0 0
        %1918 = vmatpush1.bf16.msra.mxu0 %v1885
        %1919 = vmatprep.subr.bf16.mxu0 0
        %1920 = vmatpush1.bf16.msra.mxu0 %v1886
        %1921 = vmatprep.subr.bf16.mxu0 0
        %1922 = vmatpush1.bf16.msra.mxu0 %v1887
        %1923 = vmatprep.subr.bf16.mxu0 0
        %1924 = vmatpush1.bf16.msra.mxu0 %v1888
        %1925 = vmatprep.subr.bf16.mxu0 0
        %1926 = vmatpush1.bf16.msra.mxu0 0
        %1927 = vmatprep.subr.bf16.mxu0 0
        %1928 = vmatpush1.bf16.msra.mxu0 0
        %1929 = vmatprep.subr.bf16.mxu0 0
        %1930 = vmatpush1.bf16.msra.mxu0 0
        %1931 = vmatprep.subr.bf16.mxu0 0
        %1932 = vmatpush1.bf16.msra.mxu0 0
        %1933 = vmatprep.subr.bf16.mxu0 0
        %1934 = vmatpush1.bf16.msra.mxu0 0
        %1935 = vmatprep.subr.bf16.mxu0 0
        %1936 = vmatpush1.bf16.msra.mxu0 0
        %1937 = vmatprep.subr.bf16.mxu0 0
        %1938 = vmatpush1.bf16.msra.mxu0 0
        %1939 = vmatprep.subr.bf16.mxu0 0
        %1940 = vmatpush1.bf16.msra.mxu0 0
        %1941 = vmatprep.subr.bf16.mxu0 0
        %1942 = vmatpush1.bf16.msra.mxu0 0
        %1943 = vmatprep.subr.bf16.mxu0 0
        %1944 = vmatpush1.bf16.msra.mxu0 0
        %1945 = vmatprep.subr.bf16.mxu0 0
        %1946 = vmatpush1.bf16.msra.mxu0 0
        %1947 = vmatprep.subr.bf16.mxu0 0
        %1948 = vmatpush1.bf16.msra.mxu0 0
        %1949 = vmatprep.mubr.bf16.mxu0 0
        %1950 = vmatmul.mubr.bf16.gmra.mrb[0].mxu0 %v1894
        %v1951 = vpop.f32.mrb[0].mxu0
        %v1952 = vadd.f32 0.0, %v1951
        %v1953 = vpop.f32.mrb[0].mxu0
        %v1954 = vpop.f32.mrb[0].mxu0
        %v1955 = vadd.f32 0.0, %v1954
        %v1956 = vpop.f32.mrb[0].mxu0
        %1957 = vmatprep.mubr.bf16.mxu0 0
        %1958 = vmatmul.mubr.bf16.gmra.mrb[0].mxu0 %v1897
        %v1959 = vpop.f32.mrb[0].mxu0
        %v1960 = vadd.f32 0.0, %v1959
        %v1961 = vpop.f32.mrb[0].mxu0
        %v1962 = vpop.f32.mrb[0].mxu0
        %v1963 = vadd.f32 0.0, %v1962
        %v1964 = vpop.f32.mrb[0].mxu0
        %1965 = vmatprep.mubr.bf16.mxu0 0
        %1966 = vmatmul.mubr.bf16.gmra.mrb[0].mxu0 %v1900
        %v1967 = vpop.f32.mrb[0].mxu0
        %v1968 = vadd.f32 0.0, %v1967
        %v1969 = vpop.f32.mrb[0].mxu0
        %v1970 = vpop.f32.mrb[0].mxu0
        %v1971 = vadd.f32 0.0, %v1970
        %v1972 = vpop.f32.mrb[0].mxu0
        %1973 = vmatprep.mubr.bf16.mxu0 0
        %1974 = vmatmul.mubr.bf16.gmra.mrb[0].mxu0 %v1903
        %v1975 = vpop.f32.mrb[0].mxu0
        %v1976 = vadd.f32 0.0, %v1975
        %v1977 = vpop.f32.mrb[0].mxu0
        %v1978 = vpop.f32.mrb[0].mxu0
        %v1979 = vadd.f32 0.0, %v1978
        %v1980 = vpop.f32.mrb[0].mxu0
        %1981 = vmatprep.mubr.bf16.mxu0 0
        %1982 = vmatmul.mubr.bf16.gmra.mrb[0].mxu0 %v1906
        %v1983 = vpop.f32.mrb[0].mxu0
        %v1984 = vadd.f32 0.0, %v1983
        %v1985 = vpop.f32.mrb[0].mxu0
        %v1986 = vpop.f32.mrb[0].mxu0
        %v1987 = vadd.f32 0.0, %v1986
        %v1988 = vpop.f32.mrb[0].mxu0
        %1989 = vmatprep.mubr.bf16.mxu0 0
        %1990 = vmatmul.mubr.bf16.gmra.mrb[0].mxu0 %v1909
        %v1991 = vpop.f32.mrb[0].mxu0
        %v1992 = vadd.f32 0.0, %v1991
        %v1993 = vpop.f32.mrb[0].mxu0
        %v1994 = vpop.f32.mrb[0].mxu0
        %v1995 = vadd.f32 0.0, %v1994
        %v1996 = vpop.f32.mrb[0].mxu0
        %1997 = vmatprep.mubr.bf16.mxu0 0
        %1998 = vmatmul.mubr.bf16.gmra.mrb[0].mxu0 %v1912
        %v1999 = vpop.f32.mrb[0].mxu0
        %v2000 = vadd.f32 0.0, %v1999
        %v2001 = vpop.f32.mrb[0].mxu0
        %v2002 = vpop.f32.mrb[0].mxu0
        %v2003 = vadd.f32 0.0, %v2002
        %v2004 = vpop.f32.mrb[0].mxu0
        %2005 = vmatprep.mubr.bf16.mxu0 0
        %2006 = vmatmul.mubr.bf16.gmra.mrb[0].mxu0 %v1915
        %v2007 = vpop.f32.mrb[0].mxu0
        %v2008 = vadd.f32 0.0, %v2007
        %v2009 = vpop.f32.mrb[0].mxu0
        %v2010 = vpop.f32.mrb[0].mxu0
        %v2011 = vadd.f32 0.0, %v2010
        %v2012 = vpop.f32.mrb[0].mxu0
        %2013 = vdwg.mxu0
        %v2014 = vadd.f32 %v1773, %v1952
        %v2015 = vadd.f32 %v1774, %v1955
        %v2016 = vadd.f32 %v1775, %v1960
        %v2017 = vadd.f32 %v1776, %v1963
        %v2018 = vadd.f32 %v1777, %v1968
        %v2019 = vadd.f32 %v1778, %v1971
        %v2020 = vadd.f32 %v1779, %v1976
        %v2021 = vadd.f32 %v1780, %v1979
        %v2022 = vadd.f32 %v1781, %v1984
        %v2023 = vadd.f32 %v1782, %v1987
        %v2024 = vadd.f32 %v1783, %v1992
        %v2025 = vadd.f32 %v1784, %v1995
        %v2026 = vadd.f32 %v1785, %v2000
        %v2027 = vadd.f32 %v1786, %v2003
        %v2028 = vadd.f32 %v1787, %v2008
        %v2029 = vadd.f32 %v1788, %v2011
        %s2030 = scalar_lea.vmem %s1, 160
        %v2031 = vld [vmem:[%s2030] sm:$0xf]
        %v2032 = vld [vmem:[%s2030 + $0x4] sm:$0xf]
        %v2033 = vld [vmem:[%s2030 + $0x8] sm:$0xf]
        %v2034 = vld [vmem:[%s2030 + $0xc] sm:$0xf]
        %v2035 = vld [vmem:[%s2030 + $0x10] sm:$0xf]
        %v2036 = vld [vmem:[%s2030 + $0x14] sm:$0xf]
        %v2037 = vld [vmem:[%s2030 + $0x18] sm:$0xf]
        %v2038 = vld [vmem:[%s2030 + $0x1c] sm:$0xf]
        %v2047 = vunpack.c.l.b16 %v2031
        %v2048 = vunpack.c.l.b16 %v2032
        %v2049 = vunpack.c.l.b16 %v2033
        %v2050 = vunpack.c.l.b16 %v2034
        %v2051 = vunpack.c.l.b16 %v2035
        %v2052 = vunpack.c.l.b16 %v2036
        %v2053 = vunpack.c.l.b16 %v2037
        %v2054 = vunpack.c.l.b16 %v2038
        %v2055 = vpack.c.b16 %v2048, %v2047
        %v2056 = vpack.c.b16 %v2050, %v2049
        %v2057 = vpack.c.b16 %v2052, %v2051
        %v2058 = vpack.c.b16 %v2054, %v2053
        %v2064 = vsel %vm676, %v1858, 0
        %2066 = vmatprep.subr.bf16.mxu0 0
        %2067 = vmatpush1.bf16.msra.mxu0 %v2055
        %2068 = vmatprep.subr.bf16.mxu0 0
        %2069 = vmatpush1.bf16.msra.mxu0 %v2056
        %2070 = vmatprep.subr.bf16.mxu0 0
        %2071 = vmatpush1.bf16.msra.mxu0 %v2057
        %2072 = vmatprep.subr.bf16.mxu0 0
        %2073 = vmatpush1.bf16.msra.mxu0 %v2058
        %2074 = vmatprep.subr.bf16.mxu0 0
        %2075 = vmatpush1.bf16.msra.mxu0 0
        %2076 = vmatprep.subr.bf16.mxu0 0
        %2077 = vmatpush1.bf16.msra.mxu0 0
        %2078 = vmatprep.subr.bf16.mxu0 0
        %2079 = vmatpush1.bf16.msra.mxu0 0
        %2080 = vmatprep.subr.bf16.mxu0 0
        %2081 = vmatpush1.bf16.msra.mxu0 0
        %2082 = vmatprep.subr.bf16.mxu0 0
        %2083 = vmatpush1.bf16.msra.mxu0 0
        %2084 = vmatprep.subr.bf16.mxu0 0
        %2085 = vmatpush1.bf16.msra.mxu0 0
        %2086 = vmatprep.subr.bf16.mxu0 0
        %2087 = vmatpush1.bf16.msra.mxu0 0
        %2088 = vmatprep.subr.bf16.mxu0 0
        %2089 = vmatpush1.bf16.msra.mxu0 0
        %2090 = vmatprep.subr.bf16.mxu0 0
        %2091 = vmatpush1.bf16.msra.mxu0 0
        %2092 = vmatprep.subr.bf16.mxu0 0
        %2093 = vmatpush1.bf16.msra.mxu0 0
        %2094 = vmatprep.subr.bf16.mxu0 0
        %2095 = vmatpush1.bf16.msra.mxu0 0
        %2096 = vmatprep.subr.bf16.mxu0 0
        %2097 = vmatpush1.bf16.msra.mxu0 0
        %2098 = vmatprep.mubr.bf16.mxu0 0
        %2099 = vmatmul.mubr.bf16.gmra.mrb[0].mxu0 %v1897
        %v2100 = vpop.f32.mrb[0].mxu0
        %v2101 = vadd.f32 0.0, %v2100
        %v2102 = vpop.f32.mrb[0].mxu0
        %v2103 = vpop.f32.mrb[0].mxu0
        %v2104 = vadd.f32 0.0, %v2103
        %v2105 = vpop.f32.mrb[0].mxu0
        %2106 = vmatprep.mubr.bf16.mxu0 0
        %2107 = vmatmul.mubr.bf16.gmra.mrb[0].mxu0 %v1900
        %v2108 = vpop.f32.mrb[0].mxu0
        %v2109 = vadd.f32 0.0, %v2108
        %v2110 = vpop.f32.mrb[0].mxu0
        %v2111 = vpop.f32.mrb[0].mxu0
        %v2112 = vadd.f32 0.0, %v2111
        %v2113 = vpop.f32.mrb[0].mxu0
        %2114 = vmatprep.mubr.bf16.mxu0 0
        %2115 = vmatmul.mubr.bf16.gmra.mrb[0].mxu0 %v1903
        %v2116 = vpop.f32.mrb[0].mxu0
        %v2117 = vadd.f32 0.0, %v2116
        %v2118 = vpop.f32.mrb[0].mxu0
        %v2119 = vpop.f32.mrb[0].mxu0
        %v2120 = vadd.f32 0.0, %v2119
        %v2121 = vpop.f32.mrb[0].mxu0
        %2122 = vmatprep.mubr.bf16.mxu0 0
        %2123 = vmatmul.mubr.bf16.gmra.mrb[0].mxu0 %v1906
        %v2124 = vpop.f32.mrb[0].mxu0
        %v2125 = vadd.f32 0.0, %v2124
        %v2126 = vpop.f32.mrb[0].mxu0
        %v2127 = vpop.f32.mrb[0].mxu0
        %v2128 = vadd.f32 0.0, %v2127
        %v2129 = vpop.f32.mrb[0].mxu0
        %2130 = vmatprep.mubr.bf16.mxu0 0
        %2131 = vmatmul.mubr.bf16.gmra.mrb[0].mxu0 %v1909
        %v2132 = vpop.f32.mrb[0].mxu0
        %v2133 = vadd.f32 0.0, %v2132
        %v2134 = vpop.f32.mrb[0].mxu0
        %v2135 = vpop.f32.mrb[0].mxu0
        %v2136 = vadd.f32 0.0, %v2135
        %v2137 = vpop.f32.mrb[0].mxu0
        %2138 = vmatprep.mubr.bf16.mxu0 0
        %2139 = vmatmul.mubr.bf16.gmra.mrb[0].mxu0 %v1912
        %v2140 = vpop.f32.mrb[0].mxu0
        %v2141 = vadd.f32 0.0, %v2140
        %v2142 = vpop.f32.mrb[0].mxu0
        %v2143 = vpop.f32.mrb[0].mxu0
        %v2144 = vadd.f32 0.0, %v2143
        %v2145 = vpop.f32.mrb[0].mxu0
        %2146 = vmatprep.mubr.bf16.mxu0 0
        %2147 = vmatmul.mubr.bf16.gmra.mrb[0].mxu0 %v1915
        %v2148 = vpop.f32.mrb[0].mxu0
        %v2149 = vadd.f32 0.0, %v2148
        %v2150 = vpop.f32.mrb[0].mxu0
        %v2151 = vpop.f32.mrb[0].mxu0
        %v2152 = vadd.f32 0.0, %v2151
        %v2153 = vpop.f32.mrb[0].mxu0
        %2154 = vmatprep.mubr.bf16.mxu0 0
        %2155 = vmatmul.mubr.bf16.gmra.mrb[0].mxu0 %v2064
        %v2156 = vpop.f32.mrb[0].mxu0
        %v2157 = vadd.f32 0.0, %v2156
        %v2158 = vpop.f32.mrb[0].mxu0
        %v2159 = vpop.f32.mrb[0].mxu0
        %v2160 = vadd.f32 0.0, %v2159
        %v2161 = vpop.f32.mrb[0].mxu0
        %2162 = vdwg.mxu0
        %v2163 = vadd.f32 %v2014, %v2101
        %v2164 = vadd.f32 %v2015, %v2104
        %v2165 = vadd.f32 %v2016, %v2109
        %v2166 = vadd.f32 %v2017, %v2112
        %v2167 = vadd.f32 %v2018, %v2117
        %v2168 = vadd.f32 %v2019, %v2120
        %v2169 = vadd.f32 %v2020, %v2125
        %v2170 = vadd.f32 %v2021, %v2128
        %v2171 = vadd.f32 %v2022, %v2133
        %v2172 = vadd.f32 %v2023, %v2136
        %v2173 = vadd.f32 %v2024, %v2141
        %v2174 = vadd.f32 %v2025, %v2144
        %v2175 = vadd.f32 %v2026, %v2149
        %v2176 = vadd.f32 %v2027, %v2152
        %v2177 = vadd.f32 %v2028, %v2157
        %v2178 = vadd.f32 %v2029, %v2160
        %s2179 = scalar_lea.vmem %s1, 256
        %v2180 = vld [vmem:[%s2179] sm:$0xf]
        %v2181 = vld [vmem:[%s2179 + $0x4] sm:$0xf]
        %v2182 = vld [vmem:[%s2179 + $0x8] sm:$0xf]
        %v2183 = vld [vmem:[%s2179 + $0xc] sm:$0xf]
        %v2184 = vld [vmem:[%s2179 + $0x10] sm:$0xf]
        %v2185 = vld [vmem:[%s2179 + $0x14] sm:$0xf]
        %v2186 = vld [vmem:[%s2179 + $0x18] sm:$0xf]
        %v2187 = vld [vmem:[%s2179 + $0x1c] sm:$0xf]
        %v2196 = vunpack.c.l.b16 %v2180
        %v2197 = vunpack.c.l.b16 %v2181
        %v2198 = vunpack.c.l.b16 %v2182
        %v2199 = vunpack.c.l.b16 %v2183
        %v2200 = vunpack.c.l.b16 %v2184
        %v2201 = vunpack.c.l.b16 %v2185
        %v2202 = vunpack.c.l.b16 %v2186
        %v2203 = vunpack.c.l.b16 %v2187
        %v2204 = vpack.c.b16 %v2197, %v2196
        %v2205 = vpack.c.b16 %v2199, %v2198
        %v2206 = vpack.c.b16 %v2201, %v2200
        %v2207 = vpack.c.b16 %v2203, %v2202
        %v2213 = vsel %vm676, %v1859, 0
        %2215 = vmatprep.subr.bf16.mxu0 0
        %2216 = vmatpush1.bf16.msra.mxu0 %v2204
        %2217 = vmatprep.subr.bf16.mxu0 0
        %2218 = vmatpush1.bf16.msra.mxu0 %v2205
        %2219 = vmatprep.subr.bf16.mxu0 0
        %2220 = vmatpush1.bf16.msra.mxu0 %v2206
        %2221 = vmatprep.subr.bf16.mxu0 0
        %2222 = vmatpush1.bf16.msra.mxu0 %v2207
        %2223 = vmatprep.subr.bf16.mxu0 0
        %2224 = vmatpush1.bf16.msra.mxu0 0
        %2225 = vmatprep.subr.bf16.mxu0 0
        %2226 = vmatpush1.bf16.msra.mxu0 0
        %2227 = vmatprep.subr.bf16.mxu0 0
        %2228 = vmatpush1.bf16.msra.mxu0 0
        %2229 = vmatprep.subr.bf16.mxu0 0
        %2230 = vmatpush1.bf16.msra.mxu0 0
        %2231 = vmatprep.subr.bf16.mxu0 0
        %2232 = vmatpush1.bf16.msra.mxu0 0
        %2233 = vmatprep.subr.bf16.mxu0 0
        %2234 = vmatpush1.bf16.msra.mxu0 0
        %2235 = vmatprep.subr.bf16.mxu0 0
        %2236 = vmatpush1.bf16.msra.mxu0 0
        %2237 = vmatprep.subr.bf16.mxu0 0
        %2238 = vmatpush1.bf16.msra.mxu0 0
        %2239 = vmatprep.subr.bf16.mxu0 0
        %2240 = vmatpush1.bf16.msra.mxu0 0
        %2241 = vmatprep.subr.bf16.mxu0 0
        %2242 = vmatpush1.bf16.msra.mxu0 0
        %2243 = vmatprep.subr.bf16.mxu0 0
        %2244 = vmatpush1.bf16.msra.mxu0 0
        %2245 = vmatprep.subr.bf16.mxu0 0
        %2246 = vmatpush1.bf16.msra.mxu0 0
        %2247 = vmatprep.mubr.bf16.mxu0 0
        %2248 = vmatmul.mubr.bf16.gmra.mrb[0].mxu0 %v1900
        %v2249 = vpop.f32.mrb[0].mxu0
        %v2250 = vadd.f32 0.0, %v2249
        %v2251 = vpop.f32.mrb[0].mxu0
        %v2252 = vpop.f32.mrb[0].mxu0
        %v2253 = vadd.f32 0.0, %v2252
        %v2254 = vpop.f32.mrb[0].mxu0
        %2255 = vmatprep.mubr.bf16.mxu0 0
        %2256 = vmatmul.mubr.bf16.gmra.mrb[0].mxu0 %v1903
        %v2257 = vpop.f32.mrb[0].mxu0
        %v2258 = vadd.f32 0.0, %v2257
        %v2259 = vpop.f32.mrb[0].mxu0
        %v2260 = vpop.f32.mrb[0].mxu0
        %v2261 = vadd.f32 0.0, %v2260
        %v2262 = vpop.f32.mrb[0].mxu0
        %2263 = vmatprep.mubr.bf16.mxu0 0
        %2264 = vmatmul.mubr.bf16.gmra.mrb[0].mxu0 %v1906
        %v2265 = vpop.f32.mrb[0].mxu0
        %v2266 = vadd.f32 0.0, %v2265
        %v2267 = vpop.f32.mrb[0].mxu0
        %v2268 = vpop.f32.mrb[0].mxu0
        %v2269 = vadd.f32 0.0, %v2268
        %v2270 = vpop.f32.mrb[0].mxu0
        %2271 = vmatprep.mubr.bf16.mxu0 0
        %2272 = vmatmul.mubr.bf16.gmra.mrb[0].mxu0 %v1909
        %v2273 = vpop.f32.mrb[0].mxu0
        %v2274 = vadd.f32 0.0, %v2273
        %v2275 = vpop.f32.mrb[0].mxu0
        %v2276 = vpop.f32.mrb[0].mxu0
        %v2277 = vadd.f32 0.0, %v2276
        %v2278 = vpop.f32.mrb[0].mxu0
        %2279 = vmatprep.mubr.bf16.mxu0 0
        %2280 = vmatmul.mubr.bf16.gmra.mrb[0].mxu0 %v1912
        %v2281 = vpop.f32.mrb[0].mxu0
        %v2282 = vadd.f32 0.0, %v2281
        %v2283 = vpop.f32.mrb[0].mxu0
        %v2284 = vpop.f32.mrb[0].mxu0
        %v2285 = vadd.f32 0.0, %v2284
        %v2286 = vpop.f32.mrb[0].mxu0
        %2287 = vmatprep.mubr.bf16.mxu0 0
        %2288 = vmatmul.mubr.bf16.gmra.mrb[0].mxu0 %v1915
        %v2289 = vpop.f32.mrb[0].mxu0
        %v2290 = vadd.f32 0.0, %v2289
        %v2291 = vpop.f32.mrb[0].mxu0
        %v2292 = vpop.f32.mrb[0].mxu0
        %v2293 = vadd.f32 0.0, %v2292
        %v2294 = vpop.f32.mrb[0].mxu0
        %2295 = vmatprep.mubr.bf16.mxu0 0
        %2296 = vmatmul.mubr.bf16.gmra.mrb[0].mxu0 %v2064
        %v2297 = vpop.f32.mrb[0].mxu0
        %v2298 = vadd.f32 0.0, %v2297
        %v2299 = vpop.f32.mrb[0].mxu0
        %v2300 = vpop.f32.mrb[0].mxu0
        %v2301 = vadd.f32 0.0, %v2300
        %v2302 = vpop.f32.mrb[0].mxu0
        %2303 = vmatprep.mubr.bf16.mxu0 0
        %2304 = vmatmul.mubr.bf16.gmra.mrb[0].mxu0 %v2213
        %v2305 = vpop.f32.mrb[0].mxu0
        %v2306 = vadd.f32 0.0, %v2305
        %v2307 = vpop.f32.mrb[0].mxu0
        %v2308 = vpop.f32.mrb[0].mxu0
        %v2309 = vadd.f32 0.0, %v2308
        %v2310 = vpop.f32.mrb[0].mxu0
        %2311 = vdwg.mxu0
        %v2312 = vadd.f32 %v2163, %v2250
        %v2313 = vadd.f32 %v2164, %v2253
        %v2314 = vadd.f32 %v2165, %v2258
        %v2315 = vadd.f32 %v2166, %v2261
        %v2316 = vadd.f32 %v2167, %v2266
        %v2317 = vadd.f32 %v2168, %v2269
        %v2318 = vadd.f32 %v2169, %v2274
        %v2319 = vadd.f32 %v2170, %v2277
        %v2320 = vadd.f32 %v2171, %v2282
        %v2321 = vadd.f32 %v2172, %v2285
        %v2322 = vadd.f32 %v2173, %v2290
        %v2323 = vadd.f32 %v2174, %v2293
        %v2324 = vadd.f32 %v2175, %v2298
        %v2325 = vadd.f32 %v2176, %v2301
        %v2326 = vadd.f32 %v2177, %v2306
        %v2327 = vadd.f32 %v2178, %v2309
        %v2329 = vlaneseq
        %v2330 = vshrl.u32 %v2329, 7
        %v2331 = vsub.s32 0, %v2330
        %v2332 = vrot.slane %v781, %v2331
        %v2334 = vmul.f32 %v2312, %v2332
        %v2335 = vmul.f32 %v2313, %v2332
        %v2336 = vmul.f32 %v2314, %v2332
        %v2337 = vmul.f32 %v2315, %v2332
        %v2338 = vmul.f32 %v2316, %v2332
        %v2339 = vmul.f32 %v2317, %v2332
        %v2340 = vmul.f32 %v2318, %v2332
        %v2341 = vmul.f32 %v2319, %v2332
        %v2342 = vmul.f32 %v2320, %v2332
        %v2343 = vmul.f32 %v2321, %v2332
        %v2344 = vmul.f32 %v2322, %v2332
        %v2345 = vmul.f32 %v2323, %v2332
        %v2346 = vmul.f32 %v2324, %v2332
        %v2347 = vmul.f32 %v2325, %v2332
        %v2348 = vmul.f32 %v2326, %v2332
        %v2349 = vmul.f32 %v2327, %v2332
        %v2351 = vlaneseq
        %v2352 = vshrl.u32 %v2351, 7
        %v2353 = vsub.s32 0, %v2352
        %v2354 = vrot.slane %v782, %v2353
        %v2356 = vadd.f32 %v2334, %v2354
        %v2357 = vadd.f32 %v2335, %v2354
        %v2358 = vadd.f32 %v2336, %v2354
        %v2359 = vadd.f32 %v2337, %v2354
        %v2360 = vadd.f32 %v2338, %v2354
        %v2361 = vadd.f32 %v2339, %v2354
        %v2362 = vadd.f32 %v2340, %v2354
        %v2363 = vadd.f32 %v2341, %v2354
        %v2364 = vadd.f32 %v2342, %v2354
        %v2365 = vadd.f32 %v2343, %v2354
        %v2366 = vadd.f32 %v2344, %v2354
        %v2367 = vadd.f32 %v2345, %v2354
        %v2368 = vadd.f32 %v2346, %v2354
        %v2369 = vadd.f32 %v2347, %v2354
        %v2370 = vadd.f32 %v2348, %v2354
        %v2371 = vadd.f32 %v2349, %v2354
        %v2372 = vmax.f32 %v2356, 0.0
        %v2373 = vmax.f32 %v2357, 0.0
        %v2374 = vmax.f32 %v2358, 0.0
        %v2375 = vmax.f32 %v2359, 0.0
        %v2376 = vmax.f32 %v2360, 0.0
        %v2377 = vmax.f32 %v2361, 0.0
        %v2378 = vmax.f32 %v2362, 0.0
        %v2379 = vmax.f32 %v2363, 0.0
        %v2380 = vmax.f32 %v2364, 0.0
        %v2381 = vmax.f32 %v2365, 0.0
        %v2382 = vmax.f32 %v2366, 0.0
        %v2383 = vmax.f32 %v2367, 0.0
        %v2384 = vmax.f32 %v2368, 0.0
        %v2385 = vmax.f32 %v2369, 0.0
        %v2386 = vmax.f32 %v2370, 0.0
        %v2387 = vmax.f32 %v2371, 0.0
        %2388 = vst.msk [vmem:[#allocation3 + $0x10] sm:$0xff] %vm676, %v2372
        %2389 = vst.msk [vmem:[#allocation3 + $0x18] sm:$0xff] %vm676, %v2373
        %2390 = vst.msk [vmem:[#allocation3 + $0x20] sm:$0xff] %vm676, %v2374
        %2391 = vst.msk [vmem:[#allocation3 + $0x28] sm:$0xff] %vm676, %v2375
        %2392 = vst.msk [vmem:[#allocation3 + $0x30] sm:$0xff] %vm676, %v2376
        %2393 = vst.msk [vmem:[#allocation3 + $0x38] sm:$0xff] %vm676, %v2377
        %2394 = vst.msk [vmem:[#allocation3 + $0x40] sm:$0xff] %vm676, %v2378
        %2395 = vst.msk [vmem:[#allocation3 + $0x48] sm:$0xff] %vm676, %v2379
        %2396 = vst.msk [vmem:[#allocation3 + $0x50] sm:$0xff] %vm676, %v2380
        %2397 = vst.msk [vmem:[#allocation3 + $0x58] sm:$0xff] %vm676, %v2381
        %2398 = vst.msk [vmem:[#allocation3 + $0x60] sm:$0xff] %vm676, %v2382
        %2399 = vst.msk [vmem:[#allocation3 + $0x68] sm:$0xff] %vm676, %v2383
        %2400 = vst.msk [vmem:[#allocation3 + $0x70] sm:$0xff] %vm676, %v2384
        %2401 = vst.msk [vmem:[#allocation3 + $0x78] sm:$0xff] %vm676, %v2385
        %2402 = vst.msk [vmem:[#allocation3 + $0x80] sm:$0xff] %vm676, %v2386
        %2403 = vst.msk [vmem:[#allocation3 + $0x88] sm:$0xff] %vm676, %v2387
        %v2404 = vld [vmem:[#allocation2 + $0x80] sm:$0xff]
        %v2405 = vld [vmem:[#allocation2 + $0x88] sm:$0xff]
        %v2406 = vld [vmem:[#allocation2 + $0x90] sm:$0xff]
        %v2407 = vld [vmem:[#allocation2 + $0x98] sm:$0xff]
        %v2408 = vld [vmem:[#allocation2 + $0xa0] sm:$0xff]
        %v2409 = vld [vmem:[#allocation2 + $0xa8] sm:$0xff]
        %v2410 = vld [vmem:[#allocation2 + $0xb0] sm:$0xff]
        %v2411 = vld [vmem:[#allocation2 + $0xb8] sm:$0xff]
        %v2412 = vld [vmem:[#allocation2 + $0xc0] sm:$0xff]
        %v2413 = vld [vmem:[#allocation2 + $0xc8] sm:$0xff]
        %v2414 = vld [vmem:[#allocation2 + $0xd0] sm:$0xff]
        %v2415 = vld [vmem:[#allocation2 + $0xd8] sm:$0xff]
        %v2416 = vld [vmem:[#allocation2 + $0xe0] sm:$0xff]
        %v2417 = vld [vmem:[#allocation2 + $0xe8] sm:$0xff]
        %v2418 = vld [vmem:[#allocation2 + $0xf0] sm:$0xff]
        %v2419 = vld [vmem:[#allocation2 + $0xf8] sm:$0xff]
        %v2420 = vld [vmem:[#allocation2 + $0x100] sm:$0xff]
        %v2421 = vld [vmem:[#allocation2 + $0x108] sm:$0xff]
        %v2422 = vld [vmem:[#allocation2 + $0x110] sm:$0xff]
        %v2423 = vld [vmem:[#allocation2 + $0x118] sm:$0xff]
        %v2424 = vrot.slane %v2404, 7
        %v2425 = vrot.slane %v2405, 7
        %v2426 = vrot.slane %v2406, 7
        %v2427 = vrot.slane %v2407, 7
        %v2428 = vrot.slane %v2408, 7
        %v2429 = vrot.slane %v2409, 7
        %v2430 = vrot.slane %v2410, 7
        %v2431 = vrot.slane %v2411, 7
        %v2432 = vrot.slane %v2412, 7
        %v2433 = vrot.slane %v2413, 7
        %v2434 = vrot.slane %v2414, 7
        %v2435 = vrot.slane %v2415, 7
        %v2436 = vrot.slane %v2416, 7
        %v2437 = vrot.slane %v2417, 7
        %v2438 = vrot.slane %v2418, 7
        %v2439 = vrot.slane %v2419, 7
        %v2440 = vrot.slane %v2420, 7
        %v2441 = vrot.slane %v2421, 7
        %v2442 = vrot.slane %v2422, 7
        %v2443 = vrot.slane %v2423, 7
        %v2444 = vsel %vm825, %v2442, %v2443
        %v2445 = vsel %vm825, %v2441, %v2442
        %v2446 = vsel %vm825, %v2440, %v2441
        %v2447 = vsel %vm825, %v2439, %v2440
        %v2448 = vsel %vm825, %v2438, %v2439
        %v2449 = vsel %vm825, %v2437, %v2438
        %v2450 = vsel %vm825, %v2436, %v2437
        %v2451 = vsel %vm825, %v2435, %v2436
        %v2452 = vsel %vm825, %v2434, %v2435
        %v2453 = vsel %vm825, %v2433, %v2434
        %v2454 = vsel %vm825, %v2432, %v2433
        %v2455 = vsel %vm825, %v2431, %v2432
        %v2456 = vsel %vm825, %v2430, %v2431
        %v2457 = vsel %vm825, %v2429, %v2430
        %v2458 = vsel %vm825, %v2428, %v2429
        %v2459 = vsel %vm825, %v2427, %v2428
        %v2460 = vsel %vm825, %v2426, %v2427
        %v2461 = vsel %vm825, %v2425, %v2426
        %v2462 = vsel %vm825, %v2424, %v2425
        %v2463 = vsel %vm825, %v2443, %v2424
        %v2464 = vmul.f32 %v2463, %v596
        %v2465 = vmul.f32 %v2462, %v597
        %v2466 = vmul.f32 %v2461, %v598
        %v2467 = vmul.f32 %v2460, %v599
        %v2468 = vmul.f32 %v2459, %v600
        %v2469 = vmul.f32 %v2458, %v601
        %v2470 = vmul.f32 %v2457, %v602
        %v2471 = vmul.f32 %v2456, %v603
        %v2472 = vmul.f32 %v2455, %v604
        %v2473 = vmul.f32 %v2454, %v605
        %v2474 = vmul.f32 %v2453, %v606
        %v2475 = vmul.f32 %v2452, %v607
        %v2476 = vmul.f32 %v2451, %v608
        %v2477 = vmul.f32 %v2450, %v609
        %v2478 = vmul.f32 %v2449, %v610
        %v2479 = vmul.f32 %v2448, %v611
        %v2480 = vmul.f32 %v2447, %v612
        %v2481 = vmul.f32 %v2446, %v613
        %v2482 = vmul.f32 %v2445, %v614
        %v2483 = vmul.f32 %v2444, %v615
        %v2484 = vpack.c.bf16 %v2465, %v2464
        %v2485 = vpack.c.bf16 %v2467, %v2466
        %v2486 = vpack.c.bf16 %v2469, %v2468
        %v2487 = vpack.c.bf16 %v2471, %v2470
        %v2488 = vpack.c.bf16 %v2473, %v2472
        %v2489 = vpack.c.bf16 %v2475, %v2474
        %v2490 = vpack.c.bf16 %v2477, %v2476
        %v2491 = vpack.c.bf16 %v2479, %v2478
        %v2492 = vpack.c.bf16 %v2481, %v2480
        %v2493 = vpack.c.bf16 %v2483, %v2482
        %v2494 = vld [vmem:[%s1] sm:$0xf]
        %v2495 = vld [vmem:[%s1 + $0x4] sm:$0xf]
        %v2496 = vld [vmem:[%s1 + $0x8] sm:$0xf]
        %v2497 = vld [vmem:[%s1 + $0xc] sm:$0xf]
        %v2498 = vld [vmem:[%s1 + $0x10] sm:$0xf]
        %v2499 = vld [vmem:[%s1 + $0x14] sm:$0xf]
        %v2500 = vld [vmem:[%s1 + $0x18] sm:$0xf]
        %v2501 = vld [vmem:[%s1 + $0x1c] sm:$0xf]
        %v2502 = vld [vmem:[%s884] sm:$0xf]
        %v2503 = vld [vmem:[%s884 + $0x4] sm:$0xf]
        %v2504 = vld [vmem:[%s884 + $0x8] sm:$0xf]
        %v2505 = vld [vmem:[%s884 + $0xc] sm:$0xf]
        %v2506 = vld [vmem:[%s884 + $0x10] sm:$0xf]
        %v2507 = vld [vmem:[%s884 + $0x14] sm:$0xf]
        %v2508 = vld [vmem:[%s884 + $0x18] sm:$0xf]
        %v2509 = vld [vmem:[%s884 + $0x1c] sm:$0xf]
        %v2518 = vunpack.c.l.b16 %v2502
        %v2519 = vunpack.c.l.b16 %v2503
        %v2520 = vunpack.c.l.b16 %v2504
        %v2521 = vunpack.c.l.b16 %v2505
        %v2522 = vunpack.c.l.b16 %v2506
        %v2523 = vunpack.c.l.b16 %v2507
        %v2524 = vunpack.c.l.b16 %v2508
        %v2525 = vunpack.c.l.b16 %v2509
        %v2526 = vpack.c.b16 %v2519, %v2518
        %v2527 = vpack.c.b16 %v2521, %v2520
        %v2528 = vpack.c.b16 %v2523, %v2522
        %v2529 = vpack.c.b16 %v2525, %v2524
        %v2535 = vsel %vm676, %v2485, 0
        %v2538 = vsel %vm676, %v2486, 0
        %v2541 = vsel %vm676, %v2487, 0
        %v2544 = vsel %vm676, %v2488, 0
        %v2547 = vsel %vm676, %v2489, 0
        %v2550 = vsel %vm676, %v2490, 0
        %v2553 = vsel %vm676, %v2491, 0
        %v2556 = vsel %vm676, %v2492, 0
        %2558 = vmatprep.subr.bf16.mxu0 0
        %2559 = vmatpush1.bf16.msra.mxu0 %v2526
        %2560 = vmatprep.subr.bf16.mxu0 0
        %2561 = vmatpush1.bf16.msra.mxu0 %v2527
        %2562 = vmatprep.subr.bf16.mxu0 0
        %2563 = vmatpush1.bf16.msra.mxu0 %v2528
        %2564 = vmatprep.subr.bf16.mxu0 0
        %2565 = vmatpush1.bf16.msra.mxu0 %v2529
        %2566 = vmatprep.subr.bf16.mxu0 0
        %2567 = vmatpush1.bf16.msra.mxu0 0
        %2568 = vmatprep.subr.bf16.mxu0 0
        %2569 = vmatpush1.bf16.msra.mxu0 0
        %2570 = vmatprep.subr.bf16.mxu0 0
        %2571 = vmatpush1.bf16.msra.mxu0 0
        %2572 = vmatprep.subr.bf16.mxu0 0
        %2573 = vmatpush1.bf16.msra.mxu0 0
        %2574 = vmatprep.subr.bf16.mxu0 0
        %2575 = vmatpush1.bf16.msra.mxu0 0
        %2576 = vmatprep.subr.bf16.mxu0 0
        %2577 = vmatpush1.bf16.msra.mxu0 0
        %2578 = vmatprep.subr.bf16.mxu0 0
        %2579 = vmatpush1.bf16.msra.mxu0 0
        %2580 = vmatprep.subr.bf16.mxu0 0
        %2581 = vmatpush1.bf16.msra.mxu0 0
        %2582 = vmatprep.subr.bf16.mxu0 0
        %2583 = vmatpush1.bf16.msra.mxu0 0
        %2584 = vmatprep.subr.bf16.mxu0 0
        %2585 = vmatpush1.bf16.msra.mxu0 0
        %2586 = vmatprep.subr.bf16.mxu0 0
        %2587 = vmatpush1.bf16.msra.mxu0 0
        %2588 = vmatprep.subr.bf16.mxu0 0
        %2589 = vmatpush1.bf16.msra.mxu0 0
        %2590 = vmatprep.mubr.bf16.mxu0 0
        %2591 = vmatmul.mubr.bf16.gmra.mrb[0].mxu0 %v2535
        %v2592 = vpop.f32.mrb[0].mxu0
        %v2593 = vadd.f32 0.0, %v2592
        %v2594 = vpop.f32.mrb[0].mxu0
        %v2595 = vpop.f32.mrb[0].mxu0
        %v2596 = vadd.f32 0.0, %v2595
        %v2597 = vpop.f32.mrb[0].mxu0
        %2598 = vmatprep.mubr.bf16.mxu0 0
        %2599 = vmatmul.mubr.bf16.gmra.mrb[0].mxu0 %v2538
        %v2600 = vpop.f32.mrb[0].mxu0
        %v2601 = vadd.f32 0.0, %v2600
        %v2602 = vpop.f32.mrb[0].mxu0
        %v2603 = vpop.f32.mrb[0].mxu0
        %v2604 = vadd.f32 0.0, %v2603
        %v2605 = vpop.f32.mrb[0].mxu0
        %2606 = vmatprep.mubr.bf16.mxu0 0
        %2607 = vmatmul.mubr.bf16.gmra.mrb[0].mxu0 %v2541
        %v2608 = vpop.f32.mrb[0].mxu0
        %v2609 = vadd.f32 0.0, %v2608
        %v2610 = vpop.f32.mrb[0].mxu0
        %v2611 = vpop.f32.mrb[0].mxu0
        %v2612 = vadd.f32 0.0, %v2611
        %v2613 = vpop.f32.mrb[0].mxu0
        %2614 = vmatprep.mubr.bf16.mxu0 0
        %2615 = vmatmul.mubr.bf16.gmra.mrb[0].mxu0 %v2544
        %v2616 = vpop.f32.mrb[0].mxu0
        %v2617 = vadd.f32 0.0, %v2616
        %v2618 = vpop.f32.mrb[0].mxu0
        %v2619 = vpop.f32.mrb[0].mxu0
        %v2620 = vadd.f32 0.0, %v2619
        %v2621 = vpop.f32.mrb[0].mxu0
        %2622 = vmatprep.mubr.bf16.mxu0 0
        %2623 = vmatmul.mubr.bf16.gmra.mrb[0].mxu0 %v2547
        %v2624 = vpop.f32.mrb[0].mxu0
        %v2625 = vadd.f32 0.0, %v2624
        %v2626 = vpop.f32.mrb[0].mxu0
        %v2627 = vpop.f32.mrb[0].mxu0
        %v2628 = vadd.f32 0.0, %v2627
        %v2629 = vpop.f32.mrb[0].mxu0
        %2630 = vmatprep.mubr.bf16.mxu0 0
        %2631 = vmatmul.mubr.bf16.gmra.mrb[0].mxu0 %v2550
        %v2632 = vpop.f32.mrb[0].mxu0
        %v2633 = vadd.f32 0.0, %v2632
        %v2634 = vpop.f32.mrb[0].mxu0
        %v2635 = vpop.f32.mrb[0].mxu0
        %v2636 = vadd.f32 0.0, %v2635
        %v2637 = vpop.f32.mrb[0].mxu0
        %2638 = vmatprep.mubr.bf16.mxu0 0
        %2639 = vmatmul.mubr.bf16.gmra.mrb[0].mxu0 %v2553
        %v2640 = vpop.f32.mrb[0].mxu0
        %v2641 = vadd.f32 0.0, %v2640
        %v2642 = vpop.f32.mrb[0].mxu0
        %v2643 = vpop.f32.mrb[0].mxu0
        %v2644 = vadd.f32 0.0, %v2643
        %v2645 = vpop.f32.mrb[0].mxu0
        %2646 = vmatprep.mubr.bf16.mxu0 0
        %2647 = vmatmul.mubr.bf16.gmra.mrb[0].mxu0 %v2556
        %v2648 = vpop.f32.mrb[0].mxu0
        %v2649 = vadd.f32 0.0, %v2648
        %v2650 = vpop.f32.mrb[0].mxu0
        %v2651 = vpop.f32.mrb[0].mxu0
        %v2652 = vadd.f32 0.0, %v2651
        %v2653 = vpop.f32.mrb[0].mxu0
        %2654 = vdwg.mxu0
        %v2663 = vunpack.c.l.b16 %v2494
        %v2664 = vunpack.c.l.b16 %v2495
        %v2665 = vunpack.c.l.b16 %v2496
        %v2666 = vunpack.c.l.b16 %v2497
        %v2667 = vunpack.c.l.b16 %v2498
        %v2668 = vunpack.c.l.b16 %v2499
        %v2669 = vunpack.c.l.b16 %v2500
        %v2670 = vunpack.c.l.b16 %v2501
        %v2671 = vpack.c.b16 %v2664, %v2663
        %v2672 = vpack.c.b16 %v2666, %v2665
        %v2673 = vpack.c.b16 %v2668, %v2667
        %v2674 = vpack.c.b16 %v2670, %v2669
        %v2680 = vsel %vm676, %v2484, 0
        %2682 = vmatprep.subr.bf16.mxu0 0
        %2683 = vmatpush1.bf16.msra.mxu0 %v2671
        %2684 = vmatprep.subr.bf16.mxu0 0
        %2685 = vmatpush1.bf16.msra.mxu0 %v2672
        %2686 = vmatprep.subr.bf16.mxu0 0
        %2687 = vmatpush1.bf16.msra.mxu0 %v2673
        %2688 = vmatprep.subr.bf16.mxu0 0
        %2689 = vmatpush1.bf16.msra.mxu0 %v2674
        %2690 = vmatprep.subr.bf16.mxu0 0
        %2691 = vmatpush1.bf16.msra.mxu0 0
        %2692 = vmatprep.subr.bf16.mxu0 0
        %2693 = vmatpush1.bf16.msra.mxu0 0
        %2694 = vmatprep.subr.bf16.mxu0 0
        %2695 = vmatpush1.bf16.msra.mxu0 0
        %2696 = vmatprep.subr.bf16.mxu0 0
        %2697 = vmatpush1.bf16.msra.mxu0 0
        %2698 = vmatprep.subr.bf16.mxu0 0
        %2699 = vmatpush1.bf16.msra.mxu0 0
        %2700 = vmatprep.subr.bf16.mxu0 0
        %2701 = vmatpush1.bf16.msra.mxu0 0
        %2702 = vmatprep.subr.bf16.mxu0 0
        %2703 = vmatpush1.bf16.msra.mxu0 0
        %2704 = vmatprep.subr.bf16.mxu0 0
        %2705 = vmatpush1.bf16.msra.mxu0 0
        %2706 = vmatprep.subr.bf16.mxu0 0
        %2707 = vmatpush1.bf16.msra.mxu0 0
        %2708 = vmatprep.subr.bf16.mxu0 0
        %2709 = vmatpush1.bf16.msra.mxu0 0
        %2710 = vmatprep.subr.bf16.mxu0 0
        %2711 = vmatpush1.bf16.msra.mxu0 0
        %2712 = vmatprep.subr.bf16.mxu0 0
        %2713 = vmatpush1.bf16.msra.mxu0 0
        %2714 = vmatprep.mubr.bf16.mxu0 0
        %2715 = vmatmul.mubr.bf16.gmra.mrb[0].mxu0 %v2680
        %v2716 = vpop.f32.mrb[0].mxu0
        %v2717 = vadd.f32 %v2593, %v2716
        %v2718 = vpop.f32.mrb[0].mxu0
        %v2719 = vpop.f32.mrb[0].mxu0
        %v2720 = vadd.f32 %v2596, %v2719
        %v2721 = vpop.f32.mrb[0].mxu0
        %2722 = vmatprep.mubr.bf16.mxu0 0
        %2723 = vmatmul.mubr.bf16.gmra.mrb[0].mxu0 %v2535
        %v2724 = vpop.f32.mrb[0].mxu0
        %v2725 = vadd.f32 %v2601, %v2724
        %v2726 = vpop.f32.mrb[0].mxu0
        %v2727 = vpop.f32.mrb[0].mxu0
        %v2728 = vadd.f32 %v2604, %v2727
        %v2729 = vpop.f32.mrb[0].mxu0
        %2730 = vmatprep.mubr.bf16.mxu0 0
        %2731 = vmatmul.mubr.bf16.gmra.mrb[0].mxu0 %v2538
        %v2732 = vpop.f32.mrb[0].mxu0
        %v2733 = vadd.f32 %v2609, %v2732
        %v2734 = vpop.f32.mrb[0].mxu0
        %v2735 = vpop.f32.mrb[0].mxu0
        %v2736 = vadd.f32 %v2612, %v2735
        %v2737 = vpop.f32.mrb[0].mxu0
        %2738 = vmatprep.mubr.bf16.mxu0 0
        %2739 = vmatmul.mubr.bf16.gmra.mrb[0].mxu0 %v2541
        %v2740 = vpop.f32.mrb[0].mxu0
        %v2741 = vadd.f32 %v2617, %v2740
        %v2742 = vpop.f32.mrb[0].mxu0
        %v2743 = vpop.f32.mrb[0].mxu0
        %v2744 = vadd.f32 %v2620, %v2743
        %v2745 = vpop.f32.mrb[0].mxu0
        %2746 = vmatprep.mubr.bf16.mxu0 0
        %2747 = vmatmul.mubr.bf16.gmra.mrb[0].mxu0 %v2544
        %v2748 = vpop.f32.mrb[0].mxu0
        %v2749 = vadd.f32 %v2625, %v2748
        %v2750 = vpop.f32.mrb[0].mxu0
        %v2751 = vpop.f32.mrb[0].mxu0
        %v2752 = vadd.f32 %v2628, %v2751
        %v2753 = vpop.f32.mrb[0].mxu0
        %2754 = vmatprep.mubr.bf16.mxu0 0
        %2755 = vmatmul.mubr.bf16.gmra.mrb[0].mxu0 %v2547
        %v2756 = vpop.f32.mrb[0].mxu0
        %v2757 = vadd.f32 %v2633, %v2756
        %v2758 = vpop.f32.mrb[0].mxu0
        %v2759 = vpop.f32.mrb[0].mxu0
        %v2760 = vadd.f32 %v2636, %v2759
        %v2761 = vpop.f32.mrb[0].mxu0
        %2762 = vmatprep.mubr.bf16.mxu0 0
        %2763 = vmatmul.mubr.bf16.gmra.mrb[0].mxu0 %v2550
        %v2764 = vpop.f32.mrb[0].mxu0
        %v2765 = vadd.f32 %v2641, %v2764
        %v2766 = vpop.f32.mrb[0].mxu0
        %v2767 = vpop.f32.mrb[0].mxu0
        %v2768 = vadd.f32 %v2644, %v2767
        %v2769 = vpop.f32.mrb[0].mxu0
        %2770 = vmatprep.mubr.bf16.mxu0 0
        %2771 = vmatmul.mubr.bf16.gmra.mrb[0].mxu0 %v2553
        %v2772 = vpop.f32.mrb[0].mxu0
        %v2773 = vadd.f32 %v2649, %v2772
        %v2774 = vpop.f32.mrb[0].mxu0
        %v2775 = vpop.f32.mrb[0].mxu0
        %v2776 = vadd.f32 %v2652, %v2775
        %v2777 = vpop.f32.mrb[0].mxu0
        %2778 = vdwg.mxu0
        %v2779 = vld [vmem:[%s1162] sm:$0xf]
        %v2780 = vld [vmem:[%s1162 + $0x4] sm:$0xf]
        %v2781 = vld [vmem:[%s1162 + $0x8] sm:$0xf]
        %v2782 = vld [vmem:[%s1162 + $0xc] sm:$0xf]
        %v2783 = vld [vmem:[%s1162 + $0x10] sm:$0xf]
        %v2784 = vld [vmem:[%s1162 + $0x14] sm:$0xf]
        %v2785 = vld [vmem:[%s1162 + $0x18] sm:$0xf]
        %v2786 = vld [vmem:[%s1162 + $0x1c] sm:$0xf]
        %v2795 = vunpack.c.l.b16 %v2779
        %v2796 = vunpack.c.l.b16 %v2780
        %v2797 = vunpack.c.l.b16 %v2781
        %v2798 = vunpack.c.l.b16 %v2782
        %v2799 = vunpack.c.l.b16 %v2783
        %v2800 = vunpack.c.l.b16 %v2784
        %v2801 = vunpack.c.l.b16 %v2785
        %v2802 = vunpack.c.l.b16 %v2786
        %v2803 = vpack.c.b16 %v2796, %v2795
        %v2804 = vpack.c.b16 %v2798, %v2797
        %v2805 = vpack.c.b16 %v2800, %v2799
        %v2806 = vpack.c.b16 %v2802, %v2801
        %v2812 = vsel %vm676, %v2493, 0
        %2814 = vmatprep.subr.bf16.mxu0 0
        %2815 = vmatpush1.bf16.msra.mxu0 %v2803
        %2816 = vmatprep.subr.bf16.mxu0 0
        %2817 = vmatpush1.bf16.msra.mxu0 %v2804
        %2818 = vmatprep.subr.bf16.mxu0 0
        %2819 = vmatpush1.bf16.msra.mxu0 %v2805
        %2820 = vmatprep.subr.bf16.mxu0 0
        %2821 = vmatpush1.bf16.msra.mxu0 %v2806
        %2822 = vmatprep.subr.bf16.mxu0 0
        %2823 = vmatpush1.bf16.msra.mxu0 0
        %2824 = vmatprep.subr.bf16.mxu0 0
        %2825 = vmatpush1.bf16.msra.mxu0 0
        %2826 = vmatprep.subr.bf16.mxu0 0
        %2827 = vmatpush1.bf16.msra.mxu0 0
        %2828 = vmatprep.subr.bf16.mxu0 0
        %2829 = vmatpush1.bf16.msra.mxu0 0
        %2830 = vmatprep.subr.bf16.mxu0 0
        %2831 = vmatpush1.bf16.msra.mxu0 0
        %2832 = vmatprep.subr.bf16.mxu0 0
        %2833 = vmatpush1.bf16.msra.mxu0 0
        %2834 = vmatprep.subr.bf16.mxu0 0
        %2835 = vmatpush1.bf16.msra.mxu0 0
        %2836 = vmatprep.subr.bf16.mxu0 0
        %2837 = vmatpush1.bf16.msra.mxu0 0
        %2838 = vmatprep.subr.bf16.mxu0 0
        %2839 = vmatpush1.bf16.msra.mxu0 0
        %2840 = vmatprep.subr.bf16.mxu0 0
        %2841 = vmatpush1.bf16.msra.mxu0 0
        %2842 = vmatprep.subr.bf16.mxu0 0
        %2843 = vmatpush1.bf16.msra.mxu0 0
        %2844 = vmatprep.subr.bf16.mxu0 0
        %2845 = vmatpush1.bf16.msra.mxu0 0
        %2846 = vmatprep.mubr.bf16.mxu0 0
        %2847 = vmatmul.mubr.bf16.gmra.mrb[0].mxu0 %v2538
        %v2848 = vpop.f32.mrb[0].mxu0
        %v2849 = vadd.f32 0.0, %v2848
        %v2850 = vpop.f32.mrb[0].mxu0
        %v2851 = vpop.f32.mrb[0].mxu0
        %v2852 = vadd.f32 0.0, %v2851
        %v2853 = vpop.f32.mrb[0].mxu0
        %2854 = vmatprep.mubr.bf16.mxu0 0
        %2855 = vmatmul.mubr.bf16.gmra.mrb[0].mxu0 %v2541
        %v2856 = vpop.f32.mrb[0].mxu0
        %v2857 = vadd.f32 0.0, %v2856
        %v2858 = vpop.f32.mrb[0].mxu0
        %v2859 = vpop.f32.mrb[0].mxu0
        %v2860 = vadd.f32 0.0, %v2859
        %v2861 = vpop.f32.mrb[0].mxu0
        %2862 = vmatprep.mubr.bf16.mxu0 0
        %2863 = vmatmul.mubr.bf16.gmra.mrb[0].mxu0 %v2544
        %v2864 = vpop.f32.mrb[0].mxu0
        %v2865 = vadd.f32 0.0, %v2864
        %v2866 = vpop.f32.mrb[0].mxu0
        %v2867 = vpop.f32.mrb[0].mxu0
        %v2868 = vadd.f32 0.0, %v2867
        %v2869 = vpop.f32.mrb[0].mxu0
        %2870 = vmatprep.mubr.bf16.mxu0 0
        %2871 = vmatmul.mubr.bf16.gmra.mrb[0].mxu0 %v2547
        %v2872 = vpop.f32.mrb[0].mxu0
        %v2873 = vadd.f32 0.0, %v2872
        %v2874 = vpop.f32.mrb[0].mxu0
        %v2875 = vpop.f32.mrb[0].mxu0
        %v2876 = vadd.f32 0.0, %v2875
        %v2877 = vpop.f32.mrb[0].mxu0
        %2878 = vmatprep.mubr.bf16.mxu0 0
        %2879 = vmatmul.mubr.bf16.gmra.mrb[0].mxu0 %v2550
        %v2880 = vpop.f32.mrb[0].mxu0
        %v2881 = vadd.f32 0.0, %v2880
        %v2882 = vpop.f32.mrb[0].mxu0
        %v2883 = vpop.f32.mrb[0].mxu0
        %v2884 = vadd.f32 0.0, %v2883
        %v2885 = vpop.f32.mrb[0].mxu0
        %2886 = vmatprep.mubr.bf16.mxu0 0
        %2887 = vmatmul.mubr.bf16.gmra.mrb[0].mxu0 %v2553
        %v2888 = vpop.f32.mrb[0].mxu0
        %v2889 = vadd.f32 0.0, %v2888
        %v2890 = vpop.f32.mrb[0].mxu0
        %v2891 = vpop.f32.mrb[0].mxu0
        %v2892 = vadd.f32 0.0, %v2891
        %v2893 = vpop.f32.mrb[0].mxu0
        %2894 = vmatprep.mubr.bf16.mxu0 0
        %2895 = vmatmul.mubr.bf16.gmra.mrb[0].mxu0 %v2556
        %v2896 = vpop.f32.mrb[0].mxu0
        %v2897 = vadd.f32 0.0, %v2896
        %v2898 = vpop.f32.mrb[0].mxu0
        %v2899 = vpop.f32.mrb[0].mxu0
        %v2900 = vadd.f32 0.0, %v2899
        %v2901 = vpop.f32.mrb[0].mxu0
        %2902 = vmatprep.mubr.bf16.mxu0 0
        %2903 = vmatmul.mubr.bf16.gmra.mrb[0].mxu0 %v2812
        %v2904 = vpop.f32.mrb[0].mxu0
        %v2905 = vadd.f32 0.0, %v2904
        %v2906 = vpop.f32.mrb[0].mxu0
        %v2907 = vpop.f32.mrb[0].mxu0
        %v2908 = vadd.f32 0.0, %v2907
        %v2909 = vpop.f32.mrb[0].mxu0
        %2910 = vdwg.mxu0
        %v2911 = vadd.f32 %v2717, %v2849
        %v2912 = vadd.f32 %v2720, %v2852
        %v2913 = vadd.f32 %v2725, %v2857
        %v2914 = vadd.f32 %v2728, %v2860
        %v2915 = vadd.f32 %v2733, %v2865
        %v2916 = vadd.f32 %v2736, %v2868
        %v2917 = vadd.f32 %v2741, %v2873
        %v2918 = vadd.f32 %v2744, %v2876
        %v2919 = vadd.f32 %v2749, %v2881
        %v2920 = vadd.f32 %v2752, %v2884
        %v2921 = vadd.f32 %v2757, %v2889
        %v2922 = vadd.f32 %v2760, %v2892
        %v2923 = vadd.f32 %v2765, %v2897
        %v2924 = vadd.f32 %v2768, %v2900
        %v2925 = vadd.f32 %v2773, %v2905
        %v2926 = vadd.f32 %v2776, %v2908
        %v2927 = vpack.c.bf16 %v2405, %v2404
        %v2928 = vpack.c.bf16 %v2407, %v2406
        %v2929 = vpack.c.bf16 %v2409, %v2408
        %v2930 = vpack.c.bf16 %v2411, %v2410
        %v2931 = vpack.c.bf16 %v2413, %v2412
        %v2932 = vpack.c.bf16 %v2415, %v2414
        %v2933 = vpack.c.bf16 %v2417, %v2416
        %v2934 = vpack.c.bf16 %v2419, %v2418
        %v2935 = vpack.c.bf16 %v2421, %v2420
        %v2936 = vpack.c.bf16 %v2423, %v2422
        %v2937 = vld [vmem:[%s1321] sm:$0xf]
        %v2938 = vld [vmem:[%s1321 + $0x4] sm:$0xf]
        %v2939 = vld [vmem:[%s1321 + $0x8] sm:$0xf]
        %v2940 = vld [vmem:[%s1321 + $0xc] sm:$0xf]
        %v2941 = vld [vmem:[%s1321 + $0x10] sm:$0xf]
        %v2942 = vld [vmem:[%s1321 + $0x14] sm:$0xf]
        %v2943 = vld [vmem:[%s1321 + $0x18] sm:$0xf]
        %v2944 = vld [vmem:[%s1321 + $0x1c] sm:$0xf]
        %v2953 = vunpack.c.l.b16 %v2937
        %v2954 = vunpack.c.l.b16 %v2938
        %v2955 = vunpack.c.l.b16 %v2939
        %v2956 = vunpack.c.l.b16 %v2940
        %v2957 = vunpack.c.l.b16 %v2941
        %v2958 = vunpack.c.l.b16 %v2942
        %v2959 = vunpack.c.l.b16 %v2943
        %v2960 = vunpack.c.l.b16 %v2944
        %v2961 = vpack.c.b16 %v2954, %v2953
        %v2962 = vpack.c.b16 %v2956, %v2955
        %v2963 = vpack.c.b16 %v2958, %v2957
        %v2964 = vpack.c.b16 %v2960, %v2959
        %v2970 = vsel %vm676, %v2927, 0
        %v2973 = vsel %vm676, %v2928, 0
        %v2976 = vsel %vm676, %v2929, 0
        %v2979 = vsel %vm676, %v2930, 0
        %v2982 = vsel %vm676, %v2931, 0
        %v2985 = vsel %vm676, %v2932, 0
        %v2988 = vsel %vm676, %v2933, 0
        %v2991 = vsel %vm676, %v2934, 0
        %2993 = vmatprep.subr.bf16.mxu0 0
        %2994 = vmatpush1.bf16.msra.mxu0 %v2961
        %2995 = vmatprep.subr.bf16.mxu0 0
        %2996 = vmatpush1.bf16.msra.mxu0 %v2962
        %2997 = vmatprep.subr.bf16.mxu0 0
        %2998 = vmatpush1.bf16.msra.mxu0 %v2963
        %2999 = vmatprep.subr.bf16.mxu0 0
        %3000 = vmatpush1.bf16.msra.mxu0 %v2964
        %3001 = vmatprep.subr.bf16.mxu0 0
        %3002 = vmatpush1.bf16.msra.mxu0 0
        %3003 = vmatprep.subr.bf16.mxu0 0
        %3004 = vmatpush1.bf16.msra.mxu0 0
        %3005 = vmatprep.subr.bf16.mxu0 0
        %3006 = vmatpush1.bf16.msra.mxu0 0
        %3007 = vmatprep.subr.bf16.mxu0 0
        %3008 = vmatpush1.bf16.msra.mxu0 0
        %3009 = vmatprep.subr.bf16.mxu0 0
        %3010 = vmatpush1.bf16.msra.mxu0 0
        %3011 = vmatprep.subr.bf16.mxu0 0
        %3012 = vmatpush1.bf16.msra.mxu0 0
        %3013 = vmatprep.subr.bf16.mxu0 0
        %3014 = vmatpush1.bf16.msra.mxu0 0
        %3015 = vmatprep.subr.bf16.mxu0 0
        %3016 = vmatpush1.bf16.msra.mxu0 0
        %3017 = vmatprep.subr.bf16.mxu0 0
        %3018 = vmatpush1.bf16.msra.mxu0 0
        %3019 = vmatprep.subr.bf16.mxu0 0
        %3020 = vmatpush1.bf16.msra.mxu0 0
        %3021 = vmatprep.subr.bf16.mxu0 0
        %3022 = vmatpush1.bf16.msra.mxu0 0
        %3023 = vmatprep.subr.bf16.mxu0 0
        %3024 = vmatpush1.bf16.msra.mxu0 0
        %3025 = vmatprep.mubr.bf16.mxu0 0
        %3026 = vmatmul.mubr.bf16.gmra.mrb[0].mxu0 %v2970
        %v3027 = vpop.f32.mrb[0].mxu0
        %v3028 = vadd.f32 0.0, %v3027
        %v3029 = vpop.f32.mrb[0].mxu0
        %v3030 = vpop.f32.mrb[0].mxu0
        %v3031 = vadd.f32 0.0, %v3030
        %v3032 = vpop.f32.mrb[0].mxu0
        %3033 = vmatprep.mubr.bf16.mxu0 0
        %3034 = vmatmul.mubr.bf16.gmra.mrb[0].mxu0 %v2973
        %v3035 = vpop.f32.mrb[0].mxu0
        %v3036 = vadd.f32 0.0, %v3035
        %v3037 = vpop.f32.mrb[0].mxu0
        %v3038 = vpop.f32.mrb[0].mxu0
        %v3039 = vadd.f32 0.0, %v3038
        %v3040 = vpop.f32.mrb[0].mxu0
        %3041 = vmatprep.mubr.bf16.mxu0 0
        %3042 = vmatmul.mubr.bf16.gmra.mrb[0].mxu0 %v2976
        %v3043 = vpop.f32.mrb[0].mxu0
        %v3044 = vadd.f32 0.0, %v3043
        %v3045 = vpop.f32.mrb[0].mxu0
        %v3046 = vpop.f32.mrb[0].mxu0
        %v3047 = vadd.f32 0.0, %v3046
        %v3048 = vpop.f32.mrb[0].mxu0
        %3049 = vmatprep.mubr.bf16.mxu0 0
        %3050 = vmatmul.mubr.bf16.gmra.mrb[0].mxu0 %v2979
        %v3051 = vpop.f32.mrb[0].mxu0
        %v3052 = vadd.f32 0.0, %v3051
        %v3053 = vpop.f32.mrb[0].mxu0
        %v3054 = vpop.f32.mrb[0].mxu0
        %v3055 = vadd.f32 0.0, %v3054
        %v3056 = vpop.f32.mrb[0].mxu0
        %3057 = vmatprep.mubr.bf16.mxu0 0
        %3058 = vmatmul.mubr.bf16.gmra.mrb[0].mxu0 %v2982
        %v3059 = vpop.f32.mrb[0].mxu0
        %v3060 = vadd.f32 0.0, %v3059
        %v3061 = vpop.f32.mrb[0].mxu0
        %v3062 = vpop.f32.mrb[0].mxu0
        %v3063 = vadd.f32 0.0, %v3062
        %v3064 = vpop.f32.mrb[0].mxu0
        %3065 = vmatprep.mubr.bf16.mxu0 0
        %3066 = vmatmul.mubr.bf16.gmra.mrb[0].mxu0 %v2985
        %v3067 = vpop.f32.mrb[0].mxu0
        %v3068 = vadd.f32 0.0, %v3067
        %v3069 = vpop.f32.mrb[0].mxu0
        %v3070 = vpop.f32.mrb[0].mxu0
        %v3071 = vadd.f32 0.0, %v3070
        %v3072 = vpop.f32.mrb[0].mxu0
        %3073 = vmatprep.mubr.bf16.mxu0 0
        %3074 = vmatmul.mubr.bf16.gmra.mrb[0].mxu0 %v2988
        %v3075 = vpop.f32.mrb[0].mxu0
        %v3076 = vadd.f32 0.0, %v3075
        %v3077 = vpop.f32.mrb[0].mxu0
        %v3078 = vpop.f32.mrb[0].mxu0
        %v3079 = vadd.f32 0.0, %v3078
        %v3080 = vpop.f32.mrb[0].mxu0
        %3081 = vmatprep.mubr.bf16.mxu0 0
        %3082 = vmatmul.mubr.bf16.gmra.mrb[0].mxu0 %v2991
        %v3083 = vpop.f32.mrb[0].mxu0
        %v3084 = vadd.f32 0.0, %v3083
        %v3085 = vpop.f32.mrb[0].mxu0
        %v3086 = vpop.f32.mrb[0].mxu0
        %v3087 = vadd.f32 0.0, %v3086
        %v3088 = vpop.f32.mrb[0].mxu0
        %3089 = vdwg.mxu0
        %v3090 = vadd.f32 %v2911, %v3028
        %v3091 = vadd.f32 %v2912, %v3031
        %v3092 = vadd.f32 %v2913, %v3036
        %v3093 = vadd.f32 %v2914, %v3039
        %v3094 = vadd.f32 %v2915, %v3044
        %v3095 = vadd.f32 %v2916, %v3047
        %v3096 = vadd.f32 %v2917, %v3052
        %v3097 = vadd.f32 %v2918, %v3055
        %v3098 = vadd.f32 %v2919, %v3060
        %v3099 = vadd.f32 %v2920, %v3063
        %v3100 = vadd.f32 %v2921, %v3068
        %v3101 = vadd.f32 %v2922, %v3071
        %v3102 = vadd.f32 %v2923, %v3076
        %v3103 = vadd.f32 %v2924, %v3079
        %v3104 = vadd.f32 %v2925, %v3084
        %v3105 = vadd.f32 %v2926, %v3087
        %v3106 = vld [vmem:[%s1491] sm:$0xf]
        %v3107 = vld [vmem:[%s1491 + $0x4] sm:$0xf]
        %v3108 = vld [vmem:[%s1491 + $0x8] sm:$0xf]
        %v3109 = vld [vmem:[%s1491 + $0xc] sm:$0xf]
        %v3110 = vld [vmem:[%s1491 + $0x10] sm:$0xf]
        %v3111 = vld [vmem:[%s1491 + $0x14] sm:$0xf]
        %v3112 = vld [vmem:[%s1491 + $0x18] sm:$0xf]
        %v3113 = vld [vmem:[%s1491 + $0x1c] sm:$0xf]
        %v3122 = vunpack.c.l.b16 %v3106
        %v3123 = vunpack.c.l.b16 %v3107
        %v3124 = vunpack.c.l.b16 %v3108
        %v3125 = vunpack.c.l.b16 %v3109
        %v3126 = vunpack.c.l.b16 %v3110
        %v3127 = vunpack.c.l.b16 %v3111
        %v3128 = vunpack.c.l.b16 %v3112
        %v3129 = vunpack.c.l.b16 %v3113
        %v3130 = vpack.c.b16 %v3123, %v3122
        %v3131 = vpack.c.b16 %v3125, %v3124
        %v3132 = vpack.c.b16 %v3127, %v3126
        %v3133 = vpack.c.b16 %v3129, %v3128
        %v3139 = vsel %vm676, %v2935, 0
        %3141 = vmatprep.subr.bf16.mxu0 0
        %3142 = vmatpush1.bf16.msra.mxu0 %v3130
        %3143 = vmatprep.subr.bf16.mxu0 0
        %3144 = vmatpush1.bf16.msra.mxu0 %v3131
        %3145 = vmatprep.subr.bf16.mxu0 0
        %3146 = vmatpush1.bf16.msra.mxu0 %v3132
        %3147 = vmatprep.subr.bf16.mxu0 0
        %3148 = vmatpush1.bf16.msra.mxu0 %v3133
        %3149 = vmatprep.subr.bf16.mxu0 0
        %3150 = vmatpush1.bf16.msra.mxu0 0
        %3151 = vmatprep.subr.bf16.mxu0 0
        %3152 = vmatpush1.bf16.msra.mxu0 0
        %3153 = vmatprep.subr.bf16.mxu0 0
        %3154 = vmatpush1.bf16.msra.mxu0 0
        %3155 = vmatprep.subr.bf16.mxu0 0
        %3156 = vmatpush1.bf16.msra.mxu0 0
        %3157 = vmatprep.subr.bf16.mxu0 0
        %3158 = vmatpush1.bf16.msra.mxu0 0
        %3159 = vmatprep.subr.bf16.mxu0 0
        %3160 = vmatpush1.bf16.msra.mxu0 0
        %3161 = vmatprep.subr.bf16.mxu0 0
        %3162 = vmatpush1.bf16.msra.mxu0 0
        %3163 = vmatprep.subr.bf16.mxu0 0
        %3164 = vmatpush1.bf16.msra.mxu0 0
        %3165 = vmatprep.subr.bf16.mxu0 0
        %3166 = vmatpush1.bf16.msra.mxu0 0
        %3167 = vmatprep.subr.bf16.mxu0 0
        %3168 = vmatpush1.bf16.msra.mxu0 0
        %3169 = vmatprep.subr.bf16.mxu0 0
        %3170 = vmatpush1.bf16.msra.mxu0 0
        %3171 = vmatprep.subr.bf16.mxu0 0
        %3172 = vmatpush1.bf16.msra.mxu0 0
        %3173 = vmatprep.mubr.bf16.mxu0 0
        %3174 = vmatmul.mubr.bf16.gmra.mrb[0].mxu0 %v2973
        %v3175 = vpop.f32.mrb[0].mxu0
        %v3176 = vadd.f32 0.0, %v3175
        %v3177 = vpop.f32.mrb[0].mxu0
        %v3178 = vpop.f32.mrb[0].mxu0
        %v3179 = vadd.f32 0.0, %v3178
        %v3180 = vpop.f32.mrb[0].mxu0
        %3181 = vmatprep.mubr.bf16.mxu0 0
        %3182 = vmatmul.mubr.bf16.gmra.mrb[0].mxu0 %v2976
        %v3183 = vpop.f32.mrb[0].mxu0
        %v3184 = vadd.f32 0.0, %v3183
        %v3185 = vpop.f32.mrb[0].mxu0
        %v3186 = vpop.f32.mrb[0].mxu0
        %v3187 = vadd.f32 0.0, %v3186
        %v3188 = vpop.f32.mrb[0].mxu0
        %3189 = vmatprep.mubr.bf16.mxu0 0
        %3190 = vmatmul.mubr.bf16.gmra.mrb[0].mxu0 %v2979
        %v3191 = vpop.f32.mrb[0].mxu0
        %v3192 = vadd.f32 0.0, %v3191
        %v3193 = vpop.f32.mrb[0].mxu0
        %v3194 = vpop.f32.mrb[0].mxu0
        %v3195 = vadd.f32 0.0, %v3194
        %v3196 = vpop.f32.mrb[0].mxu0
        %3197 = vmatprep.mubr.bf16.mxu0 0
        %3198 = vmatmul.mubr.bf16.gmra.mrb[0].mxu0 %v2982
        %v3199 = vpop.f32.mrb[0].mxu0
        %v3200 = vadd.f32 0.0, %v3199
        %v3201 = vpop.f32.mrb[0].mxu0
        %v3202 = vpop.f32.mrb[0].mxu0
        %v3203 = vadd.f32 0.0, %v3202
        %v3204 = vpop.f32.mrb[0].mxu0
        %3205 = vmatprep.mubr.bf16.mxu0 0
        %3206 = vmatmul.mubr.bf16.gmra.mrb[0].mxu0 %v2985
        %v3207 = vpop.f32.mrb[0].mxu0
        %v3208 = vadd.f32 0.0, %v3207
        %v3209 = vpop.f32.mrb[0].mxu0
        %v3210 = vpop.f32.mrb[0].mxu0
        %v3211 = vadd.f32 0.0, %v3210
        %v3212 = vpop.f32.mrb[0].mxu0
        %3213 = vmatprep.mubr.bf16.mxu0 0
        %3214 = vmatmul.mubr.bf16.gmra.mrb[0].mxu0 %v2988
        %v3215 = vpop.f32.mrb[0].mxu0
        %v3216 = vadd.f32 0.0, %v3215
        %v3217 = vpop.f32.mrb[0].mxu0
        %v3218 = vpop.f32.mrb[0].mxu0
        %v3219 = vadd.f32 0.0, %v3218
        %v3220 = vpop.f32.mrb[0].mxu0
        %3221 = vmatprep.mubr.bf16.mxu0 0
        %3222 = vmatmul.mubr.bf16.gmra.mrb[0].mxu0 %v2991
        %v3223 = vpop.f32.mrb[0].mxu0
        %v3224 = vadd.f32 0.0, %v3223
        %v3225 = vpop.f32.mrb[0].mxu0
        %v3226 = vpop.f32.mrb[0].mxu0
        %v3227 = vadd.f32 0.0, %v3226
        %v3228 = vpop.f32.mrb[0].mxu0
        %3229 = vmatprep.mubr.bf16.mxu0 0
        %3230 = vmatmul.mubr.bf16.gmra.mrb[0].mxu0 %v3139
        %v3231 = vpop.f32.mrb[0].mxu0
        %v3232 = vadd.f32 0.0, %v3231
        %v3233 = vpop.f32.mrb[0].mxu0
        %v3234 = vpop.f32.mrb[0].mxu0
        %v3235 = vadd.f32 0.0, %v3234
        %v3236 = vpop.f32.mrb[0].mxu0
        %3237 = vdwg.mxu0
        %v3238 = vadd.f32 %v3090, %v3176
        %v3239 = vadd.f32 %v3091, %v3179
        %v3240 = vadd.f32 %v3092, %v3184
        %v3241 = vadd.f32 %v3093, %v3187
        %v3242 = vadd.f32 %v3094, %v3192
        %v3243 = vadd.f32 %v3095, %v3195
        %v3244 = vadd.f32 %v3096, %v3200
        %v3245 = vadd.f32 %v3097, %v3203
        %v3246 = vadd.f32 %v3098, %v3208
        %v3247 = vadd.f32 %v3099, %v3211
        %v3248 = vadd.f32 %v3100, %v3216
        %v3249 = vadd.f32 %v3101, %v3219
        %v3250 = vadd.f32 %v3102, %v3224
        %v3251 = vadd.f32 %v3103, %v3227
        %v3252 = vadd.f32 %v3104, %v3232
        %v3253 = vadd.f32 %v3105, %v3235
        %v3254 = vld [vmem:[%s1640] sm:$0xf]
        %v3255 = vld [vmem:[%s1640 + $0x4] sm:$0xf]
        %v3256 = vld [vmem:[%s1640 + $0x8] sm:$0xf]
        %v3257 = vld [vmem:[%s1640 + $0xc] sm:$0xf]
        %v3258 = vld [vmem:[%s1640 + $0x10] sm:$0xf]
        %v3259 = vld [vmem:[%s1640 + $0x14] sm:$0xf]
        %v3260 = vld [vmem:[%s1640 + $0x18] sm:$0xf]
        %v3261 = vld [vmem:[%s1640 + $0x1c] sm:$0xf]
        %v3270 = vunpack.c.l.b16 %v3254
        %v3271 = vunpack.c.l.b16 %v3255
        %v3272 = vunpack.c.l.b16 %v3256
        %v3273 = vunpack.c.l.b16 %v3257
        %v3274 = vunpack.c.l.b16 %v3258
        %v3275 = vunpack.c.l.b16 %v3259
        %v3276 = vunpack.c.l.b16 %v3260
        %v3277 = vunpack.c.l.b16 %v3261
        %v3278 = vpack.c.b16 %v3271, %v3270
        %v3279 = vpack.c.b16 %v3273, %v3272
        %v3280 = vpack.c.b16 %v3275, %v3274
        %v3281 = vpack.c.b16 %v3277, %v3276
        %v3287 = vsel %vm676, %v2936, 0
        %3289 = vmatprep.subr.bf16.mxu0 0
        %3290 = vmatpush1.bf16.msra.mxu0 %v3278
        %3291 = vmatprep.subr.bf16.mxu0 0
        %3292 = vmatpush1.bf16.msra.mxu0 %v3279
        %3293 = vmatprep.subr.bf16.mxu0 0
        %3294 = vmatpush1.bf16.msra.mxu0 %v3280
        %3295 = vmatprep.subr.bf16.mxu0 0
        %3296 = vmatpush1.bf16.msra.mxu0 %v3281
        %3297 = vmatprep.subr.bf16.mxu0 0
        %3298 = vmatpush1.bf16.msra.mxu0 0
        %3299 = vmatprep.subr.bf16.mxu0 0
        %3300 = vmatpush1.bf16.msra.mxu0 0
        %3301 = vmatprep.subr.bf16.mxu0 0
        %3302 = vmatpush1.bf16.msra.mxu0 0
        %3303 = vmatprep.subr.bf16.mxu0 0
        %3304 = vmatpush1.bf16.msra.mxu0 0
        %3305 = vmatprep.subr.bf16.mxu0 0
        %3306 = vmatpush1.bf16.msra.mxu0 0
        %3307 = vmatprep.subr.bf16.mxu0 0
        %3308 = vmatpush1.bf16.msra.mxu0 0
        %3309 = vmatprep.subr.bf16.mxu0 0
        %3310 = vmatpush1.bf16.msra.mxu0 0
        %3311 = vmatprep.subr.bf16.mxu0 0
        %3312 = vmatpush1.bf16.msra.mxu0 0
        %3313 = vmatprep.subr.bf16.mxu0 0
        %3314 = vmatpush1.bf16.msra.mxu0 0
        %3315 = vmatprep.subr.bf16.mxu0 0
        %3316 = vmatpush1.bf16.msra.mxu0 0
        %3317 = vmatprep.subr.bf16.mxu0 0
        %3318 = vmatpush1.bf16.msra.mxu0 0
        %3319 = vmatprep.subr.bf16.mxu0 0
        %3320 = vmatpush1.bf16.msra.mxu0 0
        %3321 = vmatprep.mubr.bf16.mxu0 0
        %3322 = vmatmul.mubr.bf16.gmra.mrb[0].mxu0 %v2976
        %v3323 = vpop.f32.mrb[0].mxu0
        %v3324 = vadd.f32 0.0, %v3323
        %v3325 = vpop.f32.mrb[0].mxu0
        %v3326 = vpop.f32.mrb[0].mxu0
        %v3327 = vadd.f32 0.0, %v3326
        %v3328 = vpop.f32.mrb[0].mxu0
        %3329 = vmatprep.mubr.bf16.mxu0 0
        %3330 = vmatmul.mubr.bf16.gmra.mrb[0].mxu0 %v2979
        %v3331 = vpop.f32.mrb[0].mxu0
        %v3332 = vadd.f32 0.0, %v3331
        %v3333 = vpop.f32.mrb[0].mxu0
        %v3334 = vpop.f32.mrb[0].mxu0
        %v3335 = vadd.f32 0.0, %v3334
        %v3336 = vpop.f32.mrb[0].mxu0
        %3337 = vmatprep.mubr.bf16.mxu0 0
        %3338 = vmatmul.mubr.bf16.gmra.mrb[0].mxu0 %v2982
        %v3339 = vpop.f32.mrb[0].mxu0
        %v3340 = vadd.f32 0.0, %v3339
        %v3341 = vpop.f32.mrb[0].mxu0
        %v3342 = vpop.f32.mrb[0].mxu0
        %v3343 = vadd.f32 0.0, %v3342
        %v3344 = vpop.f32.mrb[0].mxu0
        %3345 = vmatprep.mubr.bf16.mxu0 0
        %3346 = vmatmul.mubr.bf16.gmra.mrb[0].mxu0 %v2985
        %v3347 = vpop.f32.mrb[0].mxu0
        %v3348 = vadd.f32 0.0, %v3347
        %v3349 = vpop.f32.mrb[0].mxu0
        %v3350 = vpop.f32.mrb[0].mxu0
        %v3351 = vadd.f32 0.0, %v3350
        %v3352 = vpop.f32.mrb[0].mxu0
        %3353 = vmatprep.mubr.bf16.mxu0 0
        %3354 = vmatmul.mubr.bf16.gmra.mrb[0].mxu0 %v2988
        %v3355 = vpop.f32.mrb[0].mxu0
        %v3356 = vadd.f32 0.0, %v3355
        %v3357 = vpop.f32.mrb[0].mxu0
        %v3358 = vpop.f32.mrb[0].mxu0
        %v3359 = vadd.f32 0.0, %v3358
        %v3360 = vpop.f32.mrb[0].mxu0
        %3361 = vmatprep.mubr.bf16.mxu0 0
        %3362 = vmatmul.mubr.bf16.gmra.mrb[0].mxu0 %v2991
        %v3363 = vpop.f32.mrb[0].mxu0
        %v3364 = vadd.f32 0.0, %v3363
        %v3365 = vpop.f32.mrb[0].mxu0
        %v3366 = vpop.f32.mrb[0].mxu0
        %v3367 = vadd.f32 0.0, %v3366
        %v3368 = vpop.f32.mrb[0].mxu0
        %3369 = vmatprep.mubr.bf16.mxu0 0
        %3370 = vmatmul.mubr.bf16.gmra.mrb[0].mxu0 %v3139
        %v3371 = vpop.f32.mrb[0].mxu0
        %v3372 = vadd.f32 0.0, %v3371
        %v3373 = vpop.f32.mrb[0].mxu0
        %v3374 = vpop.f32.mrb[0].mxu0
        %v3375 = vadd.f32 0.0, %v3374
        %v3376 = vpop.f32.mrb[0].mxu0
        %3377 = vmatprep.mubr.bf16.mxu0 0
        %3378 = vmatmul.mubr.bf16.gmra.mrb[0].mxu0 %v3287
        %v3379 = vpop.f32.mrb[0].mxu0
        %v3380 = vadd.f32 0.0, %v3379
        %v3381 = vpop.f32.mrb[0].mxu0
        %v3382 = vpop.f32.mrb[0].mxu0
        %v3383 = vadd.f32 0.0, %v3382
        %v3384 = vpop.f32.mrb[0].mxu0
        %3385 = vdwg.mxu0
        %v3386 = vadd.f32 %v3238, %v3324
        %v3387 = vadd.f32 %v3239, %v3327
        %v3388 = vadd.f32 %v3240, %v3332
        %v3389 = vadd.f32 %v3241, %v3335
        %v3390 = vadd.f32 %v3242, %v3340
        %v3391 = vadd.f32 %v3243, %v3343
        %v3392 = vadd.f32 %v3244, %v3348
        %v3393 = vadd.f32 %v3245, %v3351
        %v3394 = vadd.f32 %v3246, %v3356
        %v3395 = vadd.f32 %v3247, %v3359
        %v3396 = vadd.f32 %v3248, %v3364
        %v3397 = vadd.f32 %v3249, %v3367
        %v3398 = vadd.f32 %v3250, %v3372
        %v3399 = vadd.f32 %v3251, %v3375
        %v3400 = vadd.f32 %v3252, %v3380
        %v3401 = vadd.f32 %v3253, %v3383
        %v3402 = vrot.slane %v2404, 1
        %v3403 = vrot.slane %v2405, 1
        %v3404 = vrot.slane %v2406, 1
        %v3405 = vrot.slane %v2407, 1
        %v3406 = vrot.slane %v2408, 1
        %v3407 = vrot.slane %v2409, 1
        %v3408 = vrot.slane %v2410, 1
        %v3409 = vrot.slane %v2411, 1
        %v3410 = vrot.slane %v2412, 1
        %v3411 = vrot.slane %v2413, 1
        %v3412 = vrot.slane %v2414, 1
        %v3413 = vrot.slane %v2415, 1
        %v3414 = vrot.slane %v2416, 1
        %v3415 = vrot.slane %v2417, 1
        %v3416 = vrot.slane %v2418, 1
        %v3417 = vrot.slane %v2419, 1
        %v3418 = vrot.slane %v2420, 1
        %v3419 = vrot.slane %v2421, 1
        %v3420 = vrot.slane %v2422, 1
        %v3421 = vrot.slane %v2423, 1
        %v3422 = vsel %vm1809, %v3420, %v3421
        %v3423 = vsel %vm1809, %v3419, %v3420
        %v3424 = vsel %vm1809, %v3418, %v3419
        %v3425 = vsel %vm1809, %v3417, %v3418
        %v3426 = vsel %vm1809, %v3416, %v3417
        %v3427 = vsel %vm1809, %v3415, %v3416
        %v3428 = vsel %vm1809, %v3414, %v3415
        %v3429 = vsel %vm1809, %v3413, %v3414
        %v3430 = vsel %vm1809, %v3412, %v3413
        %v3431 = vsel %vm1809, %v3411, %v3412
        %v3432 = vsel %vm1809, %v3410, %v3411
        %v3433 = vsel %vm1809, %v3409, %v3410
        %v3434 = vsel %vm1809, %v3408, %v3409
        %v3435 = vsel %vm1809, %v3407, %v3408
        %v3436 = vsel %vm1809, %v3406, %v3407
        %v3437 = vsel %vm1809, %v3405, %v3406
        %v3438 = vsel %vm1809, %v3404, %v3405
        %v3439 = vsel %vm1809, %v3403, %v3404
        %v3440 = vsel %vm1809, %v3402, %v3403
        %v3441 = vsel %vm1809, %v3421, %v3402
        %v3442 = vmul.f32 %v3440, %v656
        %v3443 = vmul.f32 %v3439, %v657
        %v3444 = vmul.f32 %v3438, %v658
        %v3445 = vmul.f32 %v3437, %v659
        %v3446 = vmul.f32 %v3436, %v660
        %v3447 = vmul.f32 %v3435, %v661
        %v3448 = vmul.f32 %v3434, %v662
        %v3449 = vmul.f32 %v3433, %v663
        %v3450 = vmul.f32 %v3432, %v664
        %v3451 = vmul.f32 %v3431, %v665
        %v3452 = vmul.f32 %v3430, %v666
        %v3453 = vmul.f32 %v3429, %v667
        %v3454 = vmul.f32 %v3428, %v668
        %v3455 = vmul.f32 %v3427, %v669
        %v3456 = vmul.f32 %v3426, %v670
        %v3457 = vmul.f32 %v3425, %v671
        %v3458 = vmul.f32 %v3424, %v672
        %v3459 = vmul.f32 %v3423, %v673
        %v3460 = vmul.f32 %v3422, %v674
        %v3461 = vmul.f32 %v3441, %v675
        %v3462 = vpack.c.bf16 %v3443, %v3442
        %v3463 = vpack.c.bf16 %v3445, %v3444
        %v3464 = vpack.c.bf16 %v3447, %v3446
        %v3465 = vpack.c.bf16 %v3449, %v3448
        %v3466 = vpack.c.bf16 %v3451, %v3450
        %v3467 = vpack.c.bf16 %v3453, %v3452
        %v3468 = vpack.c.bf16 %v3455, %v3454
        %v3469 = vpack.c.bf16 %v3457, %v3456
        %v3470 = vpack.c.bf16 %v3459, %v3458
        %v3471 = vpack.c.bf16 %v3461, %v3460
        %v3472 = vld [vmem:[%s1860] sm:$0xf]
        %v3473 = vld [vmem:[%s1860 + $0x4] sm:$0xf]
        %v3474 = vld [vmem:[%s1860 + $0x8] sm:$0xf]
        %v3475 = vld [vmem:[%s1860 + $0xc] sm:$0xf]
        %v3476 = vld [vmem:[%s1860 + $0x10] sm:$0xf]
        %v3477 = vld [vmem:[%s1860 + $0x14] sm:$0xf]
        %v3478 = vld [vmem:[%s1860 + $0x18] sm:$0xf]
        %v3479 = vld [vmem:[%s1860 + $0x1c] sm:$0xf]
        %v3488 = vunpack.c.l.b16 %v3472
        %v3489 = vunpack.c.l.b16 %v3473
        %v3490 = vunpack.c.l.b16 %v3474
        %v3491 = vunpack.c.l.b16 %v3475
        %v3492 = vunpack.c.l.b16 %v3476
        %v3493 = vunpack.c.l.b16 %v3477
        %v3494 = vunpack.c.l.b16 %v3478
        %v3495 = vunpack.c.l.b16 %v3479
        %v3496 = vpack.c.b16 %v3489, %v3488
        %v3497 = vpack.c.b16 %v3491, %v3490
        %v3498 = vpack.c.b16 %v3493, %v3492
        %v3499 = vpack.c.b16 %v3495, %v3494
        %v3505 = vsel %vm676, %v3462, 0
        %v3508 = vsel %vm676, %v3463, 0
        %v3511 = vsel %vm676, %v3464, 0
        %v3514 = vsel %vm676, %v3465, 0
        %v3517 = vsel %vm676, %v3466, 0
        %v3520 = vsel %vm676, %v3467, 0
        %v3523 = vsel %vm676, %v3468, 0
        %v3526 = vsel %vm676, %v3469, 0
        %3528 = vmatprep.subr.bf16.mxu0 0
        %3529 = vmatpush1.bf16.msra.mxu0 %v3496
        %3530 = vmatprep.subr.bf16.mxu0 0
        %3531 = vmatpush1.bf16.msra.mxu0 %v3497
        %3532 = vmatprep.subr.bf16.mxu0 0
        %3533 = vmatpush1.bf16.msra.mxu0 %v3498
        %3534 = vmatprep.subr.bf16.mxu0 0
        %3535 = vmatpush1.bf16.msra.mxu0 %v3499
        %3536 = vmatprep.subr.bf16.mxu0 0
        %3537 = vmatpush1.bf16.msra.mxu0 0
        %3538 = vmatprep.subr.bf16.mxu0 0
        %3539 = vmatpush1.bf16.msra.mxu0 0
        %3540 = vmatprep.subr.bf16.mxu0 0
        %3541 = vmatpush1.bf16.msra.mxu0 0
        %3542 = vmatprep.subr.bf16.mxu0 0
        %3543 = vmatpush1.bf16.msra.mxu0 0
        %3544 = vmatprep.subr.bf16.mxu0 0
        %3545 = vmatpush1.bf16.msra.mxu0 0
        %3546 = vmatprep.subr.bf16.mxu0 0
        %3547 = vmatpush1.bf16.msra.mxu0 0
        %3548 = vmatprep.subr.bf16.mxu0 0
        %3549 = vmatpush1.bf16.msra.mxu0 0
        %3550 = vmatprep.subr.bf16.mxu0 0
        %3551 = vmatpush1.bf16.msra.mxu0 0
        %3552 = vmatprep.subr.bf16.mxu0 0
        %3553 = vmatpush1.bf16.msra.mxu0 0
        %3554 = vmatprep.subr.bf16.mxu0 0
        %3555 = vmatpush1.bf16.msra.mxu0 0
        %3556 = vmatprep.subr.bf16.mxu0 0
        %3557 = vmatpush1.bf16.msra.mxu0 0
        %3558 = vmatprep.subr.bf16.mxu0 0
        %3559 = vmatpush1.bf16.msra.mxu0 0
        %3560 = vmatprep.mubr.bf16.mxu0 0
        %3561 = vmatmul.mubr.bf16.gmra.mrb[0].mxu0 %v3505
        %v3562 = vpop.f32.mrb[0].mxu0
        %v3563 = vadd.f32 0.0, %v3562
        %v3564 = vpop.f32.mrb[0].mxu0
        %v3565 = vpop.f32.mrb[0].mxu0
        %v3566 = vadd.f32 0.0, %v3565
        %v3567 = vpop.f32.mrb[0].mxu0
        %3568 = vmatprep.mubr.bf16.mxu0 0
        %3569 = vmatmul.mubr.bf16.gmra.mrb[0].mxu0 %v3508
        %v3570 = vpop.f32.mrb[0].mxu0
        %v3571 = vadd.f32 0.0, %v3570
        %v3572 = vpop.f32.mrb[0].mxu0
        %v3573 = vpop.f32.mrb[0].mxu0
        %v3574 = vadd.f32 0.0, %v3573
        %v3575 = vpop.f32.mrb[0].mxu0
        %3576 = vmatprep.mubr.bf16.mxu0 0
        %3577 = vmatmul.mubr.bf16.gmra.mrb[0].mxu0 %v3511
        %v3578 = vpop.f32.mrb[0].mxu0
        %v3579 = vadd.f32 0.0, %v3578
        %v3580 = vpop.f32.mrb[0].mxu0
        %v3581 = vpop.f32.mrb[0].mxu0
        %v3582 = vadd.f32 0.0, %v3581
        %v3583 = vpop.f32.mrb[0].mxu0
        %3584 = vmatprep.mubr.bf16.mxu0 0
        %3585 = vmatmul.mubr.bf16.gmra.mrb[0].mxu0 %v3514
        %v3586 = vpop.f32.mrb[0].mxu0
        %v3587 = vadd.f32 0.0, %v3586
        %v3588 = vpop.f32.mrb[0].mxu0
        %v3589 = vpop.f32.mrb[0].mxu0
        %v3590 = vadd.f32 0.0, %v3589
        %v3591 = vpop.f32.mrb[0].mxu0
        %3592 = vmatprep.mubr.bf16.mxu0 0
        %3593 = vmatmul.mubr.bf16.gmra.mrb[0].mxu0 %v3517
        %v3594 = vpop.f32.mrb[0].mxu0
        %v3595 = vadd.f32 0.0, %v3594
        %v3596 = vpop.f32.mrb[0].mxu0
        %v3597 = vpop.f32.mrb[0].mxu0
        %v3598 = vadd.f32 0.0, %v3597
        %v3599 = vpop.f32.mrb[0].mxu0
        %3600 = vmatprep.mubr.bf16.mxu0 0
        %3601 = vmatmul.mubr.bf16.gmra.mrb[0].mxu0 %v3520
        %v3602 = vpop.f32.mrb[0].mxu0
        %v3603 = vadd.f32 0.0, %v3602
        %v3604 = vpop.f32.mrb[0].mxu0
        %v3605 = vpop.f32.mrb[0].mxu0
        %v3606 = vadd.f32 0.0, %v3605
        %v3607 = vpop.f32.mrb[0].mxu0
        %3608 = vmatprep.mubr.bf16.mxu0 0
        %3609 = vmatmul.mubr.bf16.gmra.mrb[0].mxu0 %v3523
        %v3610 = vpop.f32.mrb[0].mxu0
        %v3611 = vadd.f32 0.0, %v3610
        %v3612 = vpop.f32.mrb[0].mxu0
        %v3613 = vpop.f32.mrb[0].mxu0
        %v3614 = vadd.f32 0.0, %v3613
        %v3615 = vpop.f32.mrb[0].mxu0
        %3616 = vmatprep.mubr.bf16.mxu0 0
        %3617 = vmatmul.mubr.bf16.gmra.mrb[0].mxu0 %v3526
        %v3618 = vpop.f32.mrb[0].mxu0
        %v3619 = vadd.f32 0.0, %v3618
        %v3620 = vpop.f32.mrb[0].mxu0
        %v3621 = vpop.f32.mrb[0].mxu0
        %v3622 = vadd.f32 0.0, %v3621
        %v3623 = vpop.f32.mrb[0].mxu0
        %3624 = vdwg.mxu0
        %v3625 = vadd.f32 %v3386, %v3563
        %v3626 = vadd.f32 %v3387, %v3566
        %v3627 = vadd.f32 %v3388, %v3571
        %v3628 = vadd.f32 %v3389, %v3574
        %v3629 = vadd.f32 %v3390, %v3579
        %v3630 = vadd.f32 %v3391, %v3582
        %v3631 = vadd.f32 %v3392, %v3587
        %v3632 = vadd.f32 %v3393, %v3590
        %v3633 = vadd.f32 %v3394, %v3595
        %v3634 = vadd.f32 %v3395, %v3598
        %v3635 = vadd.f32 %v3396, %v3603
        %v3636 = vadd.f32 %v3397, %v3606
        %v3637 = vadd.f32 %v3398, %v3611
        %v3638 = vadd.f32 %v3399, %v3614
        %v3639 = vadd.f32 %v3400, %v3619
        %v3640 = vadd.f32 %v3401, %v3622
        %v3641 = vld [vmem:[%s2030] sm:$0xf]
        %v3642 = vld [vmem:[%s2030 + $0x4] sm:$0xf]
        %v3643 = vld [vmem:[%s2030 + $0x8] sm:$0xf]
        %v3644 = vld [vmem:[%s2030 + $0xc] sm:$0xf]
        %v3645 = vld [vmem:[%s2030 + $0x10] sm:$0xf]
        %v3646 = vld [vmem:[%s2030 + $0x14] sm:$0xf]
        %v3647 = vld [vmem:[%s2030 + $0x18] sm:$0xf]
        %v3648 = vld [vmem:[%s2030 + $0x1c] sm:$0xf]
        %v3657 = vunpack.c.l.b16 %v3641
        %v3658 = vunpack.c.l.b16 %v3642
        %v3659 = vunpack.c.l.b16 %v3643
        %v3660 = vunpack.c.l.b16 %v3644
        %v3661 = vunpack.c.l.b16 %v3645
        %v3662 = vunpack.c.l.b16 %v3646
        %v3663 = vunpack.c.l.b16 %v3647
        %v3664 = vunpack.c.l.b16 %v3648
        %v3665 = vpack.c.b16 %v3658, %v3657
        %v3666 = vpack.c.b16 %v3660, %v3659
        %v3667 = vpack.c.b16 %v3662, %v3661
        %v3668 = vpack.c.b16 %v3664, %v3663
        %v3674 = vsel %vm676, %v3470, 0
        %3676 = vmatprep.subr.bf16.mxu0 0
        %3677 = vmatpush1.bf16.msra.mxu0 %v3665
        %3678 = vmatprep.subr.bf16.mxu0 0
        %3679 = vmatpush1.bf16.msra.mxu0 %v3666
        %3680 = vmatprep.subr.bf16.mxu0 0
        %3681 = vmatpush1.bf16.msra.mxu0 %v3667
        %3682 = vmatprep.subr.bf16.mxu0 0
        %3683 = vmatpush1.bf16.msra.mxu0 %v3668
        %3684 = vmatprep.subr.bf16.mxu0 0
        %3685 = vmatpush1.bf16.msra.mxu0 0
        %3686 = vmatprep.subr.bf16.mxu0 0
        %3687 = vmatpush1.bf16.msra.mxu0 0
        %3688 = vmatprep.subr.bf16.mxu0 0
        %3689 = vmatpush1.bf16.msra.mxu0 0
        %3690 = vmatprep.subr.bf16.mxu0 0
        %3691 = vmatpush1.bf16.msra.mxu0 0
        %3692 = vmatprep.subr.bf16.mxu0 0
        %3693 = vmatpush1.bf16.msra.mxu0 0
        %3694 = vmatprep.subr.bf16.mxu0 0
        %3695 = vmatpush1.bf16.msra.mxu0 0
        %3696 = vmatprep.subr.bf16.mxu0 0
        %3697 = vmatpush1.bf16.msra.mxu0 0
        %3698 = vmatprep.subr.bf16.mxu0 0
        %3699 = vmatpush1.bf16.msra.mxu0 0
        %3700 = vmatprep.subr.bf16.mxu0 0
        %3701 = vmatpush1.bf16.msra.mxu0 0
        %3702 = vmatprep.subr.bf16.mxu0 0
        %3703 = vmatpush1.bf16.msra.mxu0 0
        %3704 = vmatprep.subr.bf16.mxu0 0
        %3705 = vmatpush1.bf16.msra.mxu0 0
        %3706 = vmatprep.subr.bf16.mxu0 0
        %3707 = vmatpush1.bf16.msra.mxu0 0
        %3708 = vmatprep.mubr.bf16.mxu0 0
        %3709 = vmatmul.mubr.bf16.gmra.mrb[0].mxu0 %v3508
        %v3710 = vpop.f32.mrb[0].mxu0
        %v3711 = vadd.f32 0.0, %v3710
        %v3712 = vpop.f32.mrb[0].mxu0
        %v3713 = vpop.f32.mrb[0].mxu0
        %v3714 = vadd.f32 0.0, %v3713
        %v3715 = vpop.f32.mrb[0].mxu0
        %3716 = vmatprep.mubr.bf16.mxu0 0
        %3717 = vmatmul.mubr.bf16.gmra.mrb[0].mxu0 %v3511
        %v3718 = vpop.f32.mrb[0].mxu0
        %v3719 = vadd.f32 0.0, %v3718
        %v3720 = vpop.f32.mrb[0].mxu0
        %v3721 = vpop.f32.mrb[0].mxu0
        %v3722 = vadd.f32 0.0, %v3721
        %v3723 = vpop.f32.mrb[0].mxu0
        %3724 = vmatprep.mubr.bf16.mxu0 0
        %3725 = vmatmul.mubr.bf16.gmra.mrb[0].mxu0 %v3514
        %v3726 = vpop.f32.mrb[0].mxu0
        %v3727 = vadd.f32 0.0, %v3726
        %v3728 = vpop.f32.mrb[0].mxu0
        %v3729 = vpop.f32.mrb[0].mxu0
        %v3730 = vadd.f32 0.0, %v3729
        %v3731 = vpop.f32.mrb[0].mxu0
        %3732 = vmatprep.mubr.bf16.mxu0 0
        %3733 = vmatmul.mubr.bf16.gmra.mrb[0].mxu0 %v3517
        %v3734 = vpop.f32.mrb[0].mxu0
        %v3735 = vadd.f32 0.0, %v3734
        %v3736 = vpop.f32.mrb[0].mxu0
        %v3737 = vpop.f32.mrb[0].mxu0
        %v3738 = vadd.f32 0.0, %v3737
        %v3739 = vpop.f32.mrb[0].mxu0
        %3740 = vmatprep.mubr.bf16.mxu0 0
        %3741 = vmatmul.mubr.bf16.gmra.mrb[0].mxu0 %v3520
        %v3742 = vpop.f32.mrb[0].mxu0
        %v3743 = vadd.f32 0.0, %v3742
        %v3744 = vpop.f32.mrb[0].mxu0
        %v3745 = vpop.f32.mrb[0].mxu0
        %v3746 = vadd.f32 0.0, %v3745
        %v3747 = vpop.f32.mrb[0].mxu0
        %3748 = vmatprep.mubr.bf16.mxu0 0
        %3749 = vmatmul.mubr.bf16.gmra.mrb[0].mxu0 %v3523
        %v3750 = vpop.f32.mrb[0].mxu0
        %v3751 = vadd.f32 0.0, %v3750
        %v3752 = vpop.f32.mrb[0].mxu0
        %v3753 = vpop.f32.mrb[0].mxu0
        %v3754 = vadd.f32 0.0, %v3753
        %v3755 = vpop.f32.mrb[0].mxu0
        %3756 = vmatprep.mubr.bf16.mxu0 0
        %3757 = vmatmul.mubr.bf16.gmra.mrb[0].mxu0 %v3526
        %v3758 = vpop.f32.mrb[0].mxu0
        %v3759 = vadd.f32 0.0, %v3758
        %v3760 = vpop.f32.mrb[0].mxu0
        %v3761 = vpop.f32.mrb[0].mxu0
        %v3762 = vadd.f32 0.0, %v3761
        %v3763 = vpop.f32.mrb[0].mxu0
        %3764 = vmatprep.mubr.bf16.mxu0 0
        %3765 = vmatmul.mubr.bf16.gmra.mrb[0].mxu0 %v3674
        %v3766 = vpop.f32.mrb[0].mxu0
        %v3767 = vadd.f32 0.0, %v3766
        %v3768 = vpop.f32.mrb[0].mxu0
        %v3769 = vpop.f32.mrb[0].mxu0
        %v3770 = vadd.f32 0.0, %v3769
        %v3771 = vpop.f32.mrb[0].mxu0
        %3772 = vdwg.mxu0
        %v3773 = vadd.f32 %v3625, %v3711
        %v3774 = vadd.f32 %v3626, %v3714
        %v3775 = vadd.f32 %v3627, %v3719
        %v3776 = vadd.f32 %v3628, %v3722
        %v3777 = vadd.f32 %v3629, %v3727
        %v3778 = vadd.f32 %v3630, %v3730
        %v3779 = vadd.f32 %v3631, %v3735
        %v3780 = vadd.f32 %v3632, %v3738
        %v3781 = vadd.f32 %v3633, %v3743
        %v3782 = vadd.f32 %v3634, %v3746
        %v3783 = vadd.f32 %v3635, %v3751
        %v3784 = vadd.f32 %v3636, %v3754
        %v3785 = vadd.f32 %v3637, %v3759
        %v3786 = vadd.f32 %v3638, %v3762
        %v3787 = vadd.f32 %v3639, %v3767
        %v3788 = vadd.f32 %v3640, %v3770
        %v3789 = vld [vmem:[%s2179] sm:$0xf]
        %v3790 = vld [vmem:[%s2179 + $0x4] sm:$0xf]
        %v3791 = vld [vmem:[%s2179 + $0x8] sm:$0xf]
        %v3792 = vld [vmem:[%s2179 + $0xc] sm:$0xf]
        %v3793 = vld [vmem:[%s2179 + $0x10] sm:$0xf]
        %v3794 = vld [vmem:[%s2179 + $0x14] sm:$0xf]
        %v3795 = vld [vmem:[%s2179 + $0x18] sm:$0xf]
        %v3796 = vld [vmem:[%s2179 + $0x1c] sm:$0xf]
        %v3805 = vunpack.c.l.b16 %v3789
        %v3806 = vunpack.c.l.b16 %v3790
        %v3807 = vunpack.c.l.b16 %v3791
        %v3808 = vunpack.c.l.b16 %v3792
        %v3809 = vunpack.c.l.b16 %v3793
        %v3810 = vunpack.c.l.b16 %v3794
        %v3811 = vunpack.c.l.b16 %v3795
        %v3812 = vunpack.c.l.b16 %v3796
        %v3813 = vpack.c.b16 %v3806, %v3805
        %v3814 = vpack.c.b16 %v3808, %v3807
        %v3815 = vpack.c.b16 %v3810, %v3809
        %v3816 = vpack.c.b16 %v3812, %v3811
        %v3822 = vsel %vm676, %v3471, 0
        %3824 = vmatprep.subr.bf16.mxu0 0
        %3825 = vmatpush1.bf16.msra.mxu0 %v3813
        %3826 = vmatprep.subr.bf16.mxu0 0
        %3827 = vmatpush1.bf16.msra.mxu0 %v3814
        %3828 = vmatprep.subr.bf16.mxu0 0
        %3829 = vmatpush1.bf16.msra.mxu0 %v3815
        %3830 = vmatprep.subr.bf16.mxu0 0
        %3831 = vmatpush1.bf16.msra.mxu0 %v3816
        %3832 = vmatprep.subr.bf16.mxu0 0
        %3833 = vmatpush1.bf16.msra.mxu0 0
        %3834 = vmatprep.subr.bf16.mxu0 0
        %3835 = vmatpush1.bf16.msra.mxu0 0
        %3836 = vmatprep.subr.bf16.mxu0 0
        %3837 = vmatpush1.bf16.msra.mxu0 0
        %3838 = vmatprep.subr.bf16.mxu0 0
        %3839 = vmatpush1.bf16.msra.mxu0 0
        %3840 = vmatprep.subr.bf16.mxu0 0
        %3841 = vmatpush1.bf16.msra.mxu0 0
        %3842 = vmatprep.subr.bf16.mxu0 0
        %3843 = vmatpush1.bf16.msra.mxu0 0
        %3844 = vmatprep.subr.bf16.mxu0 0
        %3845 = vmatpush1.bf16.msra.mxu0 0
        %3846 = vmatprep.subr.bf16.mxu0 0
        %3847 = vmatpush1.bf16.msra.mxu0 0
        %3848 = vmatprep.subr.bf16.mxu0 0
        %3849 = vmatpush1.bf16.msra.mxu0 0
        %3850 = vmatprep.subr.bf16.mxu0 0
        %3851 = vmatpush1.bf16.msra.mxu0 0
        %3852 = vmatprep.subr.bf16.mxu0 0
        %3853 = vmatpush1.bf16.msra.mxu0 0
        %3854 = vmatprep.subr.bf16.mxu0 0
        %3855 = vmatpush1.bf16.msra.mxu0 0
        %3856 = vmatprep.mubr.bf16.mxu0 0
        %3857 = vmatmul.mubr.bf16.gmra.mrb[0].mxu0 %v3511
        %v3858 = vpop.f32.mrb[0].mxu0
        %v3859 = vadd.f32 0.0, %v3858
        %v3860 = vpop.f32.mrb[0].mxu0
        %v3861 = vpop.f32.mrb[0].mxu0
        %v3862 = vadd.f32 0.0, %v3861
        %v3863 = vpop.f32.mrb[0].mxu0
        %3864 = vmatprep.mubr.bf16.mxu0 0
        %3865 = vmatmul.mubr.bf16.gmra.mrb[0].mxu0 %v3514
        %v3866 = vpop.f32.mrb[0].mxu0
        %v3867 = vadd.f32 0.0, %v3866
        %v3868 = vpop.f32.mrb[0].mxu0
        %v3869 = vpop.f32.mrb[0].mxu0
        %v3870 = vadd.f32 0.0, %v3869
        %v3871 = vpop.f32.mrb[0].mxu0
        %3872 = vmatprep.mubr.bf16.mxu0 0
        %3873 = vmatmul.mubr.bf16.gmra.mrb[0].mxu0 %v3517
        %v3874 = vpop.f32.mrb[0].mxu0
        %v3875 = vadd.f32 0.0, %v3874
        %v3876 = vpop.f32.mrb[0].mxu0
        %v3877 = vpop.f32.mrb[0].mxu0
        %v3878 = vadd.f32 0.0, %v3877
        %v3879 = vpop.f32.mrb[0].mxu0
        %3880 = vmatprep.mubr.bf16.mxu0 0
        %3881 = vmatmul.mubr.bf16.gmra.mrb[0].mxu0 %v3520
        %v3882 = vpop.f32.mrb[0].mxu0
        %v3883 = vadd.f32 0.0, %v3882
        %v3884 = vpop.f32.mrb[0].mxu0
        %v3885 = vpop.f32.mrb[0].mxu0
        %v3886 = vadd.f32 0.0, %v3885
        %v3887 = vpop.f32.mrb[0].mxu0
        %3888 = vmatprep.mubr.bf16.mxu0 0
        %3889 = vmatmul.mubr.bf16.gmra.mrb[0].mxu0 %v3523
        %v3890 = vpop.f32.mrb[0].mxu0
        %v3891 = vadd.f32 0.0, %v3890
        %v3892 = vpop.f32.mrb[0].mxu0
        %v3893 = vpop.f32.mrb[0].mxu0
        %v3894 = vadd.f32 0.0, %v3893
        %v3895 = vpop.f32.mrb[0].mxu0
        %3896 = vmatprep.mubr.bf16.mxu0 0
        %3897 = vmatmul.mubr.bf16.gmra.mrb[0].mxu0 %v3526
        %v3898 = vpop.f32.mrb[0].mxu0
        %v3899 = vadd.f32 0.0, %v3898
        %v3900 = vpop.f32.mrb[0].mxu0
        %v3901 = vpop.f32.mrb[0].mxu0
        %v3902 = vadd.f32 0.0, %v3901
        %v3903 = vpop.f32.mrb[0].mxu0
        %3904 = vmatprep.mubr.bf16.mxu0 0
        %3905 = vmatmul.mubr.bf16.gmra.mrb[0].mxu0 %v3674
        %v3906 = vpop.f32.mrb[0].mxu0
        %v3907 = vadd.f32 0.0, %v3906
        %v3908 = vpop.f32.mrb[0].mxu0
        %v3909 = vpop.f32.mrb[0].mxu0
        %v3910 = vadd.f32 0.0, %v3909
        %v3911 = vpop.f32.mrb[0].mxu0
        %3912 = vmatprep.mubr.bf16.mxu0 0
        %3913 = vmatmul.mubr.bf16.gmra.mrb[0].mxu0 %v3822
        %v3914 = vpop.f32.mrb[0].mxu0
        %v3915 = vadd.f32 0.0, %v3914
        %v3916 = vpop.f32.mrb[0].mxu0
        %v3917 = vpop.f32.mrb[0].mxu0
        %v3918 = vadd.f32 0.0, %v3917
        %v3919 = vpop.f32.mrb[0].mxu0
        %3920 = vdwg.mxu0
        %v3921 = vadd.f32 %v3773, %v3859
        %v3922 = vadd.f32 %v3774, %v3862
        %v3923 = vadd.f32 %v3775, %v3867
        %v3924 = vadd.f32 %v3776, %v3870
        %v3925 = vadd.f32 %v3777, %v3875
        %v3926 = vadd.f32 %v3778, %v3878
        %v3927 = vadd.f32 %v3779, %v3883
        %v3928 = vadd.f32 %v3780, %v3886
        %v3929 = vadd.f32 %v3781, %v3891
        %v3930 = vadd.f32 %v3782, %v3894
        %v3931 = vadd.f32 %v3783, %v3899
        %v3932 = vadd.f32 %v3784, %v3902
        %v3933 = vadd.f32 %v3785, %v3907
        %v3934 = vadd.f32 %v3786, %v3910
        %v3935 = vadd.f32 %v3787, %v3915
        %v3936 = vadd.f32 %v3788, %v3918
        %v3937 = vmul.f32 %v3921, %v2332
        %v3938 = vmul.f32 %v3922, %v2332
        %v3939 = vmul.f32 %v3923, %v2332
        %v3940 = vmul.f32 %v3924, %v2332
        %v3941 = vmul.f32 %v3925, %v2332
        %v3942 = vmul.f32 %v3926, %v2332
        %v3943 = vmul.f32 %v3927, %v2332
        %v3944 = vmul.f32 %v3928, %v2332
        %v3945 = vmul.f32 %v3929, %v2332
        %v3946 = vmul.f32 %v3930, %v2332
        %v3947 = vmul.f32 %v3931, %v2332
        %v3948 = vmul.f32 %v3932, %v2332
        %v3949 = vmul.f32 %v3933, %v2332
        %v3950 = vmul.f32 %v3934, %v2332
        %v3951 = vmul.f32 %v3935, %v2332
        %v3952 = vmul.f32 %v3936, %v2332
        %v3953 = vadd.f32 %v3937, %v2354
        %v3954 = vadd.f32 %v3938, %v2354
        %v3955 = vadd.f32 %v3939, %v2354
        %v3956 = vadd.f32 %v3940, %v2354
        %v3957 = vadd.f32 %v3941, %v2354
        %v3958 = vadd.f32 %v3942, %v2354
        %v3959 = vadd.f32 %v3943, %v2354
        %v3960 = vadd.f32 %v3944, %v2354
        %v3961 = vadd.f32 %v3945, %v2354
        %v3962 = vadd.f32 %v3946, %v2354
        %v3963 = vadd.f32 %v3947, %v2354
        %v3964 = vadd.f32 %v3948, %v2354
        %v3965 = vadd.f32 %v3949, %v2354
        %v3966 = vadd.f32 %v3950, %v2354
        %v3967 = vadd.f32 %v3951, %v2354
        %v3968 = vadd.f32 %v3952, %v2354
        %v3969 = vmax.f32 %v3953, 0.0
        %v3970 = vmax.f32 %v3954, 0.0
        %v3971 = vmax.f32 %v3955, 0.0
        %v3972 = vmax.f32 %v3956, 0.0
        %v3973 = vmax.f32 %v3957, 0.0
        %v3974 = vmax.f32 %v3958, 0.0
        %v3975 = vmax.f32 %v3959, 0.0
        %v3976 = vmax.f32 %v3960, 0.0
        %v3977 = vmax.f32 %v3961, 0.0
        %v3978 = vmax.f32 %v3962, 0.0
        %v3979 = vmax.f32 %v3963, 0.0
        %v3980 = vmax.f32 %v3964, 0.0
        %v3981 = vmax.f32 %v3965, 0.0
        %v3982 = vmax.f32 %v3966, 0.0
        %v3983 = vmax.f32 %v3967, 0.0
        %v3984 = vmax.f32 %v3968, 0.0
        %3985 = vst.msk [vmem:[#allocation3 + $0x90] sm:$0xff] %vm676, %v3969
        %3986 = vst.msk [vmem:[#allocation3 + $0x98] sm:$0xff] %vm676, %v3970
        %3987 = vst.msk [vmem:[#allocation3 + $0xa0] sm:$0xff] %vm676, %v3971
        %3988 = vst.msk [vmem:[#allocation3 + $0xa8] sm:$0xff] %vm676, %v3972
        %3989 = vst.msk [vmem:[#allocation3 + $0xb0] sm:$0xff] %vm676, %v3973
        %3990 = vst.msk [vmem:[#allocation3 + $0xb8] sm:$0xff] %vm676, %v3974
        %3991 = vst.msk [vmem:[#allocation3 + $0xc0] sm:$0xff] %vm676, %v3975
        %3992 = vst.msk [vmem:[#allocation3 + $0xc8] sm:$0xff] %vm676, %v3976
        %3993 = vst.msk [vmem:[#allocation3 + $0xd0] sm:$0xff] %vm676, %v3977
        %3994 = vst.msk [vmem:[#allocation3 + $0xd8] sm:$0xff] %vm676, %v3978
        %3995 = vst.msk [vmem:[#allocation3 + $0xe0] sm:$0xff] %vm676, %v3979
        %3996 = vst.msk [vmem:[#allocation3 + $0xe8] sm:$0xff] %vm676, %v3980
        %3997 = vst.msk [vmem:[#allocation3 + $0xf0] sm:$0xff] %vm676, %v3981
        %3998 = vst.msk [vmem:[#allocation3 + $0xf8] sm:$0xff] %vm676, %v3982
        %3999 = vst.msk [vmem:[#allocation3 + $0x100] sm:$0xff] %vm676, %v3983
        %4000 = vst.msk [vmem:[#allocation3 + $0x108] sm:$0xff] %vm676, %v3984
        %v4001 = vld [vmem:[#allocation3] sm:$0xff]
        %v4002 = vld [vmem:[#allocation3 + $0x8] sm:$0xff]
        %v4003 = vld [vmem:[#allocation3 + $0x10] sm:$0xff]
        %v4004 = vld [vmem:[#allocation3 + $0x18] sm:$0xff]
        %v4005 = vld [vmem:[#allocation3 + $0x20] sm:$0xff]
        %v4006 = vld [vmem:[#allocation3 + $0x28] sm:$0xff]
        %v4007 = vld [vmem:[#allocation3 + $0x30] sm:$0xff]
        %v4008 = vld [vmem:[#allocation3 + $0x38] sm:$0xff]
        %v4009 = vld [vmem:[#allocation3 + $0x40] sm:$0xff]
        %v4010 = vld [vmem:[#allocation3 + $0x48] sm:$0xff]
        %v4011 = vld [vmem:[#allocation3 + $0x50] sm:$0xff]
        %v4012 = vld [vmem:[#allocation3 + $0x58] sm:$0xff]
        %v4013 = vld [vmem:[#allocation3 + $0x60] sm:$0xff]
        %v4014 = vld [vmem:[#allocation3 + $0x68] sm:$0xff]
        %v4015 = vld [vmem:[#allocation3 + $0x70] sm:$0xff]
        %v4016 = vld [vmem:[#allocation3 + $0x78] sm:$0xff]
        %v4017 = vld [vmem:[#allocation3 + $0x80] sm:$0xff]
        %v4018 = vld [vmem:[#allocation3 + $0x88] sm:$0xff]
        %v4019 = vld [vmem:[#allocation3 + $0x90] sm:$0xff]
        %v4020 = vld [vmem:[#allocation3 + $0x98] sm:$0xff]
        %v4021 = vrot.slane %v4001, 7
        %v4022 = vrot.slane %v4002, 7
        %v4023 = vrot.slane %v4003, 7
        %v4024 = vrot.slane %v4004, 7
        %v4025 = vrot.slane %v4005, 7
        %v4026 = vrot.slane %v4006, 7
        %v4027 = vrot.slane %v4007, 7
        %v4028 = vrot.slane %v4008, 7
        %v4029 = vrot.slane %v4009, 7
        %v4030 = vrot.slane %v4010, 7
        %v4031 = vrot.slane %v4011, 7
        %v4032 = vrot.slane %v4012, 7
        %v4033 = vrot.slane %v4013, 7
        %v4034 = vrot.slane %v4014, 7
        %v4035 = vrot.slane %v4015, 7
        %v4036 = vrot.slane %v4016, 7
        %v4037 = vrot.slane %v4017, 7
        %v4038 = vrot.slane %v4018, 7
        %v4039 = vrot.slane %v4019, 7
        %v4040 = vrot.slane %v4020, 7
        %v4041 = vsel %vm825, %v4039, %v4040
        %v4042 = vsel %vm825, %v4038, %v4039
        %v4043 = vsel %vm825, %v4037, %v4038
        %v4044 = vsel %vm825, %v4036, %v4037
        %v4045 = vsel %vm825, %v4035, %v4036
        %v4046 = vsel %vm825, %v4034, %v4035
        %v4047 = vsel %vm825, %v4033, %v4034
        %v4048 = vsel %vm825, %v4032, %v4033
        %v4049 = vsel %vm825, %v4031, %v4032
        %v4050 = vsel %vm825, %v4030, %v4031
        %v4051 = vsel %vm825, %v4029, %v4030
        %v4052 = vsel %vm825, %v4028, %v4029
        %v4053 = vsel %vm825, %v4027, %v4028
        %v4054 = vsel %vm825, %v4026, %v4027
        %v4055 = vsel %vm825, %v4025, %v4026
        %v4056 = vsel %vm825, %v4024, %v4025
        %v4057 = vsel %vm825, %v4023, %v4024
        %v4058 = vsel %vm825, %v4022, %v4023
        %v4059 = vsel %vm825, %v4021, %v4022
        %v4060 = vsel %vm825, %v4040, %v4021
        %v4061 = vmul.f32 %v4060, %v596
        %v4062 = vmul.f32 %v4059, %v597
        %v4063 = vmul.f32 %v4058, %v598
        %v4064 = vmul.f32 %v4057, %v599
        %v4065 = vmul.f32 %v4056, %v600
        %v4066 = vmul.f32 %v4055, %v601
        %v4067 = vmul.f32 %v4054, %v602
        %v4068 = vmul.f32 %v4053, %v603
        %v4069 = vmul.f32 %v4052, %v604
        %v4070 = vmul.f32 %v4051, %v605
        %v4071 = vmul.f32 %v4050, %v606
        %v4072 = vmul.f32 %v4049, %v607
        %v4073 = vmul.f32 %v4048, %v608
        %v4074 = vmul.f32 %v4047, %v609
        %v4075 = vmul.f32 %v4046, %v610
        %v4076 = vmul.f32 %v4045, %v611
        %v4077 = vmul.f32 %v4044, %v612
        %v4078 = vmul.f32 %v4043, %v613
        %v4079 = vmul.f32 %v4042, %v614
        %v4080 = vmul.f32 %v4041, %v615
        %v4081 = vpack.c.bf16 %v4062, %v4061
        %v4082 = vpack.c.bf16 %v4064, %v4063
        %v4083 = vpack.c.bf16 %v4066, %v4065
        %v4084 = vpack.c.bf16 %v4068, %v4067
        %v4085 = vpack.c.bf16 %v4070, %v4069
        %v4086 = vpack.c.bf16 %v4072, %v4071
        %v4087 = vpack.c.bf16 %v4074, %v4073
        %v4088 = vpack.c.bf16 %v4076, %v4075
        %v4089 = vpack.c.bf16 %v4078, %v4077
        %v4090 = vpack.c.bf16 %v4080, %v4079
        %v4091 = vld [vmem:[#allocation4] sm:$0xf]
        %v4092 = vld [vmem:[#allocation4 + $0x4] sm:$0xf]
        %v4093 = vld [vmem:[#allocation4 + $0x8] sm:$0xf]
        %v4094 = vld [vmem:[#allocation4 + $0xc] sm:$0xf]
        %v4095 = vld [vmem:[#allocation4 + $0x10] sm:$0xf]
        %v4096 = vld [vmem:[#allocation4 + $0x14] sm:$0xf]
        %v4097 = vld [vmem:[#allocation4 + $0x18] sm:$0xf]
        %v4098 = vld [vmem:[#allocation4 + $0x1c] sm:$0xf]
        %s4099 = scalar_lea.vmem [#allocation4], 96
        %v4100 = vld [vmem:[%s4099] sm:$0xf]
        %v4101 = vld [vmem:[%s4099 + $0x4] sm:$0xf]
        %v4102 = vld [vmem:[%s4099 + $0x8] sm:$0xf]
        %v4103 = vld [vmem:[%s4099 + $0xc] sm:$0xf]
        %v4104 = vld [vmem:[%s4099 + $0x10] sm:$0xf]
        %v4105 = vld [vmem:[%s4099 + $0x14] sm:$0xf]
        %v4106 = vld [vmem:[%s4099 + $0x18] sm:$0xf]
        %v4107 = vld [vmem:[%s4099 + $0x1c] sm:$0xf]
        %v4116 = vunpack.c.l.b16 %v4100
        %v4117 = vunpack.c.l.b16 %v4101
        %v4118 = vunpack.c.l.b16 %v4102
        %v4119 = vunpack.c.l.b16 %v4103
        %v4120 = vunpack.c.l.b16 %v4104
        %v4121 = vunpack.c.l.b16 %v4105
        %v4122 = vunpack.c.l.b16 %v4106
        %v4123 = vunpack.c.l.b16 %v4107
        %v4124 = vpack.c.b16 %v4117, %v4116
        %v4125 = vpack.c.b16 %v4119, %v4118
        %v4126 = vpack.c.b16 %v4121, %v4120
        %v4127 = vpack.c.b16 %v4123, %v4122
        %v4133 = vsel %vm676, %v4082, 0
        %v4136 = vsel %vm676, %v4083, 0
        %v4139 = vsel %vm676, %v4084, 0
        %v4142 = vsel %vm676, %v4085, 0
        %v4145 = vsel %vm676, %v4086, 0
        %v4148 = vsel %vm676, %v4087, 0
        %v4151 = vsel %vm676, %v4088, 0
        %v4154 = vsel %vm676, %v4089, 0
        %4156 = vmatprep.subr.bf16.mxu0 0
        %4157 = vmatpush1.bf16.msra.mxu0 %v4124
        %4158 = vmatprep.subr.bf16.mxu0 0
        %4159 = vmatpush1.bf16.msra.mxu0 %v4125
        %4160 = vmatprep.subr.bf16.mxu0 0
        %4161 = vmatpush1.bf16.msra.mxu0 %v4126
        %4162 = vmatprep.subr.bf16.mxu0 0
        %4163 = vmatpush1.bf16.msra.mxu0 %v4127
        %4164 = vmatprep.subr.bf16.mxu0 0
        %4165 = vmatpush1.bf16.msra.mxu0 0
        %4166 = vmatprep.subr.bf16.mxu0 0
        %4167 = vmatpush1.bf16.msra.mxu0 0
        %4168 = vmatprep.subr.bf16.mxu0 0
        %4169 = vmatpush1.bf16.msra.mxu0 0
        %4170 = vmatprep.subr.bf16.mxu0 0
        %4171 = vmatpush1.bf16.msra.mxu0 0
        %4172 = vmatprep.subr.bf16.mxu0 0
        %4173 = vmatpush1.bf16.msra.mxu0 0
        %4174 = vmatprep.subr.bf16.mxu0 0
        %4175 = vmatpush1.bf16.msra.mxu0 0
        %4176 = vmatprep.subr.bf16.mxu0 0
        %4177 = vmatpush1.bf16.msra.mxu0 0
        %4178 = vmatprep.subr.bf16.mxu0 0
        %4179 = vmatpush1.bf16.msra.mxu0 0
        %4180 = vmatprep.subr.bf16.mxu0 0
        %4181 = vmatpush1.bf16.msra.mxu0 0
        %4182 = vmatprep.subr.bf16.mxu0 0
        %4183 = vmatpush1.bf16.msra.mxu0 0
        %4184 = vmatprep.subr.bf16.mxu0 0
        %4185 = vmatpush1.bf16.msra.mxu0 0
        %4186 = vmatprep.subr.bf16.mxu0 0
        %4187 = vmatpush1.bf16.msra.mxu0 0
        %4188 = vmatprep.mubr.bf16.mxu0 0
        %4189 = vmatmul.mubr.bf16.gmra.mrb[0].mxu0 %v4133
        %v4190 = vpop.f32.mrb[0].mxu0
        %v4191 = vadd.f32 0.0, %v4190
        %v4192 = vpop.f32.mrb[0].mxu0
        %v4193 = vpop.f32.mrb[0].mxu0
        %v4194 = vadd.f32 0.0, %v4193
        %v4195 = vpop.f32.mrb[0].mxu0
        %4196 = vmatprep.mubr.bf16.mxu0 0
        %4197 = vmatmul.mubr.bf16.gmra.mrb[0].mxu0 %v4136
        %v4198 = vpop.f32.mrb[0].mxu0
        %v4199 = vadd.f32 0.0, %v4198
        %v4200 = vpop.f32.mrb[0].mxu0
        %v4201 = vpop.f32.mrb[0].mxu0
        %v4202 = vadd.f32 0.0, %v4201
        %v4203 = vpop.f32.mrb[0].mxu0
        %4204 = vmatprep.mubr.bf16.mxu0 0
        %4205 = vmatmul.mubr.bf16.gmra.mrb[0].mxu0 %v4139
        %v4206 = vpop.f32.mrb[0].mxu0
        %v4207 = vadd.f32 0.0, %v4206
        %v4208 = vpop.f32.mrb[0].mxu0
        %v4209 = vpop.f32.mrb[0].mxu0
        %v4210 = vadd.f32 0.0, %v4209
        %v4211 = vpop.f32.mrb[0].mxu0
        %4212 = vmatprep.mubr.bf16.mxu0 0
        %4213 = vmatmul.mubr.bf16.gmra.mrb[0].mxu0 %v4142
        %v4214 = vpop.f32.mrb[0].mxu0
        %v4215 = vadd.f32 0.0, %v4214
        %v4216 = vpop.f32.mrb[0].mxu0
        %v4217 = vpop.f32.mrb[0].mxu0
        %v4218 = vadd.f32 0.0, %v4217
        %v4219 = vpop.f32.mrb[0].mxu0
        %4220 = vmatprep.mubr.bf16.mxu0 0
        %4221 = vmatmul.mubr.bf16.gmra.mrb[0].mxu0 %v4145
        %v4222 = vpop.f32.mrb[0].mxu0
        %v4223 = vadd.f32 0.0, %v4222
        %v4224 = vpop.f32.mrb[0].mxu0
        %v4225 = vpop.f32.mrb[0].mxu0
        %v4226 = vadd.f32 0.0, %v4225
        %v4227 = vpop.f32.mrb[0].mxu0
        %4228 = vmatprep.mubr.bf16.mxu0 0
        %4229 = vmatmul.mubr.bf16.gmra.mrb[0].mxu0 %v4148
        %v4230 = vpop.f32.mrb[0].mxu0
        %v4231 = vadd.f32 0.0, %v4230
        %v4232 = vpop.f32.mrb[0].mxu0
        %v4233 = vpop.f32.mrb[0].mxu0
        %v4234 = vadd.f32 0.0, %v4233
        %v4235 = vpop.f32.mrb[0].mxu0
        %4236 = vmatprep.mubr.bf16.mxu0 0
        %4237 = vmatmul.mubr.bf16.gmra.mrb[0].mxu0 %v4151
        %v4238 = vpop.f32.mrb[0].mxu0
        %v4239 = vadd.f32 0.0, %v4238
        %v4240 = vpop.f32.mrb[0].mxu0
        %v4241 = vpop.f32.mrb[0].mxu0
        %v4242 = vadd.f32 0.0, %v4241
        %v4243 = vpop.f32.mrb[0].mxu0
        %4244 = vmatprep.mubr.bf16.mxu0 0
        %4245 = vmatmul.mubr.bf16.gmra.mrb[0].mxu0 %v4154
        %v4246 = vpop.f32.mrb[0].mxu0
        %v4247 = vadd.f32 0.0, %v4246
        %v4248 = vpop.f32.mrb[0].mxu0
        %v4249 = vpop.f32.mrb[0].mxu0
        %v4250 = vadd.f32 0.0, %v4249
        %v4251 = vpop.f32.mrb[0].mxu0
        %4252 = vdwg.mxu0
        %v4261 = vunpack.c.l.b16 %v4091
        %v4262 = vunpack.c.l.b16 %v4092
        %v4263 = vunpack.c.l.b16 %v4093
        %v4264 = vunpack.c.l.b16 %v4094
        %v4265 = vunpack.c.l.b16 %v4095
        %v4266 = vunpack.c.l.b16 %v4096
        %v4267 = vunpack.c.l.b16 %v4097
        %v4268 = vunpack.c.l.b16 %v4098
        %v4269 = vpack.c.b16 %v4262, %v4261
        %v4270 = vpack.c.b16 %v4264, %v4263
        %v4271 = vpack.c.b16 %v4266, %v4265
        %v4272 = vpack.c.b16 %v4268, %v4267
        %v4278 = vsel %vm676, %v4081, 0
        %4280 = vmatprep.subr.bf16.mxu0 0
        %4281 = vmatpush1.bf16.msra.mxu0 %v4269
        %4282 = vmatprep.subr.bf16.mxu0 0
        %4283 = vmatpush1.bf16.msra.mxu0 %v4270
        %4284 = vmatprep.subr.bf16.mxu0 0
        %4285 = vmatpush1.bf16.msra.mxu0 %v4271
        %4286 = vmatprep.subr.bf16.mxu0 0
        %4287 = vmatpush1.bf16.msra.mxu0 %v4272
        %4288 = vmatprep.subr.bf16.mxu0 0
        %4289 = vmatpush1.bf16.msra.mxu0 0
        %4290 = vmatprep.subr.bf16.mxu0 0
        %4291 = vmatpush1.bf16.msra.mxu0 0
        %4292 = vmatprep.subr.bf16.mxu0 0
        %4293 = vmatpush1.bf16.msra.mxu0 0
        %4294 = vmatprep.subr.bf16.mxu0 0
        %4295 = vmatpush1.bf16.msra.mxu0 0
        %4296 = vmatprep.subr.bf16.mxu0 0
        %4297 = vmatpush1.bf16.msra.mxu0 0
        %4298 = vmatprep.subr.bf16.mxu0 0
        %4299 = vmatpush1.bf16.msra.mxu0 0
        %4300 = vmatprep.subr.bf16.mxu0 0
        %4301 = vmatpush1.bf16.msra.mxu0 0
        %4302 = vmatprep.subr.bf16.mxu0 0
        %4303 = vmatpush1.bf16.msra.mxu0 0
        %4304 = vmatprep.subr.bf16.mxu0 0
        %4305 = vmatpush1.bf16.msra.mxu0 0
        %4306 = vmatprep.subr.bf16.mxu0 0
        %4307 = vmatpush1.bf16.msra.mxu0 0
        %4308 = vmatprep.subr.bf16.mxu0 0
        %4309 = vmatpush1.bf16.msra.mxu0 0
        %4310 = vmatprep.subr.bf16.mxu0 0
        %4311 = vmatpush1.bf16.msra.mxu0 0
        %4312 = vmatprep.mubr.bf16.mxu0 0
        %4313 = vmatmul.mubr.bf16.gmra.mrb[0].mxu0 %v4278
        %v4314 = vpop.f32.mrb[0].mxu0
        %v4315 = vadd.f32 %v4191, %v4314
        %v4316 = vpop.f32.mrb[0].mxu0
        %v4317 = vpop.f32.mrb[0].mxu0
        %v4318 = vadd.f32 %v4194, %v4317
        %v4319 = vpop.f32.mrb[0].mxu0
        %4320 = vmatprep.mubr.bf16.mxu0 0
        %4321 = vmatmul.mubr.bf16.gmra.mrb[0].mxu0 %v4133
        %v4322 = vpop.f32.mrb[0].mxu0
        %v4323 = vadd.f32 %v4199, %v4322
        %v4324 = vpop.f32.mrb[0].mxu0
        %v4325 = vpop.f32.mrb[0].mxu0
        %v4326 = vadd.f32 %v4202, %v4325
        %v4327 = vpop.f32.mrb[0].mxu0
        %4328 = vmatprep.mubr.bf16.mxu0 0
        %4329 = vmatmul.mubr.bf16.gmra.mrb[0].mxu0 %v4136
        %v4330 = vpop.f32.mrb[0].mxu0
        %v4331 = vadd.f32 %v4207, %v4330
        %v4332 = vpop.f32.mrb[0].mxu0
        %v4333 = vpop.f32.mrb[0].mxu0
        %v4334 = vadd.f32 %v4210, %v4333
        %v4335 = vpop.f32.mrb[0].mxu0
        %4336 = vmatprep.mubr.bf16.mxu0 0
        %4337 = vmatmul.mubr.bf16.gmra.mrb[0].mxu0 %v4139
        %v4338 = vpop.f32.mrb[0].mxu0
        %v4339 = vadd.f32 %v4215, %v4338
        %v4340 = vpop.f32.mrb[0].mxu0
        %v4341 = vpop.f32.mrb[0].mxu0
        %v4342 = vadd.f32 %v4218, %v4341
        %v4343 = vpop.f32.mrb[0].mxu0
        %4344 = vmatprep.mubr.bf16.mxu0 0
        %4345 = vmatmul.mubr.bf16.gmra.mrb[0].mxu0 %v4142
        %v4346 = vpop.f32.mrb[0].mxu0
        %v4347 = vadd.f32 %v4223, %v4346
        %v4348 = vpop.f32.mrb[0].mxu0
        %v4349 = vpop.f32.mrb[0].mxu0
        %v4350 = vadd.f32 %v4226, %v4349
        %v4351 = vpop.f32.mrb[0].mxu0
        %4352 = vmatprep.mubr.bf16.mxu0 0
        %4353 = vmatmul.mubr.bf16.gmra.mrb[0].mxu0 %v4145
        %v4354 = vpop.f32.mrb[0].mxu0
        %v4355 = vadd.f32 %v4231, %v4354
        %v4356 = vpop.f32.mrb[0].mxu0
        %v4357 = vpop.f32.mrb[0].mxu0
        %v4358 = vadd.f32 %v4234, %v4357
        %v4359 = vpop.f32.mrb[0].mxu0
        %4360 = vmatprep.mubr.bf16.mxu0 0
        %4361 = vmatmul.mubr.bf16.gmra.mrb[0].mxu0 %v4148
        %v4362 = vpop.f32.mrb[0].mxu0
        %v4363 = vadd.f32 %v4239, %v4362
        %v4364 = vpop.f32.mrb[0].mxu0
        %v4365 = vpop.f32.mrb[0].mxu0
        %v4366 = vadd.f32 %v4242, %v4365
        %v4367 = vpop.f32.mrb[0].mxu0
        %4368 = vmatprep.mubr.bf16.mxu0 0
        %4369 = vmatmul.mubr.bf16.gmra.mrb[0].mxu0 %v4151
        %v4370 = vpop.f32.mrb[0].mxu0
        %v4371 = vadd.f32 %v4247, %v4370
        %v4372 = vpop.f32.mrb[0].mxu0
        %v4373 = vpop.f32.mrb[0].mxu0
        %v4374 = vadd.f32 %v4250, %v4373
        %v4375 = vpop.f32.mrb[0].mxu0
        %4376 = vdwg.mxu0
        %s4377 = scalar_lea.vmem [#allocation4], 192
        %v4378 = vld [vmem:[%s4377] sm:$0xf]
        %v4379 = vld [vmem:[%s4377 + $0x4] sm:$0xf]
        %v4380 = vld [vmem:[%s4377 + $0x8] sm:$0xf]
        %v4381 = vld [vmem:[%s4377 + $0xc] sm:$0xf]
        %v4382 = vld [vmem:[%s4377 + $0x10] sm:$0xf]
        %v4383 = vld [vmem:[%s4377 + $0x14] sm:$0xf]
        %v4384 = vld [vmem:[%s4377 + $0x18] sm:$0xf]
        %v4385 = vld [vmem:[%s4377 + $0x1c] sm:$0xf]
        %v4394 = vunpack.c.l.b16 %v4378
        %v4395 = vunpack.c.l.b16 %v4379
        %v4396 = vunpack.c.l.b16 %v4380
        %v4397 = vunpack.c.l.b16 %v4381
        %v4398 = vunpack.c.l.b16 %v4382
        %v4399 = vunpack.c.l.b16 %v4383
        %v4400 = vunpack.c.l.b16 %v4384
        %v4401 = vunpack.c.l.b16 %v4385
        %v4402 = vpack.c.b16 %v4395, %v4394
        %v4403 = vpack.c.b16 %v4397, %v4396
        %v4404 = vpack.c.b16 %v4399, %v4398
        %v4405 = vpack.c.b16 %v4401, %v4400
        %v4411 = vsel %vm676, %v4090, 0
        %4413 = vmatprep.subr.bf16.mxu0 0
        %4414 = vmatpush1.bf16.msra.mxu0 %v4402
        %4415 = vmatprep.subr.bf16.mxu0 0
        %4416 = vmatpush1.bf16.msra.mxu0 %v4403
        %4417 = vmatprep.subr.bf16.mxu0 0
        %4418 = vmatpush1.bf16.msra.mxu0 %v4404
        %4419 = vmatprep.subr.bf16.mxu0 0
        %4420 = vmatpush1.bf16.msra.mxu0 %v4405
        %4421 = vmatprep.subr.bf16.mxu0 0
        %4422 = vmatpush1.bf16.msra.mxu0 0
        %4423 = vmatprep.subr.bf16.mxu0 0
        %4424 = vmatpush1.bf16.msra.mxu0 0
        %4425 = vmatprep.subr.bf16.mxu0 0
        %4426 = vmatpush1.bf16.msra.mxu0 0
        %4427 = vmatprep.subr.bf16.mxu0 0
        %4428 = vmatpush1.bf16.msra.mxu0 0
        %4429 = vmatprep.subr.bf16.mxu0 0
        %4430 = vmatpush1.bf16.msra.mxu0 0
        %4431 = vmatprep.subr.bf16.mxu0 0
        %4432 = vmatpush1.bf16.msra.mxu0 0
        %4433 = vmatprep.subr.bf16.mxu0 0
        %4434 = vmatpush1.bf16.msra.mxu0 0
        %4435 = vmatprep.subr.bf16.mxu0 0
        %4436 = vmatpush1.bf16.msra.mxu0 0
        %4437 = vmatprep.subr.bf16.mxu0 0
        %4438 = vmatpush1.bf16.msra.mxu0 0
        %4439 = vmatprep.subr.bf16.mxu0 0
        %4440 = vmatpush1.bf16.msra.mxu0 0
        %4441 = vmatprep.subr.bf16.mxu0 0
        %4442 = vmatpush1.bf16.msra.mxu0 0
        %4443 = vmatprep.subr.bf16.mxu0 0
        %4444 = vmatpush1.bf16.msra.mxu0 0
        %4445 = vmatprep.mubr.bf16.mxu0 0
        %4446 = vmatmul.mubr.bf16.gmra.mrb[0].mxu0 %v4136
        %v4447 = vpop.f32.mrb[0].mxu0
        %v4448 = vadd.f32 0.0, %v4447
        %v4449 = vpop.f32.mrb[0].mxu0
        %v4450 = vpop.f32.mrb[0].mxu0
        %v4451 = vadd.f32 0.0, %v4450
        %v4452 = vpop.f32.mrb[0].mxu0
        %4453 = vmatprep.mubr.bf16.mxu0 0
        %4454 = vmatmul.mubr.bf16.gmra.mrb[0].mxu0 %v4139
        %v4455 = vpop.f32.mrb[0].mxu0
        %v4456 = vadd.f32 0.0, %v4455
        %v4457 = vpop.f32.mrb[0].mxu0
        %v4458 = vpop.f32.mrb[0].mxu0
        %v4459 = vadd.f32 0.0, %v4458
        %v4460 = vpop.f32.mrb[0].mxu0
        %4461 = vmatprep.mubr.bf16.mxu0 0
        %4462 = vmatmul.mubr.bf16.gmra.mrb[0].mxu0 %v4142
        %v4463 = vpop.f32.mrb[0].mxu0
        %v4464 = vadd.f32 0.0, %v4463
        %v4465 = vpop.f32.mrb[0].mxu0
        %v4466 = vpop.f32.mrb[0].mxu0
        %v4467 = vadd.f32 0.0, %v4466
        %v4468 = vpop.f32.mrb[0].mxu0
        %4469 = vmatprep.mubr.bf16.mxu0 0
        %4470 = vmatmul.mubr.bf16.gmra.mrb[0].mxu0 %v4145
        %v4471 = vpop.f32.mrb[0].mxu0
        %v4472 = vadd.f32 0.0, %v4471
        %v4473 = vpop.f32.mrb[0].mxu0
        %v4474 = vpop.f32.mrb[0].mxu0
        %v4475 = vadd.f32 0.0, %v4474
        %v4476 = vpop.f32.mrb[0].mxu0
        %4477 = vmatprep.mubr.bf16.mxu0 0
        %4478 = vmatmul.mubr.bf16.gmra.mrb[0].mxu0 %v4148
        %v4479 = vpop.f32.mrb[0].mxu0
        %v4480 = vadd.f32 0.0, %v4479
        %v4481 = vpop.f32.mrb[0].mxu0
        %v4482 = vpop.f32.mrb[0].mxu0
        %v4483 = vadd.f32 0.0, %v4482
        %v4484 = vpop.f32.mrb[0].mxu0
        %4485 = vmatprep.mubr.bf16.mxu0 0
        %4486 = vmatmul.mubr.bf16.gmra.mrb[0].mxu0 %v4151
        %v4487 = vpop.f32.mrb[0].mxu0
        %v4488 = vadd.f32 0.0, %v4487
        %v4489 = vpop.f32.mrb[0].mxu0
        %v4490 = vpop.f32.mrb[0].mxu0
        %v4491 = vadd.f32 0.0, %v4490
        %v4492 = vpop.f32.mrb[0].mxu0
        %4493 = vmatprep.mubr.bf16.mxu0 0
        %4494 = vmatmul.mubr.bf16.gmra.mrb[0].mxu0 %v4154
        %v4495 = vpop.f32.mrb[0].mxu0
        %v4496 = vadd.f32 0.0, %v4495
        %v4497 = vpop.f32.mrb[0].mxu0
        %v4498 = vpop.f32.mrb[0].mxu0
        %v4499 = vadd.f32 0.0, %v4498
        %v4500 = vpop.f32.mrb[0].mxu0
        %4501 = vmatprep.mubr.bf16.mxu0 0
        %4502 = vmatmul.mubr.bf16.gmra.mrb[0].mxu0 %v4411
        %v4503 = vpop.f32.mrb[0].mxu0
        %v4504 = vadd.f32 0.0, %v4503
        %v4505 = vpop.f32.mrb[0].mxu0
        %v4506 = vpop.f32.mrb[0].mxu0
        %v4507 = vadd.f32 0.0, %v4506
        %v4508 = vpop.f32.mrb[0].mxu0
        %4509 = vdwg.mxu0
        %v4510 = vadd.f32 %v4315, %v4448
        %v4511 = vadd.f32 %v4318, %v4451
        %v4512 = vadd.f32 %v4323, %v4456
        %v4513 = vadd.f32 %v4326, %v4459
        %v4514 = vadd.f32 %v4331, %v4464
        %v4515 = vadd.f32 %v4334, %v4467
        %v4516 = vadd.f32 %v4339, %v4472
        %v4517 = vadd.f32 %v4342, %v4475
        %v4518 = vadd.f32 %v4347, %v4480
        %v4519 = vadd.f32 %v4350, %v4483
        %v4520 = vadd.f32 %v4355, %v4488
        %v4521 = vadd.f32 %v4358, %v4491
        %v4522 = vadd.f32 %v4363, %v4496
        %v4523 = vadd.f32 %v4366, %v4499
        %v4524 = vadd.f32 %v4371, %v4504
        %v4525 = vadd.f32 %v4374, %v4507
        %v4526 = vpack.c.bf16 %v4002, %v4001
        %v4527 = vpack.c.bf16 %v4004, %v4003
        %v4528 = vpack.c.bf16 %v4006, %v4005
        %v4529 = vpack.c.bf16 %v4008, %v4007
        %v4530 = vpack.c.bf16 %v4010, %v4009
        %v4531 = vpack.c.bf16 %v4012, %v4011
        %v4532 = vpack.c.bf16 %v4014, %v4013
        %v4533 = vpack.c.bf16 %v4016, %v4015
        %v4534 = vpack.c.bf16 %v4018, %v4017
        %v4535 = vpack.c.bf16 %v4020, %v4019
        %s4536 = scalar_lea.vmem [#allocation4], 32
        %v4537 = vld [vmem:[%s4536] sm:$0xf]
        %v4538 = vld [vmem:[%s4536 + $0x4] sm:$0xf]
        %v4539 = vld [vmem:[%s4536 + $0x8] sm:$0xf]
        %v4540 = vld [vmem:[%s4536 + $0xc] sm:$0xf]
        %v4541 = vld [vmem:[%s4536 + $0x10] sm:$0xf]
        %v4542 = vld [vmem:[%s4536 + $0x14] sm:$0xf]
        %v4543 = vld [vmem:[%s4536 + $0x18] sm:$0xf]
        %v4544 = vld [vmem:[%s4536 + $0x1c] sm:$0xf]
        %v4553 = vunpack.c.l.b16 %v4537
        %v4554 = vunpack.c.l.b16 %v4538
        %v4555 = vunpack.c.l.b16 %v4539
        %v4556 = vunpack.c.l.b16 %v4540
        %v4557 = vunpack.c.l.b16 %v4541
        %v4558 = vunpack.c.l.b16 %v4542
        %v4559 = vunpack.c.l.b16 %v4543
        %v4560 = vunpack.c.l.b16 %v4544
        %v4561 = vpack.c.b16 %v4554, %v4553
        %v4562 = vpack.c.b16 %v4556, %v4555
        %v4563 = vpack.c.b16 %v4558, %v4557
        %v4564 = vpack.c.b16 %v4560, %v4559
        %v4570 = vsel %vm676, %v4526, 0
        %v4573 = vsel %vm676, %v4527, 0
        %v4576 = vsel %vm676, %v4528, 0
        %v4579 = vsel %vm676, %v4529, 0
        %v4582 = vsel %vm676, %v4530, 0
        %v4585 = vsel %vm676, %v4531, 0
        %v4588 = vsel %vm676, %v4532, 0
        %v4591 = vsel %vm676, %v4533, 0
        %4593 = vmatprep.subr.bf16.mxu0 0
        %4594 = vmatpush1.bf16.msra.mxu0 %v4561
        %4595 = vmatprep.subr.bf16.mxu0 0
        %4596 = vmatpush1.bf16.msra.mxu0 %v4562
        %4597 = vmatprep.subr.bf16.mxu0 0
        %4598 = vmatpush1.bf16.msra.mxu0 %v4563
        %4599 = vmatprep.subr.bf16.mxu0 0
        %4600 = vmatpush1.bf16.msra.mxu0 %v4564
        %4601 = vmatprep.subr.bf16.mxu0 0
        %4602 = vmatpush1.bf16.msra.mxu0 0
        %4603 = vmatprep.subr.bf16.mxu0 0
        %4604 = vmatpush1.bf16.msra.mxu0 0
        %4605 = vmatprep.subr.bf16.mxu0 0
        %4606 = vmatpush1.bf16.msra.mxu0 0
        %4607 = vmatprep.subr.bf16.mxu0 0
        %4608 = vmatpush1.bf16.msra.mxu0 0
        %4609 = vmatprep.subr.bf16.mxu0 0
        %4610 = vmatpush1.bf16.msra.mxu0 0
        %4611 = vmatprep.subr.bf16.mxu0 0
        %4612 = vmatpush1.bf16.msra.mxu0 0
        %4613 = vmatprep.subr.bf16.mxu0 0
        %4614 = vmatpush1.bf16.msra.mxu0 0
        %4615 = vmatprep.subr.bf16.mxu0 0
        %4616 = vmatpush1.bf16.msra.mxu0 0
        %4617 = vmatprep.subr.bf16.mxu0 0
        %4618 = vmatpush1.bf16.msra.mxu0 0
        %4619 = vmatprep.subr.bf16.mxu0 0
        %4620 = vmatpush1.bf16.msra.mxu0 0
        %4621 = vmatprep.subr.bf16.mxu0 0
        %4622 = vmatpush1.bf16.msra.mxu0 0
        %4623 = vmatprep.subr.bf16.mxu0 0
        %4624 = vmatpush1.bf16.msra.mxu0 0
        %4625 = vmatprep.mubr.bf16.mxu0 0
        %4626 = vmatmul.mubr.bf16.gmra.mrb[0].mxu0 %v4570
        %v4627 = vpop.f32.mrb[0].mxu0
        %v4628 = vadd.f32 0.0, %v4627
        %v4629 = vpop.f32.mrb[0].mxu0
        %v4630 = vpop.f32.mrb[0].mxu0
        %v4631 = vadd.f32 0.0, %v4630
        %v4632 = vpop.f32.mrb[0].mxu0
        %4633 = vmatprep.mubr.bf16.mxu0 0
        %4634 = vmatmul.mubr.bf16.gmra.mrb[0].mxu0 %v4573
        %v4635 = vpop.f32.mrb[0].mxu0
        %v4636 = vadd.f32 0.0, %v4635
        %v4637 = vpop.f32.mrb[0].mxu0
        %v4638 = vpop.f32.mrb[0].mxu0
        %v4639 = vadd.f32 0.0, %v4638
        %v4640 = vpop.f32.mrb[0].mxu0
        %4641 = vmatprep.mubr.bf16.mxu0 0
        %4642 = vmatmul.mubr.bf16.gmra.mrb[0].mxu0 %v4576
        %v4643 = vpop.f32.mrb[0].mxu0
        %v4644 = vadd.f32 0.0, %v4643
        %v4645 = vpop.f32.mrb[0].mxu0
        %v4646 = vpop.f32.mrb[0].mxu0
        %v4647 = vadd.f32 0.0, %v4646
        %v4648 = vpop.f32.mrb[0].mxu0
        %4649 = vmatprep.mubr.bf16.mxu0 0
        %4650 = vmatmul.mubr.bf16.gmra.mrb[0].mxu0 %v4579
        %v4651 = vpop.f32.mrb[0].mxu0
        %v4652 = vadd.f32 0.0, %v4651
        %v4653 = vpop.f32.mrb[0].mxu0
        %v4654 = vpop.f32.mrb[0].mxu0
        %v4655 = vadd.f32 0.0, %v4654
        %v4656 = vpop.f32.mrb[0].mxu0
        %4657 = vmatprep.mubr.bf16.mxu0 0
        %4658 = vmatmul.mubr.bf16.gmra.mrb[0].mxu0 %v4582
        %v4659 = vpop.f32.mrb[0].mxu0
        %v4660 = vadd.f32 0.0, %v4659
        %v4661 = vpop.f32.mrb[0].mxu0
        %v4662 = vpop.f32.mrb[0].mxu0
        %v4663 = vadd.f32 0.0, %v4662
        %v4664 = vpop.f32.mrb[0].mxu0
        %4665 = vmatprep.mubr.bf16.mxu0 0
        %4666 = vmatmul.mubr.bf16.gmra.mrb[0].mxu0 %v4585
        %v4667 = vpop.f32.mrb[0].mxu0
        %v4668 = vadd.f32 0.0, %v4667
        %v4669 = vpop.f32.mrb[0].mxu0
        %v4670 = vpop.f32.mrb[0].mxu0
        %v4671 = vadd.f32 0.0, %v4670
        %v4672 = vpop.f32.mrb[0].mxu0
        %4673 = vmatprep.mubr.bf16.mxu0 0
        %4674 = vmatmul.mubr.bf16.gmra.mrb[0].mxu0 %v4588
        %v4675 = vpop.f32.mrb[0].mxu0
        %v4676 = vadd.f32 0.0, %v4675
        %v4677 = vpop.f32.mrb[0].mxu0
        %v4678 = vpop.f32.mrb[0].mxu0
        %v4679 = vadd.f32 0.0, %v4678
        %v4680 = vpop.f32.mrb[0].mxu0
        %4681 = vmatprep.mubr.bf16.mxu0 0
        %4682 = vmatmul.mubr.bf16.gmra.mrb[0].mxu0 %v4591
        %v4683 = vpop.f32.mrb[0].mxu0
        %v4684 = vadd.f32 0.0, %v4683
        %v4685 = vpop.f32.mrb[0].mxu0
        %v4686 = vpop.f32.mrb[0].mxu0
        %v4687 = vadd.f32 0.0, %v4686
        %v4688 = vpop.f32.mrb[0].mxu0
        %4689 = vdwg.mxu0
        %v4690 = vadd.f32 %v4510, %v4628
        %v4691 = vadd.f32 %v4511, %v4631
        %v4692 = vadd.f32 %v4512, %v4636
        %v4693 = vadd.f32 %v4513, %v4639
        %v4694 = vadd.f32 %v4514, %v4644
        %v4695 = vadd.f32 %v4515, %v4647
        %v4696 = vadd.f32 %v4516, %v4652
        %v4697 = vadd.f32 %v4517, %v4655
        %v4698 = vadd.f32 %v4518, %v4660
        %v4699 = vadd.f32 %v4519, %v4663
        %v4700 = vadd.f32 %v4520, %v4668
        %v4701 = vadd.f32 %v4521, %v4671
        %v4702 = vadd.f32 %v4522, %v4676
        %v4703 = vadd.f32 %v4523, %v4679
        %v4704 = vadd.f32 %v4524, %v4684
        %v4705 = vadd.f32 %v4525, %v4687
        %s4706 = scalar_lea.vmem [#allocation4], 128
        %v4707 = vld [vmem:[%s4706] sm:$0xf]
        %v4708 = vld [vmem:[%s4706 + $0x4] sm:$0xf]
        %v4709 = vld [vmem:[%s4706 + $0x8] sm:$0xf]
        %v4710 = vld [vmem:[%s4706 + $0xc] sm:$0xf]
        %v4711 = vld [vmem:[%s4706 + $0x10] sm:$0xf]
        %v4712 = vld [vmem:[%s4706 + $0x14] sm:$0xf]
        %v4713 = vld [vmem:[%s4706 + $0x18] sm:$0xf]
        %v4714 = vld [vmem:[%s4706 + $0x1c] sm:$0xf]
        %v4723 = vunpack.c.l.b16 %v4707
        %v4724 = vunpack.c.l.b16 %v4708
        %v4725 = vunpack.c.l.b16 %v4709
        %v4726 = vunpack.c.l.b16 %v4710
        %v4727 = vunpack.c.l.b16 %v4711
        %v4728 = vunpack.c.l.b16 %v4712
        %v4729 = vunpack.c.l.b16 %v4713
        %v4730 = vunpack.c.l.b16 %v4714
        %v4731 = vpack.c.b16 %v4724, %v4723
        %v4732 = vpack.c.b16 %v4726, %v4725
        %v4733 = vpack.c.b16 %v4728, %v4727
        %v4734 = vpack.c.b16 %v4730, %v4729
        %v4740 = vsel %vm676, %v4534, 0
        %4742 = vmatprep.subr.bf16.mxu0 0
        %4743 = vmatpush1.bf16.msra.mxu0 %v4731
        %4744 = vmatprep.subr.bf16.mxu0 0
        %4745 = vmatpush1.bf16.msra.mxu0 %v4732
        %4746 = vmatprep.subr.bf16.mxu0 0
        %4747 = vmatpush1.bf16.msra.mxu0 %v4733
        %4748 = vmatprep.subr.bf16.mxu0 0
        %4749 = vmatpush1.bf16.msra.mxu0 %v4734
        %4750 = vmatprep.subr.bf16.mxu0 0
        %4751 = vmatpush1.bf16.msra.mxu0 0
        %4752 = vmatprep.subr.bf16.mxu0 0
        %4753 = vmatpush1.bf16.msra.mxu0 0
        %4754 = vmatprep.subr.bf16.mxu0 0
        %4755 = vmatpush1.bf16.msra.mxu0 0
        %4756 = vmatprep.subr.bf16.mxu0 0
        %4757 = vmatpush1.bf16.msra.mxu0 0
        %4758 = vmatprep.subr.bf16.mxu0 0
        %4759 = vmatpush1.bf16.msra.mxu0 0
        %4760 = vmatprep.subr.bf16.mxu0 0
        %4761 = vmatpush1.bf16.msra.mxu0 0
        %4762 = vmatprep.subr.bf16.mxu0 0
        %4763 = vmatpush1.bf16.msra.mxu0 0
        %4764 = vmatprep.subr.bf16.mxu0 0
        %4765 = vmatpush1.bf16.msra.mxu0 0
        %4766 = vmatprep.subr.bf16.mxu0 0
        %4767 = vmatpush1.bf16.msra.mxu0 0
        %4768 = vmatprep.subr.bf16.mxu0 0
        %4769 = vmatpush1.bf16.msra.mxu0 0
        %4770 = vmatprep.subr.bf16.mxu0 0
        %4771 = vmatpush1.bf16.msra.mxu0 0
        %4772 = vmatprep.subr.bf16.mxu0 0
        %4773 = vmatpush1.bf16.msra.mxu0 0
        %4774 = vmatprep.mubr.bf16.mxu0 0
        %4775 = vmatmul.mubr.bf16.gmra.mrb[0].mxu0 %v4573
        %v4776 = vpop.f32.mrb[0].mxu0
        %v4777 = vadd.f32 0.0, %v4776
        %v4778 = vpop.f32.mrb[0].mxu0
        %v4779 = vpop.f32.mrb[0].mxu0
        %v4780 = vadd.f32 0.0, %v4779
        %v4781 = vpop.f32.mrb[0].mxu0
        %4782 = vmatprep.mubr.bf16.mxu0 0
        %4783 = vmatmul.mubr.bf16.gmra.mrb[0].mxu0 %v4576
        %v4784 = vpop.f32.mrb[0].mxu0
        %v4785 = vadd.f32 0.0, %v4784
        %v4786 = vpop.f32.mrb[0].mxu0
        %v4787 = vpop.f32.mrb[0].mxu0
        %v4788 = vadd.f32 0.0, %v4787
        %v4789 = vpop.f32.mrb[0].mxu0
        %4790 = vmatprep.mubr.bf16.mxu0 0
        %4791 = vmatmul.mubr.bf16.gmra.mrb[0].mxu0 %v4579
        %v4792 = vpop.f32.mrb[0].mxu0
        %v4793 = vadd.f32 0.0, %v4792
        %v4794 = vpop.f32.mrb[0].mxu0
        %v4795 = vpop.f32.mrb[0].mxu0
        %v4796 = vadd.f32 0.0, %v4795
        %v4797 = vpop.f32.mrb[0].mxu0
        %4798 = vmatprep.mubr.bf16.mxu0 0
        %4799 = vmatmul.mubr.bf16.gmra.mrb[0].mxu0 %v4582
        %v4800 = vpop.f32.mrb[0].mxu0
        %v4801 = vadd.f32 0.0, %v4800
        %v4802 = vpop.f32.mrb[0].mxu0
        %v4803 = vpop.f32.mrb[0].mxu0
        %v4804 = vadd.f32 0.0, %v4803
        %v4805 = vpop.f32.mrb[0].mxu0
        %4806 = vmatprep.mubr.bf16.mxu0 0
        %4807 = vmatmul.mubr.bf16.gmra.mrb[0].mxu0 %v4585
        %v4808 = vpop.f32.mrb[0].mxu0
        %v4809 = vadd.f32 0.0, %v4808
        %v4810 = vpop.f32.mrb[0].mxu0
        %v4811 = vpop.f32.mrb[0].mxu0
        %v4812 = vadd.f32 0.0, %v4811
        %v4813 = vpop.f32.mrb[0].mxu0
        %4814 = vmatprep.mubr.bf16.mxu0 0
        %4815 = vmatmul.mubr.bf16.gmra.mrb[0].mxu0 %v4588
        %v4816 = vpop.f32.mrb[0].mxu0
        %v4817 = vadd.f32 0.0, %v4816
        %v4818 = vpop.f32.mrb[0].mxu0
        %v4819 = vpop.f32.mrb[0].mxu0
        %v4820 = vadd.f32 0.0, %v4819
        %v4821 = vpop.f32.mrb[0].mxu0
        %4822 = vmatprep.mubr.bf16.mxu0 0
        %4823 = vmatmul.mubr.bf16.gmra.mrb[0].mxu0 %v4591
        %v4824 = vpop.f32.mrb[0].mxu0
        %v4825 = vadd.f32 0.0, %v4824
        %v4826 = vpop.f32.mrb[0].mxu0
        %v4827 = vpop.f32.mrb[0].mxu0
        %v4828 = vadd.f32 0.0, %v4827
        %v4829 = vpop.f32.mrb[0].mxu0
        %4830 = vmatprep.mubr.bf16.mxu0 0
        %4831 = vmatmul.mubr.bf16.gmra.mrb[0].mxu0 %v4740
        %v4832 = vpop.f32.mrb[0].mxu0
        %v4833 = vadd.f32 0.0, %v4832
        %v4834 = vpop.f32.mrb[0].mxu0
        %v4835 = vpop.f32.mrb[0].mxu0
        %v4836 = vadd.f32 0.0, %v4835
        %v4837 = vpop.f32.mrb[0].mxu0
        %4838 = vdwg.mxu0
        %v4839 = vadd.f32 %v4690, %v4777
        %v4840 = vadd.f32 %v4691, %v4780
        %v4841 = vadd.f32 %v4692, %v4785
        %v4842 = vadd.f32 %v4693, %v4788
        %v4843 = vadd.f32 %v4694, %v4793
        %v4844 = vadd.f32 %v4695, %v4796
        %v4845 = vadd.f32 %v4696, %v4801
        %v4846 = vadd.f32 %v4697, %v4804
        %v4847 = vadd.f32 %v4698, %v4809
        %v4848 = vadd.f32 %v4699, %v4812
        %v4849 = vadd.f32 %v4700, %v4817
        %v4850 = vadd.f32 %v4701, %v4820
        %v4851 = vadd.f32 %v4702, %v4825
        %v4852 = vadd.f32 %v4703, %v4828
        %v4853 = vadd.f32 %v4704, %v4833
        %v4854 = vadd.f32 %v4705, %v4836
        %s4855 = scalar_lea.vmem [#allocation4], 224
        %v4856 = vld [vmem:[%s4855] sm:$0xf]
        %v4857 = vld [vmem:[%s4855 + $0x4] sm:$0xf]
        %v4858 = vld [vmem:[%s4855 + $0x8] sm:$0xf]
        %v4859 = vld [vmem:[%s4855 + $0xc] sm:$0xf]
        %v4860 = vld [vmem:[%s4855 + $0x10] sm:$0xf]
        %v4861 = vld [vmem:[%s4855 + $0x14] sm:$0xf]
        %v4862 = vld [vmem:[%s4855 + $0x18] sm:$0xf]
        %v4863 = vld [vmem:[%s4855 + $0x1c] sm:$0xf]
        %v4872 = vunpack.c.l.b16 %v4856
        %v4873 = vunpack.c.l.b16 %v4857
        %v4874 = vunpack.c.l.b16 %v4858
        %v4875 = vunpack.c.l.b16 %v4859
        %v4876 = vunpack.c.l.b16 %v4860
        %v4877 = vunpack.c.l.b16 %v4861
        %v4878 = vunpack.c.l.b16 %v4862
        %v4879 = vunpack.c.l.b16 %v4863
        %v4880 = vpack.c.b16 %v4873, %v4872
        %v4881 = vpack.c.b16 %v4875, %v4874
        %v4882 = vpack.c.b16 %v4877, %v4876
        %v4883 = vpack.c.b16 %v4879, %v4878
        %v4889 = vsel %vm676, %v4535, 0
        %4891 = vmatprep.subr.bf16.mxu0 0
        %4892 = vmatpush1.bf16.msra.mxu0 %v4880
        %4893 = vmatprep.subr.bf16.mxu0 0
        %4894 = vmatpush1.bf16.msra.mxu0 %v4881
        %4895 = vmatprep.subr.bf16.mxu0 0
        %4896 = vmatpush1.bf16.msra.mxu0 %v4882
        %4897 = vmatprep.subr.bf16.mxu0 0
        %4898 = vmatpush1.bf16.msra.mxu0 %v4883
        %4899 = vmatprep.subr.bf16.mxu0 0
        %4900 = vmatpush1.bf16.msra.mxu0 0
        %4901 = vmatprep.subr.bf16.mxu0 0
        %4902 = vmatpush1.bf16.msra.mxu0 0
        %4903 = vmatprep.subr.bf16.mxu0 0
        %4904 = vmatpush1.bf16.msra.mxu0 0
        %4905 = vmatprep.subr.bf16.mxu0 0
        %4906 = vmatpush1.bf16.msra.mxu0 0
        %4907 = vmatprep.subr.bf16.mxu0 0
        %4908 = vmatpush1.bf16.msra.mxu0 0
        %4909 = vmatprep.subr.bf16.mxu0 0
        %4910 = vmatpush1.bf16.msra.mxu0 0
        %4911 = vmatprep.subr.bf16.mxu0 0
        %4912 = vmatpush1.bf16.msra.mxu0 0
        %4913 = vmatprep.subr.bf16.mxu0 0
        %4914 = vmatpush1.bf16.msra.mxu0 0
        %4915 = vmatprep.subr.bf16.mxu0 0
        %4916 = vmatpush1.bf16.msra.mxu0 0
        %4917 = vmatprep.subr.bf16.mxu0 0
        %4918 = vmatpush1.bf16.msra.mxu0 0
        %4919 = vmatprep.subr.bf16.mxu0 0
        %4920 = vmatpush1.bf16.msra.mxu0 0
        %4921 = vmatprep.subr.bf16.mxu0 0
        %4922 = vmatpush1.bf16.msra.mxu0 0
        %4923 = vmatprep.mubr.bf16.mxu0 0
        %4924 = vmatmul.mubr.bf16.gmra.mrb[0].mxu0 %v4576
        %v4925 = vpop.f32.mrb[0].mxu0
        %v4926 = vadd.f32 0.0, %v4925
        %v4927 = vpop.f32.mrb[0].mxu0
        %v4928 = vpop.f32.mrb[0].mxu0
        %v4929 = vadd.f32 0.0, %v4928
        %v4930 = vpop.f32.mrb[0].mxu0
        %4931 = vmatprep.mubr.bf16.mxu0 0
        %4932 = vmatmul.mubr.bf16.gmra.mrb[0].mxu0 %v4579
        %v4933 = vpop.f32.mrb[0].mxu0
        %v4934 = vadd.f32 0.0, %v4933
        %v4935 = vpop.f32.mrb[0].mxu0
        %v4936 = vpop.f32.mrb[0].mxu0
        %v4937 = vadd.f32 0.0, %v4936
        %v4938 = vpop.f32.mrb[0].mxu0
        %4939 = vmatprep.mubr.bf16.mxu0 0
        %4940 = vmatmul.mubr.bf16.gmra.mrb[0].mxu0 %v4582
        %v4941 = vpop.f32.mrb[0].mxu0
        %v4942 = vadd.f32 0.0, %v4941
        %v4943 = vpop.f32.mrb[0].mxu0
        %v4944 = vpop.f32.mrb[0].mxu0
        %v4945 = vadd.f32 0.0, %v4944
        %v4946 = vpop.f32.mrb[0].mxu0
        %4947 = vmatprep.mubr.bf16.mxu0 0
        %4948 = vmatmul.mubr.bf16.gmra.mrb[0].mxu0 %v4585
        %v4949 = vpop.f32.mrb[0].mxu0
        %v4950 = vadd.f32 0.0, %v4949
        %v4951 = vpop.f32.mrb[0].mxu0
        %v4952 = vpop.f32.mrb[0].mxu0
        %v4953 = vadd.f32 0.0, %v4952
        %v4954 = vpop.f32.mrb[0].mxu0
        %4955 = vmatprep.mubr.bf16.mxu0 0
        %4956 = vmatmul.mubr.bf16.gmra.mrb[0].mxu0 %v4588
        %v4957 = vpop.f32.mrb[0].mxu0
        %v4958 = vadd.f32 0.0, %v4957
        %v4959 = vpop.f32.mrb[0].mxu0
        %v4960 = vpop.f32.mrb[0].mxu0
        %v4961 = vadd.f32 0.0, %v4960
        %v4962 = vpop.f32.mrb[0].mxu0
        %4963 = vmatprep.mubr.bf16.mxu0 0
        %4964 = vmatmul.mubr.bf16.gmra.mrb[0].mxu0 %v4591
        %v4965 = vpop.f32.mrb[0].mxu0
        %v4966 = vadd.f32 0.0, %v4965
        %v4967 = vpop.f32.mrb[0].mxu0
        %v4968 = vpop.f32.mrb[0].mxu0
        %v4969 = vadd.f32 0.0, %v4968
        %v4970 = vpop.f32.mrb[0].mxu0
        %4971 = vmatprep.mubr.bf16.mxu0 0
        %4972 = vmatmul.mubr.bf16.gmra.mrb[0].mxu0 %v4740
        %v4973 = vpop.f32.mrb[0].mxu0
        %v4974 = vadd.f32 0.0, %v4973
        %v4975 = vpop.f32.mrb[0].mxu0
        %v4976 = vpop.f32.mrb[0].mxu0
        %v4977 = vadd.f32 0.0, %v4976
        %v4978 = vpop.f32.mrb[0].mxu0
        %4979 = vmatprep.mubr.bf16.mxu0 0
        %4980 = vmatmul.mubr.bf16.gmra.mrb[0].mxu0 %v4889
        %v4981 = vpop.f32.mrb[0].mxu0
        %v4982 = vadd.f32 0.0, %v4981
        %v4983 = vpop.f32.mrb[0].mxu0
        %v4984 = vpop.f32.mrb[0].mxu0
        %v4985 = vadd.f32 0.0, %v4984
        %v4986 = vpop.f32.mrb[0].mxu0
        %4987 = vdwg.mxu0
        %v4988 = vadd.f32 %v4839, %v4926
        %v4989 = vadd.f32 %v4840, %v4929
        %v4990 = vadd.f32 %v4841, %v4934
        %v4991 = vadd.f32 %v4842, %v4937
        %v4992 = vadd.f32 %v4843, %v4942
        %v4993 = vadd.f32 %v4844, %v4945
        %v4994 = vadd.f32 %v4845, %v4950
        %v4995 = vadd.f32 %v4846, %v4953
        %v4996 = vadd.f32 %v4847, %v4958
        %v4997 = vadd.f32 %v4848, %v4961
        %v4998 = vadd.f32 %v4849, %v4966
        %v4999 = vadd.f32 %v4850, %v4969
        %v5000 = vadd.f32 %v4851, %v4974
        %v5001 = vadd.f32 %v4852, %v4977
        %v5002 = vadd.f32 %v4853, %v4982
        %v5003 = vadd.f32 %v4854, %v4985
        %v5004 = vrot.slane %v4001, 1
        %v5005 = vrot.slane %v4002, 1
        %v5006 = vrot.slane %v4003, 1
        %v5007 = vrot.slane %v4004, 1
        %v5008 = vrot.slane %v4005, 1
        %v5009 = vrot.slane %v4006, 1
        %v5010 = vrot.slane %v4007, 1
        %v5011 = vrot.slane %v4008, 1
        %v5012 = vrot.slane %v4009, 1
        %v5013 = vrot.slane %v4010, 1
        %v5014 = vrot.slane %v4011, 1
        %v5015 = vrot.slane %v4012, 1
        %v5016 = vrot.slane %v4013, 1
        %v5017 = vrot.slane %v4014, 1
        %v5018 = vrot.slane %v4015, 1
        %v5019 = vrot.slane %v4016, 1
        %v5020 = vrot.slane %v4017, 1
        %v5021 = vrot.slane %v4018, 1
        %v5022 = vrot.slane %v4019, 1
        %v5023 = vrot.slane %v4020, 1
        %v5024 = vsel %vm1809, %v5022, %v5023
        %v5025 = vsel %vm1809, %v5021, %v5022
        %v5026 = vsel %vm1809, %v5020, %v5021
        %v5027 = vsel %vm1809, %v5019, %v5020
        %v5028 = vsel %vm1809, %v5018, %v5019
        %v5029 = vsel %vm1809, %v5017, %v5018
        %v5030 = vsel %vm1809, %v5016, %v5017
        %v5031 = vsel %vm1809, %v5015, %v5016
        %v5032 = vsel %vm1809, %v5014, %v5015
        %v5033 = vsel %vm1809, %v5013, %v5014
        %v5034 = vsel %vm1809, %v5012, %v5013
        %v5035 = vsel %vm1809, %v5011, %v5012
        %v5036 = vsel %vm1809, %v5010, %v5011
        %v5037 = vsel %vm1809, %v5009, %v5010
        %v5038 = vsel %vm1809, %v5008, %v5009
        %v5039 = vsel %vm1809, %v5007, %v5008
        %v5040 = vsel %vm1809, %v5006, %v5007
        %v5041 = vsel %vm1809, %v5005, %v5006
        %v5042 = vsel %vm1809, %v5004, %v5005
        %v5043 = vsel %vm1809, %v5023, %v5004
        %v5044 = vmul.f32 %v5042, %v656
        %v5045 = vmul.f32 %v5041, %v657
        %v5046 = vmul.f32 %v5040, %v658
        %v5047 = vmul.f32 %v5039, %v659
        %v5048 = vmul.f32 %v5038, %v660
        %v5049 = vmul.f32 %v5037, %v661
        %v5050 = vmul.f32 %v5036, %v662
        %v5051 = vmul.f32 %v5035, %v663
        %v5052 = vmul.f32 %v5034, %v664
        %v5053 = vmul.f32 %v5033, %v665
        %v5054 = vmul.f32 %v5032, %v666
        %v5055 = vmul.f32 %v5031, %v667
        %v5056 = vmul.f32 %v5030, %v668
        %v5057 = vmul.f32 %v5029, %v669
        %v5058 = vmul.f32 %v5028, %v670
        %v5059 = vmul.f32 %v5027, %v671
        %v5060 = vmul.f32 %v5026, %v672
        %v5061 = vmul.f32 %v5025, %v673
        %v5062 = vmul.f32 %v5024, %v674
        %v5063 = vmul.f32 %v5043, %v675
        %v5064 = vpack.c.bf16 %v5045, %v5044
        %v5065 = vpack.c.bf16 %v5047, %v5046
        %v5066 = vpack.c.bf16 %v5049, %v5048
        %v5067 = vpack.c.bf16 %v5051, %v5050
        %v5068 = vpack.c.bf16 %v5053, %v5052
        %v5069 = vpack.c.bf16 %v5055, %v5054
        %v5070 = vpack.c.bf16 %v5057, %v5056
        %v5071 = vpack.c.bf16 %v5059, %v5058
        %v5072 = vpack.c.bf16 %v5061, %v5060
        %v5073 = vpack.c.bf16 %v5063, %v5062
        %s5074 = scalar_lea.vmem [#allocation4], 64
        %v5075 = vld [vmem:[%s5074] sm:$0xf]
        %v5076 = vld [vmem:[%s5074 + $0x4] sm:$0xf]
        %v5077 = vld [vmem:[%s5074 + $0x8] sm:$0xf]
        %v5078 = vld [vmem:[%s5074 + $0xc] sm:$0xf]
        %v5079 = vld [vmem:[%s5074 + $0x10] sm:$0xf]
        %v5080 = vld [vmem:[%s5074 + $0x14] sm:$0xf]
        %v5081 = vld [vmem:[%s5074 + $0x18] sm:$0xf]
        %v5082 = vld [vmem:[%s5074 + $0x1c] sm:$0xf]
        %v5091 = vunpack.c.l.b16 %v5075
        %v5092 = vunpack.c.l.b16 %v5076
        %v5093 = vunpack.c.l.b16 %v5077
        %v5094 = vunpack.c.l.b16 %v5078
        %v5095 = vunpack.c.l.b16 %v5079
        %v5096 = vunpack.c.l.b16 %v5080
        %v5097 = vunpack.c.l.b16 %v5081
        %v5098 = vunpack.c.l.b16 %v5082
        %v5099 = vpack.c.b16 %v5092, %v5091
        %v5100 = vpack.c.b16 %v5094, %v5093
        %v5101 = vpack.c.b16 %v5096, %v5095
        %v5102 = vpack.c.b16 %v5098, %v5097
        %v5108 = vsel %vm676, %v5064, 0
        %v5111 = vsel %vm676, %v5065, 0
        %v5114 = vsel %vm676, %v5066, 0
        %v5117 = vsel %vm676, %v5067, 0
        %v5120 = vsel %vm676, %v5068, 0
        %v5123 = vsel %vm676, %v5069, 0
        %v5126 = vsel %vm676, %v5070, 0
        %v5129 = vsel %vm676, %v5071, 0
        %5131 = vmatprep.subr.bf16.mxu0 0
        %5132 = vmatpush1.bf16.msra.mxu0 %v5099
        %5133 = vmatprep.subr.bf16.mxu0 0
        %5134 = vmatpush1.bf16.msra.mxu0 %v5100
        %5135 = vmatprep.subr.bf16.mxu0 0
        %5136 = vmatpush1.bf16.msra.mxu0 %v5101
        %5137 = vmatprep.subr.bf16.mxu0 0
        %5138 = vmatpush1.bf16.msra.mxu0 %v5102
        %5139 = vmatprep.subr.bf16.mxu0 0
        %5140 = vmatpush1.bf16.msra.mxu0 0
        %5141 = vmatprep.subr.bf16.mxu0 0
        %5142 = vmatpush1.bf16.msra.mxu0 0
        %5143 = vmatprep.subr.bf16.mxu0 0
        %5144 = vmatpush1.bf16.msra.mxu0 0
        %5145 = vmatprep.subr.bf16.mxu0 0
        %5146 = vmatpush1.bf16.msra.mxu0 0
        %5147 = vmatprep.subr.bf16.mxu0 0
        %5148 = vmatpush1.bf16.msra.mxu0 0
        %5149 = vmatprep.subr.bf16.mxu0 0
        %5150 = vmatpush1.bf16.msra.mxu0 0
        %5151 = vmatprep.subr.bf16.mxu0 0
        %5152 = vmatpush1.bf16.msra.mxu0 0
        %5153 = vmatprep.subr.bf16.mxu0 0
        %5154 = vmatpush1.bf16.msra.mxu0 0
        %5155 = vmatprep.subr.bf16.mxu0 0
        %5156 = vmatpush1.bf16.msra.mxu0 0
        %5157 = vmatprep.subr.bf16.mxu0 0
        %5158 = vmatpush1.bf16.msra.mxu0 0
        %5159 = vmatprep.subr.bf16.mxu0 0
        %5160 = vmatpush1.bf16.msra.mxu0 0
        %5161 = vmatprep.subr.bf16.mxu0 0
        %5162 = vmatpush1.bf16.msra.mxu0 0
        %5163 = vmatprep.mubr.bf16.mxu0 0
        %5164 = vmatmul.mubr.bf16.gmra.mrb[0].mxu0 %v5108
        %v5165 = vpop.f32.mrb[0].mxu0
        %v5166 = vadd.f32 0.0, %v5165
        %v5167 = vpop.f32.mrb[0].mxu0
        %v5168 = vpop.f32.mrb[0].mxu0
        %v5169 = vadd.f32 0.0, %v5168
        %v5170 = vpop.f32.mrb[0].mxu0
        %5171 = vmatprep.mubr.bf16.mxu0 0
        %5172 = vmatmul.mubr.bf16.gmra.mrb[0].mxu0 %v5111
        %v5173 = vpop.f32.mrb[0].mxu0
        %v5174 = vadd.f32 0.0, %v5173
        %v5175 = vpop.f32.mrb[0].mxu0
        %v5176 = vpop.f32.mrb[0].mxu0
        %v5177 = vadd.f32 0.0, %v5176
        %v5178 = vpop.f32.mrb[0].mxu0
        %5179 = vmatprep.mubr.bf16.mxu0 0
        %5180 = vmatmul.mubr.bf16.gmra.mrb[0].mxu0 %v5114
        %v5181 = vpop.f32.mrb[0].mxu0
        %v5182 = vadd.f32 0.0, %v5181
        %v5183 = vpop.f32.mrb[0].mxu0
        %v5184 = vpop.f32.mrb[0].mxu0
        %v5185 = vadd.f32 0.0, %v5184
        %v5186 = vpop.f32.mrb[0].mxu0
        %5187 = vmatprep.mubr.bf16.mxu0 0
        %5188 = vmatmul.mubr.bf16.gmra.mrb[0].mxu0 %v5117
        %v5189 = vpop.f32.mrb[0].mxu0
        %v5190 = vadd.f32 0.0, %v5189
        %v5191 = vpop.f32.mrb[0].mxu0
        %v5192 = vpop.f32.mrb[0].mxu0
        %v5193 = vadd.f32 0.0, %v5192
        %v5194 = vpop.f32.mrb[0].mxu0
        %5195 = vmatprep.mubr.bf16.mxu0 0
        %5196 = vmatmul.mubr.bf16.gmra.mrb[0].mxu0 %v5120
        %v5197 = vpop.f32.mrb[0].mxu0
        %v5198 = vadd.f32 0.0, %v5197
        %v5199 = vpop.f32.mrb[0].mxu0
        %v5200 = vpop.f32.mrb[0].mxu0
        %v5201 = vadd.f32 0.0, %v5200
        %v5202 = vpop.f32.mrb[0].mxu0
        %5203 = vmatprep.mubr.bf16.mxu0 0
        %5204 = vmatmul.mubr.bf16.gmra.mrb[0].mxu0 %v5123
        %v5205 = vpop.f32.mrb[0].mxu0
        %v5206 = vadd.f32 0.0, %v5205
        %v5207 = vpop.f32.mrb[0].mxu0
        %v5208 = vpop.f32.mrb[0].mxu0
        %v5209 = vadd.f32 0.0, %v5208
        %v5210 = vpop.f32.mrb[0].mxu0
        %5211 = vmatprep.mubr.bf16.mxu0 0
        %5212 = vmatmul.mubr.bf16.gmra.mrb[0].mxu0 %v5126
        %v5213 = vpop.f32.mrb[0].mxu0
        %v5214 = vadd.f32 0.0, %v5213
        %v5215 = vpop.f32.mrb[0].mxu0
        %v5216 = vpop.f32.mrb[0].mxu0
        %v5217 = vadd.f32 0.0, %v5216
        %v5218 = vpop.f32.mrb[0].mxu0
        %5219 = vmatprep.mubr.bf16.mxu0 0
        %5220 = vmatmul.mubr.bf16.gmra.mrb[0].mxu0 %v5129
        %v5221 = vpop.f32.mrb[0].mxu0
        %v5222 = vadd.f32 0.0, %v5221
        %v5223 = vpop.f32.mrb[0].mxu0
        %v5224 = vpop.f32.mrb[0].mxu0
        %v5225 = vadd.f32 0.0, %v5224
        %v5226 = vpop.f32.mrb[0].mxu0
        %5227 = vdwg.mxu0
        %v5228 = vadd.f32 %v4988, %v5166
        %v5229 = vadd.f32 %v4989, %v5169
        %v5230 = vadd.f32 %v4990, %v5174
        %v5231 = vadd.f32 %v4991, %v5177
        %v5232 = vadd.f32 %v4992, %v5182
        %v5233 = vadd.f32 %v4993, %v5185
        %v5234 = vadd.f32 %v4994, %v5190
        %v5235 = vadd.f32 %v4995, %v5193
        %v5236 = vadd.f32 %v4996, %v5198
        %v5237 = vadd.f32 %v4997, %v5201
        %v5238 = vadd.f32 %v4998, %v5206
        %v5239 = vadd.f32 %v4999, %v5209
        %v5240 = vadd.f32 %v5000, %v5214
        %v5241 = vadd.f32 %v5001, %v5217
        %v5242 = vadd.f32 %v5002, %v5222
        %v5243 = vadd.f32 %v5003, %v5225
        %s5244 = scalar_lea.vmem [#allocation4], 160
        %v5245 = vld [vmem:[%s5244] sm:$0xf]
        %v5246 = vld [vmem:[%s5244 + $0x4] sm:$0xf]
        %v5247 = vld [vmem:[%s5244 + $0x8] sm:$0xf]
        %v5248 = vld [vmem:[%s5244 + $0xc] sm:$0xf]
        %v5249 = vld [vmem:[%s5244 + $0x10] sm:$0xf]
        %v5250 = vld [vmem:[%s5244 + $0x14] sm:$0xf]
        %v5251 = vld [vmem:[%s5244 + $0x18] sm:$0xf]
        %v5252 = vld [vmem:[%s5244 + $0x1c] sm:$0xf]
        %v5261 = vunpack.c.l.b16 %v5245
        %v5262 = vunpack.c.l.b16 %v5246
        %v5263 = vunpack.c.l.b16 %v5247
        %v5264 = vunpack.c.l.b16 %v5248
        %v5265 = vunpack.c.l.b16 %v5249
        %v5266 = vunpack.c.l.b16 %v5250
        %v5267 = vunpack.c.l.b16 %v5251
        %v5268 = vunpack.c.l.b16 %v5252
        %v5269 = vpack.c.b16 %v5262, %v5261
        %v5270 = vpack.c.b16 %v5264, %v5263
        %v5271 = vpack.c.b16 %v5266, %v5265
        %v5272 = vpack.c.b16 %v5268, %v5267
        %v5278 = vsel %vm676, %v5072, 0
        %5280 = vmatprep.subr.bf16.mxu0 0
        %5281 = vmatpush1.bf16.msra.mxu0 %v5269
        %5282 = vmatprep.subr.bf16.mxu0 0
        %5283 = vmatpush1.bf16.msra.mxu0 %v5270
        %5284 = vmatprep.subr.bf16.mxu0 0
        %5285 = vmatpush1.bf16.msra.mxu0 %v5271
        %5286 = vmatprep.subr.bf16.mxu0 0
        %5287 = vmatpush1.bf16.msra.mxu0 %v5272
        %5288 = vmatprep.subr.bf16.mxu0 0
        %5289 = vmatpush1.bf16.msra.mxu0 0
        %5290 = vmatprep.subr.bf16.mxu0 0
        %5291 = vmatpush1.bf16.msra.mxu0 0
        %5292 = vmatprep.subr.bf16.mxu0 0
        %5293 = vmatpush1.bf16.msra.mxu0 0
        %5294 = vmatprep.subr.bf16.mxu0 0
        %5295 = vmatpush1.bf16.msra.mxu0 0
        %5296 = vmatprep.subr.bf16.mxu0 0
        %5297 = vmatpush1.bf16.msra.mxu0 0
        %5298 = vmatprep.subr.bf16.mxu0 0
        %5299 = vmatpush1.bf16.msra.mxu0 0
        %5300 = vmatprep.subr.bf16.mxu0 0
        %5301 = vmatpush1.bf16.msra.mxu0 0
        %5302 = vmatprep.subr.bf16.mxu0 0
        %5303 = vmatpush1.bf16.msra.mxu0 0
        %5304 = vmatprep.subr.bf16.mxu0 0
        %5305 = vmatpush1.bf16.msra.mxu0 0
        %5306 = vmatprep.subr.bf16.mxu0 0
        %5307 = vmatpush1.bf16.msra.mxu0 0
        %5308 = vmatprep.subr.bf16.mxu0 0
        %5309 = vmatpush1.bf16.msra.mxu0 0
        %5310 = vmatprep.subr.bf16.mxu0 0
        %5311 = vmatpush1.bf16.msra.mxu0 0
        %5312 = vmatprep.mubr.bf16.mxu0 0
        %5313 = vmatmul.mubr.bf16.gmra.mrb[0].mxu0 %v5111
        %v5314 = vpop.f32.mrb[0].mxu0
        %v5315 = vadd.f32 0.0, %v5314
        %v5316 = vpop.f32.mrb[0].mxu0
        %v5317 = vpop.f32.mrb[0].mxu0
        %v5318 = vadd.f32 0.0, %v5317
        %v5319 = vpop.f32.mrb[0].mxu0
        %5320 = vmatprep.mubr.bf16.mxu0 0
        %5321 = vmatmul.mubr.bf16.gmra.mrb[0].mxu0 %v5114
        %v5322 = vpop.f32.mrb[0].mxu0
        %v5323 = vadd.f32 0.0, %v5322
        %v5324 = vpop.f32.mrb[0].mxu0
        %v5325 = vpop.f32.mrb[0].mxu0
        %v5326 = vadd.f32 0.0, %v5325
        %v5327 = vpop.f32.mrb[0].mxu0
        %5328 = vmatprep.mubr.bf16.mxu0 0
        %5329 = vmatmul.mubr.bf16.gmra.mrb[0].mxu0 %v5117
        %v5330 = vpop.f32.mrb[0].mxu0
        %v5331 = vadd.f32 0.0, %v5330
        %v5332 = vpop.f32.mrb[0].mxu0
        %v5333 = vpop.f32.mrb[0].mxu0
        %v5334 = vadd.f32 0.0, %v5333
        %v5335 = vpop.f32.mrb[0].mxu0
        %5336 = vmatprep.mubr.bf16.mxu0 0
        %5337 = vmatmul.mubr.bf16.gmra.mrb[0].mxu0 %v5120
        %v5338 = vpop.f32.mrb[0].mxu0
        %v5339 = vadd.f32 0.0, %v5338
        %v5340 = vpop.f32.mrb[0].mxu0
        %v5341 = vpop.f32.mrb[0].mxu0
        %v5342 = vadd.f32 0.0, %v5341
        %v5343 = vpop.f32.mrb[0].mxu0
        %5344 = vmatprep.mubr.bf16.mxu0 0
        %5345 = vmatmul.mubr.bf16.gmra.mrb[0].mxu0 %v5123
        %v5346 = vpop.f32.mrb[0].mxu0
        %v5347 = vadd.f32 0.0, %v5346
        %v5348 = vpop.f32.mrb[0].mxu0
        %v5349 = vpop.f32.mrb[0].mxu0
        %v5350 = vadd.f32 0.0, %v5349
        %v5351 = vpop.f32.mrb[0].mxu0
        %5352 = vmatprep.mubr.bf16.mxu0 0
        %5353 = vmatmul.mubr.bf16.gmra.mrb[0].mxu0 %v5126
        %v5354 = vpop.f32.mrb[0].mxu0
        %v5355 = vadd.f32 0.0, %v5354
        %v5356 = vpop.f32.mrb[0].mxu0
        %v5357 = vpop.f32.mrb[0].mxu0
        %v5358 = vadd.f32 0.0, %v5357
        %v5359 = vpop.f32.mrb[0].mxu0
        %5360 = vmatprep.mubr.bf16.mxu0 0
        %5361 = vmatmul.mubr.bf16.gmra.mrb[0].mxu0 %v5129
        %v5362 = vpop.f32.mrb[0].mxu0
        %v5363 = vadd.f32 0.0, %v5362
        %v5364 = vpop.f32.mrb[0].mxu0
        %v5365 = vpop.f32.mrb[0].mxu0
        %v5366 = vadd.f32 0.0, %v5365
        %v5367 = vpop.f32.mrb[0].mxu0
        %5368 = vmatprep.mubr.bf16.mxu0 0
        %5369 = vmatmul.mubr.bf16.gmra.mrb[0].mxu0 %v5278
        %v5370 = vpop.f32.mrb[0].mxu0
        %v5371 = vadd.f32 0.0, %v5370
        %v5372 = vpop.f32.mrb[0].mxu0
        %v5373 = vpop.f32.mrb[0].mxu0
        %v5374 = vadd.f32 0.0, %v5373
        %v5375 = vpop.f32.mrb[0].mxu0
        %5376 = vdwg.mxu0
        %v5377 = vadd.f32 %v5228, %v5315
        %v5378 = vadd.f32 %v5229, %v5318
        %v5379 = vadd.f32 %v5230, %v5323
        %v5380 = vadd.f32 %v5231, %v5326
        %v5381 = vadd.f32 %v5232, %v5331
        %v5382 = vadd.f32 %v5233, %v5334
        %v5383 = vadd.f32 %v5234, %v5339
        %v5384 = vadd.f32 %v5235, %v5342
        %v5385 = vadd.f32 %v5236, %v5347
        %v5386 = vadd.f32 %v5237, %v5350
        %v5387 = vadd.f32 %v5238, %v5355
        %v5388 = vadd.f32 %v5239, %v5358
        %v5389 = vadd.f32 %v5240, %v5363
        %v5390 = vadd.f32 %v5241, %v5366
        %v5391 = vadd.f32 %v5242, %v5371
        %v5392 = vadd.f32 %v5243, %v5374
        %s5393 = scalar_lea.vmem [#allocation4], 256
        %v5394 = vld [vmem:[%s5393] sm:$0xf]
        %v5395 = vld [vmem:[%s5393 + $0x4] sm:$0xf]
        %v5396 = vld [vmem:[%s5393 + $0x8] sm:$0xf]
        %v5397 = vld [vmem:[%s5393 + $0xc] sm:$0xf]
        %v5398 = vld [vmem:[%s5393 + $0x10] sm:$0xf]
        %v5399 = vld [vmem:[%s5393 + $0x14] sm:$0xf]
        %v5400 = vld [vmem:[%s5393 + $0x18] sm:$0xf]
        %v5401 = vld [vmem:[%s5393 + $0x1c] sm:$0xf]
        %v5410 = vunpack.c.l.b16 %v5394
        %v5411 = vunpack.c.l.b16 %v5395
        %v5412 = vunpack.c.l.b16 %v5396
        %v5413 = vunpack.c.l.b16 %v5397
        %v5414 = vunpack.c.l.b16 %v5398
        %v5415 = vunpack.c.l.b16 %v5399
        %v5416 = vunpack.c.l.b16 %v5400
        %v5417 = vunpack.c.l.b16 %v5401
        %v5418 = vpack.c.b16 %v5411, %v5410
        %v5419 = vpack.c.b16 %v5413, %v5412
        %v5420 = vpack.c.b16 %v5415, %v5414
        %v5421 = vpack.c.b16 %v5417, %v5416
        %v5427 = vsel %vm676, %v5073, 0
        %5429 = vmatprep.subr.bf16.mxu0 0
        %5430 = vmatpush1.bf16.msra.mxu0 %v5418
        %5431 = vmatprep.subr.bf16.mxu0 0
        %5432 = vmatpush1.bf16.msra.mxu0 %v5419
        %5433 = vmatprep.subr.bf16.mxu0 0
        %5434 = vmatpush1.bf16.msra.mxu0 %v5420
        %5435 = vmatprep.subr.bf16.mxu0 0
        %5436 = vmatpush1.bf16.msra.mxu0 %v5421
        %5437 = vmatprep.subr.bf16.mxu0 0
        %5438 = vmatpush1.bf16.msra.mxu0 0
        %5439 = vmatprep.subr.bf16.mxu0 0
        %5440 = vmatpush1.bf16.msra.mxu0 0
        %5441 = vmatprep.subr.bf16.mxu0 0
        %5442 = vmatpush1.bf16.msra.mxu0 0
        %5443 = vmatprep.subr.bf16.mxu0 0
        %5444 = vmatpush1.bf16.msra.mxu0 0
        %5445 = vmatprep.subr.bf16.mxu0 0
        %5446 = vmatpush1.bf16.msra.mxu0 0
        %5447 = vmatprep.subr.bf16.mxu0 0
        %5448 = vmatpush1.bf16.msra.mxu0 0
        %5449 = vmatprep.subr.bf16.mxu0 0
        %5450 = vmatpush1.bf16.msra.mxu0 0
        %5451 = vmatprep.subr.bf16.mxu0 0
        %5452 = vmatpush1.bf16.msra.mxu0 0
        %5453 = vmatprep.subr.bf16.mxu0 0
        %5454 = vmatpush1.bf16.msra.mxu0 0
        %5455 = vmatprep.subr.bf16.mxu0 0
        %5456 = vmatpush1.bf16.msra.mxu0 0
        %5457 = vmatprep.subr.bf16.mxu0 0
        %5458 = vmatpush1.bf16.msra.mxu0 0
        %5459 = vmatprep.subr.bf16.mxu0 0
        %5460 = vmatpush1.bf16.msra.mxu0 0
        %5461 = vmatprep.mubr.bf16.mxu0 0
        %5462 = vmatmul.mubr.bf16.gmra.mrb[0].mxu0 %v5114
        %v5463 = vpop.f32.mrb[0].mxu0
        %v5464 = vadd.f32 0.0, %v5463
        %v5465 = vpop.f32.mrb[0].mxu0
        %v5466 = vpop.f32.mrb[0].mxu0
        %v5467 = vadd.f32 0.0, %v5466
        %v5468 = vpop.f32.mrb[0].mxu0
        %5469 = vmatprep.mubr.bf16.mxu0 0
        %5470 = vmatmul.mubr.bf16.gmra.mrb[0].mxu0 %v5117
        %v5471 = vpop.f32.mrb[0].mxu0
        %v5472 = vadd.f32 0.0, %v5471
        %v5473 = vpop.f32.mrb[0].mxu0
        %v5474 = vpop.f32.mrb[0].mxu0
        %v5475 = vadd.f32 0.0, %v5474
        %v5476 = vpop.f32.mrb[0].mxu0
        %5477 = vmatprep.mubr.bf16.mxu0 0
        %5478 = vmatmul.mubr.bf16.gmra.mrb[0].mxu0 %v5120
        %v5479 = vpop.f32.mrb[0].mxu0
        %v5480 = vadd.f32 0.0, %v5479
        %v5481 = vpop.f32.mrb[0].mxu0
        %v5482 = vpop.f32.mrb[0].mxu0
        %v5483 = vadd.f32 0.0, %v5482
        %v5484 = vpop.f32.mrb[0].mxu0
        %5485 = vmatprep.mubr.bf16.mxu0 0
        %5486 = vmatmul.mubr.bf16.gmra.mrb[0].mxu0 %v5123
        %v5487 = vpop.f32.mrb[0].mxu0
        %v5488 = vadd.f32 0.0, %v5487
        %v5489 = vpop.f32.mrb[0].mxu0
        %v5490 = vpop.f32.mrb[0].mxu0
        %v5491 = vadd.f32 0.0, %v5490
        %v5492 = vpop.f32.mrb[0].mxu0
        %5493 = vmatprep.mubr.bf16.mxu0 0
        %5494 = vmatmul.mubr.bf16.gmra.mrb[0].mxu0 %v5126
        %v5495 = vpop.f32.mrb[0].mxu0
        %v5496 = vadd.f32 0.0, %v5495
        %v5497 = vpop.f32.mrb[0].mxu0
        %v5498 = vpop.f32.mrb[0].mxu0
        %v5499 = vadd.f32 0.0, %v5498
        %v5500 = vpop.f32.mrb[0].mxu0
        %5501 = vmatprep.mubr.bf16.mxu0 0
        %5502 = vmatmul.mubr.bf16.gmra.mrb[0].mxu0 %v5129
        %v5503 = vpop.f32.mrb[0].mxu0
        %v5504 = vadd.f32 0.0, %v5503
        %v5505 = vpop.f32.mrb[0].mxu0
        %v5506 = vpop.f32.mrb[0].mxu0
        %v5507 = vadd.f32 0.0, %v5506
        %v5508 = vpop.f32.mrb[0].mxu0
        %5509 = vmatprep.mubr.bf16.mxu0 0
        %5510 = vmatmul.mubr.bf16.gmra.mrb[0].mxu0 %v5278
        %v5511 = vpop.f32.mrb[0].mxu0
        %v5512 = vadd.f32 0.0, %v5511
        %v5513 = vpop.f32.mrb[0].mxu0
        %v5514 = vpop.f32.mrb[0].mxu0
        %v5515 = vadd.f32 0.0, %v5514
        %v5516 = vpop.f32.mrb[0].mxu0
        %5517 = vmatprep.mubr.bf16.mxu0 0
        %5518 = vmatmul.mubr.bf16.gmra.mrb[0].mxu0 %v5427
        %v5519 = vpop.f32.mrb[0].mxu0
        %v5520 = vadd.f32 0.0, %v5519
        %v5521 = vpop.f32.mrb[0].mxu0
        %v5522 = vpop.f32.mrb[0].mxu0
        %v5523 = vadd.f32 0.0, %v5522
        %v5524 = vpop.f32.mrb[0].mxu0
        %5525 = vdwg.mxu0
        %v5526 = vadd.f32 %v5377, %v5464
        %v5527 = vadd.f32 %v5378, %v5467
        %v5528 = vadd.f32 %v5379, %v5472
        %v5529 = vadd.f32 %v5380, %v5475
        %v5530 = vadd.f32 %v5381, %v5480
        %v5531 = vadd.f32 %v5382, %v5483
        %v5532 = vadd.f32 %v5383, %v5488
        %v5533 = vadd.f32 %v5384, %v5491
        %v5534 = vadd.f32 %v5385, %v5496
        %v5535 = vadd.f32 %v5386, %v5499
        %v5536 = vadd.f32 %v5387, %v5504
        %v5537 = vadd.f32 %v5388, %v5507
        %v5538 = vadd.f32 %v5389, %v5512
        %v5539 = vadd.f32 %v5390, %v5515
        %v5540 = vadd.f32 %v5391, %v5520
        %v5541 = vadd.f32 %v5392, %v5523
        %v5543 = vlaneseq
        %v5544 = vshrl.u32 %v5543, 7
        %v5545 = vsub.s32 0, %v5544
        %v5546 = vrot.slane %v783, %v5545
        %v5548 = vmul.f32 %v5526, %v5546
        %v5549 = vmul.f32 %v5527, %v5546
        %v5550 = vmul.f32 %v5528, %v5546
        %v5551 = vmul.f32 %v5529, %v5546
        %v5552 = vmul.f32 %v5530, %v5546
        %v5553 = vmul.f32 %v5531, %v5546
        %v5554 = vmul.f32 %v5532, %v5546
        %v5555 = vmul.f32 %v5533, %v5546
        %v5556 = vmul.f32 %v5534, %v5546
        %v5557 = vmul.f32 %v5535, %v5546
        %v5558 = vmul.f32 %v5536, %v5546
        %v5559 = vmul.f32 %v5537, %v5546
        %v5560 = vmul.f32 %v5538, %v5546
        %v5561 = vmul.f32 %v5539, %v5546
        %v5562 = vmul.f32 %v5540, %v5546
        %v5563 = vmul.f32 %v5541, %v5546
        %v5565 = vlaneseq
        %v5566 = vshrl.u32 %v5565, 7
        %v5567 = vsub.s32 0, %v5566
        %v5568 = vrot.slane %v784, %v5567
        %v5570 = vadd.f32 %v5548, %v5568
        %v5571 = vadd.f32 %v5549, %v5568
        %v5572 = vadd.f32 %v5550, %v5568
        %v5573 = vadd.f32 %v5551, %v5568
        %v5574 = vadd.f32 %v5552, %v5568
        %v5575 = vadd.f32 %v5553, %v5568
        %v5576 = vadd.f32 %v5554, %v5568
        %v5577 = vadd.f32 %v5555, %v5568
        %v5578 = vadd.f32 %v5556, %v5568
        %v5579 = vadd.f32 %v5557, %v5568
        %v5580 = vadd.f32 %v5558, %v5568
        %v5581 = vadd.f32 %v5559, %v5568
        %v5582 = vadd.f32 %v5560, %v5568
        %v5583 = vadd.f32 %v5561, %v5568
        %v5584 = vadd.f32 %v5562, %v5568
        %v5585 = vadd.f32 %v5563, %v5568
        %v5586 = vld [vmem:[#allocation2 + $0x10] sm:$0xff]
        %v5587 = vld [vmem:[#allocation2 + $0x18] sm:$0xff]
        %v5588 = vld [vmem:[#allocation2 + $0x20] sm:$0xff]
        %v5589 = vld [vmem:[#allocation2 + $0x28] sm:$0xff]
        %v5590 = vld [vmem:[#allocation2 + $0x30] sm:$0xff]
        %v5591 = vld [vmem:[#allocation2 + $0x38] sm:$0xff]
        %v5592 = vld [vmem:[#allocation2 + $0x40] sm:$0xff]
        %v5593 = vld [vmem:[#allocation2 + $0x48] sm:$0xff]
        %v5594 = vld [vmem:[#allocation2 + $0x50] sm:$0xff]
        %v5595 = vld [vmem:[#allocation2 + $0x58] sm:$0xff]
        %v5596 = vld [vmem:[#allocation2 + $0x60] sm:$0xff]
        %v5597 = vld [vmem:[#allocation2 + $0x68] sm:$0xff]
        %v5598 = vld [vmem:[#allocation2 + $0x70] sm:$0xff]
        %v5599 = vld [vmem:[#allocation2 + $0x78] sm:$0xff]
        %v5600 = vld [vmem:[#allocation2 + $0x80] sm:$0xff]
        %v5601 = vld [vmem:[#allocation2 + $0x88] sm:$0xff]
        %v5602 = vadd.f32 %v5570, %v5586
        %v5603 = vadd.f32 %v5571, %v5587
        %v5604 = vadd.f32 %v5572, %v5588
        %v5605 = vadd.f32 %v5573, %v5589
        %v5606 = vadd.f32 %v5574, %v5590
        %v5607 = vadd.f32 %v5575, %v5591
        %v5608 = vadd.f32 %v5576, %v5592
        %v5609 = vadd.f32 %v5577, %v5593
        %v5610 = vadd.f32 %v5578, %v5594
        %v5611 = vadd.f32 %v5579, %v5595
        %v5612 = vadd.f32 %v5580, %v5596
        %v5613 = vadd.f32 %v5581, %v5597
        %v5614 = vadd.f32 %v5582, %v5598
        %v5615 = vadd.f32 %v5583, %v5599
        %v5616 = vadd.f32 %v5584, %v5600
        %v5617 = vadd.f32 %v5585, %v5601
        %v5618 = vmax.f32 %v5602, 0.0
        %v5619 = vmax.f32 %v5603, 0.0
        %v5620 = vmax.f32 %v5604, 0.0
        %v5621 = vmax.f32 %v5605, 0.0
        %v5622 = vmax.f32 %v5606, 0.0
        %v5623 = vmax.f32 %v5607, 0.0
        %v5624 = vmax.f32 %v5608, 0.0
        %v5625 = vmax.f32 %v5609, 0.0
        %v5626 = vmax.f32 %v5610, 0.0
        %v5627 = vmax.f32 %v5611, 0.0
        %v5628 = vmax.f32 %v5612, 0.0
        %v5629 = vmax.f32 %v5613, 0.0
        %v5630 = vmax.f32 %v5614, 0.0
        %v5631 = vmax.f32 %v5615, 0.0
        %v5632 = vmax.f32 %v5616, 0.0
        %v5633 = vmax.f32 %v5617, 0.0
        %5634 = vst.msk [vmem:[%s293] sm:$0xff] %vm676, %v5618
        %5635 = vst.msk [vmem:[%s293 + $0x8] sm:$0xff] %vm676, %v5619
        %5636 = vst.msk [vmem:[%s293 + $0x10] sm:$0xff] %vm676, %v5620
        %5637 = vst.msk [vmem:[%s293 + $0x18] sm:$0xff] %vm676, %v5621
        %5638 = vst.msk [vmem:[%s293 + $0x20] sm:$0xff] %vm676, %v5622
        %5639 = vst.msk [vmem:[%s293 + $0x28] sm:$0xff] %vm676, %v5623
        %5640 = vst.msk [vmem:[%s293 + $0x30] sm:$0xff] %vm676, %v5624
        %5641 = vst.msk [vmem:[%s293 + $0x38] sm:$0xff] %vm676, %v5625
        %5642 = vst.msk [vmem:[%s293 + $0x40] sm:$0xff] %vm676, %v5626
        %5643 = vst.msk [vmem:[%s293 + $0x48] sm:$0xff] %vm676, %v5627
        %5644 = vst.msk [vmem:[%s293 + $0x50] sm:$0xff] %vm676, %v5628
        %5645 = vst.msk [vmem:[%s293 + $0x58] sm:$0xff] %vm676, %v5629
        %5646 = vst.msk [vmem:[%s293 + $0x60] sm:$0xff] %vm676, %v5630
        %5647 = vst.msk [vmem:[%s293 + $0x68] sm:$0xff] %vm676, %v5631
        %5648 = vst.msk [vmem:[%s293 + $0x70] sm:$0xff] %vm676, %v5632
        %5649 = vst.msk [vmem:[%s293 + $0x78] sm:$0xff] %vm676, %v5633
        %v5650 = vld [vmem:[#allocation3 + $0x80] sm:$0xff]
        %v5651 = vld [vmem:[#allocation3 + $0x88] sm:$0xff]
        %v5652 = vld [vmem:[#allocation3 + $0x90] sm:$0xff]
        %v5653 = vld [vmem:[#allocation3 + $0x98] sm:$0xff]
        %v5654 = vld [vmem:[#allocation3 + $0xa0] sm:$0xff]
        %v5655 = vld [vmem:[#allocation3 + $0xa8] sm:$0xff]
        %v5656 = vld [vmem:[#allocation3 + $0xb0] sm:$0xff]
        %v5657 = vld [vmem:[#allocation3 + $0xb8] sm:$0xff]
        %v5658 = vld [vmem:[#allocation3 + $0xc0] sm:$0xff]
        %v5659 = vld [vmem:[#allocation3 + $0xc8] sm:$0xff]
        %v5660 = vld [vmem:[#allocation3 + $0xd0] sm:$0xff]
        %v5661 = vld [vmem:[#allocation3 + $0xd8] sm:$0xff]
        %v5662 = vld [vmem:[#allocation3 + $0xe0] sm:$0xff]
        %v5663 = vld [vmem:[#allocation3 + $0xe8] sm:$0xff]
        %v5664 = vld [vmem:[#allocation3 + $0xf0] sm:$0xff]
        %v5665 = vld [vmem:[#allocation3 + $0xf8] sm:$0xff]
        %v5666 = vld [vmem:[#allocation3 + $0x100] sm:$0xff]
        %v5667 = vld [vmem:[#allocation3 + $0x108] sm:$0xff]
        %v5668 = vld [vmem:[#allocation3 + $0x110] sm:$0xff]
        %v5669 = vld [vmem:[#allocation3 + $0x118] sm:$0xff]
        %v5670 = vrot.slane %v5650, 7
        %v5671 = vrot.slane %v5651, 7
        %v5672 = vrot.slane %v5652, 7
        %v5673 = vrot.slane %v5653, 7
        %v5674 = vrot.slane %v5654, 7
        %v5675 = vrot.slane %v5655, 7
        %v5676 = vrot.slane %v5656, 7
        %v5677 = vrot.slane %v5657, 7
        %v5678 = vrot.slane %v5658, 7
        %v5679 = vrot.slane %v5659, 7
        %v5680 = vrot.slane %v5660, 7
        %v5681 = vrot.slane %v5661, 7
        %v5682 = vrot.slane %v5662, 7
        %v5683 = vrot.slane %v5663, 7
        %v5684 = vrot.slane %v5664, 7
        %v5685 = vrot.slane %v5665, 7
        %v5686 = vrot.slane %v5666, 7
        %v5687 = vrot.slane %v5667, 7
        %v5688 = vrot.slane %v5668, 7
        %v5689 = vrot.slane %v5669, 7
        %v5690 = vsel %vm825, %v5688, %v5689
        %v5691 = vsel %vm825, %v5687, %v5688
        %v5692 = vsel %vm825, %v5686, %v5687
        %v5693 = vsel %vm825, %v5685, %v5686
        %v5694 = vsel %vm825, %v5684, %v5685
        %v5695 = vsel %vm825, %v5683, %v5684
        %v5696 = vsel %vm825, %v5682, %v5683
        %v5697 = vsel %vm825, %v5681, %v5682
        %v5698 = vsel %vm825, %v5680, %v5681
        %v5699 = vsel %vm825, %v5679, %v5680
        %v5700 = vsel %vm825, %v5678, %v5679
        %v5701 = vsel %vm825, %v5677, %v5678
        %v5702 = vsel %vm825, %v5676, %v5677
        %v5703 = vsel %vm825, %v5675, %v5676
        %v5704 = vsel %vm825, %v5674, %v5675
        %v5705 = vsel %vm825, %v5673, %v5674
        %v5706 = vsel %vm825, %v5672, %v5673
        %v5707 = vsel %vm825, %v5671, %v5672
        %v5708 = vsel %vm825, %v5670, %v5671
        %v5709 = vsel %vm825, %v5689, %v5670
        %v5710 = vmul.f32 %v5709, %v596
        %v5711 = vmul.f32 %v5708, %v597
        %v5712 = vmul.f32 %v5707, %v598
        %v5713 = vmul.f32 %v5706, %v599
        %v5714 = vmul.f32 %v5705, %v600
        %v5715 = vmul.f32 %v5704, %v601
        %v5716 = vmul.f32 %v5703, %v602
        %v5717 = vmul.f32 %v5702, %v603
        %v5718 = vmul.f32 %v5701, %v604
        %v5719 = vmul.f32 %v5700, %v605
        %v5720 = vmul.f32 %v5699, %v606
        %v5721 = vmul.f32 %v5698, %v607
        %v5722 = vmul.f32 %v5697, %v608
        %v5723 = vmul.f32 %v5696, %v609
        %v5724 = vmul.f32 %v5695, %v610
        %v5725 = vmul.f32 %v5694, %v611
        %v5726 = vmul.f32 %v5693, %v612
        %v5727 = vmul.f32 %v5692, %v613
        %v5728 = vmul.f32 %v5691, %v614
        %v5729 = vmul.f32 %v5690, %v615
        %v5730 = vpack.c.bf16 %v5711, %v5710
        %v5731 = vpack.c.bf16 %v5713, %v5712
        %v5732 = vpack.c.bf16 %v5715, %v5714
        %v5733 = vpack.c.bf16 %v5717, %v5716
        %v5734 = vpack.c.bf16 %v5719, %v5718
        %v5735 = vpack.c.bf16 %v5721, %v5720
        %v5736 = vpack.c.bf16 %v5723, %v5722
        %v5737 = vpack.c.bf16 %v5725, %v5724
        %v5738 = vpack.c.bf16 %v5727, %v5726
        %v5739 = vpack.c.bf16 %v5729, %v5728
        %v5740 = vld [vmem:[#allocation4] sm:$0xf]
        %v5741 = vld [vmem:[#allocation4 + $0x4] sm:$0xf]
        %v5742 = vld [vmem:[#allocation4 + $0x8] sm:$0xf]
        %v5743 = vld [vmem:[#allocation4 + $0xc] sm:$0xf]
        %v5744 = vld [vmem:[#allocation4 + $0x10] sm:$0xf]
        %v5745 = vld [vmem:[#allocation4 + $0x14] sm:$0xf]
        %v5746 = vld [vmem:[#allocation4 + $0x18] sm:$0xf]
        %v5747 = vld [vmem:[#allocation4 + $0x1c] sm:$0xf]
        %v5748 = vld [vmem:[%s4099] sm:$0xf]
        %v5749 = vld [vmem:[%s4099 + $0x4] sm:$0xf]
        %v5750 = vld [vmem:[%s4099 + $0x8] sm:$0xf]
        %v5751 = vld [vmem:[%s4099 + $0xc] sm:$0xf]
        %v5752 = vld [vmem:[%s4099 + $0x10] sm:$0xf]
        %v5753 = vld [vmem:[%s4099 + $0x14] sm:$0xf]
        %v5754 = vld [vmem:[%s4099 + $0x18] sm:$0xf]
        %v5755 = vld [vmem:[%s4099 + $0x1c] sm:$0xf]
        %v5764 = vunpack.c.l.b16 %v5748
        %v5765 = vunpack.c.l.b16 %v5749
        %v5766 = vunpack.c.l.b16 %v5750
        %v5767 = vunpack.c.l.b16 %v5751
        %v5768 = vunpack.c.l.b16 %v5752
        %v5769 = vunpack.c.l.b16 %v5753
        %v5770 = vunpack.c.l.b16 %v5754
        %v5771 = vunpack.c.l.b16 %v5755
        %v5772 = vpack.c.b16 %v5765, %v5764
        %v5773 = vpack.c.b16 %v5767, %v5766
        %v5774 = vpack.c.b16 %v5769, %v5768
        %v5775 = vpack.c.b16 %v5771, %v5770
        %v5781 = vsel %vm676, %v5731, 0
        %v5784 = vsel %vm676, %v5732, 0
        %v5787 = vsel %vm676, %v5733, 0
        %v5790 = vsel %vm676, %v5734, 0
        %v5793 = vsel %vm676, %v5735, 0
        %v5796 = vsel %vm676, %v5736, 0
        %v5799 = vsel %vm676, %v5737, 0
        %v5802 = vsel %vm676, %v5738, 0
        %5804 = vmatprep.subr.bf16.mxu0 0
        %5805 = vmatpush1.bf16.msra.mxu0 %v5772
        %5806 = vmatprep.subr.bf16.mxu0 0
        %5807 = vmatpush1.bf16.msra.mxu0 %v5773
        %5808 = vmatprep.subr.bf16.mxu0 0
        %5809 = vmatpush1.bf16.msra.mxu0 %v5774
        %5810 = vmatprep.subr.bf16.mxu0 0
        %5811 = vmatpush1.bf16.msra.mxu0 %v5775
        %5812 = vmatprep.subr.bf16.mxu0 0
        %5813 = vmatpush1.bf16.msra.mxu0 0
        %5814 = vmatprep.subr.bf16.mxu0 0
        %5815 = vmatpush1.bf16.msra.mxu0 0
        %5816 = vmatprep.subr.bf16.mxu0 0
        %5817 = vmatpush1.bf16.msra.mxu0 0
        %5818 = vmatprep.subr.bf16.mxu0 0
        %5819 = vmatpush1.bf16.msra.mxu0 0
        %5820 = vmatprep.subr.bf16.mxu0 0
        %5821 = vmatpush1.bf16.msra.mxu0 0
        %5822 = vmatprep.subr.bf16.mxu0 0
        %5823 = vmatpush1.bf16.msra.mxu0 0
        %5824 = vmatprep.subr.bf16.mxu0 0
        %5825 = vmatpush1.bf16.msra.mxu0 0
        %5826 = vmatprep.subr.bf16.mxu0 0
        %5827 = vmatpush1.bf16.msra.mxu0 0
        %5828 = vmatprep.subr.bf16.mxu0 0
        %5829 = vmatpush1.bf16.msra.mxu0 0
        %5830 = vmatprep.subr.bf16.mxu0 0
        %5831 = vmatpush1.bf16.msra.mxu0 0
        %5832 = vmatprep.subr.bf16.mxu0 0
        %5833 = vmatpush1.bf16.msra.mxu0 0
        %5834 = vmatprep.subr.bf16.mxu0 0
        %5835 = vmatpush1.bf16.msra.mxu0 0
        %5836 = vmatprep.mubr.bf16.mxu0 0
        %5837 = vmatmul.mubr.bf16.gmra.mrb[0].mxu0 %v5781
        %v5838 = vpop.f32.mrb[0].mxu0
        %v5839 = vadd.f32 0.0, %v5838
        %v5840 = vpop.f32.mrb[0].mxu0
        %v5841 = vpop.f32.mrb[0].mxu0
        %v5842 = vadd.f32 0.0, %v5841
        %v5843 = vpop.f32.mrb[0].mxu0
        %5844 = vmatprep.mubr.bf16.mxu0 0
        %5845 = vmatmul.mubr.bf16.gmra.mrb[0].mxu0 %v5784
        %v5846 = vpop.f32.mrb[0].mxu0
        %v5847 = vadd.f32 0.0, %v5846
        %v5848 = vpop.f32.mrb[0].mxu0
        %v5849 = vpop.f32.mrb[0].mxu0
        %v5850 = vadd.f32 0.0, %v5849
        %v5851 = vpop.f32.mrb[0].mxu0
        %5852 = vmatprep.mubr.bf16.mxu0 0
        %5853 = vmatmul.mubr.bf16.gmra.mrb[0].mxu0 %v5787
        %v5854 = vpop.f32.mrb[0].mxu0
        %v5855 = vadd.f32 0.0, %v5854
        %v5856 = vpop.f32.mrb[0].mxu0
        %v5857 = vpop.f32.mrb[0].mxu0
        %v5858 = vadd.f32 0.0, %v5857
        %v5859 = vpop.f32.mrb[0].mxu0
        %5860 = vmatprep.mubr.bf16.mxu0 0
        %5861 = vmatmul.mubr.bf16.gmra.mrb[0].mxu0 %v5790
        %v5862 = vpop.f32.mrb[0].mxu0
        %v5863 = vadd.f32 0.0, %v5862
        %v5864 = vpop.f32.mrb[0].mxu0
        %v5865 = vpop.f32.mrb[0].mxu0
        %v5866 = vadd.f32 0.0, %v5865
        %v5867 = vpop.f32.mrb[0].mxu0
        %5868 = vmatprep.mubr.bf16.mxu0 0
        %5869 = vmatmul.mubr.bf16.gmra.mrb[0].mxu0 %v5793
        %v5870 = vpop.f32.mrb[0].mxu0
        %v5871 = vadd.f32 0.0, %v5870
        %v5872 = vpop.f32.mrb[0].mxu0
        %v5873 = vpop.f32.mrb[0].mxu0
        %v5874 = vadd.f32 0.0, %v5873
        %v5875 = vpop.f32.mrb[0].mxu0
        %5876 = vmatprep.mubr.bf16.mxu0 0
        %5877 = vmatmul.mubr.bf16.gmra.mrb[0].mxu0 %v5796
        %v5878 = vpop.f32.mrb[0].mxu0
        %v5879 = vadd.f32 0.0, %v5878
        %v5880 = vpop.f32.mrb[0].mxu0
        %v5881 = vpop.f32.mrb[0].mxu0
        %v5882 = vadd.f32 0.0, %v5881
        %v5883 = vpop.f32.mrb[0].mxu0
        %5884 = vmatprep.mubr.bf16.mxu0 0
        %5885 = vmatmul.mubr.bf16.gmra.mrb[0].mxu0 %v5799
        %v5886 = vpop.f32.mrb[0].mxu0
        %v5887 = vadd.f32 0.0, %v5886
        %v5888 = vpop.f32.mrb[0].mxu0
        %v5889 = vpop.f32.mrb[0].mxu0
        %v5890 = vadd.f32 0.0, %v5889
        %v5891 = vpop.f32.mrb[0].mxu0
        %5892 = vmatprep.mubr.bf16.mxu0 0
        %5893 = vmatmul.mubr.bf16.gmra.mrb[0].mxu0 %v5802
        %v5894 = vpop.f32.mrb[0].mxu0
        %v5895 = vadd.f32 0.0, %v5894
        %v5896 = vpop.f32.mrb[0].mxu0
        %v5897 = vpop.f32.mrb[0].mxu0
        %v5898 = vadd.f32 0.0, %v5897
        %v5899 = vpop.f32.mrb[0].mxu0
        %5900 = vdwg.mxu0
        %v5909 = vunpack.c.l.b16 %v5740
        %v5910 = vunpack.c.l.b16 %v5741
        %v5911 = vunpack.c.l.b16 %v5742
        %v5912 = vunpack.c.l.b16 %v5743
        %v5913 = vunpack.c.l.b16 %v5744
        %v5914 = vunpack.c.l.b16 %v5745
        %v5915 = vunpack.c.l.b16 %v5746
        %v5916 = vunpack.c.l.b16 %v5747
        %v5917 = vpack.c.b16 %v5910, %v5909
        %v5918 = vpack.c.b16 %v5912, %v5911
        %v5919 = vpack.c.b16 %v5914, %v5913
        %v5920 = vpack.c.b16 %v5916, %v5915
        %v5926 = vsel %vm676, %v5730, 0
        %5928 = vmatprep.subr.bf16.mxu0 0
        %5929 = vmatpush1.bf16.msra.mxu0 %v5917
        %5930 = vmatprep.subr.bf16.mxu0 0
        %5931 = vmatpush1.bf16.msra.mxu0 %v5918
        %5932 = vmatprep.subr.bf16.mxu0 0
        %5933 = vmatpush1.bf16.msra.mxu0 %v5919
        %5934 = vmatprep.subr.bf16.mxu0 0
        %5935 = vmatpush1.bf16.msra.mxu0 %v5920
        %5936 = vmatprep.subr.bf16.mxu0 0
        %5937 = vmatpush1.bf16.msra.mxu0 0
        %5938 = vmatprep.subr.bf16.mxu0 0
        %5939 = vmatpush1.bf16.msra.mxu0 0
        %5940 = vmatprep.subr.bf16.mxu0 0
        %5941 = vmatpush1.bf16.msra.mxu0 0
        %5942 = vmatprep.subr.bf16.mxu0 0
        %5943 = vmatpush1.bf16.msra.mxu0 0
        %5944 = vmatprep.subr.bf16.mxu0 0
        %5945 = vmatpush1.bf16.msra.mxu0 0
        %5946 = vmatprep.subr.bf16.mxu0 0
        %5947 = vmatpush1.bf16.msra.mxu0 0
        %5948 = vmatprep.subr.bf16.mxu0 0
        %5949 = vmatpush1.bf16.msra.mxu0 0
        %5950 = vmatprep.subr.bf16.mxu0 0
        %5951 = vmatpush1.bf16.msra.mxu0 0
        %5952 = vmatprep.subr.bf16.mxu0 0
        %5953 = vmatpush1.bf16.msra.mxu0 0
        %5954 = vmatprep.subr.bf16.mxu0 0
        %5955 = vmatpush1.bf16.msra.mxu0 0
        %5956 = vmatprep.subr.bf16.mxu0 0
        %5957 = vmatpush1.bf16.msra.mxu0 0
        %5958 = vmatprep.subr.bf16.mxu0 0
        %5959 = vmatpush1.bf16.msra.mxu0 0
        %5960 = vmatprep.mubr.bf16.mxu0 0
        %5961 = vmatmul.mubr.bf16.gmra.mrb[0].mxu0 %v5926
        %v5962 = vpop.f32.mrb[0].mxu0
        %v5963 = vadd.f32 %v5839, %v5962
        %v5964 = vpop.f32.mrb[0].mxu0
        %v5965 = vpop.f32.mrb[0].mxu0
        %v5966 = vadd.f32 %v5842, %v5965
        %v5967 = vpop.f32.mrb[0].mxu0
        %5968 = vmatprep.mubr.bf16.mxu0 0
        %5969 = vmatmul.mubr.bf16.gmra.mrb[0].mxu0 %v5781
        %v5970 = vpop.f32.mrb[0].mxu0
        %v5971 = vadd.f32 %v5847, %v5970
        %v5972 = vpop.f32.mrb[0].mxu0
        %v5973 = vpop.f32.mrb[0].mxu0
        %v5974 = vadd.f32 %v5850, %v5973
        %v5975 = vpop.f32.mrb[0].mxu0
        %5976 = vmatprep.mubr.bf16.mxu0 0
        %5977 = vmatmul.mubr.bf16.gmra.mrb[0].mxu0 %v5784
        %v5978 = vpop.f32.mrb[0].mxu0
        %v5979 = vadd.f32 %v5855, %v5978
        %v5980 = vpop.f32.mrb[0].mxu0
        %v5981 = vpop.f32.mrb[0].mxu0
        %v5982 = vadd.f32 %v5858, %v5981
        %v5983 = vpop.f32.mrb[0].mxu0
        %5984 = vmatprep.mubr.bf16.mxu0 0
        %5985 = vmatmul.mubr.bf16.gmra.mrb[0].mxu0 %v5787
        %v5986 = vpop.f32.mrb[0].mxu0
        %v5987 = vadd.f32 %v5863, %v5986
        %v5988 = vpop.f32.mrb[0].mxu0
        %v5989 = vpop.f32.mrb[0].mxu0
        %v5990 = vadd.f32 %v5866, %v5989
        %v5991 = vpop.f32.mrb[0].mxu0
        %5992 = vmatprep.mubr.bf16.mxu0 0
        %5993 = vmatmul.mubr.bf16.gmra.mrb[0].mxu0 %v5790
        %v5994 = vpop.f32.mrb[0].mxu0
        %v5995 = vadd.f32 %v5871, %v5994
        %v5996 = vpop.f32.mrb[0].mxu0
        %v5997 = vpop.f32.mrb[0].mxu0
        %v5998 = vadd.f32 %v5874, %v5997
        %v5999 = vpop.f32.mrb[0].mxu0
        %6000 = vmatprep.mubr.bf16.mxu0 0
        %6001 = vmatmul.mubr.bf16.gmra.mrb[0].mxu0 %v5793
        %v6002 = vpop.f32.mrb[0].mxu0
        %v6003 = vadd.f32 %v5879, %v6002
        %v6004 = vpop.f32.mrb[0].mxu0
        %v6005 = vpop.f32.mrb[0].mxu0
        %v6006 = vadd.f32 %v5882, %v6005
        %v6007 = vpop.f32.mrb[0].mxu0
        %6008 = vmatprep.mubr.bf16.mxu0 0
        %6009 = vmatmul.mubr.bf16.gmra.mrb[0].mxu0 %v5796
        %v6010 = vpop.f32.mrb[0].mxu0
        %v6011 = vadd.f32 %v5887, %v6010
        %v6012 = vpop.f32.mrb[0].mxu0
        %v6013 = vpop.f32.mrb[0].mxu0
        %v6014 = vadd.f32 %v5890, %v6013
        %v6015 = vpop.f32.mrb[0].mxu0
        %6016 = vmatprep.mubr.bf16.mxu0 0
        %6017 = vmatmul.mubr.bf16.gmra.mrb[0].mxu0 %v5799
        %v6018 = vpop.f32.mrb[0].mxu0
        %v6019 = vadd.f32 %v5895, %v6018
        %v6020 = vpop.f32.mrb[0].mxu0
        %v6021 = vpop.f32.mrb[0].mxu0
        %v6022 = vadd.f32 %v5898, %v6021
        %v6023 = vpop.f32.mrb[0].mxu0
        %6024 = vdwg.mxu0
        %v6025 = vld [vmem:[%s4377] sm:$0xf]
        %v6026 = vld [vmem:[%s4377 + $0x4] sm:$0xf]
        %v6027 = vld [vmem:[%s4377 + $0x8] sm:$0xf]
        %v6028 = vld [vmem:[%s4377 + $0xc] sm:$0xf]
        %v6029 = vld [vmem:[%s4377 + $0x10] sm:$0xf]
        %v6030 = vld [vmem:[%s4377 + $0x14] sm:$0xf]
        %v6031 = vld [vmem:[%s4377 + $0x18] sm:$0xf]
        %v6032 = vld [vmem:[%s4377 + $0x1c] sm:$0xf]
        %v6041 = vunpack.c.l.b16 %v6025
        %v6042 = vunpack.c.l.b16 %v6026
        %v6043 = vunpack.c.l.b16 %v6027
        %v6044 = vunpack.c.l.b16 %v6028
        %v6045 = vunpack.c.l.b16 %v6029
        %v6046 = vunpack.c.l.b16 %v6030
        %v6047 = vunpack.c.l.b16 %v6031
        %v6048 = vunpack.c.l.b16 %v6032
        %v6049 = vpack.c.b16 %v6042, %v6041
        %v6050 = vpack.c.b16 %v6044, %v6043
        %v6051 = vpack.c.b16 %v6046, %v6045
        %v6052 = vpack.c.b16 %v6048, %v6047
        %v6058 = vsel %vm676, %v5739, 0
        %6060 = vmatprep.subr.bf16.mxu0 0
        %6061 = vmatpush1.bf16.msra.mxu0 %v6049
        %6062 = vmatprep.subr.bf16.mxu0 0
        %6063 = vmatpush1.bf16.msra.mxu0 %v6050
        %6064 = vmatprep.subr.bf16.mxu0 0
        %6065 = vmatpush1.bf16.msra.mxu0 %v6051
        %6066 = vmatprep.subr.bf16.mxu0 0
        %6067 = vmatpush1.bf16.msra.mxu0 %v6052
        %6068 = vmatprep.subr.bf16.mxu0 0
        %6069 = vmatpush1.bf16.msra.mxu0 0
        %6070 = vmatprep.subr.bf16.mxu0 0
        %6071 = vmatpush1.bf16.msra.mxu0 0
        %6072 = vmatprep.subr.bf16.mxu0 0
        %6073 = vmatpush1.bf16.msra.mxu0 0
        %6074 = vmatprep.subr.bf16.mxu0 0
        %6075 = vmatpush1.bf16.msra.mxu0 0
        %6076 = vmatprep.subr.bf16.mxu0 0
        %6077 = vmatpush1.bf16.msra.mxu0 0
        %6078 = vmatprep.subr.bf16.mxu0 0
        %6079 = vmatpush1.bf16.msra.mxu0 0
        %6080 = vmatprep.subr.bf16.mxu0 0
        %6081 = vmatpush1.bf16.msra.mxu0 0
        %6082 = vmatprep.subr.bf16.mxu0 0
        %6083 = vmatpush1.bf16.msra.mxu0 0
        %6084 = vmatprep.subr.bf16.mxu0 0
        %6085 = vmatpush1.bf16.msra.mxu0 0
        %6086 = vmatprep.subr.bf16.mxu0 0
        %6087 = vmatpush1.bf16.msra.mxu0 0
        %6088 = vmatprep.subr.bf16.mxu0 0
        %6089 = vmatpush1.bf16.msra.mxu0 0
        %6090 = vmatprep.subr.bf16.mxu0 0
        %6091 = vmatpush1.bf16.msra.mxu0 0
        %6092 = vmatprep.mubr.bf16.mxu0 0
        %6093 = vmatmul.mubr.bf16.gmra.mrb[0].mxu0 %v5784
        %v6094 = vpop.f32.mrb[0].mxu0
        %v6095 = vadd.f32 0.0, %v6094
        %v6096 = vpop.f32.mrb[0].mxu0
        %v6097 = vpop.f32.mrb[0].mxu0
        %v6098 = vadd.f32 0.0, %v6097
        %v6099 = vpop.f32.mrb[0].mxu0
        %6100 = vmatprep.mubr.bf16.mxu0 0
        %6101 = vmatmul.mubr.bf16.gmra.mrb[0].mxu0 %v5787
        %v6102 = vpop.f32.mrb[0].mxu0
        %v6103 = vadd.f32 0.0, %v6102
        %v6104 = vpop.f32.mrb[0].mxu0
        %v6105 = vpop.f32.mrb[0].mxu0
        %v6106 = vadd.f32 0.0, %v6105
        %v6107 = vpop.f32.mrb[0].mxu0
        %6108 = vmatprep.mubr.bf16.mxu0 0
        %6109 = vmatmul.mubr.bf16.gmra.mrb[0].mxu0 %v5790
        %v6110 = vpop.f32.mrb[0].mxu0
        %v6111 = vadd.f32 0.0, %v6110
        %v6112 = vpop.f32.mrb[0].mxu0
        %v6113 = vpop.f32.mrb[0].mxu0
        %v6114 = vadd.f32 0.0, %v6113
        %v6115 = vpop.f32.mrb[0].mxu0
        %6116 = vmatprep.mubr.bf16.mxu0 0
        %6117 = vmatmul.mubr.bf16.gmra.mrb[0].mxu0 %v5793
        %v6118 = vpop.f32.mrb[0].mxu0
        %v6119 = vadd.f32 0.0, %v6118
        %v6120 = vpop.f32.mrb[0].mxu0
        %v6121 = vpop.f32.mrb[0].mxu0
        %v6122 = vadd.f32 0.0, %v6121
        %v6123 = vpop.f32.mrb[0].mxu0
        %6124 = vmatprep.mubr.bf16.mxu0 0
        %6125 = vmatmul.mubr.bf16.gmra.mrb[0].mxu0 %v5796
        %v6126 = vpop.f32.mrb[0].mxu0
        %v6127 = vadd.f32 0.0, %v6126
        %v6128 = vpop.f32.mrb[0].mxu0
        %v6129 = vpop.f32.mrb[0].mxu0
        %v6130 = vadd.f32 0.0, %v6129
        %v6131 = vpop.f32.mrb[0].mxu0
        %6132 = vmatprep.mubr.bf16.mxu0 0
        %6133 = vmatmul.mubr.bf16.gmra.mrb[0].mxu0 %v5799
        %v6134 = vpop.f32.mrb[0].mxu0
        %v6135 = vadd.f32 0.0, %v6134
        %v6136 = vpop.f32.mrb[0].mxu0
        %v6137 = vpop.f32.mrb[0].mxu0
        %v6138 = vadd.f32 0.0, %v6137
        %v6139 = vpop.f32.mrb[0].mxu0
        %6140 = vmatprep.mubr.bf16.mxu0 0
        %6141 = vmatmul.mubr.bf16.gmra.mrb[0].mxu0 %v5802
        %v6142 = vpop.f32.mrb[0].mxu0
        %v6143 = vadd.f32 0.0, %v6142
        %v6144 = vpop.f32.mrb[0].mxu0
        %v6145 = vpop.f32.mrb[0].mxu0
        %v6146 = vadd.f32 0.0, %v6145
        %v6147 = vpop.f32.mrb[0].mxu0
        %6148 = vmatprep.mubr.bf16.mxu0 0
        %6149 = vmatmul.mubr.bf16.gmra.mrb[0].mxu0 %v6058
        %v6150 = vpop.f32.mrb[0].mxu0
        %v6151 = vadd.f32 0.0, %v6150
        %v6152 = vpop.f32.mrb[0].mxu0
        %v6153 = vpop.f32.mrb[0].mxu0
        %v6154 = vadd.f32 0.0, %v6153
        %v6155 = vpop.f32.mrb[0].mxu0
        %6156 = vdwg.mxu0
        %v6157 = vadd.f32 %v5963, %v6095
        %v6158 = vadd.f32 %v5966, %v6098
        %v6159 = vadd.f32 %v5971, %v6103
        %v6160 = vadd.f32 %v5974, %v6106
        %v6161 = vadd.f32 %v5979, %v6111
        %v6162 = vadd.f32 %v5982, %v6114
        %v6163 = vadd.f32 %v5987, %v6119
        %v6164 = vadd.f32 %v5990, %v6122
        %v6165 = vadd.f32 %v5995, %v6127
        %v6166 = vadd.f32 %v5998, %v6130
        %v6167 = vadd.f32 %v6003, %v6135
        %v6168 = vadd.f32 %v6006, %v6138
        %v6169 = vadd.f32 %v6011, %v6143
        %v6170 = vadd.f32 %v6014, %v6146
        %v6171 = vadd.f32 %v6019, %v6151
        %v6172 = vadd.f32 %v6022, %v6154
        %v6173 = vpack.c.bf16 %v5651, %v5650
        %v6174 = vpack.c.bf16 %v5653, %v5652
        %v6175 = vpack.c.bf16 %v5655, %v5654
        %v6176 = vpack.c.bf16 %v5657, %v5656
        %v6177 = vpack.c.bf16 %v5659, %v5658
        %v6178 = vpack.c.bf16 %v5661, %v5660
        %v6179 = vpack.c.bf16 %v5663, %v5662
        %v6180 = vpack.c.bf16 %v5665, %v5664
        %v6181 = vpack.c.bf16 %v5667, %v5666
        %v6182 = vpack.c.bf16 %v5669, %v5668
        %v6183 = vld [vmem:[%s4536] sm:$0xf]
        %v6184 = vld [vmem:[%s4536 + $0x4] sm:$0xf]
        %v6185 = vld [vmem:[%s4536 + $0x8] sm:$0xf]
        %v6186 = vld [vmem:[%s4536 + $0xc] sm:$0xf]
        %v6187 = vld [vmem:[%s4536 + $0x10] sm:$0xf]
        %v6188 = vld [vmem:[%s4536 + $0x14] sm:$0xf]
        %v6189 = vld [vmem:[%s4536 + $0x18] sm:$0xf]
        %v6190 = vld [vmem:[%s4536 + $0x1c] sm:$0xf]
        %v6199 = vunpack.c.l.b16 %v6183
        %v6200 = vunpack.c.l.b16 %v6184
        %v6201 = vunpack.c.l.b16 %v6185
        %v6202 = vunpack.c.l.b16 %v6186
        %v6203 = vunpack.c.l.b16 %v6187
        %v6204 = vunpack.c.l.b16 %v6188
        %v6205 = vunpack.c.l.b16 %v6189
        %v6206 = vunpack.c.l.b16 %v6190
        %v6207 = vpack.c.b16 %v6200, %v6199
        %v6208 = vpack.c.b16 %v6202, %v6201
        %v6209 = vpack.c.b16 %v6204, %v6203
        %v6210 = vpack.c.b16 %v6206, %v6205
        %v6216 = vsel %vm676, %v6173, 0
        %v6219 = vsel %vm676, %v6174, 0
        %v6222 = vsel %vm676, %v6175, 0
        %v6225 = vsel %vm676, %v6176, 0
        %v6228 = vsel %vm676, %v6177, 0
        %v6231 = vsel %vm676, %v6178, 0
        %v6234 = vsel %vm676, %v6179, 0
        %v6237 = vsel %vm676, %v6180, 0
        %6239 = vmatprep.subr.bf16.mxu0 0
        %6240 = vmatpush1.bf16.msra.mxu0 %v6207
        %6241 = vmatprep.subr.bf16.mxu0 0
        %6242 = vmatpush1.bf16.msra.mxu0 %v6208
        %6243 = vmatprep.subr.bf16.mxu0 0
        %6244 = vmatpush1.bf16.msra.mxu0 %v6209
        %6245 = vmatprep.subr.bf16.mxu0 0
        %6246 = vmatpush1.bf16.msra.mxu0 %v6210
        %6247 = vmatprep.subr.bf16.mxu0 0
        %6248 = vmatpush1.bf16.msra.mxu0 0
        %6249 = vmatprep.subr.bf16.mxu0 0
        %6250 = vmatpush1.bf16.msra.mxu0 0
        %6251 = vmatprep.subr.bf16.mxu0 0
        %6252 = vmatpush1.bf16.msra.mxu0 0
        %6253 = vmatprep.subr.bf16.mxu0 0
        %6254 = vmatpush1.bf16.msra.mxu0 0
        %6255 = vmatprep.subr.bf16.mxu0 0
        %6256 = vmatpush1.bf16.msra.mxu0 0
        %6257 = vmatprep.subr.bf16.mxu0 0
        %6258 = vmatpush1.bf16.msra.mxu0 0
        %6259 = vmatprep.subr.bf16.mxu0 0
        %6260 = vmatpush1.bf16.msra.mxu0 0
        %6261 = vmatprep.subr.bf16.mxu0 0
        %6262 = vmatpush1.bf16.msra.mxu0 0
        %6263 = vmatprep.subr.bf16.mxu0 0
        %6264 = vmatpush1.bf16.msra.mxu0 0
        %6265 = vmatprep.subr.bf16.mxu0 0
        %6266 = vmatpush1.bf16.msra.mxu0 0
        %6267 = vmatprep.subr.bf16.mxu0 0
        %6268 = vmatpush1.bf16.msra.mxu0 0
        %6269 = vmatprep.subr.bf16.mxu0 0
        %6270 = vmatpush1.bf16.msra.mxu0 0
        %6271 = vmatprep.mubr.bf16.mxu0 0
        %6272 = vmatmul.mubr.bf16.gmra.mrb[0].mxu0 %v6216
        %v6273 = vpop.f32.mrb[0].mxu0
        %v6274 = vadd.f32 0.0, %v6273
        %v6275 = vpop.f32.mrb[0].mxu0
        %v6276 = vpop.f32.mrb[0].mxu0
        %v6277 = vadd.f32 0.0, %v6276
        %v6278 = vpop.f32.mrb[0].mxu0
        %6279 = vmatprep.mubr.bf16.mxu0 0
        %6280 = vmatmul.mubr.bf16.gmra.mrb[0].mxu0 %v6219
        %v6281 = vpop.f32.mrb[0].mxu0
        %v6282 = vadd.f32 0.0, %v6281
        %v6283 = vpop.f32.mrb[0].mxu0
        %v6284 = vpop.f32.mrb[0].mxu0
        %v6285 = vadd.f32 0.0, %v6284
        %v6286 = vpop.f32.mrb[0].mxu0
        %6287 = vmatprep.mubr.bf16.mxu0 0
        %6288 = vmatmul.mubr.bf16.gmra.mrb[0].mxu0 %v6222
        %v6289 = vpop.f32.mrb[0].mxu0
        %v6290 = vadd.f32 0.0, %v6289
        %v6291 = vpop.f32.mrb[0].mxu0
        %v6292 = vpop.f32.mrb[0].mxu0
        %v6293 = vadd.f32 0.0, %v6292
        %v6294 = vpop.f32.mrb[0].mxu0
        %6295 = vmatprep.mubr.bf16.mxu0 0
        %6296 = vmatmul.mubr.bf16.gmra.mrb[0].mxu0 %v6225
        %v6297 = vpop.f32.mrb[0].mxu0
        %v6298 = vadd.f32 0.0, %v6297
        %v6299 = vpop.f32.mrb[0].mxu0
        %v6300 = vpop.f32.mrb[0].mxu0
        %v6301 = vadd.f32 0.0, %v6300
        %v6302 = vpop.f32.mrb[0].mxu0
        %6303 = vmatprep.mubr.bf16.mxu0 0
        %6304 = vmatmul.mubr.bf16.gmra.mrb[0].mxu0 %v6228
        %v6305 = vpop.f32.mrb[0].mxu0
        %v6306 = vadd.f32 0.0, %v6305
        %v6307 = vpop.f32.mrb[0].mxu0
        %v6308 = vpop.f32.mrb[0].mxu0
        %v6309 = vadd.f32 0.0, %v6308
        %v6310 = vpop.f32.mrb[0].mxu0
        %6311 = vmatprep.mubr.bf16.mxu0 0
        %6312 = vmatmul.mubr.bf16.gmra.mrb[0].mxu0 %v6231
        %v6313 = vpop.f32.mrb[0].mxu0
        %v6314 = vadd.f32 0.0, %v6313
        %v6315 = vpop.f32.mrb[0].mxu0
        %v6316 = vpop.f32.mrb[0].mxu0
        %v6317 = vadd.f32 0.0, %v6316
        %v6318 = vpop.f32.mrb[0].mxu0
        %6319 = vmatprep.mubr.bf16.mxu0 0
        %6320 = vmatmul.mubr.bf16.gmra.mrb[0].mxu0 %v6234
        %v6321 = vpop.f32.mrb[0].mxu0
        %v6322 = vadd.f32 0.0, %v6321
        %v6323 = vpop.f32.mrb[0].mxu0
        %v6324 = vpop.f32.mrb[0].mxu0
        %v6325 = vadd.f32 0.0, %v6324
        %v6326 = vpop.f32.mrb[0].mxu0
        %6327 = vmatprep.mubr.bf16.mxu0 0
        %6328 = vmatmul.mubr.bf16.gmra.mrb[0].mxu0 %v6237
        %v6329 = vpop.f32.mrb[0].mxu0
        %v6330 = vadd.f32 0.0, %v6329
        %v6331 = vpop.f32.mrb[0].mxu0
        %v6332 = vpop.f32.mrb[0].mxu0
        %v6333 = vadd.f32 0.0, %v6332
        %v6334 = vpop.f32.mrb[0].mxu0
        %6335 = vdwg.mxu0
        %v6336 = vadd.f32 %v6157, %v6274
        %v6337 = vadd.f32 %v6158, %v6277
        %v6338 = vadd.f32 %v6159, %v6282
        %v6339 = vadd.f32 %v6160, %v6285
        %v6340 = vadd.f32 %v6161, %v6290
        %v6341 = vadd.f32 %v6162, %v6293
        %v6342 = vadd.f32 %v6163, %v6298
        %v6343 = vadd.f32 %v6164, %v6301
        %v6344 = vadd.f32 %v6165, %v6306
        %v6345 = vadd.f32 %v6166, %v6309
        %v6346 = vadd.f32 %v6167, %v6314
        %v6347 = vadd.f32 %v6168, %v6317
        %v6348 = vadd.f32 %v6169, %v6322
        %v6349 = vadd.f32 %v6170, %v6325
        %v6350 = vadd.f32 %v6171, %v6330
        %v6351 = vadd.f32 %v6172, %v6333
        %v6352 = vld [vmem:[%s4706] sm:$0xf]
        %v6353 = vld [vmem:[%s4706 + $0x4] sm:$0xf]
        %v6354 = vld [vmem:[%s4706 + $0x8] sm:$0xf]
        %v6355 = vld [vmem:[%s4706 + $0xc] sm:$0xf]
        %v6356 = vld [vmem:[%s4706 + $0x10] sm:$0xf]
        %v6357 = vld [vmem:[%s4706 + $0x14] sm:$0xf]
        %v6358 = vld [vmem:[%s4706 + $0x18] sm:$0xf]
        %v6359 = vld [vmem:[%s4706 + $0x1c] sm:$0xf]
        %v6368 = vunpack.c.l.b16 %v6352
        %v6369 = vunpack.c.l.b16 %v6353
        %v6370 = vunpack.c.l.b16 %v6354
        %v6371 = vunpack.c.l.b16 %v6355
        %v6372 = vunpack.c.l.b16 %v6356
        %v6373 = vunpack.c.l.b16 %v6357
        %v6374 = vunpack.c.l.b16 %v6358
        %v6375 = vunpack.c.l.b16 %v6359
        %v6376 = vpack.c.b16 %v6369, %v6368
        %v6377 = vpack.c.b16 %v6371, %v6370
        %v6378 = vpack.c.b16 %v6373, %v6372
        %v6379 = vpack.c.b16 %v6375, %v6374
        %v6385 = vsel %vm676, %v6181, 0
        %6387 = vmatprep.subr.bf16.mxu0 0
        %6388 = vmatpush1.bf16.msra.mxu0 %v6376
        %6389 = vmatprep.subr.bf16.mxu0 0
        %6390 = vmatpush1.bf16.msra.mxu0 %v6377
        %6391 = vmatprep.subr.bf16.mxu0 0
        %6392 = vmatpush1.bf16.msra.mxu0 %v6378
        %6393 = vmatprep.subr.bf16.mxu0 0
        %6394 = vmatpush1.bf16.msra.mxu0 %v6379
        %6395 = vmatprep.subr.bf16.mxu0 0
        %6396 = vmatpush1.bf16.msra.mxu0 0
        %6397 = vmatprep.subr.bf16.mxu0 0
        %6398 = vmatpush1.bf16.msra.mxu0 0
        %6399 = vmatprep.subr.bf16.mxu0 0
        %6400 = vmatpush1.bf16.msra.mxu0 0
        %6401 = vmatprep.subr.bf16.mxu0 0
        %6402 = vmatpush1.bf16.msra.mxu0 0
        %6403 = vmatprep.subr.bf16.mxu0 0
        %6404 = vmatpush1.bf16.msra.mxu0 0
        %6405 = vmatprep.subr.bf16.mxu0 0
        %6406 = vmatpush1.bf16.msra.mxu0 0
        %6407 = vmatprep.subr.bf16.mxu0 0
        %6408 = vmatpush1.bf16.msra.mxu0 0
        %6409 = vmatprep.subr.bf16.mxu0 0
        %6410 = vmatpush1.bf16.msra.mxu0 0
        %6411 = vmatprep.subr.bf16.mxu0 0
        %6412 = vmatpush1.bf16.msra.mxu0 0
        %6413 = vmatprep.subr.bf16.mxu0 0
        %6414 = vmatpush1.bf16.msra.mxu0 0
        %6415 = vmatprep.subr.bf16.mxu0 0
        %6416 = vmatpush1.bf16.msra.mxu0 0
        %6417 = vmatprep.subr.bf16.mxu0 0
        %6418 = vmatpush1.bf16.msra.mxu0 0
        %6419 = vmatprep.mubr.bf16.mxu0 0
        %6420 = vmatmul.mubr.bf16.gmra.mrb[0].mxu0 %v6219
        %v6421 = vpop.f32.mrb[0].mxu0
        %v6422 = vadd.f32 0.0, %v6421
        %v6423 = vpop.f32.mrb[0].mxu0
        %v6424 = vpop.f32.mrb[0].mxu0
        %v6425 = vadd.f32 0.0, %v6424
        %v6426 = vpop.f32.mrb[0].mxu0
        %6427 = vmatprep.mubr.bf16.mxu0 0
        %6428 = vmatmul.mubr.bf16.gmra.mrb[0].mxu0 %v6222
        %v6429 = vpop.f32.mrb[0].mxu0
        %v6430 = vadd.f32 0.0, %v6429
        %v6431 = vpop.f32.mrb[0].mxu0
        %v6432 = vpop.f32.mrb[0].mxu0
        %v6433 = vadd.f32 0.0, %v6432
        %v6434 = vpop.f32.mrb[0].mxu0
        %6435 = vmatprep.mubr.bf16.mxu0 0
        %6436 = vmatmul.mubr.bf16.gmra.mrb[0].mxu0 %v6225
        %v6437 = vpop.f32.mrb[0].mxu0
        %v6438 = vadd.f32 0.0, %v6437
        %v6439 = vpop.f32.mrb[0].mxu0
        %v6440 = vpop.f32.mrb[0].mxu0
        %v6441 = vadd.f32 0.0, %v6440
        %v6442 = vpop.f32.mrb[0].mxu0
        %6443 = vmatprep.mubr.bf16.mxu0 0
        %6444 = vmatmul.mubr.bf16.gmra.mrb[0].mxu0 %v6228
        %v6445 = vpop.f32.mrb[0].mxu0
        %v6446 = vadd.f32 0.0, %v6445
        %v6447 = vpop.f32.mrb[0].mxu0
        %v6448 = vpop.f32.mrb[0].mxu0
        %v6449 = vadd.f32 0.0, %v6448
        %v6450 = vpop.f32.mrb[0].mxu0
        %6451 = vmatprep.mubr.bf16.mxu0 0
        %6452 = vmatmul.mubr.bf16.gmra.mrb[0].mxu0 %v6231
        %v6453 = vpop.f32.mrb[0].mxu0
        %v6454 = vadd.f32 0.0, %v6453
        %v6455 = vpop.f32.mrb[0].mxu0
        %v6456 = vpop.f32.mrb[0].mxu0
        %v6457 = vadd.f32 0.0, %v6456
        %v6458 = vpop.f32.mrb[0].mxu0
        %6459 = vmatprep.mubr.bf16.mxu0 0
        %6460 = vmatmul.mubr.bf16.gmra.mrb[0].mxu0 %v6234
        %v6461 = vpop.f32.mrb[0].mxu0
        %v6462 = vadd.f32 0.0, %v6461
        %v6463 = vpop.f32.mrb[0].mxu0
        %v6464 = vpop.f32.mrb[0].mxu0
        %v6465 = vadd.f32 0.0, %v6464
        %v6466 = vpop.f32.mrb[0].mxu0
        %6467 = vmatprep.mubr.bf16.mxu0 0
        %6468 = vmatmul.mubr.bf16.gmra.mrb[0].mxu0 %v6237
        %v6469 = vpop.f32.mrb[0].mxu0
        %v6470 = vadd.f32 0.0, %v6469
        %v6471 = vpop.f32.mrb[0].mxu0
        %v6472 = vpop.f32.mrb[0].mxu0
        %v6473 = vadd.f32 0.0, %v6472
        %v6474 = vpop.f32.mrb[0].mxu0
        %6475 = vmatprep.mubr.bf16.mxu0 0
        %6476 = vmatmul.mubr.bf16.gmra.mrb[0].mxu0 %v6385
        %v6477 = vpop.f32.mrb[0].mxu0
        %v6478 = vadd.f32 0.0, %v6477
        %v6479 = vpop.f32.mrb[0].mxu0
        %v6480 = vpop.f32.mrb[0].mxu0
        %v6481 = vadd.f32 0.0, %v6480
        %v6482 = vpop.f32.mrb[0].mxu0
        %6483 = vdwg.mxu0
        %v6484 = vadd.f32 %v6336, %v6422
        %v6485 = vadd.f32 %v6337, %v6425
        %v6486 = vadd.f32 %v6338, %v6430
        %v6487 = vadd.f32 %v6339, %v6433
        %v6488 = vadd.f32 %v6340, %v6438
        %v6489 = vadd.f32 %v6341, %v6441
        %v6490 = vadd.f32 %v6342, %v6446
        %v6491 = vadd.f32 %v6343, %v6449
        %v6492 = vadd.f32 %v6344, %v6454
        %v6493 = vadd.f32 %v6345, %v6457
        %v6494 = vadd.f32 %v6346, %v6462
        %v6495 = vadd.f32 %v6347, %v6465
        %v6496 = vadd.f32 %v6348, %v6470
        %v6497 = vadd.f32 %v6349, %v6473
        %v6498 = vadd.f32 %v6350, %v6478
        %v6499 = vadd.f32 %v6351, %v6481
        %v6500 = vld [vmem:[%s4855] sm:$0xf]
        %v6501 = vld [vmem:[%s4855 + $0x4] sm:$0xf]
        %v6502 = vld [vmem:[%s4855 + $0x8] sm:$0xf]
        %v6503 = vld [vmem:[%s4855 + $0xc] sm:$0xf]
        %v6504 = vld [vmem:[%s4855 + $0x10] sm:$0xf]
        %v6505 = vld [vmem:[%s4855 + $0x14] sm:$0xf]
        %v6506 = vld [vmem:[%s4855 + $0x18] sm:$0xf]
        %v6507 = vld [vmem:[%s4855 + $0x1c] sm:$0xf]
        %v6516 = vunpack.c.l.b16 %v6500
        %v6517 = vunpack.c.l.b16 %v6501
        %v6518 = vunpack.c.l.b16 %v6502
        %v6519 = vunpack.c.l.b16 %v6503
        %v6520 = vunpack.c.l.b16 %v6504
        %v6521 = vunpack.c.l.b16 %v6505
        %v6522 = vunpack.c.l.b16 %v6506
        %v6523 = vunpack.c.l.b16 %v6507
        %v6524 = vpack.c.b16 %v6517, %v6516
        %v6525 = vpack.c.b16 %v6519, %v6518
        %v6526 = vpack.c.b16 %v6521, %v6520
        %v6527 = vpack.c.b16 %v6523, %v6522
        %v6533 = vsel %vm676, %v6182, 0
        %6535 = vmatprep.subr.bf16.mxu0 0
        %6536 = vmatpush1.bf16.msra.mxu0 %v6524
        %6537 = vmatprep.subr.bf16.mxu0 0
        %6538 = vmatpush1.bf16.msra.mxu0 %v6525
        %6539 = vmatprep.subr.bf16.mxu0 0
        %6540 = vmatpush1.bf16.msra.mxu0 %v6526
        %6541 = vmatprep.subr.bf16.mxu0 0
        %6542 = vmatpush1.bf16.msra.mxu0 %v6527
        %6543 = vmatprep.subr.bf16.mxu0 0
        %6544 = vmatpush1.bf16.msra.mxu0 0
        %6545 = vmatprep.subr.bf16.mxu0 0
        %6546 = vmatpush1.bf16.msra.mxu0 0
        %6547 = vmatprep.subr.bf16.mxu0 0
        %6548 = vmatpush1.bf16.msra.mxu0 0
        %6549 = vmatprep.subr.bf16.mxu0 0
        %6550 = vmatpush1.bf16.msra.mxu0 0
        %6551 = vmatprep.subr.bf16.mxu0 0
        %6552 = vmatpush1.bf16.msra.mxu0 0
        %6553 = vmatprep.subr.bf16.mxu0 0
        %6554 = vmatpush1.bf16.msra.mxu0 0
        %6555 = vmatprep.subr.bf16.mxu0 0
        %6556 = vmatpush1.bf16.msra.mxu0 0
        %6557 = vmatprep.subr.bf16.mxu0 0
        %6558 = vmatpush1.bf16.msra.mxu0 0
        %6559 = vmatprep.subr.bf16.mxu0 0
        %6560 = vmatpush1.bf16.msra.mxu0 0
        %6561 = vmatprep.subr.bf16.mxu0 0
        %6562 = vmatpush1.bf16.msra.mxu0 0
        %6563 = vmatprep.subr.bf16.mxu0 0
        %6564 = vmatpush1.bf16.msra.mxu0 0
        %6565 = vmatprep.subr.bf16.mxu0 0
        %6566 = vmatpush1.bf16.msra.mxu0 0
        %6567 = vmatprep.mubr.bf16.mxu0 0
        %6568 = vmatmul.mubr.bf16.gmra.mrb[0].mxu0 %v6222
        %v6569 = vpop.f32.mrb[0].mxu0
        %v6570 = vadd.f32 0.0, %v6569
        %v6571 = vpop.f32.mrb[0].mxu0
        %v6572 = vpop.f32.mrb[0].mxu0
        %v6573 = vadd.f32 0.0, %v6572
        %v6574 = vpop.f32.mrb[0].mxu0
        %6575 = vmatprep.mubr.bf16.mxu0 0
        %6576 = vmatmul.mubr.bf16.gmra.mrb[0].mxu0 %v6225
        %v6577 = vpop.f32.mrb[0].mxu0
        %v6578 = vadd.f32 0.0, %v6577
        %v6579 = vpop.f32.mrb[0].mxu0
        %v6580 = vpop.f32.mrb[0].mxu0
        %v6581 = vadd.f32 0.0, %v6580
        %v6582 = vpop.f32.mrb[0].mxu0
        %6583 = vmatprep.mubr.bf16.mxu0 0
        %6584 = vmatmul.mubr.bf16.gmra.mrb[0].mxu0 %v6228
        %v6585 = vpop.f32.mrb[0].mxu0
        %v6586 = vadd.f32 0.0, %v6585
        %v6587 = vpop.f32.mrb[0].mxu0
        %v6588 = vpop.f32.mrb[0].mxu0
        %v6589 = vadd.f32 0.0, %v6588
        %v6590 = vpop.f32.mrb[0].mxu0
        %6591 = vmatprep.mubr.bf16.mxu0 0
        %6592 = vmatmul.mubr.bf16.gmra.mrb[0].mxu0 %v6231
        %v6593 = vpop.f32.mrb[0].mxu0
        %v6594 = vadd.f32 0.0, %v6593
        %v6595 = vpop.f32.mrb[0].mxu0
        %v6596 = vpop.f32.mrb[0].mxu0
        %v6597 = vadd.f32 0.0, %v6596
        %v6598 = vpop.f32.mrb[0].mxu0
        %6599 = vmatprep.mubr.bf16.mxu0 0
        %6600 = vmatmul.mubr.bf16.gmra.mrb[0].mxu0 %v6234
        %v6601 = vpop.f32.mrb[0].mxu0
        %v6602 = vadd.f32 0.0, %v6601
        %v6603 = vpop.f32.mrb[0].mxu0
        %v6604 = vpop.f32.mrb[0].mxu0
        %v6605 = vadd.f32 0.0, %v6604
        %v6606 = vpop.f32.mrb[0].mxu0
        %6607 = vmatprep.mubr.bf16.mxu0 0
        %6608 = vmatmul.mubr.bf16.gmra.mrb[0].mxu0 %v6237
        %v6609 = vpop.f32.mrb[0].mxu0
        %v6610 = vadd.f32 0.0, %v6609
        %v6611 = vpop.f32.mrb[0].mxu0
        %v6612 = vpop.f32.mrb[0].mxu0
        %v6613 = vadd.f32 0.0, %v6612
        %v6614 = vpop.f32.mrb[0].mxu0
        %6615 = vmatprep.mubr.bf16.mxu0 0
        %6616 = vmatmul.mubr.bf16.gmra.mrb[0].mxu0 %v6385
        %v6617 = vpop.f32.mrb[0].mxu0
        %v6618 = vadd.f32 0.0, %v6617
        %v6619 = vpop.f32.mrb[0].mxu0
        %v6620 = vpop.f32.mrb[0].mxu0
        %v6621 = vadd.f32 0.0, %v6620
        %v6622 = vpop.f32.mrb[0].mxu0
        %6623 = vmatprep.mubr.bf16.mxu0 0
        %6624 = vmatmul.mubr.bf16.gmra.mrb[0].mxu0 %v6533
        %v6625 = vpop.f32.mrb[0].mxu0
        %v6626 = vadd.f32 0.0, %v6625
        %v6627 = vpop.f32.mrb[0].mxu0
        %v6628 = vpop.f32.mrb[0].mxu0
        %v6629 = vadd.f32 0.0, %v6628
        %v6630 = vpop.f32.mrb[0].mxu0
        %6631 = vdwg.mxu0
        %v6632 = vadd.f32 %v6484, %v6570
        %v6633 = vadd.f32 %v6485, %v6573
        %v6634 = vadd.f32 %v6486, %v6578
        %v6635 = vadd.f32 %v6487, %v6581
        %v6636 = vadd.f32 %v6488, %v6586
        %v6637 = vadd.f32 %v6489, %v6589
        %v6638 = vadd.f32 %v6490, %v6594
        %v6639 = vadd.f32 %v6491, %v6597
        %v6640 = vadd.f32 %v6492, %v6602
        %v6641 = vadd.f32 %v6493, %v6605
        %v6642 = vadd.f32 %v6494, %v6610
        %v6643 = vadd.f32 %v6495, %v6613
        %v6644 = vadd.f32 %v6496, %v6618
        %v6645 = vadd.f32 %v6497, %v6621
        %v6646 = vadd.f32 %v6498, %v6626
        %v6647 = vadd.f32 %v6499, %v6629
        %v6648 = vrot.slane %v5650, 1
        %v6649 = vrot.slane %v5651, 1
        %v6650 = vrot.slane %v5652, 1
        %v6651 = vrot.slane %v5653, 1
        %v6652 = vrot.slane %v5654, 1
        %v6653 = vrot.slane %v5655, 1
        %v6654 = vrot.slane %v5656, 1
        %v6655 = vrot.slane %v5657, 1
        %v6656 = vrot.slane %v5658, 1
        %v6657 = vrot.slane %v5659, 1
        %v6658 = vrot.slane %v5660, 1
        %v6659 = vrot.slane %v5661, 1
        %v6660 = vrot.slane %v5662, 1
        %v6661 = vrot.slane %v5663, 1
        %v6662 = vrot.slane %v5664, 1
        %v6663 = vrot.slane %v5665, 1
        %v6664 = vrot.slane %v5666, 1
        %v6665 = vrot.slane %v5667, 1
        %v6666 = vrot.slane %v5668, 1
        %v6667 = vrot.slane %v5669, 1
        %v6668 = vsel %vm1809, %v6666, %v6667
        %v6669 = vsel %vm1809, %v6665, %v6666
        %v6670 = vsel %vm1809, %v6664, %v6665
        %v6671 = vsel %vm1809, %v6663, %v6664
        %v6672 = vsel %vm1809, %v6662, %v6663
        %v6673 = vsel %vm1809, %v6661, %v6662
        %v6674 = vsel %vm1809, %v6660, %v6661
        %v6675 = vsel %vm1809, %v6659, %v6660
        %v6676 = vsel %vm1809, %v6658, %v6659
        %v6677 = vsel %vm1809, %v6657, %v6658
        %v6678 = vsel %vm1809, %v6656, %v6657
        %v6679 = vsel %vm1809, %v6655, %v6656
        %v6680 = vsel %vm1809, %v6654, %v6655
        %v6681 = vsel %vm1809, %v6653, %v6654
        %v6682 = vsel %vm1809, %v6652, %v6653
        %v6683 = vsel %vm1809, %v6651, %v6652
        %v6684 = vsel %vm1809, %v6650, %v6651
        %v6685 = vsel %vm1809, %v6649, %v6650
        %v6686 = vsel %vm1809, %v6648, %v6649
        %v6687 = vsel %vm1809, %v6667, %v6648
        %v6688 = vmul.f32 %v6686, %v656
        %v6689 = vmul.f32 %v6685, %v657
        %v6690 = vmul.f32 %v6684, %v658
        %v6691 = vmul.f32 %v6683, %v659
        %v6692 = vmul.f32 %v6682, %v660
        %v6693 = vmul.f32 %v6681, %v661
        %v6694 = vmul.f32 %v6680, %v662
        %v6695 = vmul.f32 %v6679, %v663
        %v6696 = vmul.f32 %v6678, %v664
        %v6697 = vmul.f32 %v6677, %v665
        %v6698 = vmul.f32 %v6676, %v666
        %v6699 = vmul.f32 %v6675, %v667
        %v6700 = vmul.f32 %v6674, %v668
        %v6701 = vmul.f32 %v6673, %v669
        %v6702 = vmul.f32 %v6672, %v670
        %v6703 = vmul.f32 %v6671, %v671
        %v6704 = vmul.f32 %v6670, %v672
        %v6705 = vmul.f32 %v6669, %v673
        %v6706 = vmul.f32 %v6668, %v674
        %v6707 = vmul.f32 %v6687, %v675
        %v6708 = vpack.c.bf16 %v6689, %v6688
        %v6709 = vpack.c.bf16 %v6691, %v6690
        %v6710 = vpack.c.bf16 %v6693, %v6692
        %v6711 = vpack.c.bf16 %v6695, %v6694
        %v6712 = vpack.c.bf16 %v6697, %v6696
        %v6713 = vpack.c.bf16 %v6699, %v6698
        %v6714 = vpack.c.bf16 %v6701, %v6700
        %v6715 = vpack.c.bf16 %v6703, %v6702
        %v6716 = vpack.c.bf16 %v6705, %v6704
        %v6717 = vpack.c.bf16 %v6707, %v6706
        %v6718 = vld [vmem:[%s5074] sm:$0xf]
        %v6719 = vld [vmem:[%s5074 + $0x4] sm:$0xf]
        %v6720 = vld [vmem:[%s5074 + $0x8] sm:$0xf]
        %v6721 = vld [vmem:[%s5074 + $0xc] sm:$0xf]
        %v6722 = vld [vmem:[%s5074 + $0x10] sm:$0xf]
        %v6723 = vld [vmem:[%s5074 + $0x14] sm:$0xf]
        %v6724 = vld [vmem:[%s5074 + $0x18] sm:$0xf]
        %v6725 = vld [vmem:[%s5074 + $0x1c] sm:$0xf]
        %v6734 = vunpack.c.l.b16 %v6718
        %v6735 = vunpack.c.l.b16 %v6719
        %v6736 = vunpack.c.l.b16 %v6720
        %v6737 = vunpack.c.l.b16 %v6721
        %v6738 = vunpack.c.l.b16 %v6722
        %v6739 = vunpack.c.l.b16 %v6723
        %v6740 = vunpack.c.l.b16 %v6724
        %v6741 = vunpack.c.l.b16 %v6725
        %v6742 = vpack.c.b16 %v6735, %v6734
        %v6743 = vpack.c.b16 %v6737, %v6736
        %v6744 = vpack.c.b16 %v6739, %v6738
        %v6745 = vpack.c.b16 %v6741, %v6740
        %v6751 = vsel %vm676, %v6708, 0
        %v6754 = vsel %vm676, %v6709, 0
        %v6757 = vsel %vm676, %v6710, 0
        %v6760 = vsel %vm676, %v6711, 0
        %v6763 = vsel %vm676, %v6712, 0
        %v6766 = vsel %vm676, %v6713, 0
        %v6769 = vsel %vm676, %v6714, 0
        %v6772 = vsel %vm676, %v6715, 0
        %6774 = vmatprep.subr.bf16.mxu0 0
        %6775 = vmatpush1.bf16.msra.mxu0 %v6742
        %6776 = vmatprep.subr.bf16.mxu0 0
        %6777 = vmatpush1.bf16.msra.mxu0 %v6743
        %6778 = vmatprep.subr.bf16.mxu0 0
        %6779 = vmatpush1.bf16.msra.mxu0 %v6744
        %6780 = vmatprep.subr.bf16.mxu0 0
        %6781 = vmatpush1.bf16.msra.mxu0 %v6745
        %6782 = vmatprep.subr.bf16.mxu0 0
        %6783 = vmatpush1.bf16.msra.mxu0 0
        %6784 = vmatprep.subr.bf16.mxu0 0
        %6785 = vmatpush1.bf16.msra.mxu0 0
        %6786 = vmatprep.subr.bf16.mxu0 0
        %6787 = vmatpush1.bf16.msra.mxu0 0
        %6788 = vmatprep.subr.bf16.mxu0 0
        %6789 = vmatpush1.bf16.msra.mxu0 0
        %6790 = vmatprep.subr.bf16.mxu0 0
        %6791 = vmatpush1.bf16.msra.mxu0 0
        %6792 = vmatprep.subr.bf16.mxu0 0
        %6793 = vmatpush1.bf16.msra.mxu0 0
        %6794 = vmatprep.subr.bf16.mxu0 0
        %6795 = vmatpush1.bf16.msra.mxu0 0
        %6796 = vmatprep.subr.bf16.mxu0 0
        %6797 = vmatpush1.bf16.msra.mxu0 0
        %6798 = vmatprep.subr.bf16.mxu0 0
        %6799 = vmatpush1.bf16.msra.mxu0 0
        %6800 = vmatprep.subr.bf16.mxu0 0
        %6801 = vmatpush1.bf16.msra.mxu0 0
        %6802 = vmatprep.subr.bf16.mxu0 0
        %6803 = vmatpush1.bf16.msra.mxu0 0
        %6804 = vmatprep.subr.bf16.mxu0 0
        %6805 = vmatpush1.bf16.msra.mxu0 0
        %6806 = vmatprep.mubr.bf16.mxu0 0
        %6807 = vmatmul.mubr.bf16.gmra.mrb[0].mxu0 %v6751
        %v6808 = vpop.f32.mrb[0].mxu0
        %v6809 = vadd.f32 0.0, %v6808
        %v6810 = vpop.f32.mrb[0].mxu0
        %v6811 = vpop.f32.mrb[0].mxu0
        %v6812 = vadd.f32 0.0, %v6811
        %v6813 = vpop.f32.mrb[0].mxu0
        %6814 = vmatprep.mubr.bf16.mxu0 0
        %6815 = vmatmul.mubr.bf16.gmra.mrb[0].mxu0 %v6754
        %v6816 = vpop.f32.mrb[0].mxu0
        %v6817 = vadd.f32 0.0, %v6816
        %v6818 = vpop.f32.mrb[0].mxu0
        %v6819 = vpop.f32.mrb[0].mxu0
        %v6820 = vadd.f32 0.0, %v6819
        %v6821 = vpop.f32.mrb[0].mxu0
        %6822 = vmatprep.mubr.bf16.mxu0 0
        %6823 = vmatmul.mubr.bf16.gmra.mrb[0].mxu0 %v6757
        %v6824 = vpop.f32.mrb[0].mxu0
        %v6825 = vadd.f32 0.0, %v6824
        %v6826 = vpop.f32.mrb[0].mxu0
        %v6827 = vpop.f32.mrb[0].mxu0
        %v6828 = vadd.f32 0.0, %v6827
        %v6829 = vpop.f32.mrb[0].mxu0
        %6830 = vmatprep.mubr.bf16.mxu0 0
        %6831 = vmatmul.mubr.bf16.gmra.mrb[0].mxu0 %v6760
        %v6832 = vpop.f32.mrb[0].mxu0
        %v6833 = vadd.f32 0.0, %v6832
        %v6834 = vpop.f32.mrb[0].mxu0
        %v6835 = vpop.f32.mrb[0].mxu0
        %v6836 = vadd.f32 0.0, %v6835
        %v6837 = vpop.f32.mrb[0].mxu0
        %6838 = vmatprep.mubr.bf16.mxu0 0
        %6839 = vmatmul.mubr.bf16.gmra.mrb[0].mxu0 %v6763
        %v6840 = vpop.f32.mrb[0].mxu0
        %v6841 = vadd.f32 0.0, %v6840
        %v6842 = vpop.f32.mrb[0].mxu0
        %v6843 = vpop.f32.mrb[0].mxu0
        %v6844 = vadd.f32 0.0, %v6843
        %v6845 = vpop.f32.mrb[0].mxu0
        %6846 = vmatprep.mubr.bf16.mxu0 0
        %6847 = vmatmul.mubr.bf16.gmra.mrb[0].mxu0 %v6766
        %v6848 = vpop.f32.mrb[0].mxu0
        %v6849 = vadd.f32 0.0, %v6848
        %v6850 = vpop.f32.mrb[0].mxu0
        %v6851 = vpop.f32.mrb[0].mxu0
        %v6852 = vadd.f32 0.0, %v6851
        %v6853 = vpop.f32.mrb[0].mxu0
        %6854 = vmatprep.mubr.bf16.mxu0 0
        %6855 = vmatmul.mubr.bf16.gmra.mrb[0].mxu0 %v6769
        %v6856 = vpop.f32.mrb[0].mxu0
        %v6857 = vadd.f32 0.0, %v6856
        %v6858 = vpop.f32.mrb[0].mxu0
        %v6859 = vpop.f32.mrb[0].mxu0
        %v6860 = vadd.f32 0.0, %v6859
        %v6861 = vpop.f32.mrb[0].mxu0
        %6862 = vmatprep.mubr.bf16.mxu0 0
        %6863 = vmatmul.mubr.bf16.gmra.mrb[0].mxu0 %v6772
        %v6864 = vpop.f32.mrb[0].mxu0
        %v6865 = vadd.f32 0.0, %v6864
        %v6866 = vpop.f32.mrb[0].mxu0
        %v6867 = vpop.f32.mrb[0].mxu0
        %v6868 = vadd.f32 0.0, %v6867
        %v6869 = vpop.f32.mrb[0].mxu0
        %6870 = vdwg.mxu0
        %v6871 = vadd.f32 %v6632, %v6809
        %v6872 = vadd.f32 %v6633, %v6812
        %v6873 = vadd.f32 %v6634, %v6817
        %v6874 = vadd.f32 %v6635, %v6820
        %v6875 = vadd.f32 %v6636, %v6825
        %v6876 = vadd.f32 %v6637, %v6828
        %v6877 = vadd.f32 %v6638, %v6833
        %v6878 = vadd.f32 %v6639, %v6836
        %v6879 = vadd.f32 %v6640, %v6841
        %v6880 = vadd.f32 %v6641, %v6844
        %v6881 = vadd.f32 %v6642, %v6849
        %v6882 = vadd.f32 %v6643, %v6852
        %v6883 = vadd.f32 %v6644, %v6857
        %v6884 = vadd.f32 %v6645, %v6860
        %v6885 = vadd.f32 %v6646, %v6865
        %v6886 = vadd.f32 %v6647, %v6868
        %v6887 = vld [vmem:[%s5244] sm:$0xf]
        %v6888 = vld [vmem:[%s5244 + $0x4] sm:$0xf]
        %v6889 = vld [vmem:[%s5244 + $0x8] sm:$0xf]
        %v6890 = vld [vmem:[%s5244 + $0xc] sm:$0xf]
        %v6891 = vld [vmem:[%s5244 + $0x10] sm:$0xf]
        %v6892 = vld [vmem:[%s5244 + $0x14] sm:$0xf]
        %v6893 = vld [vmem:[%s5244 + $0x18] sm:$0xf]
        %v6894 = vld [vmem:[%s5244 + $0x1c] sm:$0xf]
        %v6903 = vunpack.c.l.b16 %v6887
        %v6904 = vunpack.c.l.b16 %v6888
        %v6905 = vunpack.c.l.b16 %v6889
        %v6906 = vunpack.c.l.b16 %v6890
        %v6907 = vunpack.c.l.b16 %v6891
        %v6908 = vunpack.c.l.b16 %v6892
        %v6909 = vunpack.c.l.b16 %v6893
        %v6910 = vunpack.c.l.b16 %v6894
        %v6911 = vpack.c.b16 %v6904, %v6903
        %v6912 = vpack.c.b16 %v6906, %v6905
        %v6913 = vpack.c.b16 %v6908, %v6907
        %v6914 = vpack.c.b16 %v6910, %v6909
        %v6920 = vsel %vm676, %v6716, 0
        %6922 = vmatprep.subr.bf16.mxu0 0
        %6923 = vmatpush1.bf16.msra.mxu0 %v6911
        %6924 = vmatprep.subr.bf16.mxu0 0
        %6925 = vmatpush1.bf16.msra.mxu0 %v6912
        %6926 = vmatprep.subr.bf16.mxu0 0
        %6927 = vmatpush1.bf16.msra.mxu0 %v6913
        %6928 = vmatprep.subr.bf16.mxu0 0
        %6929 = vmatpush1.bf16.msra.mxu0 %v6914
        %6930 = vmatprep.subr.bf16.mxu0 0
        %6931 = vmatpush1.bf16.msra.mxu0 0
        %6932 = vmatprep.subr.bf16.mxu0 0
        %6933 = vmatpush1.bf16.msra.mxu0 0
        %6934 = vmatprep.subr.bf16.mxu0 0
        %6935 = vmatpush1.bf16.msra.mxu0 0
        %6936 = vmatprep.subr.bf16.mxu0 0
        %6937 = vmatpush1.bf16.msra.mxu0 0
        %6938 = vmatprep.subr.bf16.mxu0 0
        %6939 = vmatpush1.bf16.msra.mxu0 0
        %6940 = vmatprep.subr.bf16.mxu0 0
        %6941 = vmatpush1.bf16.msra.mxu0 0
        %6942 = vmatprep.subr.bf16.mxu0 0
        %6943 = vmatpush1.bf16.msra.mxu0 0
        %6944 = vmatprep.subr.bf16.mxu0 0
        %6945 = vmatpush1.bf16.msra.mxu0 0
        %6946 = vmatprep.subr.bf16.mxu0 0
        %6947 = vmatpush1.bf16.msra.mxu0 0
        %6948 = vmatprep.subr.bf16.mxu0 0
        %6949 = vmatpush1.bf16.msra.mxu0 0
        %6950 = vmatprep.subr.bf16.mxu0 0
        %6951 = vmatpush1.bf16.msra.mxu0 0
        %6952 = vmatprep.subr.bf16.mxu0 0
        %6953 = vmatpush1.bf16.msra.mxu0 0
        %6954 = vmatprep.mubr.bf16.mxu0 0
        %6955 = vmatmul.mubr.bf16.gmra.mrb[0].mxu0 %v6754
        %v6956 = vpop.f32.mrb[0].mxu0
        %v6957 = vadd.f32 0.0, %v6956
        %v6958 = vpop.f32.mrb[0].mxu0
        %v6959 = vpop.f32.mrb[0].mxu0
        %v6960 = vadd.f32 0.0, %v6959
        %v6961 = vpop.f32.mrb[0].mxu0
        %6962 = vmatprep.mubr.bf16.mxu0 0
        %6963 = vmatmul.mubr.bf16.gmra.mrb[0].mxu0 %v6757
        %v6964 = vpop.f32.mrb[0].mxu0
        %v6965 = vadd.f32 0.0, %v6964
        %v6966 = vpop.f32.mrb[0].mxu0
        %v6967 = vpop.f32.mrb[0].mxu0
        %v6968 = vadd.f32 0.0, %v6967
        %v6969 = vpop.f32.mrb[0].mxu0
        %6970 = vmatprep.mubr.bf16.mxu0 0
        %6971 = vmatmul.mubr.bf16.gmra.mrb[0].mxu0 %v6760
        %v6972 = vpop.f32.mrb[0].mxu0
        %v6973 = vadd.f32 0.0, %v6972
        %v6974 = vpop.f32.mrb[0].mxu0
        %v6975 = vpop.f32.mrb[0].mxu0
        %v6976 = vadd.f32 0.0, %v6975
        %v6977 = vpop.f32.mrb[0].mxu0
        %6978 = vmatprep.mubr.bf16.mxu0 0
        %6979 = vmatmul.mubr.bf16.gmra.mrb[0].mxu0 %v6763
        %v6980 = vpop.f32.mrb[0].mxu0
        %v6981 = vadd.f32 0.0, %v6980
        %v6982 = vpop.f32.mrb[0].mxu0
        %v6983 = vpop.f32.mrb[0].mxu0
        %v6984 = vadd.f32 0.0, %v6983
        %v6985 = vpop.f32.mrb[0].mxu0
        %6986 = vmatprep.mubr.bf16.mxu0 0
        %6987 = vmatmul.mubr.bf16.gmra.mrb[0].mxu0 %v6766
        %v6988 = vpop.f32.mrb[0].mxu0
        %v6989 = vadd.f32 0.0, %v6988
        %v6990 = vpop.f32.mrb[0].mxu0
        %v6991 = vpop.f32.mrb[0].mxu0
        %v6992 = vadd.f32 0.0, %v6991
        %v6993 = vpop.f32.mrb[0].mxu0
        %6994 = vmatprep.mubr.bf16.mxu0 0
        %6995 = vmatmul.mubr.bf16.gmra.mrb[0].mxu0 %v6769
        %v6996 = vpop.f32.mrb[0].mxu0
        %v6997 = vadd.f32 0.0, %v6996
        %v6998 = vpop.f32.mrb[0].mxu0
        %v6999 = vpop.f32.mrb[0].mxu0
        %v7000 = vadd.f32 0.0, %v6999
        %v7001 = vpop.f32.mrb[0].mxu0
        %7002 = vmatprep.mubr.bf16.mxu0 0
        %7003 = vmatmul.mubr.bf16.gmra.mrb[0].mxu0 %v6772
        %v7004 = vpop.f32.mrb[0].mxu0
        %v7005 = vadd.f32 0.0, %v7004
        %v7006 = vpop.f32.mrb[0].mxu0
        %v7007 = vpop.f32.mrb[0].mxu0
        %v7008 = vadd.f32 0.0, %v7007
        %v7009 = vpop.f32.mrb[0].mxu0
        %7010 = vmatprep.mubr.bf16.mxu0 0
        %7011 = vmatmul.mubr.bf16.gmra.mrb[0].mxu0 %v6920
        %v7012 = vpop.f32.mrb[0].mxu0
        %v7013 = vadd.f32 0.0, %v7012
        %v7014 = vpop.f32.mrb[0].mxu0
        %v7015 = vpop.f32.mrb[0].mxu0
        %v7016 = vadd.f32 0.0, %v7015
        %v7017 = vpop.f32.mrb[0].mxu0
        %7018 = vdwg.mxu0
        %v7019 = vadd.f32 %v6871, %v6957
        %v7020 = vadd.f32 %v6872, %v6960
        %v7021 = vadd.f32 %v6873, %v6965
        %v7022 = vadd.f32 %v6874, %v6968
        %v7023 = vadd.f32 %v6875, %v6973
        %v7024 = vadd.f32 %v6876, %v6976
        %v7025 = vadd.f32 %v6877, %v6981
        %v7026 = vadd.f32 %v6878, %v6984
        %v7027 = vadd.f32 %v6879, %v6989
        %v7028 = vadd.f32 %v6880, %v6992
        %v7029 = vadd.f32 %v6881, %v6997
        %v7030 = vadd.f32 %v6882, %v7000
        %v7031 = vadd.f32 %v6883, %v7005
        %v7032 = vadd.f32 %v6884, %v7008
        %v7033 = vadd.f32 %v6885, %v7013
        %v7034 = vadd.f32 %v6886, %v7016
        %v7035 = vld [vmem:[%s5393] sm:$0xf]
        %v7036 = vld [vmem:[%s5393 + $0x4] sm:$0xf]
        %v7037 = vld [vmem:[%s5393 + $0x8] sm:$0xf]
        %v7038 = vld [vmem:[%s5393 + $0xc] sm:$0xf]
        %v7039 = vld [vmem:[%s5393 + $0x10] sm:$0xf]
        %v7040 = vld [vmem:[%s5393 + $0x14] sm:$0xf]
        %v7041 = vld [vmem:[%s5393 + $0x18] sm:$0xf]
        %v7042 = vld [vmem:[%s5393 + $0x1c] sm:$0xf]
        %v7051 = vunpack.c.l.b16 %v7035
        %v7052 = vunpack.c.l.b16 %v7036
        %v7053 = vunpack.c.l.b16 %v7037
        %v7054 = vunpack.c.l.b16 %v7038
        %v7055 = vunpack.c.l.b16 %v7039
        %v7056 = vunpack.c.l.b16 %v7040
        %v7057 = vunpack.c.l.b16 %v7041
        %v7058 = vunpack.c.l.b16 %v7042
        %v7059 = vpack.c.b16 %v7052, %v7051
        %v7060 = vpack.c.b16 %v7054, %v7053
        %v7061 = vpack.c.b16 %v7056, %v7055
        %v7062 = vpack.c.b16 %v7058, %v7057
        %v7068 = vsel %vm676, %v6717, 0
        %7070 = vmatprep.subr.bf16.mxu0 0
        %7071 = vmatpush1.bf16.msra.mxu0 %v7059
        %7072 = vmatprep.subr.bf16.mxu0 0
        %7073 = vmatpush1.bf16.msra.mxu0 %v7060
        %7074 = vmatprep.subr.bf16.mxu0 0
        %7075 = vmatpush1.bf16.msra.mxu0 %v7061
        %7076 = vmatprep.subr.bf16.mxu0 0
        %7077 = vmatpush1.bf16.msra.mxu0 %v7062
        %7078 = vmatprep.subr.bf16.mxu0 0
        %7079 = vmatpush1.bf16.msra.mxu0 0
        %7080 = vmatprep.subr.bf16.mxu0 0
        %7081 = vmatpush1.bf16.msra.mxu0 0
        %7082 = vmatprep.subr.bf16.mxu0 0
        %7083 = vmatpush1.bf16.msra.mxu0 0
        %7084 = vmatprep.subr.bf16.mxu0 0
        %7085 = vmatpush1.bf16.msra.mxu0 0
        %7086 = vmatprep.subr.bf16.mxu0 0
        %7087 = vmatpush1.bf16.msra.mxu0 0
        %7088 = vmatprep.subr.bf16.mxu0 0
        %7089 = vmatpush1.bf16.msra.mxu0 0
        %7090 = vmatprep.subr.bf16.mxu0 0
        %7091 = vmatpush1.bf16.msra.mxu0 0
        %7092 = vmatprep.subr.bf16.mxu0 0
        %7093 = vmatpush1.bf16.msra.mxu0 0
        %7094 = vmatprep.subr.bf16.mxu0 0
        %7095 = vmatpush1.bf16.msra.mxu0 0
        %7096 = vmatprep.subr.bf16.mxu0 0
        %7097 = vmatpush1.bf16.msra.mxu0 0
        %7098 = vmatprep.subr.bf16.mxu0 0
        %7099 = vmatpush1.bf16.msra.mxu0 0
        %7100 = vmatprep.subr.bf16.mxu0 0
        %7101 = vmatpush1.bf16.msra.mxu0 0
        %7102 = vmatprep.mubr.bf16.mxu0 0
        %7103 = vmatmul.mubr.bf16.gmra.mrb[0].mxu0 %v6757
        %v7104 = vpop.f32.mrb[0].mxu0
        %v7105 = vadd.f32 0.0, %v7104
        %v7106 = vpop.f32.mrb[0].mxu0
        %v7107 = vpop.f32.mrb[0].mxu0
        %v7108 = vadd.f32 0.0, %v7107
        %v7109 = vpop.f32.mrb[0].mxu0
        %7110 = vmatprep.mubr.bf16.mxu0 0
        %7111 = vmatmul.mubr.bf16.gmra.mrb[0].mxu0 %v6760
        %v7112 = vpop.f32.mrb[0].mxu0
        %v7113 = vadd.f32 0.0, %v7112
        %v7114 = vpop.f32.mrb[0].mxu0
        %v7115 = vpop.f32.mrb[0].mxu0
        %v7116 = vadd.f32 0.0, %v7115
        %v7117 = vpop.f32.mrb[0].mxu0
        %7118 = vmatprep.mubr.bf16.mxu0 0
        %7119 = vmatmul.mubr.bf16.gmra.mrb[0].mxu0 %v6763
        %v7120 = vpop.f32.mrb[0].mxu0
        %v7121 = vadd.f32 0.0, %v7120
        %v7122 = vpop.f32.mrb[0].mxu0
        %v7123 = vpop.f32.mrb[0].mxu0
        %v7124 = vadd.f32 0.0, %v7123
        %v7125 = vpop.f32.mrb[0].mxu0
        %7126 = vmatprep.mubr.bf16.mxu0 0
        %7127 = vmatmul.mubr.bf16.gmra.mrb[0].mxu0 %v6766
        %v7128 = vpop.f32.mrb[0].mxu0
        %v7129 = vadd.f32 0.0, %v7128
        %v7130 = vpop.f32.mrb[0].mxu0
        %v7131 = vpop.f32.mrb[0].mxu0
        %v7132 = vadd.f32 0.0, %v7131
        %v7133 = vpop.f32.mrb[0].mxu0
        %7134 = vmatprep.mubr.bf16.mxu0 0
        %7135 = vmatmul.mubr.bf16.gmra.mrb[0].mxu0 %v6769
        %v7136 = vpop.f32.mrb[0].mxu0
        %v7137 = vadd.f32 0.0, %v7136
        %v7138 = vpop.f32.mrb[0].mxu0
        %v7139 = vpop.f32.mrb[0].mxu0
        %v7140 = vadd.f32 0.0, %v7139
        %v7141 = vpop.f32.mrb[0].mxu0
        %7142 = vmatprep.mubr.bf16.mxu0 0
        %7143 = vmatmul.mubr.bf16.gmra.mrb[0].mxu0 %v6772
        %v7144 = vpop.f32.mrb[0].mxu0
        %v7145 = vadd.f32 0.0, %v7144
        %v7146 = vpop.f32.mrb[0].mxu0
        %v7147 = vpop.f32.mrb[0].mxu0
        %v7148 = vadd.f32 0.0, %v7147
        %v7149 = vpop.f32.mrb[0].mxu0
        %7150 = vmatprep.mubr.bf16.mxu0 0
        %7151 = vmatmul.mubr.bf16.gmra.mrb[0].mxu0 %v6920
        %v7152 = vpop.f32.mrb[0].mxu0
        %v7153 = vadd.f32 0.0, %v7152
        %v7154 = vpop.f32.mrb[0].mxu0
        %v7155 = vpop.f32.mrb[0].mxu0
        %v7156 = vadd.f32 0.0, %v7155
        %v7157 = vpop.f32.mrb[0].mxu0
        %7158 = vmatprep.mubr.bf16.mxu0 0
        %7159 = vmatmul.mubr.bf16.gmra.mrb[0].mxu0 %v7068
        %v7160 = vpop.f32.mrb[0].mxu0
        %v7161 = vadd.f32 0.0, %v7160
        %v7162 = vpop.f32.mrb[0].mxu0
        %v7163 = vpop.f32.mrb[0].mxu0
        %v7164 = vadd.f32 0.0, %v7163
        %v7165 = vpop.f32.mrb[0].mxu0
        %7166 = vdwg.mxu0
        %v7167 = vadd.f32 %v7019, %v7105
        %v7168 = vadd.f32 %v7020, %v7108
        %v7169 = vadd.f32 %v7021, %v7113
        %v7170 = vadd.f32 %v7022, %v7116
        %v7171 = vadd.f32 %v7023, %v7121
        %v7172 = vadd.f32 %v7024, %v7124
        %v7173 = vadd.f32 %v7025, %v7129
        %v7174 = vadd.f32 %v7026, %v7132
        %v7175 = vadd.f32 %v7027, %v7137
        %v7176 = vadd.f32 %v7028, %v7140
        %v7177 = vadd.f32 %v7029, %v7145
        %v7178 = vadd.f32 %v7030, %v7148
        %v7179 = vadd.f32 %v7031, %v7153
        %v7180 = vadd.f32 %v7032, %v7156
        %v7181 = vadd.f32 %v7033, %v7161
        %v7182 = vadd.f32 %v7034, %v7164
        %v7183 = vmul.f32 %v7167, %v5546
        %v7184 = vmul.f32 %v7168, %v5546
        %v7185 = vmul.f32 %v7169, %v5546
        %v7186 = vmul.f32 %v7170, %v5546
        %v7187 = vmul.f32 %v7171, %v5546
        %v7188 = vmul.f32 %v7172, %v5546
        %v7189 = vmul.f32 %v7173, %v5546
        %v7190 = vmul.f32 %v7174, %v5546
        %v7191 = vmul.f32 %v7175, %v5546
        %v7192 = vmul.f32 %v7176, %v5546
        %v7193 = vmul.f32 %v7177, %v5546
        %v7194 = vmul.f32 %v7178, %v5546
        %v7195 = vmul.f32 %v7179, %v5546
        %v7196 = vmul.f32 %v7180, %v5546
        %v7197 = vmul.f32 %v7181, %v5546
        %v7198 = vmul.f32 %v7182, %v5546
        %v7199 = vadd.f32 %v7183, %v5568
        %v7200 = vadd.f32 %v7184, %v5568
        %v7201 = vadd.f32 %v7185, %v5568
        %v7202 = vadd.f32 %v7186, %v5568
        %v7203 = vadd.f32 %v7187, %v5568
        %v7204 = vadd.f32 %v7188, %v5568
        %v7205 = vadd.f32 %v7189, %v5568
        %v7206 = vadd.f32 %v7190, %v5568
        %v7207 = vadd.f32 %v7191, %v5568
        %v7208 = vadd.f32 %v7192, %v5568
        %v7209 = vadd.f32 %v7193, %v5568
        %v7210 = vadd.f32 %v7194, %v5568
        %v7211 = vadd.f32 %v7195, %v5568
        %v7212 = vadd.f32 %v7196, %v5568
        %v7213 = vadd.f32 %v7197, %v5568
        %v7214 = vadd.f32 %v7198, %v5568
        %v7215 = vld [vmem:[#allocation2 + $0x90] sm:$0xff]
        %v7216 = vld [vmem:[#allocation2 + $0x98] sm:$0xff]
        %v7217 = vld [vmem:[#allocation2 + $0xa0] sm:$0xff]
        %v7218 = vld [vmem:[#allocation2 + $0xa8] sm:$0xff]
        %v7219 = vld [vmem:[#allocation2 + $0xb0] sm:$0xff]
        %v7220 = vld [vmem:[#allocation2 + $0xb8] sm:$0xff]
        %v7221 = vld [vmem:[#allocation2 + $0xc0] sm:$0xff]
        %v7222 = vld [vmem:[#allocation2 + $0xc8] sm:$0xff]
        %v7223 = vld [vmem:[#allocation2 + $0xd0] sm:$0xff]
        %v7224 = vld [vmem:[#allocation2 + $0xd8] sm:$0xff]
        %v7225 = vld [vmem:[#allocation2 + $0xe0] sm:$0xff]
        %v7226 = vld [vmem:[#allocation2 + $0xe8] sm:$0xff]
        %v7227 = vld [vmem:[#allocation2 + $0xf0] sm:$0xff]
        %v7228 = vld [vmem:[#allocation2 + $0xf8] sm:$0xff]
        %v7229 = vld [vmem:[#allocation2 + $0x100] sm:$0xff]
        %v7230 = vld [vmem:[#allocation2 + $0x108] sm:$0xff]
        %v7231 = vadd.f32 %v7199, %v7215
        %v7232 = vadd.f32 %v7200, %v7216
        %v7233 = vadd.f32 %v7201, %v7217
        %v7234 = vadd.f32 %v7202, %v7218
        %v7235 = vadd.f32 %v7203, %v7219
        %v7236 = vadd.f32 %v7204, %v7220
        %v7237 = vadd.f32 %v7205, %v7221
        %v7238 = vadd.f32 %v7206, %v7222
        %v7239 = vadd.f32 %v7207, %v7223
        %v7240 = vadd.f32 %v7208, %v7224
        %v7241 = vadd.f32 %v7209, %v7225
        %v7242 = vadd.f32 %v7210, %v7226
        %v7243 = vadd.f32 %v7211, %v7227
        %v7244 = vadd.f32 %v7212, %v7228
        %v7245 = vadd.f32 %v7213, %v7229
        %v7246 = vadd.f32 %v7214, %v7230
        %v7247 = vmax.f32 %v7231, 0.0
        %v7248 = vmax.f32 %v7232, 0.0
        %v7249 = vmax.f32 %v7233, 0.0
        %v7250 = vmax.f32 %v7234, 0.0
        %v7251 = vmax.f32 %v7235, 0.0
        %v7252 = vmax.f32 %v7236, 0.0
        %v7253 = vmax.f32 %v7237, 0.0
        %v7254 = vmax.f32 %v7238, 0.0
        %v7255 = vmax.f32 %v7239, 0.0
        %v7256 = vmax.f32 %v7240, 0.0
        %v7257 = vmax.f32 %v7241, 0.0
        %v7258 = vmax.f32 %v7242, 0.0
        %v7259 = vmax.f32 %v7243, 0.0
        %v7260 = vmax.f32 %v7244, 0.0
        %v7261 = vmax.f32 %v7245, 0.0
        %v7262 = vmax.f32 %v7246, 0.0
        %7263 = vst.msk [vmem:[%s293 + $0x80] sm:$0xff] %vm676, %v7247
        %7264 = vst.msk [vmem:[%s293 + $0x88] sm:$0xff] %vm676, %v7248
        %7265 = vst.msk [vmem:[%s293 + $0x90] sm:$0xff] %vm676, %v7249
        %7266 = vst.msk [vmem:[%s293 + $0x98] sm:$0xff] %vm676, %v7250
        %7267 = vst.msk [vmem:[%s293 + $0xa0] sm:$0xff] %vm676, %v7251
        %7268 = vst.msk [vmem:[%s293 + $0xa8] sm:$0xff] %vm676, %v7252
        %7269 = vst.msk [vmem:[%s293 + $0xb0] sm:$0xff] %vm676, %v7253
        %7270 = vst.msk [vmem:[%s293 + $0xb8] sm:$0xff] %vm676, %v7254
        %7271 = vst.msk [vmem:[%s293 + $0xc0] sm:$0xff] %vm676, %v7255
        %7272 = vst.msk [vmem:[%s293 + $0xc8] sm:$0xff] %vm676, %v7256
        %7273 = vst.msk [vmem:[%s293 + $0xd0] sm:$0xff] %vm676, %v7257
        %7274 = vst.msk [vmem:[%s293 + $0xd8] sm:$0xff] %vm676, %v7258
        %7275 = vst.msk [vmem:[%s293 + $0xe0] sm:$0xff] %vm676, %v7259
        %7276 = vst.msk [vmem:[%s293 + $0xe8] sm:$0xff] %vm676, %v7260
        %7277 = vst.msk [vmem:[%s293 + $0xf0] sm:$0xff] %vm676, %v7261
        %7278 = vst.msk [vmem:[%s293 + $0xf8] sm:$0xff] %vm676, %v7262
        %p7279 = scmp.lt.s32.totalorder %s19, 1
        %s7280 = scalar_select %p7279, %s19, 1
        %s7281 = smul.addr %s7280, 32
        %s7282 = smul.addr %s7281, 8
        %s7283 = scalar_lea.vmem %s7, %s7282
        // Predicated region
        $region53: #{tpu_custom_call.1} parent=47 // pred_check
          %p7284 = pneg %p189
        $region54: #{tpu_custom_call.1} parent=47 // pred_check_branch
          %7286 = sbr.rel (%p7284) target = $region56
        $region55: #{tpu_custom_call.1} parent=47 // pred_region
          _
        $region56: #{tpu_custom_call.1} parent=47 // pred_fallthru
          _
      $region48: #{tpu_custom_call.1} parent=5 // pred_fallthru
        _
      %p7287 = scmp.le.s32.totalorder 2, %s14
      // Predicated region
      $region57: #{tpu_custom_call.1} parent=5 // pred_check
        %p7288 = pneg %p7287
      $region58: #{tpu_custom_call.1} parent=5 // pred_check_branch
        %7290 = sbr.rel (%p7288) target = $region60
      $region59: #{tpu_custom_call.1} parent=5 // pred_region
        %s7291 = ssub.s32 %s14, 2
        // Predicated region
        $region61: #{tpu_custom_call.1} parent=59 // pred_check
          %p7292 = pneg %p195
        $region62: #{tpu_custom_call.1} parent=59 // pred_check_branch
          %7294 = sbr.rel (%p7292) target = $region64
        $region63: #{tpu_custom_call.1} parent=59 // pred_region
          %p7295 = scmp.lt.s32.totalorder %s20, 1
          %s7296 = scalar_select %p7295, %s20, 1
          %s7297 = smul.addr %s7296, 32
          %s7298 = smul.addr %s7297, 8
          %s7299 = scalar_lea.vmem %s7, %s7298
        $region64: #{tpu_custom_call.1} parent=59 // pred_fallthru
          _
      $region60: #{tpu_custom_call.1} parent=5 // pred_fallthru
        _
    $region6: #{tpu_custom_call.1} parent=1 // loop_footer
      %s18 = sadd.s32 1, %s14
    $region7: #{tpu_custom_call.1} parent=1 // loop_footer_branch
      %13 = sbr.rel target = $region3
    $region8: #{tpu_custom_call.1} parent=1 // loop_exit
      _
    %7300 = vsyncpa [#allocation5], 1
    %s7301 = scalar_lea.sflag [#allocation5], 1
    %7302 = vsyncpa %s7301, 1

</llo_original>
